<compile_context>
chip_gen: v7x
topology: tpu7x:2x2x1
jax: 0.10.0
libtpu: 0.0.40
codegen_flags: <defaults>
</compile_context>

<pallas_src>
import numpy as np

import jax
import jax.numpy as jnp
from jax.experimental import pallas as pl
from jax.experimental.pallas import tpu as pltpu


def _build_dft_matrices(nd, nh, nw, lwmax):
    """Deterministic 'parameters': ortho inverse-DFT matrices (no checkpoint)."""
    def inv_dft(n):
        k = np.arange(n)
        return np.exp(2j * np.pi * np.outer(k, k) / n) / np.sqrt(n)

    wd = inv_dft(nd)                       # (nd, nd) complex
    wh = inv_dft(nh)                       # (nh, nh) complex
    # TODO(synk): at production SFNO sizes (nd*nh in the thousands) replace the
    # Kronecker matrix with the separable Wd/Wh application (h-transform batched
    # over d) — kron is O((nd*nh)^2) in weights/FLOPs and will not fit v7x's
    # 64 MiB VMEM.  At the small sizes exercised here kron(Wd, Wh) is a single
    # MXU tile and is the faster choice.
    f = np.kron(wd, wh)                    # (M, M), row-major (d, h) flatten

    # irfft(norm='ortho') is a real-linear map of (X_re, X_im); build its matrix
    # columns by pushing unit basis vectors through numpy's irfft (this also
    # reproduces the exact DC / Nyquist handling of torch.fft.irfft).
    eye = np.eye(lwmax)
    cr = np.stack([np.fft.irfft(eye[k], n=nw, norm="ortho") for k in range(lwmax)], 0)
    ci = np.stack([np.fft.irfft(1j * eye[k], n=nw, norm="ortho") for k in range(lwmax)], 0)

    # Transposed forms used by the kernel:
    #   crT/ciT (nw, lwmax) left-multiply (lwmax, M) per-sample slabs,
    #   frT/fiT (M, M)      right-multiply the batch-folded (NB*nw, M) slab.
    return (np.ascontiguousarray(cr.T).astype(np.float32),
            np.ascontiguousarray(ci.T).astype(np.float32),
            np.ascontiguousarray(f.real.T).astype(np.float32),
            np.ascontiguousarray(f.imag.T).astype(np.float32))


def _ifft3_kernel(xr_ref, xi_ref, crT_ref, ciT_ref, frT_ref, fiT_ref, o_ref):
    # xr/xi block : (NB, lwmax, M)  -- per-sample spectral slabs, M = nd*nh lanes
    # crT/ciT     : (nw, lwmax)     -- ortho irfft over w as a real-linear map
    # frT/fiT     : (M, M)          -- transposed kron(Wd, Wh) inverse DFT
    # o block     : (NB, nw, M)     -- lane-dense output slab
    nb = xr_ref.shape[0]
    crT = crT_ref[...]
    ciT = ciT_ref[...]

    # Stage 1 (cheap): irfft map over w, per sample; rows ordered (n, w).
    yr_parts = []
    yi_parts = []
    for n in range(nb):                      # static unrolled loop, NB is small
        xr_n = xr_ref[n]                     # (lwmax, M)
        xi_n = xi_ref[n]
        yr_parts.append(jnp.dot(crT, xr_n, preferred_element_type=jnp.float32)
                        + jnp.dot(ciT, xi_n, preferred_element_type=jnp.float32))
        yi_parts.append(jnp.dot(ciT, xr_n, preferred_element_type=jnp.float32)
                        - jnp.dot(crT, xi_n, preferred_element_type=jnp.float32))
    wdt = frT_ref.dtype
    yr = jnp.concatenate(yr_parts, axis=0).astype(wdt)   # (NB*nw, M)
    yi = jnp.concatenate(yi_parts, axis=0).astype(wdt)

    # Stage 2 (MXU-heavy): inverse DFT over (d, h).  Batch folded into the rows
    # (NB*nw), N = M lanes (lane-dense); only two big matmuls (reassociation).
    out = (jnp.dot(yr, frT_ref[...], preferred_element_type=jnp.float32)
           + jnp.dot(yi, fiT_ref[...], preferred_element_type=jnp.float32))
    o_ref[...] = out.reshape(o_ref.shape)    # free leading-dim split


def _pick_batch_tile(g, nw, lwmax, m, itemsize=4, vmem_budget=8 * 2**20):
    """Largest divisor of g whose double-buffered in/out blocks fit the budget."""
    best = 1
    for nb in range(1, g + 1):
        if g % nb:
            continue
        block_bytes = (2 * nb * lwmax * m + nb * nw * m) * itemsize * 2
        if block_bytes <= vmem_budget and nb * nw <= 4096:
            best = nb
    return best


def distributed_inverse_real_fft3(x_real, x_imag, nd, nh, nw,
                                  ldmax=None, lhmax=None, lwmax=None,
                                  batch_tile=None, use_bfloat16=False):
    """Single-rank DistributedInverseRealFFT3.forward."""
    assert x_real.ndim == 5 and x_imag.ndim == 5
    B, C, d, h, w = x_real.shape

    ldmax = min(ldmax or nd, nd)
    lhmax = min(lhmax or nh, nh)
    lwmax = min(lwmax or nw // 2 + 1, nw // 2 + 1)
    # full-mode case (module defaults): slicing / zero-pad reordering is a no-op.
    assert d == ldmax == nd and h == lhmax == nh and w == lwmax
    # TODO(synk): distributed_transpose_h/_w collectives (comm_size > 1) and the
    # truncated-mode (lhmax < nh, ldmax < nd) zero-pad reordering branches are
    # not implemented in this single-rank kernel.

    crT, ciT, frT, fiT = _build_dft_matrices(nd, nh, nw, lwmax)
    cdt = jnp.bfloat16 if use_bfloat16 else jnp.float32   # v6e/v7x: bf16 weights
    crT, ciT, frT, fiT = (jnp.asarray(a, cdt) for a in (crT, ciT, frT, fiT))

    M = nd * nh
    G = B * C
    NB = batch_tile or _pick_batch_tile(G, nw, lwmax, M)
    assert G % NB == 0

    # Wrapper-side layout plumbing: lane-dense input slabs (G, lwmax, M) with
    # the M = nd*nh axis on the lanes (last dim), batch flattened to one axis.
    xr_t = jnp.transpose(x_real, (0, 1, 4, 2, 3)).reshape(G, lwmax, M).astype(cdt)
    xi_t = jnp.transpose(x_imag, (0, 1, 4, 2, 3)).reshape(G, lwmax, M).astype(cdt)

    flops = 2 * G * nw * M * (4 * lwmax + 2 * M)
    bytes_accessed = 4 * (2 * G * lwmax * M + G * nw * M + 2 * nw * lwmax + 2 * M * M)
    block_bytes = 4 * NB * M * (2 * lwmax + nw) * 2 + 4 * 2 * (nw * lwmax + M * M) * 2
    vmem_limit = int(min(64 * 2**20, max(16 * 2**20, 4 * block_bytes)))

    def _call(single_buffer_weights):
        # Invariant weights need no double buffer (constant index_map); this is
        # the v7x VMEM-budget request from the review.  Falls back cleanly below.
        w_kw = dict(pipeline_mode=pl.Buffered(1)) if single_buffer_weights else {}
        in_specs = [
            pl.BlockSpec((NB, lwmax, M), lambda g: (g, 0, 0)),
            pl.BlockSpec((NB, lwmax, M), lambda g: (g, 0, 0)),
            pl.BlockSpec((nw, lwmax), lambda g: (0, 0), **w_kw),
            pl.BlockSpec((nw, lwmax), lambda g: (0, 0), **w_kw),
            pl.BlockSpec((M, M), lambda g: (0, 0), **w_kw),
            pl.BlockSpec((M, M), lambda g: (0, 0), **w_kw),
        ]
        return pl.pallas_call(
            _ifft3_kernel,
            out_shape=jax.ShapeDtypeStruct((G, nw, M), jnp.float32),
            grid_spec=pltpu.PrefetchScalarGridSpec(
                num_scalar_prefetch=0,
                grid=(G // NB,),
                in_specs=in_specs,
                out_specs=pl.BlockSpec((NB, nw, M), lambda g: (g, 0, 0)),
            ),
            compiler_params=pltpu.CompilerParams(
                dimension_semantics=("parallel",),
                vmem_limit_bytes=vmem_limit),
            cost_estimate=pl.CostEstimate(
                flops=flops, transcendentals=0, bytes_accessed=bytes_accessed),
        )(xr_t, xi_t, crT, ciT, frT, fiT)

    try:
        out = _call(True)
    except Exception:
        # pipeline_mode=pl.Buffered(1) not accepted by this jax/Mosaic version;
        # default double-buffering of the (small) weights is harmless here.
        out = _call(False)

    # (G, nw, M) -> (B, C, nd, nh, nw)   (wrapper-side layout plumbing)
    return jnp.transpose(out.reshape(B, C, nw, nd, nh), (0, 1, 3, 4, 2))


if __name__ == "__main__":
    B, Cch = 2, 4
    nd, nh, nw = 8, 16, 16
    lwmax = nw // 2 + 1

    key = jax.random.PRNGKey(0)
    kr, ki = jax.random.split(key)
    x_real = jax.random.normal(kr, (B, Cch, nd, nh, lwmax), jnp.float32)
    x_imag = jax.random.normal(ki, (B, Cch, nd, nh, lwmax), jnp.float32)

    out = distributed_inverse_real_fft3(x_real, x_imag, nd, nh, nw)
    out = jax.block_until_ready(out)
    assert out.shape == (B, Cch, nd, nh, nw)
    assert out.dtype == jnp.float32

    # Reference: matches torch.fft.ifft2(norm='ortho') + torch.fft.irfft(norm='ortho')
    xc = np.asarray(x_real, np.float64) + 1j * np.asarray(x_imag, np.float64)
    xf = np.fft.ifft2(xc, s=(nd, nh), axes=(2, 3), norm="ortho")
    ref = np.fft.irfft(xf[..., :lwmax], n=nw, axis=-1, norm="ortho")
    np.testing.assert_allclose(np.asarray(out), ref, rtol=1e-3, atol=5e-4)

    print("KERNEL_OK")
</pallas_src>

<mosaic_0001>
module attributes {stable_mosaic.version = 11 : i64} {
  func.func @_ifft3_kernel(%arg0: i32, %arg1: memref<8x9x128xf32, #tpu.memory_space<vmem>>, %arg2: memref<8x9x128xf32, #tpu.memory_space<vmem>>, %arg3: memref<16x9xf32, #tpu.memory_space<vmem>>, %arg4: memref<16x9xf32, #tpu.memory_space<vmem>>, %arg5: memref<128x128xf32, #tpu.memory_space<vmem>>, %arg6: memref<128x128xf32, #tpu.memory_space<vmem>>, %arg7: memref<8x16x128xf32, #tpu.memory_space<vmem>>) attributes {dimension_semantics = [#tpu.dimension_semantics<parallel>], iteration_bounds = array<i64: 1>, scalar_prefetch = 0 : i64, scratch_operands = 0 : i64, tpu.core_type = #tpu.core_type<tc>, window_params = [{transform_indices = @transform_0, window_bounds = array<i64: 8, 9, 128>}, {transform_indices = @transform_1, window_bounds = array<i64: 8, 9, 128>}, {pipeline_mode = #tpu.pipeline_mode<synchronous>, transform_indices = @transform_2, window_bounds = array<i64: 16, 9>}, {pipeline_mode = #tpu.pipeline_mode<synchronous>, transform_indices = @transform_3, window_bounds = array<i64: 16, 9>}, {pipeline_mode = #tpu.pipeline_mode<synchronous>, transform_indices = @transform_4, window_bounds = array<i64: 128, 128>}, {pipeline_mode = #tpu.pipeline_mode<synchronous>, transform_indices = @transform_5, window_bounds = array<i64: 128, 128>}, {transform_indices = @transform_6, window_bounds = array<i64: 8, 16, 128>}]} {
    %c0 = arith.constant 0 : index
    %c0_0 = arith.constant 0 : index
    %0 = vector.load %arg3[%c0, %c0_0] : memref<16x9xf32, #tpu.memory_space<vmem>>, vector<16x9xf32>
    %c0_1 = arith.constant 0 : index
    %c0_2 = arith.constant 0 : index
    %1 = vector.load %arg4[%c0_1, %c0_2] : memref<16x9xf32, #tpu.memory_space<vmem>>, vector<16x9xf32>
    %c0_3 = arith.constant 0 : index
    %c0_4 = arith.constant 0 : index
    %c0_5 = arith.constant 0 : index
    %2 = vector.load %arg1[%c0_3, %c0_4, %c0_5] : memref<8x9x128xf32, #tpu.memory_space<vmem>>, vector<1x9x128xf32>
    %3 = vector.shape_cast %2 : vector<1x9x128xf32> to vector<9x128xf32>
    %c0_6 = arith.constant 0 : index
    %c0_7 = arith.constant 0 : index
    %c0_8 = arith.constant 0 : index
    %4 = vector.load %arg2[%c0_6, %c0_7, %c0_8] : memref<8x9x128xf32, #tpu.memory_space<vmem>>, vector<1x9x128xf32>
    %5 = vector.shape_cast %4 : vector<1x9x128xf32> to vector<9x128xf32>
    %cst = arith.constant dense<0.000000e+00> : vector<16x128xf32>
    %6 = tpu.matmul %0, %3, %cst {dimension_numbers = #tpu.dot_dimension_numbers<[1], [0], [0], [1], [0, 0, 1, 1], [], []>} : vector<16x9xf32>, vector<9x128xf32>, vector<16x128xf32> -> vector<16x128xf32>
    %cst_9 = arith.constant dense<0.000000e+00> : vector<16x128xf32>
    %7 = tpu.matmul %1, %5, %cst_9 {dimension_numbers = #tpu.dot_dimension_numbers<[1], [0], [0], [1], [0, 0, 1, 1], [], []>} : vector<16x9xf32>, vector<9x128xf32>, vector<16x128xf32> -> vector<16x128xf32>
    %8 = arith.addf %6, %7 : vector<16x128xf32>
    %cst_10 = arith.constant dense<0.000000e+00> : vector<16x128xf32>
    %9 = tpu.matmul %1, %3, %cst_10 {dimension_numbers = #tpu.dot_dimension_numbers<[1], [0], [0], [1], [0, 0, 1, 1], [], []>} : vector<16x9xf32>, vector<9x128xf32>, vector<16x128xf32> -> vector<16x128xf32>
    %cst_11 = arith.constant dense<0.000000e+00> : vector<16x128xf32>
    %10 = tpu.matmul %0, %5, %cst_11 {dimension_numbers = #tpu.dot_dimension_numbers<[1], [0], [0], [1], [0, 0, 1, 1], [], []>} : vector<16x9xf32>, vector<9x128xf32>, vector<16x128xf32> -> vector<16x128xf32>
    %11 = arith.subf %9, %10 : vector<16x128xf32>
    %c1 = arith.constant 1 : index
    %c0_12 = arith.constant 0 : index
    %c0_13 = arith.constant 0 : index
    %12 = vector.load %arg1[%c1, %c0_12, %c0_13] : memref<8x9x128xf32, #tpu.memory_space<vmem>>, vector<1x9x128xf32>
    %13 = vector.shape_cast %12 : vector<1x9x128xf32> to vector<9x128xf32>
    %c1_14 = arith.constant 1 : index
    %c0_15 = arith.constant 0 : index
    %c0_16 = arith.constant 0 : index
    %14 = vector.load %arg2[%c1_14, %c0_15, %c0_16] : memref<8x9x128xf32, #tpu.memory_space<vmem>>, vector<1x9x128xf32>
    %15 = vector.shape_cast %14 : vector<1x9x128xf32> to vector<9x128xf32>
    %cst_17 = arith.constant dense<0.000000e+00> : vector<16x128xf32>
    %16 = tpu.matmul %0, %13, %cst_17 {dimension_numbers = #tpu.dot_dimension_numbers<[1], [0], [0], [1], [0, 0, 1, 1], [], []>} : vector<16x9xf32>, vector<9x128xf32>, vector<16x128xf32> -> vector<16x128xf32>
    %cst_18 = arith.constant dense<0.000000e+00> : vector<16x128xf32>
    %17 = tpu.matmul %1, %15, %cst_18 {dimension_numbers = #tpu.dot_dimension_numbers<[1], [0], [0], [1], [0, 0, 1, 1], [], []>} : vector<16x9xf32>, vector<9x128xf32>, vector<16x128xf32> -> vector<16x128xf32>
    %18 = arith.addf %16, %17 : vector<16x128xf32>
    %cst_19 = arith.constant dense<0.000000e+00> : vector<16x128xf32>
    %19 = tpu.matmul %1, %13, %cst_19 {dimension_numbers = #tpu.dot_dimension_numbers<[1], [0], [0], [1], [0, 0, 1, 1], [], []>} : vector<16x9xf32>, vector<9x128xf32>, vector<16x128xf32> -> vector<16x128xf32>
    %cst_20 = arith.constant dense<0.000000e+00> : vector<16x128xf32>
    %20 = tpu.matmul %0, %15, %cst_20 {dimension_numbers = #tpu.dot_dimension_numbers<[1], [0], [0], [1], [0, 0, 1, 1], [], []>} : vector<16x9xf32>, vector<9x128xf32>, vector<16x128xf32> -> vector<16x128xf32>
    %21 = arith.subf %19, %20 : vector<16x128xf32>
    %c2 = arith.constant 2 : index
    %c0_21 = arith.constant 0 : index
    %c0_22 = arith.constant 0 : index
    %22 = vector.load %arg1[%c2, %c0_21, %c0_22] : memref<8x9x128xf32, #tpu.memory_space<vmem>>, vector<1x9x128xf32>
    %23 = vector.shape_cast %22 : vector<1x9x128xf32> to vector<9x128xf32>
    %c2_23 = arith.constant 2 : index
    %c0_24 = arith.constant 0 : index
    %c0_25 = arith.constant 0 : index
    %24 = vector.load %arg2[%c2_23, %c0_24, %c0_25] : memref<8x9x128xf32, #tpu.memory_space<vmem>>, vector<1x9x128xf32>
    %25 = vector.shape_cast %24 : vector<1x9x128xf32> to vector<9x128xf32>
    %cst_26 = arith.constant dense<0.000000e+00> : vector<16x128xf32>
    %26 = tpu.matmul %0, %23, %cst_26 {dimension_numbers = #tpu.dot_dimension_numbers<[1], [0], [0], [1], [0, 0, 1, 1], [], []>} : vector<16x9xf32>, vector<9x128xf32>, vector<16x128xf32> -> vector<16x128xf32>
    %cst_27 = arith.constant dense<0.000000e+00> : vector<16x128xf32>
    %27 = tpu.matmul %1, %25, %cst_27 {dimension_numbers = #tpu.dot_dimension_numbers<[1], [0], [0], [1], [0, 0, 1, 1], [], []>} : vector<16x9xf32>, vector<9x128xf32>, vector<16x128xf32> -> vector<16x128xf32>
    %28 = arith.addf %26, %27 : vector<16x128xf32>
    %cst_28 = arith.constant dense<0.000000e+00> : vector<16x128xf32>
    %29 = tpu.matmul %1, %23, %cst_28 {dimension_numbers = #tpu.dot_dimension_numbers<[1], [0], [0], [1], [0, 0, 1, 1], [], []>} : vector<16x9xf32>, vector<9x128xf32>, vector<16x128xf32> -> vector<16x128xf32>
    %cst_29 = arith.constant dense<0.000000e+00> : vector<16x128xf32>
    %30 = tpu.matmul %0, %25, %cst_29 {dimension_numbers = #tpu.dot_dimension_numbers<[1], [0], [0], [1], [0, 0, 1, 1], [], []>} : vector<16x9xf32>, vector<9x128xf32>, vector<16x128xf32> -> vector<16x128xf32>
    %31 = arith.subf %29, %30 : vector<16x128xf32>
    %c3 = arith.constant 3 : index
    %c0_30 = arith.constant 0 : index
    %c0_31 = arith.constant 0 : index
    %32 = vector.load %arg1[%c3, %c0_30, %c0_31] : memref<8x9x128xf32, #tpu.memory_space<vmem>>, vector<1x9x128xf32>
    %33 = vector.shape_cast %32 : vector<1x9x128xf32> to vector<9x128xf32>
    %c3_32 = arith.constant 3 : index
    %c0_33 = arith.constant 0 : index
    %c0_34 = arith.constant 0 : index
    %34 = vector.load %arg2[%c3_32, %c0_33, %c0_34] : memref<8x9x128xf32, #tpu.memory_space<vmem>>, vector<1x9x128xf32>
    %35 = vector.shape_cast %34 : vector<1x9x128xf32> to vector<9x128xf32>
    %cst_35 = arith.constant dense<0.000000e+00> : vector<16x128xf32>
    %36 = tpu.matmul %0, %33, %cst_35 {dimension_numbers = #tpu.dot_dimension_numbers<[1], [0], [0], [1], [0, 0, 1, 1], [], []>} : vector<16x9xf32>, vector<9x128xf32>, vector<16x128xf32> -> vector<16x128xf32>
    %cst_36 = arith.constant dense<0.000000e+00> : vector<16x128xf32>
    %37 = tpu.matmul %1, %35, %cst_36 {dimension_numbers = #tpu.dot_dimension_numbers<[1], [0], [0], [1], [0, 0, 1, 1], [], []>} : vector<16x9xf32>, vector<9x128xf32>, vector<16x128xf32> -> vector<16x128xf32>
    %38 = arith.addf %36, %37 : vector<16x128xf32>
    %cst_37 = arith.constant dense<0.000000e+00> : vector<16x128xf32>
    %39 = tpu.matmul %1, %33, %cst_37 {dimension_numbers = #tpu.dot_dimension_numbers<[1], [0], [0], [1], [0, 0, 1, 1], [], []>} : vector<16x9xf32>, vector<9x128xf32>, vector<16x128xf32> -> vector<16x128xf32>
    %cst_38 = arith.constant dense<0.000000e+00> : vector<16x128xf32>
    %40 = tpu.matmul %0, %35, %cst_38 {dimension_numbers = #tpu.dot_dimension_numbers<[1], [0], [0], [1], [0, 0, 1, 1], [], []>} : vector<16x9xf32>, vector<9x128xf32>, vector<16x128xf32> -> vector<16x128xf32>
    %41 = arith.subf %39, %40 : vector<16x128xf32>
    %c4 = arith.constant 4 : index
    %c0_39 = arith.constant 0 : index
    %c0_40 = arith.constant 0 : index
    %42 = vector.load %arg1[%c4, %c0_39, %c0_40] : memref<8x9x128xf32, #tpu.memory_space<vmem>>, vector<1x9x128xf32>
    %43 = vector.shape_cast %42 : vector<1x9x128xf32> to vector<9x128xf32>
    %c4_41 = arith.constant 4 : index
    %c0_42 = arith.constant 0 : index
    %c0_43 = arith.constant 0 : index
    %44 = vector.load %arg2[%c4_41, %c0_42, %c0_43] : memref<8x9x128xf32, #tpu.memory_space<vmem>>, vector<1x9x128xf32>
    %45 = vector.shape_cast %44 : vector<1x9x128xf32> to vector<9x128xf32>
    %cst_44 = arith.constant dense<0.000000e+00> : vector<16x128xf32>
    %46 = tpu.matmul %0, %43, %cst_44 {dimension_numbers = #tpu.dot_dimension_numbers<[1], [0], [0], [1], [0, 0, 1, 1], [], []>} : vector<16x9xf32>, vector<9x128xf32>, vector<16x128xf32> -> vector<16x128xf32>
    %cst_45 = arith.constant dense<0.000000e+00> : vector<16x128xf32>
    %47 = tpu.matmul %1, %45, %cst_45 {dimension_numbers = #tpu.dot_dimension_numbers<[1], [0], [0], [1], [0, 0, 1, 1], [], []>} : vector<16x9xf32>, vector<9x128xf32>, vector<16x128xf32> -> vector<16x128xf32>
    %48 = arith.addf %46, %47 : vector<16x128xf32>
    %cst_46 = arith.constant dense<0.000000e+00> : vector<16x128xf32>
    %49 = tpu.matmul %1, %43, %cst_46 {dimension_numbers = #tpu.dot_dimension_numbers<[1], [0], [0], [1], [0, 0, 1, 1], [], []>} : vector<16x9xf32>, vector<9x128xf32>, vector<16x128xf32> -> vector<16x128xf32>
    %cst_47 = arith.constant dense<0.000000e+00> : vector<16x128xf32>
    %50 = tpu.matmul %0, %45, %cst_47 {dimension_numbers = #tpu.dot_dimension_numbers<[1], [0], [0], [1], [0, 0, 1, 1], [], []>} : vector<16x9xf32>, vector<9x128xf32>, vector<16x128xf32> -> vector<16x128xf32>
    %51 = arith.subf %49, %50 : vector<16x128xf32>
    %c5 = arith.constant 5 : index
    %c0_48 = arith.constant 0 : index
    %c0_49 = arith.constant 0 : index
    %52 = vector.load %arg1[%c5, %c0_48, %c0_49] : memref<8x9x128xf32, #tpu.memory_space<vmem>>, vector<1x9x128xf32>
    %53 = vector.shape_cast %52 : vector<1x9x128xf32> to vector<9x128xf32>
    %c5_50 = arith.constant 5 : index
    %c0_51 = arith.constant 0 : index
    %c0_52 = arith.constant 0 : index
    %54 = vector.load %arg2[%c5_50, %c0_51, %c0_52] : memref<8x9x128xf32, #tpu.memory_space<vmem>>, vector<1x9x128xf32>
    %55 = vector.shape_cast %54 : vector<1x9x128xf32> to vector<9x128xf32>
    %cst_53 = arith.constant dense<0.000000e+00> : vector<16x128xf32>
    %56 = tpu.matmul %0, %53, %cst_53 {dimension_numbers = #tpu.dot_dimension_numbers<[1], [0], [0], [1], [0, 0, 1, 1], [], []>} : vector<16x9xf32>, vector<9x128xf32>, vector<16x128xf32> -> vector<16x128xf32>
    %cst_54 = arith.constant dense<0.000000e+00> : vector<16x128xf32>
    %57 = tpu.matmul %1, %55, %cst_54 {dimension_numbers = #tpu.dot_dimension_numbers<[1], [0], [0], [1], [0, 0, 1, 1], [], []>} : vector<16x9xf32>, vector<9x128xf32>, vector<16x128xf32> -> vector<16x128xf32>
    %58 = arith.addf %56, %57 : vector<16x128xf32>
    %cst_55 = arith.constant dense<0.000000e+00> : vector<16x128xf32>
    %59 = tpu.matmul %1, %53, %cst_55 {dimension_numbers = #tpu.dot_dimension_numbers<[1], [0], [0], [1], [0, 0, 1, 1], [], []>} : vector<16x9xf32>, vector<9x128xf32>, vector<16x128xf32> -> vector<16x128xf32>
    %cst_56 = arith.constant dense<0.000000e+00> : vector<16x128xf32>
    %60 = tpu.matmul %0, %55, %cst_56 {dimension_numbers = #tpu.dot_dimension_numbers<[1], [0], [0], [1], [0, 0, 1, 1], [], []>} : vector<16x9xf32>, vector<9x128xf32>, vector<16x128xf32> -> vector<16x128xf32>
    %61 = arith.subf %59, %60 : vector<16x128xf32>
    %c6 = arith.constant 6 : index
    %c0_57 = arith.constant 0 : index
    %c0_58 = arith.constant 0 : index
    %62 = vector.load %arg1[%c6, %c0_57, %c0_58] : memref<8x9x128xf32, #tpu.memory_space<vmem>>, vector<1x9x128xf32>
    %63 = vector.shape_cast %62 : vector<1x9x128xf32> to vector<9x128xf32>
    %c6_59 = arith.constant 6 : index
    %c0_60 = arith.constant 0 : index
    %c0_61 = arith.constant 0 : index
    %64 = vector.load %arg2[%c6_59, %c0_60, %c0_61] : memref<8x9x128xf32, #tpu.memory_space<vmem>>, vector<1x9x128xf32>
    %65 = vector.shape_cast %64 : vector<1x9x128xf32> to vector<9x128xf32>
    %cst_62 = arith.constant dense<0.000000e+00> : vector<16x128xf32>
    %66 = tpu.matmul %0, %63, %cst_62 {dimension_numbers = #tpu.dot_dimension_numbers<[1], [0], [0], [1], [0, 0, 1, 1], [], []>} : vector<16x9xf32>, vector<9x128xf32>, vector<16x128xf32> -> vector<16x128xf32>
    %cst_63 = arith.constant dense<0.000000e+00> : vector<16x128xf32>
    %67 = tpu.matmul %1, %65, %cst_63 {dimension_numbers = #tpu.dot_dimension_numbers<[1], [0], [0], [1], [0, 0, 1, 1], [], []>} : vector<16x9xf32>, vector<9x128xf32>, vector<16x128xf32> -> vector<16x128xf32>
    %68 = arith.addf %66, %67 : vector<16x128xf32>
    %cst_64 = arith.constant dense<0.000000e+00> : vector<16x128xf32>
    %69 = tpu.matmul %1, %63, %cst_64 {dimension_numbers = #tpu.dot_dimension_numbers<[1], [0], [0], [1], [0, 0, 1, 1], [], []>} : vector<16x9xf32>, vector<9x128xf32>, vector<16x128xf32> -> vector<16x128xf32>
    %cst_65 = arith.constant dense<0.000000e+00> : vector<16x128xf32>
    %70 = tpu.matmul %0, %65, %cst_65 {dimension_numbers = #tpu.dot_dimension_numbers<[1], [0], [0], [1], [0, 0, 1, 1], [], []>} : vector<16x9xf32>, vector<9x128xf32>, vector<16x128xf32> -> vector<16x128xf32>
    %71 = arith.subf %69, %70 : vector<16x128xf32>
    %c7 = arith.constant 7 : index
    %c0_66 = arith.constant 0 : index
    %c0_67 = arith.constant 0 : index
    %72 = vector.load %arg1[%c7, %c0_66, %c0_67] : memref<8x9x128xf32, #tpu.memory_space<vmem>>, vector<1x9x128xf32>
    %73 = vector.shape_cast %72 : vector<1x9x128xf32> to vector<9x128xf32>
    %c7_68 = arith.constant 7 : index
    %c0_69 = arith.constant 0 : index
    %c0_70 = arith.constant 0 : index
    %74 = vector.load %arg2[%c7_68, %c0_69, %c0_70] : memref<8x9x128xf32, #tpu.memory_space<vmem>>, vector<1x9x128xf32>
    %75 = vector.shape_cast %74 : vector<1x9x128xf32> to vector<9x128xf32>
    %cst_71 = arith.constant dense<0.000000e+00> : vector<16x128xf32>
    %76 = tpu.matmul %0, %73, %cst_71 {dimension_numbers = #tpu.dot_dimension_numbers<[1], [0], [0], [1], [0, 0, 1, 1], [], []>} : vector<16x9xf32>, vector<9x128xf32>, vector<16x128xf32> -> vector<16x128xf32>
    %cst_72 = arith.constant dense<0.000000e+00> : vector<16x128xf32>
    %77 = tpu.matmul %1, %75, %cst_72 {dimension_numbers = #tpu.dot_dimension_numbers<[1], [0], [0], [1], [0, 0, 1, 1], [], []>} : vector<16x9xf32>, vector<9x128xf32>, vector<16x128xf32> -> vector<16x128xf32>
    %78 = arith.addf %76, %77 : vector<16x128xf32>
    %cst_73 = arith.constant dense<0.000000e+00> : vector<16x128xf32>
    %79 = tpu.matmul %1, %73, %cst_73 {dimension_numbers = #tpu.dot_dimension_numbers<[1], [0], [0], [1], [0, 0, 1, 1], [], []>} : vector<16x9xf32>, vector<9x128xf32>, vector<16x128xf32> -> vector<16x128xf32>
    %cst_74 = arith.constant dense<0.000000e+00> : vector<16x128xf32>
    %80 = tpu.matmul %0, %75, %cst_74 {dimension_numbers = #tpu.dot_dimension_numbers<[1], [0], [0], [1], [0, 0, 1, 1], [], []>} : vector<16x9xf32>, vector<9x128xf32>, vector<16x128xf32> -> vector<16x128xf32>
    %81 = arith.subf %79, %80 : vector<16x128xf32>
    %82 = tpu.concatenate %8, %18, %28, %38, %48, %58, %68, %78 in 0 : vector<16x128xf32>, vector<16x128xf32>, vector<16x128xf32>, vector<16x128xf32>, vector<16x128xf32>, vector<16x128xf32>, vector<16x128xf32>, vector<16x128xf32> -> vector<128x128xf32>
    %83 = tpu.concatenate %11, %21, %31, %41, %51, %61, %71, %81 in 0 : vector<16x128xf32>, vector<16x128xf32>, vector<16x128xf32>, vector<16x128xf32>, vector<16x128xf32>, vector<16x128xf32>, vector<16x128xf32>, vector<16x128xf32> -> vector<128x128xf32>
    %c0_75 = arith.constant 0 : index
    %c0_76 = arith.constant 0 : index
    %84 = vector.load %arg5[%c0_75, %c0_76] : memref<128x128xf32, #tpu.memory_space<vmem>>, vector<128x128xf32>
    %cst_77 = arith.constant dense<0.000000e+00> : vector<128x128xf32>
    %85 = tpu.matmul %82, %84, %cst_77 {dimension_numbers = #tpu.dot_dimension_numbers<[1], [0], [0], [1], [0, 0, 1, 1], [], []>} : vector<128x128xf32>, vector<128x128xf32>, vector<128x128xf32> -> vector<128x128xf32>
    %c0_78 = arith.constant 0 : index
    %c0_79 = arith.constant 0 : index
    %86 = vector.load %arg6[%c0_78, %c0_79] : memref<128x128xf32, #tpu.memory_space<vmem>>, vector<128x128xf32>
    %cst_80 = arith.constant dense<0.000000e+00> : vector<128x128xf32>
    %87 = tpu.matmul %83, %86, %cst_80 {dimension_numbers = #tpu.dot_dimension_numbers<[1], [0], [0], [1], [0, 0, 1, 1], [], []>} : vector<128x128xf32>, vector<128x128xf32>, vector<128x128xf32> -> vector<128x128xf32>
    %88 = arith.addf %85, %87 : vector<128x128xf32>
    %89 = vector.shape_cast %88 : vector<128x128xf32> to vector<8x16x128xf32>
    %c0_81 = arith.constant 0 : index
    %c0_82 = arith.constant 0 : index
    %c0_83 = arith.constant 0 : index
    %90 = vector.load %arg7[%c0_81, %c0_82, %c0_83] : memref<8x16x128xf32, #tpu.memory_space<vmem>>, vector<8x16x128xf32>
    tpu.vector_store %arg7[%c0_81, %c0_82, %c0_83], %89 {strides = array<i32>} : memref<8x16x128xf32, #tpu.memory_space<vmem>>, vector<8x16x128xf32>,
    return
  }
  func.func @transform_0(%arg0: i32) -> (i32, i32, i32) {
    %c0_i32 = arith.constant 0 : i32
    %c0_i32_0 = arith.constant 0 : i32
    %c0_i32_1 = arith.constant 0 : i32
    return %arg0, %c0_i32, %c0_i32_0 : i32, i32, i32
  }
  func.func @transform_1(%arg0: i32) -> (i32, i32, i32) {
    %c0_i32 = arith.constant 0 : i32
    %c0_i32_0 = arith.constant 0 : i32
    %c0_i32_1 = arith.constant 0 : i32
    return %arg0, %c0_i32, %c0_i32_0 : i32, i32, i32
  }
  func.func @transform_2(%arg0: i32) -> (i32, i32) {
    %c0_i32 = arith.constant 0 : i32
    %c0_i32_0 = arith.constant 0 : i32
    %c0_i32_1 = arith.constant 0 : i32
    return %c0_i32, %c0_i32_0 : i32, i32
  }
  func.func @transform_3(%arg0: i32) -> (i32, i32) {
    %c0_i32 = arith.constant 0 : i32
    %c0_i32_0 = arith.constant 0 : i32
    %c0_i32_1 = arith.constant 0 : i32
    return %c0_i32, %c0_i32_0 : i32, i32
  }
  func.func @transform_4(%arg0: i32) -> (i32, i32) {
    %c0_i32 = arith.constant 0 : i32
    %c0_i32_0 = arith.constant 0 : i32
    %c0_i32_1 = arith.constant 0 : i32
    return %c0_i32, %c0_i32_0 : i32, i32
  }
  func.func @transform_5(%arg0: i32) -> (i32, i32) {
    %c0_i32 = arith.constant 0 : i32
    %c0_i32_0 = arith.constant 0 : i32
    %c0_i32_1 = arith.constant 0 : i32
    return %c0_i32, %c0_i32_0 : i32, i32
  }
  func.func @transform_6(%arg0: i32) -> (i32, i32, i32) {
    %c0_i32 = arith.constant 0 : i32
    %c0_i32_0 = arith.constant 0 : i32
    %c0_i32_1 = arith.constant 0 : i32
    return %arg0, %c0_i32, %c0_i32_0 : i32, i32, i32
  }
}

module attributes {stable_mosaic.version = 11 : i64} {
  func.func @_ifft3_kernel(%arg0: i32, %arg1: memref<8x9x128xf32, #tpu.memory_space<vmem>>, %arg2: memref<8x9x128xf32, #tpu.memory_space<vmem>>, %arg3: memref<16x9xf32, #tpu.memory_space<vmem>>, %arg4: memref<16x9xf32, #tpu.memory_space<vmem>>, %arg5: memref<128x128xf32, #tpu.memory_space<vmem>>, %arg6: memref<128x128xf32, #tpu.memory_space<vmem>>, %arg7: memref<8x16x128xf32, #tpu.memory_space<vmem>>) attributes {dimension_semantics = [#tpu.dimension_semantics<parallel>], iteration_bounds = array<i64: 1>, scalar_prefetch = 0 : i64, scratch_operands = 0 : i64, tpu.core_type = #tpu.core_type<tc>, window_params = [{transform_indices = @transform_0, window_bounds = array<i64: 8, 9, 128>}, {transform_indices = @transform_1, window_bounds = array<i64: 8, 9, 128>}, {pipeline_mode = #tpu.pipeline_mode<synchronous>, transform_indices = @transform_2, window_bounds = array<i64: 16, 9>}, {pipeline_mode = #tpu.pipeline_mode<synchronous>, transform_indices = @transform_3, window_bounds = array<i64: 16, 9>}, {pipeline_mode = #tpu.pipeline_mode<synchronous>, transform_indices = @transform_4, window_bounds = array<i64: 128, 128>}, {pipeline_mode = #tpu.pipeline_mode<synchronous>, transform_indices = @transform_5, window_bounds = array<i64: 128, 128>}, {transform_indices = @transform_6, window_bounds = array<i64: 8, 16, 128>}]} {
    %c0 = arith.constant 0 : index
    %c0_0 = arith.constant 0 : index
    %0 = vector.load %arg3[%c0, %c0_0] : memref<16x9xf32, #tpu.memory_space<vmem>>, vector<16x9xf32>
    %c0_1 = arith.constant 0 : index
    %c0_2 = arith.constant 0 : index
    %1 = vector.load %arg4[%c0_1, %c0_2] : memref<16x9xf32, #tpu.memory_space<vmem>>, vector<16x9xf32>
    %c0_3 = arith.constant 0 : index
    %c0_4 = arith.constant 0 : index
    %c0_5 = arith.constant 0 : index
    %2 = vector.load %arg1[%c0_3, %c0_4, %c0_5] : memref<8x9x128xf32, #tpu.memory_space<vmem>>, vector<1x9x128xf32>
    %3 = vector.shape_cast %2 : vector<1x9x128xf32> to vector<9x128xf32>
    %c0_6 = arith.constant 0 : index
    %c0_7 = arith.constant 0 : index
    %c0_8 = arith.constant 0 : index
    %4 = vector.load %arg2[%c0_6, %c0_7, %c0_8] : memref<8x9x128xf32, #tpu.memory_space<vmem>>, vector<1x9x128xf32>
    %5 = vector.shape_cast %4 : vector<1x9x128xf32> to vector<9x128xf32>
    %cst = arith.constant dense<0.000000e+00> : vector<16x128xf32>
    %6 = tpu.matmul %0, %3, %cst {dimension_numbers = #tpu.dot_dimension_numbers<[1], [0], [0], [1], [0, 0, 1, 1], [], []>} : vector<16x9xf32>, vector<9x128xf32>, vector<16x128xf32> -> vector<16x128xf32>
    %cst_9 = arith.constant dense<0.000000e+00> : vector<16x128xf32>
    %7 = tpu.matmul %1, %5, %cst_9 {dimension_numbers = #tpu.dot_dimension_numbers<[1], [0], [0], [1], [0, 0, 1, 1], [], []>} : vector<16x9xf32>, vector<9x128xf32>, vector<16x128xf32> -> vector<16x128xf32>
    %8 = arith.addf %6, %7 : vector<16x128xf32>
    %cst_10 = arith.constant dense<0.000000e+00> : vector<16x128xf32>
    %9 = tpu.matmul %1, %3, %cst_10 {dimension_numbers = #tpu.dot_dimension_numbers<[1], [0], [0], [1], [0, 0, 1, 1], [], []>} : vector<16x9xf32>, vector<9x128xf32>, vector<16x128xf32> -> vector<16x128xf32>
    %cst_11 = arith.constant dense<0.000000e+00> : vector<16x128xf32>
    %10 = tpu.matmul %0, %5, %cst_11 {dimension_numbers = #tpu.dot_dimension_numbers<[1], [0], [0], [1], [0, 0, 1, 1], [], []>} : vector<16x9xf32>, vector<9x128xf32>, vector<16x128xf32> -> vector<16x128xf32>
    %11 = arith.subf %9, %10 : vector<16x128xf32>
    %c1 = arith.constant 1 : index
    %c0_12 = arith.constant 0 : index
    %c0_13 = arith.constant 0 : index
    %12 = vector.load %arg1[%c1, %c0_12, %c0_13] : memref<8x9x128xf32, #tpu.memory_space<vmem>>, vector<1x9x128xf32>
    %13 = vector.shape_cast %12 : vector<1x9x128xf32> to vector<9x128xf32>
    %c1_14 = arith.constant 1 : index
    %c0_15 = arith.constant 0 : index
    %c0_16 = arith.constant 0 : index
    %14 = vector.load %arg2[%c1_14, %c0_15, %c0_16] : memref<8x9x128xf32, #tpu.memory_space<vmem>>, vector<1x9x128xf32>
    %15 = vector.shape_cast %14 : vector<1x9x128xf32> to vector<9x128xf32>
    %cst_17 = arith.constant dense<0.000000e+00> : vector<16x128xf32>
    %16 = tpu.matmul %0, %13, %cst_17 {dimension_numbers = #tpu.dot_dimension_numbers<[1], [0], [0], [1], [0, 0, 1, 1], [], []>} : vector<16x9xf32>, vector<9x128xf32>, vector<16x128xf32> -> vector<16x128xf32>
    %cst_18 = arith.constant dense<0.000000e+00> : vector<16x128xf32>
    %17 = tpu.matmul %1, %15, %cst_18 {dimension_numbers = #tpu.dot_dimension_numbers<[1], [0], [0], [1], [0, 0, 1, 1], [], []>} : vector<16x9xf32>, vector<9x128xf32>, vector<16x128xf32> -> vector<16x128xf32>
    %18 = arith.addf %16, %17 : vector<16x128xf32>
    %cst_19 = arith.constant dense<0.000000e+00> : vector<16x128xf32>
    %19 = tpu.matmul %1, %13, %cst_19 {dimension_numbers = #tpu.dot_dimension_numbers<[1], [0], [0], [1], [0, 0, 1, 1], [], []>} : vector<16x9xf32>, vector<9x128xf32>, vector<16x128xf32> -> vector<16x128xf32>
    %cst_20 = arith.constant dense<0.000000e+00> : vector<16x128xf32>
    %20 = tpu.matmul %0, %15, %cst_20 {dimension_numbers = #tpu.dot_dimension_numbers<[1], [0], [0], [1], [0, 0, 1, 1], [], []>} : vector<16x9xf32>, vector<9x128xf32>, vector<16x128xf32> -> vector<16x128xf32>
    %21 = arith.subf %19, %20 : vector<16x128xf32>
    %c2 = arith.constant 2 : index
    %c0_21 = arith.constant 0 : index
    %c0_22 = arith.constant 0 : index
    %22 = vector.load %arg1[%c2, %c0_21, %c0_22] : memref<8x9x128xf32, #tpu.memory_space<vmem>>, vector<1x9x128xf32>
    %23 = vector.shape_cast %22 : vector<1x9x128xf32> to vector<9x128xf32>
    %c2_23 = arith.constant 2 : index
    %c0_24 = arith.constant 0 : index
    %c0_25 = arith.constant 0 : index
    %24 = vector.load %arg2[%c2_23, %c0_24, %c0_25] : memref<8x9x128xf32, #tpu.memory_space<vmem>>, vector<1x9x128xf32>
    %25 = vector.shape_cast %24 : vector<1x9x128xf32> to vector<9x128xf32>
    %cst_26 = arith.constant dense<0.000000e+00> : vector<16x128xf32>
    %26 = tpu.matmul %0, %23, %cst_26 {dimension_numbers = #tpu.dot_dimension_numbers<[1], [0], [0], [1], [0, 0, 1, 1], [], []>} : vector<16x9xf32>, vector<9x128xf32>, vector<16x128xf32> -> vector<16x128xf32>
    %cst_27 = arith.constant dense<0.000000e+00> : vector<16x128xf32>
    %27 = tpu.matmul %1, %25, %cst_27 {dimension_numbers = #tpu.dot_dimension_numbers<[1], [0], [0], [1], [0, 0, 1, 1], [], []>} : vector<16x9xf32>, vector<9x128xf32>, vector<16x128xf32> -> vector<16x128xf32>
    %28 = arith.addf %26, %27 : vector<16x128xf32>
    %cst_28 = arith.constant dense<0.000000e+00> : vector<16x128xf32>
    %29 = tpu.matmul %1, %23, %cst_28 {dimension_numbers = #tpu.dot_dimension_numbers<[1], [0], [0], [1], [0, 0, 1, 1], [], []>} : vector<16x9xf32>, vector<9x128xf32>, vector<16x128xf32> -> vector<16x128xf32>
    %cst_29 = arith.constant dense<0.000000e+00> : vector<16x128xf32>
    %30 = tpu.matmul %0, %25, %cst_29 {dimension_numbers = #tpu.dot_dimension_numbers<[1], [0], [0], [1], [0, 0, 1, 1], [], []>} : vector<16x9xf32>, vector<9x128xf32>, vector<16x128xf32> -> vector<16x128xf32>
    %31 = arith.subf %29, %30 : vector<16x128xf32>
    %c3 = arith.constant 3 : index
    %c0_30 = arith.constant 0 : index
    %c0_31 = arith.constant 0 : index
    %32 = vector.load %arg1[%c3, %c0_30, %c0_31] : memref<8x9x128xf32, #tpu.memory_space<vmem>>, vector<1x9x128xf32>
    %33 = vector.shape_cast %32 : vector<1x9x128xf32> to vector<9x128xf32>
    %c3_32 = arith.constant 3 : index
    %c0_33 = arith.constant 0 : index
    %c0_34 = arith.constant 0 : index
    %34 = vector.load %arg2[%c3_32, %c0_33, %c0_34] : memref<8x9x128xf32, #tpu.memory_space<vmem>>, vector<1x9x128xf32>
    %35 = vector.shape_cast %34 : vector<1x9x128xf32> to vector<9x128xf32>
    %cst_35 = arith.constant dense<0.000000e+00> : vector<16x128xf32>
    %36 = tpu.matmul %0, %33, %cst_35 {dimension_numbers = #tpu.dot_dimension_numbers<[1], [0], [0], [1], [0, 0, 1, 1], [], []>} : vector<16x9xf32>, vector<9x128xf32>, vector<16x128xf32> -> vector<16x128xf32>
    %cst_36 = arith.constant dense<0.000000e+00> : vector<16x128xf32>
    %37 = tpu.matmul %1, %35, %cst_36 {dimension_numbers = #tpu.dot_dimension_numbers<[1], [0], [0], [1], [0, 0, 1, 1], [], []>} : vector<16x9xf32>, vector<9x128xf32>, vector<16x128xf32> -> vector<16x128xf32>
    %38 = arith.addf %36, %37 : vector<16x128xf32>
    %cst_37 = arith.constant dense<0.000000e+00> : vector<16x128xf32>
    %39 = tpu.matmul %1, %33, %cst_37 {dimension_numbers = #tpu.dot_dimension_numbers<[1], [0], [0], [1], [0, 0, 1, 1], [], []>} : vector<16x9xf32>, vector<9x128xf32>, vector<16x128xf32> -> vector<16x128xf32>
    %cst_38 = arith.constant dense<0.000000e+00> : vector<16x128xf32>
    %40 = tpu.matmul %0, %35, %cst_38 {dimension_numbers = #tpu.dot_dimension_numbers<[1], [0], [0], [1], [0, 0, 1, 1], [], []>} : vector<16x9xf32>, vector<9x128xf32>, vector<16x128xf32> -> vector<16x128xf32>
    %41 = arith.subf %39, %40 : vector<16x128xf32>
    %c4 = arith.constant 4 : index
    %c0_39 = arith.constant 0 : index
    %c0_40 = arith.constant 0 : index
    %42 = vector.load %arg1[%c4, %c0_39, %c0_40] : memref<8x9x128xf32, #tpu.memory_space<vmem>>, vector<1x9x128xf32>
    %43 = vector.shape_cast %42 : vector<1x9x128xf32> to vector<9x128xf32>
    %c4_41 = arith.constant 4 : index
    %c0_42 = arith.constant 0 : index
    %c0_43 = arith.constant 0 : index
    %44 = vector.load %arg2[%c4_41, %c0_42, %c0_43] : memref<8x9x128xf32, #tpu.memory_space<vmem>>, vector<1x9x128xf32>
    %45 = vector.shape_cast %44 : vector<1x9x128xf32> to vector<9x128xf32>
    %cst_44 = arith.constant dense<0.000000e+00> : vector<16x128xf32>
    %46 = tpu.matmul %0, %43, %cst_44 {dimension_numbers = #tpu.dot_dimension_numbers<[1], [0], [0], [1], [0, 0, 1, 1], [], []>} : vector<16x9xf32>, vector<9x128xf32>, vector<16x128xf32> -> vector<16x128xf32>
    %cst_45 = arith.constant dense<0.000000e+00> : vector<16x128xf32>
    %47 = tpu.matmul %1, %45, %cst_45 {dimension_numbers = #tpu.dot_dimension_numbers<[1], [0], [0], [1], [0, 0, 1, 1], [], []>} : vector<16x9xf32>, vector<9x128xf32>, vector<16x128xf32> -> vector<16x128xf32>
    %48 = arith.addf %46, %47 : vector<16x128xf32>
    %cst_46 = arith.constant dense<0.000000e+00> : vector<16x128xf32>
    %49 = tpu.matmul %1, %43, %cst_46 {dimension_numbers = #tpu.dot_dimension_numbers<[1], [0], [0], [1], [0, 0, 1, 1], [], []>} : vector<16x9xf32>, vector<9x128xf32>, vector<16x128xf32> -> vector<16x128xf32>
    %cst_47 = arith.constant dense<0.000000e+00> : vector<16x128xf32>
    %50 = tpu.matmul %0, %45, %cst_47 {dimension_numbers = #tpu.dot_dimension_numbers<[1], [0], [0], [1], [0, 0, 1, 1], [], []>} : vector<16x9xf32>, vector<9x128xf32>, vector<16x128xf32> -> vector<16x128xf32>
    %51 = arith.subf %49, %50 : vector<16x128xf32>
    %c5 = arith.constant 5 : index
    %c0_48 = arith.constant 0 : index
    %c0_49 = arith.constant 0 : index
    %52 = vector.load %arg1[%c5, %c0_48, %c0_49] : memref<8x9x128xf32, #tpu.memory_space<vmem>>, vector<1x9x128xf32>
    %53 = vector.shape_cast %52 : vector<1x9x128xf32> to vector<9x128xf32>
    %c5_50 = arith.constant 5 : index
    %c0_51 = arith.constant 0 : index
    %c0_52 = arith.constant 0 : index
    %54 = vector.load %arg2[%c5_50, %c0_51, %c0_52] : memref<8x9x128xf32, #tpu.memory_space<vmem>>, vector<1x9x128xf32>
    %55 = vector.shape_cast %54 : vector<1x9x128xf32> to vector<9x128xf32>
    %cst_53 = arith.constant dense<0.000000e+00> : vector<16x128xf32>
    %56 = tpu.matmul %0, %53, %cst_53 {dimension_numbers = #tpu.dot_dimension_numbers<[1], [0], [0], [1], [0, 0, 1, 1], [], []>} : vector<16x9xf32>, vector<9x128xf32>, vector<16x128xf32> -> vector<16x128xf32>
    %cst_54 = arith.constant dense<0.000000e+00> : vector<16x128xf32>
    %57 = tpu.matmul %1, %55, %cst_54 {dimension_numbers = #tpu.dot_dimension_numbers<[1], [0], [0], [1], [0, 0, 1, 1], [], []>} : vector<16x9xf32>, vector<9x128xf32>, vector<16x128xf32> -> vector<16x128xf32>
    %58 = arith.addf %56, %57 : vector<16x128xf32>
    %cst_55 = arith.constant dense<0.000000e+00> : vector<16x128xf32>
    %59 = tpu.matmul %1, %53, %cst_55 {dimension_numbers = #tpu.dot_dimension_numbers<[1], [0], [0], [1], [0, 0, 1, 1], [], []>} : vector<16x9xf32>, vector<9x128xf32>, vector<16x128xf32> -> vector<16x128xf32>
    %cst_56 = arith.constant dense<0.000000e+00> : vector<16x128xf32>
    %60 = tpu.matmul %0, %55, %cst_56 {dimension_numbers = #tpu.dot_dimension_numbers<[1], [0], [0], [1], [0, 0, 1, 1], [], []>} : vector<16x9xf32>, vector<9x128xf32>, vector<16x128xf32> -> vector<16x128xf32>
    %61 = arith.subf %59, %60 : vector<16x128xf32>
    %c6 = arith.constant 6 : index
    %c0_57 = arith.constant 0 : index
    %c0_58 = arith.constant 0 : index
    %62 = vector.load %arg1[%c6, %c0_57, %c0_58] : memref<8x9x128xf32, #tpu.memory_space<vmem>>, vector<1x9x128xf32>
    %63 = vector.shape_cast %62 : vector<1x9x128xf32> to vector<9x128xf32>
    %c6_59 = arith.constant 6 : index
    %c0_60 = arith.constant 0 : index
    %c0_61 = arith.constant 0 : index
    %64 = vector.load %arg2[%c6_59, %c0_60, %c0_61] : memref<8x9x128xf32, #tpu.memory_space<vmem>>, vector<1x9x128xf32>
    %65 = vector.shape_cast %64 : vector<1x9x128xf32> to vector<9x128xf32>
    %cst_62 = arith.constant dense<0.000000e+00> : vector<16x128xf32>
    %66 = tpu.matmul %0, %63, %cst_62 {dimension_numbers = #tpu.dot_dimension_numbers<[1], [0], [0], [1], [0, 0, 1, 1], [], []>} : vector<16x9xf32>, vector<9x128xf32>, vector<16x128xf32> -> vector<16x128xf32>
    %cst_63 = arith.constant dense<0.000000e+00> : vector<16x128xf32>
    %67 = tpu.matmul %1, %65, %cst_63 {dimension_numbers = #tpu.dot_dimension_numbers<[1], [0], [0], [1], [0, 0, 1, 1], [], []>} : vector<16x9xf32>, vector<9x128xf32>, vector<16x128xf32> -> vector<16x128xf32>
    %68 = arith.addf %66, %67 : vector<16x128xf32>
    %cst_64 = arith.constant dense<0.000000e+00> : vector<16x128xf32>
    %69 = tpu.matmul %1, %63, %cst_64 {dimension_numbers = #tpu.dot_dimension_numbers<[1], [0], [0], [1], [0, 0, 1, 1], [], []>} : vector<16x9xf32>, vector<9x128xf32>, vector<16x128xf32> -> vector<16x128xf32>
    %cst_65 = arith.constant dense<0.000000e+00> : vector<16x128xf32>
    %70 = tpu.matmul %0, %65, %cst_65 {dimension_numbers = #tpu.dot_dimension_numbers<[1], [0], [0], [1], [0, 0, 1, 1], [], []>} : vector<16x9xf32>, vector<9x128xf32>, vector<16x128xf32> -> vector<16x128xf32>
    %71 = arith.subf %69, %70 : vector<16x128xf32>
    %c7 = arith.constant 7 : index
    %c0_66 = arith.constant 0 : index
    %c0_67 = arith.constant 0 : index
    %72 = vector.load %arg1[%c7, %c0_66, %c0_67] : memref<8x9x128xf32, #tpu.memory_space<vmem>>, vector<1x9x128xf32>
    %73 = vector.shape_cast %72 : vector<1x9x128xf32> to vector<9x128xf32>
    %c7_68 = arith.constant 7 : index
    %c0_69 = arith.constant 0 : index
    %c0_70 = arith.constant 0 : index
    %74 = vector.load %arg2[%c7_68, %c0_69, %c0_70] : memref<8x9x128xf32, #tpu.memory_space<vmem>>, vector<1x9x128xf32>
    %75 = vector.shape_cast %74 : vector<1x9x128xf32> to vector<9x128xf32>
    %cst_71 = arith.constant dense<0.000000e+00> : vector<16x128xf32>
    %76 = tpu.matmul %0, %73, %cst_71 {dimension_numbers = #tpu.dot_dimension_numbers<[1], [0], [0], [1], [0, 0, 1, 1], [], []>} : vector<16x9xf32>, vector<9x128xf32>, vector<16x128xf32> -> vector<16x128xf32>
    %cst_72 = arith.constant dense<0.000000e+00> : vector<16x128xf32>
    %77 = tpu.matmul %1, %75, %cst_72 {dimension_numbers = #tpu.dot_dimension_numbers<[1], [0], [0], [1], [0, 0, 1, 1], [], []>} : vector<16x9xf32>, vector<9x128xf32>, vector<16x128xf32> -> vector<16x128xf32>
    %78 = arith.addf %76, %77 : vector<16x128xf32>
    %cst_73 = arith.constant dense<0.000000e+00> : vector<16x128xf32>
    %79 = tpu.matmul %1, %73, %cst_73 {dimension_numbers = #tpu.dot_dimension_numbers<[1], [0], [0], [1], [0, 0, 1, 1], [], []>} : vector<16x9xf32>, vector<9x128xf32>, vector<16x128xf32> -> vector<16x128xf32>
    %cst_74 = arith.constant dense<0.000000e+00> : vector<16x128xf32>
    %80 = tpu.matmul %0, %75, %cst_74 {dimension_numbers = #tpu.dot_dimension_numbers<[1], [0], [0], [1], [0, 0, 1, 1], [], []>} : vector<16x9xf32>, vector<9x128xf32>, vector<16x128xf32> -> vector<16x128xf32>
    %81 = arith.subf %79, %80 : vector<16x128xf32>
    %82 = tpu.concatenate %8, %18, %28, %38, %48, %58, %68, %78 in 0 : vector<16x128xf32>, vector<16x128xf32>, vector<16x128xf32>, vector<16x128xf32>, vector<16x128xf32>, vector<16x128xf32>, vector<16x128xf32>, vector<16x128xf32> -> vector<128x128xf32>
    %83 = tpu.concatenate %11, %21, %31, %41, %51, %61, %71, %81 in 0 : vector<16x128xf32>, vector<16x128xf32>, vector<16x128xf32>, vector<16x128xf32>, vector<16x128xf32>, vector<16x128xf32>, vector<16x128xf32>, vector<16x128xf32> -> vector<128x128xf32>
    %c0_75 = arith.constant 0 : index
    %c0_76 = arith.constant 0 : index
    %84 = vector.load %arg5[%c0_75, %c0_76] : memref<128x128xf32, #tpu.memory_space<vmem>>, vector<128x128xf32>
    %cst_77 = arith.constant dense<0.000000e+00> : vector<128x128xf32>
    %85 = tpu.matmul %82, %84, %cst_77 {dimension_numbers = #tpu.dot_dimension_numbers<[1], [0], [0], [1], [0, 0, 1, 1], [], []>} : vector<128x128xf32>, vector<128x128xf32>, vector<128x128xf32> -> vector<128x128xf32>
    %c0_78 = arith.constant 0 : index
    %c0_79 = arith.constant 0 : index
    %86 = vector.load %arg6[%c0_78, %c0_79] : memref<128x128xf32, #tpu.memory_space<vmem>>, vector<128x128xf32>
    %cst_80 = arith.constant dense<0.000000e+00> : vector<128x128xf32>
    %87 = tpu.matmul %83, %86, %cst_80 {dimension_numbers = #tpu.dot_dimension_numbers<[1], [0], [0], [1], [0, 0, 1, 1], [], []>} : vector<128x128xf32>, vector<128x128xf32>, vector<128x128xf32> -> vector<128x128xf32>
    %88 = arith.addf %85, %87 : vector<128x128xf32>
    %89 = vector.shape_cast %88 : vector<128x128xf32> to vector<8x16x128xf32>
    %c0_81 = arith.constant 0 : index
    %c0_82 = arith.constant 0 : index
    %c0_83 = arith.constant 0 : index
    %90 = vector.load %arg7[%c0_81, %c0_82, %c0_83] : memref<8x16x128xf32, #tpu.memory_space<vmem>>, vector<8x16x128xf32>
    tpu.vector_store %arg7[%c0_81, %c0_82, %c0_83], %89 {strides = array<i32>} : memref<8x16x128xf32, #tpu.memory_space<vmem>>, vector<8x16x128xf32>,
    return
  }
  func.func @transform_0(%arg0: i32) -> (i32, i32, i32) {
    %c0_i32 = arith.constant 0 : i32
    %c0_i32_0 = arith.constant 0 : i32
    %c0_i32_1 = arith.constant 0 : i32
    return %arg0, %c0_i32, %c0_i32_0 : i32, i32, i32
  }
  func.func @transform_1(%arg0: i32) -> (i32, i32, i32) {
    %c0_i32 = arith.constant 0 : i32
    %c0_i32_0 = arith.constant 0 : i32
    %c0_i32_1 = arith.constant 0 : i32
    return %arg0, %c0_i32, %c0_i32_0 : i32, i32, i32
  }
  func.func @transform_2(%arg0: i32) -> (i32, i32) {
    %c0_i32 = arith.constant 0 : i32
    %c0_i32_0 = arith.constant 0 : i32
    %c0_i32_1 = arith.constant 0 : i32
    return %c0_i32, %c0_i32_0 : i32, i32
  }
  func.func @transform_3(%arg0: i32) -> (i32, i32) {
    %c0_i32 = arith.constant 0 : i32
    %c0_i32_0 = arith.constant 0 : i32
    %c0_i32_1 = arith.constant 0 : i32
    return %c0_i32, %c0_i32_0 : i32, i32
  }
  func.func @transform_4(%arg0: i32) -> (i32, i32) {
    %c0_i32 = arith.constant 0 : i32
    %c0_i32_0 = arith.constant 0 : i32
    %c0_i32_1 = arith.constant 0 : i32
    return %c0_i32, %c0_i32_0 : i32, i32
  }
  func.func @transform_5(%arg0: i32) -> (i32, i32) {
    %c0_i32 = arith.constant 0 : i32
    %c0_i32_0 = arith.constant 0 : i32
    %c0_i32_1 = arith.constant 0 : i32
    return %c0_i32, %c0_i32_0 : i32, i32
  }
  func.func @transform_6(%arg0: i32) -> (i32, i32, i32) {
    %c0_i32 = arith.constant 0 : i32
    %c0_i32_0 = arith.constant 0 : i32
    %c0_i32_1 = arith.constant 0 : i32
    return %arg0, %c0_i32, %c0_i32_0 : i32, i32, i32
  }
}

</mosaic_0001>

<llo_original>
// kernel: tpu_custom_call.1
$region0: #{tpu_custom_call.1}
  #allocation0 [shape = 'u32[]', space=smem, size = 0x4, offset = 0x4, fixed_abs, tag = 'smem constant byte address 0x4 - core index']
  #allocation1 [shape = 'u32[144,128]{1,0:T(1,128)}', space=vmem, size = 0x12000, scoped, tag = 'internal scratch']
  %s0 = inlined_call_operand.vmem [shape: f32[8,9,128], index: 0, kind: input, shape index: {}]
  %s1 = inlined_call_operand.vmem [shape: f32[8,9,128], index: 1, kind: input, shape index: {}]
  %s2 = inlined_call_operand.vmem [shape: f32[16,9], index: 2, kind: input, shape index: {}]
  %s3 = inlined_call_operand.vmem [shape: f32[16,9], index: 3, kind: input, shape index: {}]
  %s4 = inlined_call_operand.vmem [shape: f32[128,128], index: 4, kind: input, shape index: {}]
  %s5 = inlined_call_operand.vmem [shape: f32[128,128], index: 5, kind: input, shape index: {}]
  %s6 = inlined_call_operand.hbm [shape: f32[8,16,128], index: 6, kind: output, shape index: {}]
  %s7 = sld [smem:[#allocation0]]
  $region34: #{tpu_custom_call.1} parent=0
    _
  %s9 = ssub.s32 1, %s7
  %s10 = scalar_select 0, %s9, %s7
  $region1: #{tpu_custom_call.1} parent=0
    #allocation2 [shape = 'u8[65536]{0}', space=vmem, size = 0x10000, scoped, tag = 'output window, operand 0, single buffered']
    #allocation3 [shape = 's32[1]{0}', space=sflag, size = 0x4, scoped, tag = 'scoped memory for tpu_custom_call.1']
    %11 = vsyncpa [#allocation3], 0
    // Predicated region
    $region2: #{tpu_custom_call.1} parent=1 // pred_check
      _
    $region3: #{tpu_custom_call.1} parent=1 // pred_check_branch
      %13 = sbr.rel (0) target = $region5
    $region4: #{tpu_custom_call.1} parent=1 // pred_region
      _
    $region5: #{tpu_custom_call.1} parent=1 // pred_fallthru
      _
    // Predicated region
    $region6: #{tpu_custom_call.1} parent=1 // pred_check
      _
    $region7: #{tpu_custom_call.1} parent=1 // pred_check_branch
      %15 = sbr.rel (0) target = $region9
    $region8: #{tpu_custom_call.1} parent=1 // pred_region
      _
    $region9: #{tpu_custom_call.1} parent=1 // pred_fallthru
      _
    // Predicated region
    $region10: #{tpu_custom_call.1} parent=1 // pred_check
      _
    $region11: #{tpu_custom_call.1} parent=1 // pred_check_branch
      %17 = sbr.rel (0) target = $region13
    $region12: #{tpu_custom_call.1} parent=1 // pred_region
      _
    $region13: #{tpu_custom_call.1} parent=1 // pred_fallthru
      _
    // Predicated region
    $region14: #{tpu_custom_call.1} parent=1 // pred_check
      _
    $region15: #{tpu_custom_call.1} parent=1 // pred_check_branch
      %19 = sbr.rel (0) target = $region17
    $region16: #{tpu_custom_call.1} parent=1 // pred_region
      _
    $region17: #{tpu_custom_call.1} parent=1 // pred_fallthru
      _
    // Predicated region
    $region18: #{tpu_custom_call.1} parent=1 // pred_check
      _
    $region19: #{tpu_custom_call.1} parent=1 // pred_check_branch
      %21 = sbr.rel (0) target = $region21
    $region20: #{tpu_custom_call.1} parent=1 // pred_region
      _
    $region21: #{tpu_custom_call.1} parent=1 // pred_fallthru
      _
    // Predicated region
    $region22: #{tpu_custom_call.1} parent=1 // pred_check
      _
    $region23: #{tpu_custom_call.1} parent=1 // pred_check_branch
      %23 = sbr.rel (0) target = $region25
    $region24: #{tpu_custom_call.1} parent=1 // pred_region
      _
    $region25: #{tpu_custom_call.1} parent=1 // pred_fallthru
      _
    %v24 = vld [vmem:[%s2] sm:$0xff]
    %v25 = vld [vmem:[%s2 + $0x8] sm:$0xff]
    %v26 = vld [vmem:[%s3] sm:$0xff]
    %v27 = vld [vmem:[%s3 + $0x8] sm:$0xff]
    %v28 = vld [vmem:[%s0] sm:$0xff]
    %v29 = vld [vmem:[%s0 + $0x8] sm:$0x1]
    %v30 = vld [vmem:[%s1] sm:$0xff]
    %v31 = vld [vmem:[%s1 + $0x8] sm:$0x1]
    %vm32 = vcmask 72704
    %v34 = vsel %vm32, %v26, 0
    %v37 = vsel %vm32, %v27, 0
    %vm39 = vcmask 1040384
    %v41 = vsel %vm39, %v31, 0
    %43 = vmatprep.subr.mxu0 0.0
    %44 = vmatpush1.msra.mxu0 %v30
    %45 = vmatprep.subr.mxu0 0.0
    %46 = vmatpush1.msra.mxu0 %v41
    %47 = vmatprep.subr.mxu0 0.0
    %48 = vmatpush1.msra.mxu0 0.0
    %49 = vmatprep.subr.mxu0 0.0
    %50 = vmatpush1.msra.mxu0 0.0
    %51 = vmatprep.subr.mxu0 0.0
    %52 = vmatpush1.msra.mxu0 0.0
    %53 = vmatprep.subr.mxu0 0.0
    %54 = vmatpush1.msra.mxu0 0.0
    %55 = vmatprep.subr.mxu0 0.0
    %56 = vmatpush1.msra.mxu0 0.0
    %57 = vmatprep.subr.mxu0 0.0
    %58 = vmatpush1.msra.mxu0 0.0
    %59 = vmatprep.subr.mxu0 0.0
    %60 = vmatpush1.msra.mxu0 0.0
    %61 = vmatprep.subr.mxu0 0.0
    %62 = vmatpush1.msra.mxu0 0.0
    %63 = vmatprep.subr.mxu0 0.0
    %64 = vmatpush1.msra.mxu0 0.0
    %65 = vmatprep.subr.mxu0 0.0
    %66 = vmatpush1.msra.mxu0 0.0
    %67 = vmatprep.subr.mxu0 0.0
    %68 = vmatpush1.msra.mxu0 0.0
    %69 = vmatprep.subr.mxu0 0.0
    %70 = vmatpush1.msra.mxu0 0.0
    %71 = vmatprep.subr.mxu0 0.0
    %72 = vmatpush1.msra.mxu0 0.0
    %73 = vmatprep.subr.mxu0 0.0
    %74 = vmatpush1.msra.mxu0 0.0
    %75 = vmatprep.subr.mxu0 0.0
    %76 = vmatpush1.msra.mxu0 0.0
    %77 = vmatprep.subr.mxu0 0.0
    %78 = vmatpush1.msra.mxu0 0.0
    %79 = vmatprep.subr.mxu0 0.0
    %80 = vmatpush1.msra.mxu0 0.0
    %81 = vmatprep.subr.mxu0 0.0
    %82 = vmatpush1.msra.mxu0 0.0
    %83 = vmatprep.subr.mxu0 0.0
    %84 = vmatpush1.msra.mxu0 0.0
    %85 = vmatprep.subr.mxu0 0.0
    %86 = vmatpush1.msra.mxu0 0.0
    %87 = vmatprep.subr.mxu0 0.0
    %88 = vmatpush1.msra.mxu0 0.0
    %89 = vmatprep.subr.mxu0 0.0
    %90 = vmatpush1.msra.mxu0 0.0
    %91 = vmatprep.subr.mxu0 0.0
    %92 = vmatpush1.msra.mxu0 0.0
    %93 = vmatprep.subr.mxu0 0.0
    %94 = vmatpush1.msra.mxu0 0.0
    %95 = vmatprep.subr.mxu0 0.0
    %96 = vmatpush1.msra.mxu0 0.0
    %97 = vmatprep.subr.mxu0 0.0
    %98 = vmatpush1.msra.mxu0 0.0
    %99 = vmatprep.subr.mxu0 0.0
    %100 = vmatpush1.msra.mxu0 0.0
    %101 = vmatprep.subr.mxu0 0.0
    %102 = vmatpush1.msra.mxu0 0.0
    %103 = vmatprep.subr.mxu0 0.0
    %104 = vmatpush1.msra.mxu0 0.0
    %105 = vmatprep.subr.mxu0 0.0
    %106 = vmatpush1.msra.mxu0 0.0
    %107 = vmatprep.mubr.f32.mxu0 0.0
    %108 = vmatmul.mubr.f32.gmra.mrb[0].mxu0 %v34
    %v109 = vpop.f32.mrb[0].mxu0
    %v110 = vadd.f32 0.0, %v109
    %v111 = vpop.f32.mrb[0].mxu0
    %112 = vmatprep.mubr.f32.mxu0 0.0
    %113 = vmatmul.mubr.f32.gmra.mrb[0].mxu0 %v37
    %v114 = vpop.f32.mrb[0].mxu0
    %v115 = vadd.f32 0.0, %v114
    %v116 = vpop.f32.mrb[0].mxu0
    %117 = vdwg.mxu0
    %v119 = vsel %vm32, %v24, 0
    %v122 = vsel %vm32, %v25, 0
    %v125 = vsel %vm39, %v29, 0
    %127 = vmatprep.subr.mxu0 0.0
    %128 = vmatpush1.msra.mxu0 %v28
    %129 = vmatprep.subr.mxu0 0.0
    %130 = vmatpush1.msra.mxu0 %v125
    %131 = vmatprep.subr.mxu0 0.0
    %132 = vmatpush1.msra.mxu0 0.0
    %133 = vmatprep.subr.mxu0 0.0
    %134 = vmatpush1.msra.mxu0 0.0
    %135 = vmatprep.subr.mxu0 0.0
    %136 = vmatpush1.msra.mxu0 0.0
    %137 = vmatprep.subr.mxu0 0.0
    %138 = vmatpush1.msra.mxu0 0.0
    %139 = vmatprep.subr.mxu0 0.0
    %140 = vmatpush1.msra.mxu0 0.0
    %141 = vmatprep.subr.mxu0 0.0
    %142 = vmatpush1.msra.mxu0 0.0
    %143 = vmatprep.subr.mxu0 0.0
    %144 = vmatpush1.msra.mxu0 0.0
    %145 = vmatprep.subr.mxu0 0.0
    %146 = vmatpush1.msra.mxu0 0.0
    %147 = vmatprep.subr.mxu0 0.0
    %148 = vmatpush1.msra.mxu0 0.0
    %149 = vmatprep.subr.mxu0 0.0
    %150 = vmatpush1.msra.mxu0 0.0
    %151 = vmatprep.subr.mxu0 0.0
    %152 = vmatpush1.msra.mxu0 0.0
    %153 = vmatprep.subr.mxu0 0.0
    %154 = vmatpush1.msra.mxu0 0.0
    %155 = vmatprep.subr.mxu0 0.0
    %156 = vmatpush1.msra.mxu0 0.0
    %157 = vmatprep.subr.mxu0 0.0
    %158 = vmatpush1.msra.mxu0 0.0
    %159 = vmatprep.subr.mxu0 0.0
    %160 = vmatpush1.msra.mxu0 0.0
    %161 = vmatprep.subr.mxu0 0.0
    %162 = vmatpush1.msra.mxu0 0.0
    %163 = vmatprep.subr.mxu0 0.0
    %164 = vmatpush1.msra.mxu0 0.0
    %165 = vmatprep.subr.mxu0 0.0
    %166 = vmatpush1.msra.mxu0 0.0
    %167 = vmatprep.subr.mxu0 0.0
    %168 = vmatpush1.msra.mxu0 0.0
    %169 = vmatprep.subr.mxu0 0.0
    %170 = vmatpush1.msra.mxu0 0.0
    %171 = vmatprep.subr.mxu0 0.0
    %172 = vmatpush1.msra.mxu0 0.0
    %173 = vmatprep.subr.mxu0 0.0
    %174 = vmatpush1.msra.mxu0 0.0
    %175 = vmatprep.subr.mxu0 0.0
    %176 = vmatpush1.msra.mxu0 0.0
    %177 = vmatprep.subr.mxu0 0.0
    %178 = vmatpush1.msra.mxu0 0.0
    %179 = vmatprep.subr.mxu0 0.0
    %180 = vmatpush1.msra.mxu0 0.0
    %181 = vmatprep.subr.mxu0 0.0
    %182 = vmatpush1.msra.mxu0 0.0
    %183 = vmatprep.subr.mxu0 0.0
    %184 = vmatpush1.msra.mxu0 0.0
    %185 = vmatprep.subr.mxu0 0.0
    %186 = vmatpush1.msra.mxu0 0.0
    %187 = vmatprep.subr.mxu0 0.0
    %188 = vmatpush1.msra.mxu0 0.0
    %189 = vmatprep.subr.mxu0 0.0
    %190 = vmatpush1.msra.mxu0 0.0
    %191 = vmatprep.mubr.f32.mxu0 0.0
    %192 = vmatmul.mubr.f32.gmra.mrb[0].mxu0 %v119
    %v193 = vpop.f32.mrb[0].mxu0
    %v194 = vadd.f32 %v110, %v193
    %v195 = vpop.f32.mrb[0].mxu0
    %196 = vmatprep.mubr.f32.mxu0 0.0
    %197 = vmatmul.mubr.f32.gmra.mrb[0].mxu0 %v122
    %v198 = vpop.f32.mrb[0].mxu0
    %v199 = vadd.f32 %v115, %v198
    %v200 = vpop.f32.mrb[0].mxu0
    %201 = vdwg.mxu0
    %202 = vmatprep.subr.mxu0 0.0
    %203 = vmatpush1.msra.mxu0 %v28
    %204 = vmatprep.subr.mxu0 0.0
    %205 = vmatpush1.msra.mxu0 %v125
    %206 = vmatprep.subr.mxu0 0.0
    %207 = vmatpush1.msra.mxu0 0.0
    %208 = vmatprep.subr.mxu0 0.0
    %209 = vmatpush1.msra.mxu0 0.0
    %210 = vmatprep.subr.mxu0 0.0
    %211 = vmatpush1.msra.mxu0 0.0
    %212 = vmatprep.subr.mxu0 0.0
    %213 = vmatpush1.msra.mxu0 0.0
    %214 = vmatprep.subr.mxu0 0.0
    %215 = vmatpush1.msra.mxu0 0.0
    %216 = vmatprep.subr.mxu0 0.0
    %217 = vmatpush1.msra.mxu0 0.0
    %218 = vmatprep.subr.mxu0 0.0
    %219 = vmatpush1.msra.mxu0 0.0
    %220 = vmatprep.subr.mxu0 0.0
    %221 = vmatpush1.msra.mxu0 0.0
    %222 = vmatprep.subr.mxu0 0.0
    %223 = vmatpush1.msra.mxu0 0.0
    %224 = vmatprep.subr.mxu0 0.0
    %225 = vmatpush1.msra.mxu0 0.0
    %226 = vmatprep.subr.mxu0 0.0
    %227 = vmatpush1.msra.mxu0 0.0
    %228 = vmatprep.subr.mxu0 0.0
    %229 = vmatpush1.msra.mxu0 0.0
    %230 = vmatprep.subr.mxu0 0.0
    %231 = vmatpush1.msra.mxu0 0.0
    %232 = vmatprep.subr.mxu0 0.0
    %233 = vmatpush1.msra.mxu0 0.0
    %234 = vmatprep.subr.mxu0 0.0
    %235 = vmatpush1.msra.mxu0 0.0
    %236 = vmatprep.subr.mxu0 0.0
    %237 = vmatpush1.msra.mxu0 0.0
    %238 = vmatprep.subr.mxu0 0.0
    %239 = vmatpush1.msra.mxu0 0.0
    %240 = vmatprep.subr.mxu0 0.0
    %241 = vmatpush1.msra.mxu0 0.0
    %242 = vmatprep.subr.mxu0 0.0
    %243 = vmatpush1.msra.mxu0 0.0
    %244 = vmatprep.subr.mxu0 0.0
    %245 = vmatpush1.msra.mxu0 0.0
    %246 = vmatprep.subr.mxu0 0.0
    %247 = vmatpush1.msra.mxu0 0.0
    %248 = vmatprep.subr.mxu0 0.0
    %249 = vmatpush1.msra.mxu0 0.0
    %250 = vmatprep.subr.mxu0 0.0
    %251 = vmatpush1.msra.mxu0 0.0
    %252 = vmatprep.subr.mxu0 0.0
    %253 = vmatpush1.msra.mxu0 0.0
    %254 = vmatprep.subr.mxu0 0.0
    %255 = vmatpush1.msra.mxu0 0.0
    %256 = vmatprep.subr.mxu0 0.0
    %257 = vmatpush1.msra.mxu0 0.0
    %258 = vmatprep.subr.mxu0 0.0
    %259 = vmatpush1.msra.mxu0 0.0
    %260 = vmatprep.subr.mxu0 0.0
    %261 = vmatpush1.msra.mxu0 0.0
    %262 = vmatprep.subr.mxu0 0.0
    %263 = vmatpush1.msra.mxu0 0.0
    %264 = vmatprep.subr.mxu0 0.0
    %265 = vmatpush1.msra.mxu0 0.0
    %266 = vmatprep.mubr.f32.mxu0 0.0
    %267 = vmatmul.mubr.f32.gmra.mrb[0].mxu0 %v34
    %v268 = vpop.f32.mrb[0].mxu0
    %v269 = vadd.f32 0.0, %v268
    %v270 = vpop.f32.mrb[0].mxu0
    %271 = vmatprep.mubr.f32.mxu0 0.0
    %272 = vmatmul.mubr.f32.gmra.mrb[0].mxu0 %v37
    %v273 = vpop.f32.mrb[0].mxu0
    %v274 = vadd.f32 0.0, %v273
    %v275 = vpop.f32.mrb[0].mxu0
    %276 = vdwg.mxu0
    %277 = vmatprep.subr.mxu0 0.0
    %278 = vmatpush1.msra.mxu0 %v30
    %279 = vmatprep.subr.mxu0 0.0
    %280 = vmatpush1.msra.mxu0 %v41
    %281 = vmatprep.subr.mxu0 0.0
    %282 = vmatpush1.msra.mxu0 0.0
    %283 = vmatprep.subr.mxu0 0.0
    %284 = vmatpush1.msra.mxu0 0.0
    %285 = vmatprep.subr.mxu0 0.0
    %286 = vmatpush1.msra.mxu0 0.0
    %287 = vmatprep.subr.mxu0 0.0
    %288 = vmatpush1.msra.mxu0 0.0
    %289 = vmatprep.subr.mxu0 0.0
    %290 = vmatpush1.msra.mxu0 0.0
    %291 = vmatprep.subr.mxu0 0.0
    %292 = vmatpush1.msra.mxu0 0.0
    %293 = vmatprep.subr.mxu0 0.0
    %294 = vmatpush1.msra.mxu0 0.0
    %295 = vmatprep.subr.mxu0 0.0
    %296 = vmatpush1.msra.mxu0 0.0
    %297 = vmatprep.subr.mxu0 0.0
    %298 = vmatpush1.msra.mxu0 0.0
    %299 = vmatprep.subr.mxu0 0.0
    %300 = vmatpush1.msra.mxu0 0.0
    %301 = vmatprep.subr.mxu0 0.0
    %302 = vmatpush1.msra.mxu0 0.0
    %303 = vmatprep.subr.mxu0 0.0
    %304 = vmatpush1.msra.mxu0 0.0
    %305 = vmatprep.subr.mxu0 0.0
    %306 = vmatpush1.msra.mxu0 0.0
    %307 = vmatprep.subr.mxu0 0.0
    %308 = vmatpush1.msra.mxu0 0.0
    %309 = vmatprep.subr.mxu0 0.0
    %310 = vmatpush1.msra.mxu0 0.0
    %311 = vmatprep.subr.mxu0 0.0
    %312 = vmatpush1.msra.mxu0 0.0
    %313 = vmatprep.subr.mxu0 0.0
    %314 = vmatpush1.msra.mxu0 0.0
    %315 = vmatprep.subr.mxu0 0.0
    %316 = vmatpush1.msra.mxu0 0.0
    %317 = vmatprep.subr.mxu0 0.0
    %318 = vmatpush1.msra.mxu0 0.0
    %319 = vmatprep.subr.mxu0 0.0
    %320 = vmatpush1.msra.mxu0 0.0
    %321 = vmatprep.subr.mxu0 0.0
    %322 = vmatpush1.msra.mxu0 0.0
    %323 = vmatprep.subr.mxu0 0.0
    %324 = vmatpush1.msra.mxu0 0.0
    %325 = vmatprep.subr.mxu0 0.0
    %326 = vmatpush1.msra.mxu0 0.0
    %327 = vmatprep.subr.mxu0 0.0
    %328 = vmatpush1.msra.mxu0 0.0
    %329 = vmatprep.subr.mxu0 0.0
    %330 = vmatpush1.msra.mxu0 0.0
    %331 = vmatprep.subr.mxu0 0.0
    %332 = vmatpush1.msra.mxu0 0.0
    %333 = vmatprep.subr.mxu0 0.0
    %334 = vmatpush1.msra.mxu0 0.0
    %335 = vmatprep.subr.mxu0 0.0
    %336 = vmatpush1.msra.mxu0 0.0
    %337 = vmatprep.subr.mxu0 0.0
    %338 = vmatpush1.msra.mxu0 0.0
    %339 = vmatprep.subr.mxu0 0.0
    %340 = vmatpush1.msra.mxu0 0.0
    %341 = vmatprep.mubr.f32.mxu0 0.0
    %342 = vmatmul.mubr.f32.gmra.mrb[0].mxu0 %v119
    %v343 = vpop.f32.mrb[0].mxu0
    %v344 = vadd.f32 0.0, %v343
    %v345 = vpop.f32.mrb[0].mxu0
    %346 = vmatprep.mubr.f32.mxu0 0.0
    %347 = vmatmul.mubr.f32.gmra.mrb[0].mxu0 %v122
    %v348 = vpop.f32.mrb[0].mxu0
    %v349 = vadd.f32 0.0, %v348
    %v350 = vpop.f32.mrb[0].mxu0
    %351 = vdwg.mxu0
    %v352 = vsub.f32 %v269, %v344
    %v353 = vsub.f32 %v274, %v349
    %s354 = scalar_lea.vmem %s0, 16
    %v355 = vld [vmem:[%s354] sm:$0xff]
    %v356 = vld [vmem:[%s354 + $0x8] sm:$0x1]
    %s357 = scalar_lea.vmem %s1, 16
    %v358 = vld [vmem:[%s357] sm:$0xff]
    %v359 = vld [vmem:[%s357 + $0x8] sm:$0x1]
    %v361 = vsel %vm39, %v359, 0
    %363 = vmatprep.subr.mxu0 0.0
    %364 = vmatpush1.msra.mxu0 %v358
    %365 = vmatprep.subr.mxu0 0.0
    %366 = vmatpush1.msra.mxu0 %v361
    %367 = vmatprep.subr.mxu0 0.0
    %368 = vmatpush1.msra.mxu0 0.0
    %369 = vmatprep.subr.mxu0 0.0
    %370 = vmatpush1.msra.mxu0 0.0
    %371 = vmatprep.subr.mxu0 0.0
    %372 = vmatpush1.msra.mxu0 0.0
    %373 = vmatprep.subr.mxu0 0.0
    %374 = vmatpush1.msra.mxu0 0.0
    %375 = vmatprep.subr.mxu0 0.0
    %376 = vmatpush1.msra.mxu0 0.0
    %377 = vmatprep.subr.mxu0 0.0
    %378 = vmatpush1.msra.mxu0 0.0
    %379 = vmatprep.subr.mxu0 0.0
    %380 = vmatpush1.msra.mxu0 0.0
    %381 = vmatprep.subr.mxu0 0.0
    %382 = vmatpush1.msra.mxu0 0.0
    %383 = vmatprep.subr.mxu0 0.0
    %384 = vmatpush1.msra.mxu0 0.0
    %385 = vmatprep.subr.mxu0 0.0
    %386 = vmatpush1.msra.mxu0 0.0
    %387 = vmatprep.subr.mxu0 0.0
    %388 = vmatpush1.msra.mxu0 0.0
    %389 = vmatprep.subr.mxu0 0.0
    %390 = vmatpush1.msra.mxu0 0.0
    %391 = vmatprep.subr.mxu0 0.0
    %392 = vmatpush1.msra.mxu0 0.0
    %393 = vmatprep.subr.mxu0 0.0
    %394 = vmatpush1.msra.mxu0 0.0
    %395 = vmatprep.subr.mxu0 0.0
    %396 = vmatpush1.msra.mxu0 0.0
    %397 = vmatprep.subr.mxu0 0.0
    %398 = vmatpush1.msra.mxu0 0.0
    %399 = vmatprep.subr.mxu0 0.0
    %400 = vmatpush1.msra.mxu0 0.0
    %401 = vmatprep.subr.mxu0 0.0
    %402 = vmatpush1.msra.mxu0 0.0
    %403 = vmatprep.subr.mxu0 0.0
    %404 = vmatpush1.msra.mxu0 0.0
    %405 = vmatprep.subr.mxu0 0.0
    %406 = vmatpush1.msra.mxu0 0.0
    %407 = vmatprep.subr.mxu0 0.0
    %408 = vmatpush1.msra.mxu0 0.0
    %409 = vmatprep.subr.mxu0 0.0
    %410 = vmatpush1.msra.mxu0 0.0
    %411 = vmatprep.subr.mxu0 0.0
    %412 = vmatpush1.msra.mxu0 0.0
    %413 = vmatprep.subr.mxu0 0.0
    %414 = vmatpush1.msra.mxu0 0.0
    %415 = vmatprep.subr.mxu0 0.0
    %416 = vmatpush1.msra.mxu0 0.0
    %417 = vmatprep.subr.mxu0 0.0
    %418 = vmatpush1.msra.mxu0 0.0
    %419 = vmatprep.subr.mxu0 0.0
    %420 = vmatpush1.msra.mxu0 0.0
    %421 = vmatprep.subr.mxu0 0.0
    %422 = vmatpush1.msra.mxu0 0.0
    %423 = vmatprep.subr.mxu0 0.0
    %424 = vmatpush1.msra.mxu0 0.0
    %425 = vmatprep.subr.mxu0 0.0
    %426 = vmatpush1.msra.mxu0 0.0
    %427 = vmatprep.mubr.f32.mxu0 0.0
    %428 = vmatmul.mubr.f32.gmra.mrb[0].mxu0 %v34
    %v429 = vpop.f32.mrb[0].mxu0
    %v430 = vadd.f32 0.0, %v429
    %v431 = vpop.f32.mrb[0].mxu0
    %432 = vmatprep.mubr.f32.mxu0 0.0
    %433 = vmatmul.mubr.f32.gmra.mrb[0].mxu0 %v37
    %v434 = vpop.f32.mrb[0].mxu0
    %v435 = vadd.f32 0.0, %v434
    %v436 = vpop.f32.mrb[0].mxu0
    %437 = vdwg.mxu0
    %v439 = vsel %vm39, %v356, 0
    %441 = vmatprep.subr.mxu0 0.0
    %442 = vmatpush1.msra.mxu0 %v355
    %443 = vmatprep.subr.mxu0 0.0
    %444 = vmatpush1.msra.mxu0 %v439
    %445 = vmatprep.subr.mxu0 0.0
    %446 = vmatpush1.msra.mxu0 0.0
    %447 = vmatprep.subr.mxu0 0.0
    %448 = vmatpush1.msra.mxu0 0.0
    %449 = vmatprep.subr.mxu0 0.0
    %450 = vmatpush1.msra.mxu0 0.0
    %451 = vmatprep.subr.mxu0 0.0
    %452 = vmatpush1.msra.mxu0 0.0
    %453 = vmatprep.subr.mxu0 0.0
    %454 = vmatpush1.msra.mxu0 0.0
    %455 = vmatprep.subr.mxu0 0.0
    %456 = vmatpush1.msra.mxu0 0.0
    %457 = vmatprep.subr.mxu0 0.0
    %458 = vmatpush1.msra.mxu0 0.0
    %459 = vmatprep.subr.mxu0 0.0
    %460 = vmatpush1.msra.mxu0 0.0
    %461 = vmatprep.subr.mxu0 0.0
    %462 = vmatpush1.msra.mxu0 0.0
    %463 = vmatprep.subr.mxu0 0.0
    %464 = vmatpush1.msra.mxu0 0.0
    %465 = vmatprep.subr.mxu0 0.0
    %466 = vmatpush1.msra.mxu0 0.0
    %467 = vmatprep.subr.mxu0 0.0
    %468 = vmatpush1.msra.mxu0 0.0
    %469 = vmatprep.subr.mxu0 0.0
    %470 = vmatpush1.msra.mxu0 0.0
    %471 = vmatprep.subr.mxu0 0.0
    %472 = vmatpush1.msra.mxu0 0.0
    %473 = vmatprep.subr.mxu0 0.0
    %474 = vmatpush1.msra.mxu0 0.0
    %475 = vmatprep.subr.mxu0 0.0
    %476 = vmatpush1.msra.mxu0 0.0
    %477 = vmatprep.subr.mxu0 0.0
    %478 = vmatpush1.msra.mxu0 0.0
    %479 = vmatprep.subr.mxu0 0.0
    %480 = vmatpush1.msra.mxu0 0.0
    %481 = vmatprep.subr.mxu0 0.0
    %482 = vmatpush1.msra.mxu0 0.0
    %483 = vmatprep.subr.mxu0 0.0
    %484 = vmatpush1.msra.mxu0 0.0
    %485 = vmatprep.subr.mxu0 0.0
    %486 = vmatpush1.msra.mxu0 0.0
    %487 = vmatprep.subr.mxu0 0.0
    %488 = vmatpush1.msra.mxu0 0.0
    %489 = vmatprep.subr.mxu0 0.0
    %490 = vmatpush1.msra.mxu0 0.0
    %491 = vmatprep.subr.mxu0 0.0
    %492 = vmatpush1.msra.mxu0 0.0
    %493 = vmatprep.subr.mxu0 0.0
    %494 = vmatpush1.msra.mxu0 0.0
    %495 = vmatprep.subr.mxu0 0.0
    %496 = vmatpush1.msra.mxu0 0.0
    %497 = vmatprep.subr.mxu0 0.0
    %498 = vmatpush1.msra.mxu0 0.0
    %499 = vmatprep.subr.mxu0 0.0
    %500 = vmatpush1.msra.mxu0 0.0
    %501 = vmatprep.subr.mxu0 0.0
    %502 = vmatpush1.msra.mxu0 0.0
    %503 = vmatprep.subr.mxu0 0.0
    %504 = vmatpush1.msra.mxu0 0.0
    %505 = vmatprep.mubr.f32.mxu0 0.0
    %506 = vmatmul.mubr.f32.gmra.mrb[0].mxu0 %v119
    %v507 = vpop.f32.mrb[0].mxu0
    %v508 = vadd.f32 %v430, %v507
    %v509 = vpop.f32.mrb[0].mxu0
    %510 = vmatprep.mubr.f32.mxu0 0.0
    %511 = vmatmul.mubr.f32.gmra.mrb[0].mxu0 %v122
    %v512 = vpop.f32.mrb[0].mxu0
    %v513 = vadd.f32 %v435, %v512
    %v514 = vpop.f32.mrb[0].mxu0
    %515 = vdwg.mxu0
    %516 = vmatprep.subr.mxu0 0.0
    %517 = vmatpush1.msra.mxu0 %v355
    %518 = vmatprep.subr.mxu0 0.0
    %519 = vmatpush1.msra.mxu0 %v439
    %520 = vmatprep.subr.mxu0 0.0
    %521 = vmatpush1.msra.mxu0 0.0
    %522 = vmatprep.subr.mxu0 0.0
    %523 = vmatpush1.msra.mxu0 0.0
    %524 = vmatprep.subr.mxu0 0.0
    %525 = vmatpush1.msra.mxu0 0.0
    %526 = vmatprep.subr.mxu0 0.0
    %527 = vmatpush1.msra.mxu0 0.0
    %528 = vmatprep.subr.mxu0 0.0
    %529 = vmatpush1.msra.mxu0 0.0
    %530 = vmatprep.subr.mxu0 0.0
    %531 = vmatpush1.msra.mxu0 0.0
    %532 = vmatprep.subr.mxu0 0.0
    %533 = vmatpush1.msra.mxu0 0.0
    %534 = vmatprep.subr.mxu0 0.0
    %535 = vmatpush1.msra.mxu0 0.0
    %536 = vmatprep.subr.mxu0 0.0
    %537 = vmatpush1.msra.mxu0 0.0
    %538 = vmatprep.subr.mxu0 0.0
    %539 = vmatpush1.msra.mxu0 0.0
    %540 = vmatprep.subr.mxu0 0.0
    %541 = vmatpush1.msra.mxu0 0.0
    %542 = vmatprep.subr.mxu0 0.0
    %543 = vmatpush1.msra.mxu0 0.0
    %544 = vmatprep.subr.mxu0 0.0
    %545 = vmatpush1.msra.mxu0 0.0
    %546 = vmatprep.subr.mxu0 0.0
    %547 = vmatpush1.msra.mxu0 0.0
    %548 = vmatprep.subr.mxu0 0.0
    %549 = vmatpush1.msra.mxu0 0.0
    %550 = vmatprep.subr.mxu0 0.0
    %551 = vmatpush1.msra.mxu0 0.0
    %552 = vmatprep.subr.mxu0 0.0
    %553 = vmatpush1.msra.mxu0 0.0
    %554 = vmatprep.subr.mxu0 0.0
    %555 = vmatpush1.msra.mxu0 0.0
    %556 = vmatprep.subr.mxu0 0.0
    %557 = vmatpush1.msra.mxu0 0.0
    %558 = vmatprep.subr.mxu0 0.0
    %559 = vmatpush1.msra.mxu0 0.0
    %560 = vmatprep.subr.mxu0 0.0
    %561 = vmatpush1.msra.mxu0 0.0
    %562 = vmatprep.subr.mxu0 0.0
    %563 = vmatpush1.msra.mxu0 0.0
    %564 = vmatprep.subr.mxu0 0.0
    %565 = vmatpush1.msra.mxu0 0.0
    %566 = vmatprep.subr.mxu0 0.0
    %567 = vmatpush1.msra.mxu0 0.0
    %568 = vmatprep.subr.mxu0 0.0
    %569 = vmatpush1.msra.mxu0 0.0
    %570 = vmatprep.subr.mxu0 0.0
    %571 = vmatpush1.msra.mxu0 0.0
    %572 = vmatprep.subr.mxu0 0.0
    %573 = vmatpush1.msra.mxu0 0.0
    %574 = vmatprep.subr.mxu0 0.0
    %575 = vmatpush1.msra.mxu0 0.0
    %576 = vmatprep.subr.mxu0 0.0
    %577 = vmatpush1.msra.mxu0 0.0
    %578 = vmatprep.subr.mxu0 0.0
    %579 = vmatpush1.msra.mxu0 0.0
    %580 = vmatprep.mubr.f32.mxu0 0.0
    %581 = vmatmul.mubr.f32.gmra.mrb[0].mxu0 %v34
    %v582 = vpop.f32.mrb[0].mxu0
    %v583 = vadd.f32 0.0, %v582
    %v584 = vpop.f32.mrb[0].mxu0
    %585 = vmatprep.mubr.f32.mxu0 0.0
    %586 = vmatmul.mubr.f32.gmra.mrb[0].mxu0 %v37
    %v587 = vpop.f32.mrb[0].mxu0
    %v588 = vadd.f32 0.0, %v587
    %v589 = vpop.f32.mrb[0].mxu0
    %590 = vdwg.mxu0
    %591 = vmatprep.subr.mxu0 0.0
    %592 = vmatpush1.msra.mxu0 %v358
    %593 = vmatprep.subr.mxu0 0.0
    %594 = vmatpush1.msra.mxu0 %v361
    %595 = vmatprep.subr.mxu0 0.0
    %596 = vmatpush1.msra.mxu0 0.0
    %597 = vmatprep.subr.mxu0 0.0
    %598 = vmatpush1.msra.mxu0 0.0
    %599 = vmatprep.subr.mxu0 0.0
    %600 = vmatpush1.msra.mxu0 0.0
    %601 = vmatprep.subr.mxu0 0.0
    %602 = vmatpush1.msra.mxu0 0.0
    %603 = vmatprep.subr.mxu0 0.0
    %604 = vmatpush1.msra.mxu0 0.0
    %605 = vmatprep.subr.mxu0 0.0
    %606 = vmatpush1.msra.mxu0 0.0
    %607 = vmatprep.subr.mxu0 0.0
    %608 = vmatpush1.msra.mxu0 0.0
    %609 = vmatprep.subr.mxu0 0.0
    %610 = vmatpush1.msra.mxu0 0.0
    %611 = vmatprep.subr.mxu0 0.0
    %612 = vmatpush1.msra.mxu0 0.0
    %613 = vmatprep.subr.mxu0 0.0
    %614 = vmatpush1.msra.mxu0 0.0
    %615 = vmatprep.subr.mxu0 0.0
    %616 = vmatpush1.msra.mxu0 0.0
    %617 = vmatprep.subr.mxu0 0.0
    %618 = vmatpush1.msra.mxu0 0.0
    %619 = vmatprep.subr.mxu0 0.0
    %620 = vmatpush1.msra.mxu0 0.0
    %621 = vmatprep.subr.mxu0 0.0
    %622 = vmatpush1.msra.mxu0 0.0
    %623 = vmatprep.subr.mxu0 0.0
    %624 = vmatpush1.msra.mxu0 0.0
    %625 = vmatprep.subr.mxu0 0.0
    %626 = vmatpush1.msra.mxu0 0.0
    %627 = vmatprep.subr.mxu0 0.0
    %628 = vmatpush1.msra.mxu0 0.0
    %629 = vmatprep.subr.mxu0 0.0
    %630 = vmatpush1.msra.mxu0 0.0
    %631 = vmatprep.subr.mxu0 0.0
    %632 = vmatpush1.msra.mxu0 0.0
    %633 = vmatprep.subr.mxu0 0.0
    %634 = vmatpush1.msra.mxu0 0.0
    %635 = vmatprep.subr.mxu0 0.0
    %636 = vmatpush1.msra.mxu0 0.0
    %637 = vmatprep.subr.mxu0 0.0
    %638 = vmatpush1.msra.mxu0 0.0
    %639 = vmatprep.subr.mxu0 0.0
    %640 = vmatpush1.msra.mxu0 0.0
    %641 = vmatprep.subr.mxu0 0.0
    %642 = vmatpush1.msra.mxu0 0.0
    %643 = vmatprep.subr.mxu0 0.0
    %644 = vmatpush1.msra.mxu0 0.0
    %645 = vmatprep.subr.mxu0 0.0
    %646 = vmatpush1.msra.mxu0 0.0
    %647 = vmatprep.subr.mxu0 0.0
    %648 = vmatpush1.msra.mxu0 0.0
    %649 = vmatprep.subr.mxu0 0.0
    %650 = vmatpush1.msra.mxu0 0.0
    %651 = vmatprep.subr.mxu0 0.0
    %652 = vmatpush1.msra.mxu0 0.0
    %653 = vmatprep.subr.mxu0 0.0
    %654 = vmatpush1.msra.mxu0 0.0
    %655 = vmatprep.mubr.f32.mxu0 0.0
    %656 = vmatmul.mubr.f32.gmra.mrb[0].mxu0 %v119
    %v657 = vpop.f32.mrb[0].mxu0
    %v658 = vadd.f32 0.0, %v657
    %v659 = vpop.f32.mrb[0].mxu0
    %660 = vmatprep.mubr.f32.mxu0 0.0
    %661 = vmatmul.mubr.f32.gmra.mrb[0].mxu0 %v122
    %v662 = vpop.f32.mrb[0].mxu0
    %v663 = vadd.f32 0.0, %v662
    %v664 = vpop.f32.mrb[0].mxu0
    %665 = vdwg.mxu0
    %v666 = vsub.f32 %v583, %v658
    %v667 = vsub.f32 %v588, %v663
    %s668 = scalar_lea.vmem %s0, 32
    %v669 = vld [vmem:[%s668] sm:$0xff]
    %v670 = vld [vmem:[%s668 + $0x8] sm:$0x1]
    %s671 = scalar_lea.vmem %s1, 32
    %v672 = vld [vmem:[%s671] sm:$0xff]
    %v673 = vld [vmem:[%s671 + $0x8] sm:$0x1]
    %v675 = vsel %vm39, %v673, 0
    %677 = vmatprep.subr.mxu0 0.0
    %678 = vmatpush1.msra.mxu0 %v672
    %679 = vmatprep.subr.mxu0 0.0
    %680 = vmatpush1.msra.mxu0 %v675
    %681 = vmatprep.subr.mxu0 0.0
    %682 = vmatpush1.msra.mxu0 0.0
    %683 = vmatprep.subr.mxu0 0.0
    %684 = vmatpush1.msra.mxu0 0.0
    %685 = vmatprep.subr.mxu0 0.0
    %686 = vmatpush1.msra.mxu0 0.0
    %687 = vmatprep.subr.mxu0 0.0
    %688 = vmatpush1.msra.mxu0 0.0
    %689 = vmatprep.subr.mxu0 0.0
    %690 = vmatpush1.msra.mxu0 0.0
    %691 = vmatprep.subr.mxu0 0.0
    %692 = vmatpush1.msra.mxu0 0.0
    %693 = vmatprep.subr.mxu0 0.0
    %694 = vmatpush1.msra.mxu0 0.0
    %695 = vmatprep.subr.mxu0 0.0
    %696 = vmatpush1.msra.mxu0 0.0
    %697 = vmatprep.subr.mxu0 0.0
    %698 = vmatpush1.msra.mxu0 0.0
    %699 = vmatprep.subr.mxu0 0.0
    %700 = vmatpush1.msra.mxu0 0.0
    %701 = vmatprep.subr.mxu0 0.0
    %702 = vmatpush1.msra.mxu0 0.0
    %703 = vmatprep.subr.mxu0 0.0
    %704 = vmatpush1.msra.mxu0 0.0
    %705 = vmatprep.subr.mxu0 0.0
    %706 = vmatpush1.msra.mxu0 0.0
    %707 = vmatprep.subr.mxu0 0.0
    %708 = vmatpush1.msra.mxu0 0.0
    %709 = vmatprep.subr.mxu0 0.0
    %710 = vmatpush1.msra.mxu0 0.0
    %711 = vmatprep.subr.mxu0 0.0
    %712 = vmatpush1.msra.mxu0 0.0
    %713 = vmatprep.subr.mxu0 0.0
    %714 = vmatpush1.msra.mxu0 0.0
    %715 = vmatprep.subr.mxu0 0.0
    %716 = vmatpush1.msra.mxu0 0.0
    %717 = vmatprep.subr.mxu0 0.0
    %718 = vmatpush1.msra.mxu0 0.0
    %719 = vmatprep.subr.mxu0 0.0
    %720 = vmatpush1.msra.mxu0 0.0
    %721 = vmatprep.subr.mxu0 0.0
    %722 = vmatpush1.msra.mxu0 0.0
    %723 = vmatprep.subr.mxu0 0.0
    %724 = vmatpush1.msra.mxu0 0.0
    %725 = vmatprep.subr.mxu0 0.0
    %726 = vmatpush1.msra.mxu0 0.0
    %727 = vmatprep.subr.mxu0 0.0
    %728 = vmatpush1.msra.mxu0 0.0
    %729 = vmatprep.subr.mxu0 0.0
    %730 = vmatpush1.msra.mxu0 0.0
    %731 = vmatprep.subr.mxu0 0.0
    %732 = vmatpush1.msra.mxu0 0.0
    %733 = vmatprep.subr.mxu0 0.0
    %734 = vmatpush1.msra.mxu0 0.0
    %735 = vmatprep.subr.mxu0 0.0
    %736 = vmatpush1.msra.mxu0 0.0
    %737 = vmatprep.subr.mxu0 0.0
    %738 = vmatpush1.msra.mxu0 0.0
    %739 = vmatprep.subr.mxu0 0.0
    %740 = vmatpush1.msra.mxu0 0.0
    %741 = vmatprep.mubr.f32.mxu0 0.0
    %742 = vmatmul.mubr.f32.gmra.mrb[0].mxu0 %v34
    %v743 = vpop.f32.mrb[0].mxu0
    %v744 = vadd.f32 0.0, %v743
    %v745 = vpop.f32.mrb[0].mxu0
    %746 = vmatprep.mubr.f32.mxu0 0.0
    %747 = vmatmul.mubr.f32.gmra.mrb[0].mxu0 %v37
    %v748 = vpop.f32.mrb[0].mxu0
    %v749 = vadd.f32 0.0, %v748
    %v750 = vpop.f32.mrb[0].mxu0
    %751 = vdwg.mxu0
    %v753 = vsel %vm39, %v670, 0
    %755 = vmatprep.subr.mxu0 0.0
    %756 = vmatpush1.msra.mxu0 %v669
    %757 = vmatprep.subr.mxu0 0.0
    %758 = vmatpush1.msra.mxu0 %v753
    %759 = vmatprep.subr.mxu0 0.0
    %760 = vmatpush1.msra.mxu0 0.0
    %761 = vmatprep.subr.mxu0 0.0
    %762 = vmatpush1.msra.mxu0 0.0
    %763 = vmatprep.subr.mxu0 0.0
    %764 = vmatpush1.msra.mxu0 0.0
    %765 = vmatprep.subr.mxu0 0.0
    %766 = vmatpush1.msra.mxu0 0.0
    %767 = vmatprep.subr.mxu0 0.0
    %768 = vmatpush1.msra.mxu0 0.0
    %769 = vmatprep.subr.mxu0 0.0
    %770 = vmatpush1.msra.mxu0 0.0
    %771 = vmatprep.subr.mxu0 0.0
    %772 = vmatpush1.msra.mxu0 0.0
    %773 = vmatprep.subr.mxu0 0.0
    %774 = vmatpush1.msra.mxu0 0.0
    %775 = vmatprep.subr.mxu0 0.0
    %776 = vmatpush1.msra.mxu0 0.0
    %777 = vmatprep.subr.mxu0 0.0
    %778 = vmatpush1.msra.mxu0 0.0
    %779 = vmatprep.subr.mxu0 0.0
    %780 = vmatpush1.msra.mxu0 0.0
    %781 = vmatprep.subr.mxu0 0.0
    %782 = vmatpush1.msra.mxu0 0.0
    %783 = vmatprep.subr.mxu0 0.0
    %784 = vmatpush1.msra.mxu0 0.0
    %785 = vmatprep.subr.mxu0 0.0
    %786 = vmatpush1.msra.mxu0 0.0
    %787 = vmatprep.subr.mxu0 0.0
    %788 = vmatpush1.msra.mxu0 0.0
    %789 = vmatprep.subr.mxu0 0.0
    %790 = vmatpush1.msra.mxu0 0.0
    %791 = vmatprep.subr.mxu0 0.0
    %792 = vmatpush1.msra.mxu0 0.0
    %793 = vmatprep.subr.mxu0 0.0
    %794 = vmatpush1.msra.mxu0 0.0
    %795 = vmatprep.subr.mxu0 0.0
    %796 = vmatpush1.msra.mxu0 0.0
    %797 = vmatprep.subr.mxu0 0.0
    %798 = vmatpush1.msra.mxu0 0.0
    %799 = vmatprep.subr.mxu0 0.0
    %800 = vmatpush1.msra.mxu0 0.0
    %801 = vmatprep.subr.mxu0 0.0
    %802 = vmatpush1.msra.mxu0 0.0
    %803 = vmatprep.subr.mxu0 0.0
    %804 = vmatpush1.msra.mxu0 0.0
    %805 = vmatprep.subr.mxu0 0.0
    %806 = vmatpush1.msra.mxu0 0.0
    %807 = vmatprep.subr.mxu0 0.0
    %808 = vmatpush1.msra.mxu0 0.0
    %809 = vmatprep.subr.mxu0 0.0
    %810 = vmatpush1.msra.mxu0 0.0
    %811 = vmatprep.subr.mxu0 0.0
    %812 = vmatpush1.msra.mxu0 0.0
    %813 = vmatprep.subr.mxu0 0.0
    %814 = vmatpush1.msra.mxu0 0.0
    %815 = vmatprep.subr.mxu0 0.0
    %816 = vmatpush1.msra.mxu0 0.0
    %817 = vmatprep.subr.mxu0 0.0
    %818 = vmatpush1.msra.mxu0 0.0
    %819 = vmatprep.mubr.f32.mxu0 0.0
    %820 = vmatmul.mubr.f32.gmra.mrb[0].mxu0 %v119
    %v821 = vpop.f32.mrb[0].mxu0
    %v822 = vadd.f32 %v744, %v821
    %v823 = vpop.f32.mrb[0].mxu0
    %824 = vmatprep.mubr.f32.mxu0 0.0
    %825 = vmatmul.mubr.f32.gmra.mrb[0].mxu0 %v122
    %v826 = vpop.f32.mrb[0].mxu0
    %v827 = vadd.f32 %v749, %v826
    %v828 = vpop.f32.mrb[0].mxu0
    %829 = vdwg.mxu0
    %830 = vmatprep.subr.mxu0 0.0
    %831 = vmatpush1.msra.mxu0 %v669
    %832 = vmatprep.subr.mxu0 0.0
    %833 = vmatpush1.msra.mxu0 %v753
    %834 = vmatprep.subr.mxu0 0.0
    %835 = vmatpush1.msra.mxu0 0.0
    %836 = vmatprep.subr.mxu0 0.0
    %837 = vmatpush1.msra.mxu0 0.0
    %838 = vmatprep.subr.mxu0 0.0
    %839 = vmatpush1.msra.mxu0 0.0
    %840 = vmatprep.subr.mxu0 0.0
    %841 = vmatpush1.msra.mxu0 0.0
    %842 = vmatprep.subr.mxu0 0.0
    %843 = vmatpush1.msra.mxu0 0.0
    %844 = vmatprep.subr.mxu0 0.0
    %845 = vmatpush1.msra.mxu0 0.0
    %846 = vmatprep.subr.mxu0 0.0
    %847 = vmatpush1.msra.mxu0 0.0
    %848 = vmatprep.subr.mxu0 0.0
    %849 = vmatpush1.msra.mxu0 0.0
    %850 = vmatprep.subr.mxu0 0.0
    %851 = vmatpush1.msra.mxu0 0.0
    %852 = vmatprep.subr.mxu0 0.0
    %853 = vmatpush1.msra.mxu0 0.0
    %854 = vmatprep.subr.mxu0 0.0
    %855 = vmatpush1.msra.mxu0 0.0
    %856 = vmatprep.subr.mxu0 0.0
    %857 = vmatpush1.msra.mxu0 0.0
    %858 = vmatprep.subr.mxu0 0.0
    %859 = vmatpush1.msra.mxu0 0.0
    %860 = vmatprep.subr.mxu0 0.0
    %861 = vmatpush1.msra.mxu0 0.0
    %862 = vmatprep.subr.mxu0 0.0
    %863 = vmatpush1.msra.mxu0 0.0
    %864 = vmatprep.subr.mxu0 0.0
    %865 = vmatpush1.msra.mxu0 0.0
    %866 = vmatprep.subr.mxu0 0.0
    %867 = vmatpush1.msra.mxu0 0.0
    %868 = vmatprep.subr.mxu0 0.0
    %869 = vmatpush1.msra.mxu0 0.0
    %870 = vmatprep.subr.mxu0 0.0
    %871 = vmatpush1.msra.mxu0 0.0
    %872 = vmatprep.subr.mxu0 0.0
    %873 = vmatpush1.msra.mxu0 0.0
    %874 = vmatprep.subr.mxu0 0.0
    %875 = vmatpush1.msra.mxu0 0.0
    %876 = vmatprep.subr.mxu0 0.0
    %877 = vmatpush1.msra.mxu0 0.0
    %878 = vmatprep.subr.mxu0 0.0
    %879 = vmatpush1.msra.mxu0 0.0
    %880 = vmatprep.subr.mxu0 0.0
    %881 = vmatpush1.msra.mxu0 0.0
    %882 = vmatprep.subr.mxu0 0.0
    %883 = vmatpush1.msra.mxu0 0.0
    %884 = vmatprep.subr.mxu0 0.0
    %885 = vmatpush1.msra.mxu0 0.0
    %886 = vmatprep.subr.mxu0 0.0
    %887 = vmatpush1.msra.mxu0 0.0
    %888 = vmatprep.subr.mxu0 0.0
    %889 = vmatpush1.msra.mxu0 0.0
    %890 = vmatprep.subr.mxu0 0.0
    %891 = vmatpush1.msra.mxu0 0.0
    %892 = vmatprep.subr.mxu0 0.0
    %893 = vmatpush1.msra.mxu0 0.0
    %894 = vmatprep.mubr.f32.mxu0 0.0
    %895 = vmatmul.mubr.f32.gmra.mrb[0].mxu0 %v34
    %v896 = vpop.f32.mrb[0].mxu0
    %v897 = vadd.f32 0.0, %v896
    %v898 = vpop.f32.mrb[0].mxu0
    %899 = vmatprep.mubr.f32.mxu0 0.0
    %900 = vmatmul.mubr.f32.gmra.mrb[0].mxu0 %v37
    %v901 = vpop.f32.mrb[0].mxu0
    %v902 = vadd.f32 0.0, %v901
    %v903 = vpop.f32.mrb[0].mxu0
    %904 = vdwg.mxu0
    %905 = vmatprep.subr.mxu0 0.0
    %906 = vmatpush1.msra.mxu0 %v672
    %907 = vmatprep.subr.mxu0 0.0
    %908 = vmatpush1.msra.mxu0 %v675
    %909 = vmatprep.subr.mxu0 0.0
    %910 = vmatpush1.msra.mxu0 0.0
    %911 = vmatprep.subr.mxu0 0.0
    %912 = vmatpush1.msra.mxu0 0.0
    %913 = vmatprep.subr.mxu0 0.0
    %914 = vmatpush1.msra.mxu0 0.0
    %915 = vmatprep.subr.mxu0 0.0
    %916 = vmatpush1.msra.mxu0 0.0
    %917 = vmatprep.subr.mxu0 0.0
    %918 = vmatpush1.msra.mxu0 0.0
    %919 = vmatprep.subr.mxu0 0.0
    %920 = vmatpush1.msra.mxu0 0.0
    %921 = vmatprep.subr.mxu0 0.0
    %922 = vmatpush1.msra.mxu0 0.0
    %923 = vmatprep.subr.mxu0 0.0
    %924 = vmatpush1.msra.mxu0 0.0
    %925 = vmatprep.subr.mxu0 0.0
    %926 = vmatpush1.msra.mxu0 0.0
    %927 = vmatprep.subr.mxu0 0.0
    %928 = vmatpush1.msra.mxu0 0.0
    %929 = vmatprep.subr.mxu0 0.0
    %930 = vmatpush1.msra.mxu0 0.0
    %931 = vmatprep.subr.mxu0 0.0
    %932 = vmatpush1.msra.mxu0 0.0
    %933 = vmatprep.subr.mxu0 0.0
    %934 = vmatpush1.msra.mxu0 0.0
    %935 = vmatprep.subr.mxu0 0.0
    %936 = vmatpush1.msra.mxu0 0.0
    %937 = vmatprep.subr.mxu0 0.0
    %938 = vmatpush1.msra.mxu0 0.0
    %939 = vmatprep.subr.mxu0 0.0
    %940 = vmatpush1.msra.mxu0 0.0
    %941 = vmatprep.subr.mxu0 0.0
    %942 = vmatpush1.msra.mxu0 0.0
    %943 = vmatprep.subr.mxu0 0.0
    %944 = vmatpush1.msra.mxu0 0.0
    %945 = vmatprep.subr.mxu0 0.0
    %946 = vmatpush1.msra.mxu0 0.0
    %947 = vmatprep.subr.mxu0 0.0
    %948 = vmatpush1.msra.mxu0 0.0
    %949 = vmatprep.subr.mxu0 0.0
    %950 = vmatpush1.msra.mxu0 0.0
    %951 = vmatprep.subr.mxu0 0.0
    %952 = vmatpush1.msra.mxu0 0.0
    %953 = vmatprep.subr.mxu0 0.0
    %954 = vmatpush1.msra.mxu0 0.0
    %955 = vmatprep.subr.mxu0 0.0
    %956 = vmatpush1.msra.mxu0 0.0
    %957 = vmatprep.subr.mxu0 0.0
    %958 = vmatpush1.msra.mxu0 0.0
    %959 = vmatprep.subr.mxu0 0.0
    %960 = vmatpush1.msra.mxu0 0.0
    %961 = vmatprep.subr.mxu0 0.0
    %962 = vmatpush1.msra.mxu0 0.0
    %963 = vmatprep.subr.mxu0 0.0
    %964 = vmatpush1.msra.mxu0 0.0
    %965 = vmatprep.subr.mxu0 0.0
    %966 = vmatpush1.msra.mxu0 0.0
    %967 = vmatprep.subr.mxu0 0.0
    %968 = vmatpush1.msra.mxu0 0.0
    %969 = vmatprep.mubr.f32.mxu0 0.0
    %970 = vmatmul.mubr.f32.gmra.mrb[0].mxu0 %v119
    %v971 = vpop.f32.mrb[0].mxu0
    %v972 = vadd.f32 0.0, %v971
    %v973 = vpop.f32.mrb[0].mxu0
    %974 = vmatprep.mubr.f32.mxu0 0.0
    %975 = vmatmul.mubr.f32.gmra.mrb[0].mxu0 %v122
    %v976 = vpop.f32.mrb[0].mxu0
    %v977 = vadd.f32 0.0, %v976
    %v978 = vpop.f32.mrb[0].mxu0
    %979 = vdwg.mxu0
    %v980 = vsub.f32 %v897, %v972
    %v981 = vsub.f32 %v902, %v977
    %s982 = scalar_lea.vmem %s0, 48
    %v983 = vld [vmem:[%s982] sm:$0xff]
    %v984 = vld [vmem:[%s982 + $0x8] sm:$0x1]
    %s985 = scalar_lea.vmem %s1, 48
    %v986 = vld [vmem:[%s985] sm:$0xff]
    %v987 = vld [vmem:[%s985 + $0x8] sm:$0x1]
    %v989 = vsel %vm39, %v987, 0
    %991 = vmatprep.subr.mxu0 0.0
    %992 = vmatpush1.msra.mxu0 %v986
    %993 = vmatprep.subr.mxu0 0.0
    %994 = vmatpush1.msra.mxu0 %v989
    %995 = vmatprep.subr.mxu0 0.0
    %996 = vmatpush1.msra.mxu0 0.0
    %997 = vmatprep.subr.mxu0 0.0
    %998 = vmatpush1.msra.mxu0 0.0
    %999 = vmatprep.subr.mxu0 0.0
    %1000 = vmatpush1.msra.mxu0 0.0
    %1001 = vmatprep.subr.mxu0 0.0
    %1002 = vmatpush1.msra.mxu0 0.0
    %1003 = vmatprep.subr.mxu0 0.0
    %1004 = vmatpush1.msra.mxu0 0.0
    %1005 = vmatprep.subr.mxu0 0.0
    %1006 = vmatpush1.msra.mxu0 0.0
    %1007 = vmatprep.subr.mxu0 0.0
    %1008 = vmatpush1.msra.mxu0 0.0
    %1009 = vmatprep.subr.mxu0 0.0
    %1010 = vmatpush1.msra.mxu0 0.0
    %1011 = vmatprep.subr.mxu0 0.0
    %1012 = vmatpush1.msra.mxu0 0.0
    %1013 = vmatprep.subr.mxu0 0.0
    %1014 = vmatpush1.msra.mxu0 0.0
    %1015 = vmatprep.subr.mxu0 0.0
    %1016 = vmatpush1.msra.mxu0 0.0
    %1017 = vmatprep.subr.mxu0 0.0
    %1018 = vmatpush1.msra.mxu0 0.0
    %1019 = vmatprep.subr.mxu0 0.0
    %1020 = vmatpush1.msra.mxu0 0.0
    %1021 = vmatprep.subr.mxu0 0.0
    %1022 = vmatpush1.msra.mxu0 0.0
    %1023 = vmatprep.subr.mxu0 0.0
    %1024 = vmatpush1.msra.mxu0 0.0
    %1025 = vmatprep.subr.mxu0 0.0
    %1026 = vmatpush1.msra.mxu0 0.0
    %1027 = vmatprep.subr.mxu0 0.0
    %1028 = vmatpush1.msra.mxu0 0.0
    %1029 = vmatprep.subr.mxu0 0.0
    %1030 = vmatpush1.msra.mxu0 0.0
    %1031 = vmatprep.subr.mxu0 0.0
    %1032 = vmatpush1.msra.mxu0 0.0
    %1033 = vmatprep.subr.mxu0 0.0
    %1034 = vmatpush1.msra.mxu0 0.0
    %1035 = vmatprep.subr.mxu0 0.0
    %1036 = vmatpush1.msra.mxu0 0.0
    %1037 = vmatprep.subr.mxu0 0.0
    %1038 = vmatpush1.msra.mxu0 0.0
    %1039 = vmatprep.subr.mxu0 0.0
    %1040 = vmatpush1.msra.mxu0 0.0
    %1041 = vmatprep.subr.mxu0 0.0
    %1042 = vmatpush1.msra.mxu0 0.0
    %1043 = vmatprep.subr.mxu0 0.0
    %1044 = vmatpush1.msra.mxu0 0.0
    %1045 = vmatprep.subr.mxu0 0.0
    %1046 = vmatpush1.msra.mxu0 0.0
    %1047 = vmatprep.subr.mxu0 0.0
    %1048 = vmatpush1.msra.mxu0 0.0
    %1049 = vmatprep.subr.mxu0 0.0
    %1050 = vmatpush1.msra.mxu0 0.0
    %1051 = vmatprep.subr.mxu0 0.0
    %1052 = vmatpush1.msra.mxu0 0.0
    %1053 = vmatprep.subr.mxu0 0.0
    %1054 = vmatpush1.msra.mxu0 0.0
    %1055 = vmatprep.mubr.f32.mxu0 0.0
    %1056 = vmatmul.mubr.f32.gmra.mrb[0].mxu0 %v34
    %v1057 = vpop.f32.mrb[0].mxu0
    %v1058 = vadd.f32 0.0, %v1057
    %v1059 = vpop.f32.mrb[0].mxu0
    %1060 = vmatprep.mubr.f32.mxu0 0.0
    %1061 = vmatmul.mubr.f32.gmra.mrb[0].mxu0 %v37
    %v1062 = vpop.f32.mrb[0].mxu0
    %v1063 = vadd.f32 0.0, %v1062
    %v1064 = vpop.f32.mrb[0].mxu0
    %1065 = vdwg.mxu0
    %v1067 = vsel %vm39, %v984, 0
    %1069 = vmatprep.subr.mxu0 0.0
    %1070 = vmatpush1.msra.mxu0 %v983
    %1071 = vmatprep.subr.mxu0 0.0
    %1072 = vmatpush1.msra.mxu0 %v1067
    %1073 = vmatprep.subr.mxu0 0.0
    %1074 = vmatpush1.msra.mxu0 0.0
    %1075 = vmatprep.subr.mxu0 0.0
    %1076 = vmatpush1.msra.mxu0 0.0
    %1077 = vmatprep.subr.mxu0 0.0
    %1078 = vmatpush1.msra.mxu0 0.0
    %1079 = vmatprep.subr.mxu0 0.0
    %1080 = vmatpush1.msra.mxu0 0.0
    %1081 = vmatprep.subr.mxu0 0.0
    %1082 = vmatpush1.msra.mxu0 0.0
    %1083 = vmatprep.subr.mxu0 0.0
    %1084 = vmatpush1.msra.mxu0 0.0
    %1085 = vmatprep.subr.mxu0 0.0
    %1086 = vmatpush1.msra.mxu0 0.0
    %1087 = vmatprep.subr.mxu0 0.0
    %1088 = vmatpush1.msra.mxu0 0.0
    %1089 = vmatprep.subr.mxu0 0.0
    %1090 = vmatpush1.msra.mxu0 0.0
    %1091 = vmatprep.subr.mxu0 0.0
    %1092 = vmatpush1.msra.mxu0 0.0
    %1093 = vmatprep.subr.mxu0 0.0
    %1094 = vmatpush1.msra.mxu0 0.0
    %1095 = vmatprep.subr.mxu0 0.0
    %1096 = vmatpush1.msra.mxu0 0.0
    %1097 = vmatprep.subr.mxu0 0.0
    %1098 = vmatpush1.msra.mxu0 0.0
    %1099 = vmatprep.subr.mxu0 0.0
    %1100 = vmatpush1.msra.mxu0 0.0
    %1101 = vmatprep.subr.mxu0 0.0
    %1102 = vmatpush1.msra.mxu0 0.0
    %1103 = vmatprep.subr.mxu0 0.0
    %1104 = vmatpush1.msra.mxu0 0.0
    %1105 = vmatprep.subr.mxu0 0.0
    %1106 = vmatpush1.msra.mxu0 0.0
    %1107 = vmatprep.subr.mxu0 0.0
    %1108 = vmatpush1.msra.mxu0 0.0
    %1109 = vmatprep.subr.mxu0 0.0
    %1110 = vmatpush1.msra.mxu0 0.0
    %1111 = vmatprep.subr.mxu0 0.0
    %1112 = vmatpush1.msra.mxu0 0.0
    %1113 = vmatprep.subr.mxu0 0.0
    %1114 = vmatpush1.msra.mxu0 0.0
    %1115 = vmatprep.subr.mxu0 0.0
    %1116 = vmatpush1.msra.mxu0 0.0
    %1117 = vmatprep.subr.mxu0 0.0
    %1118 = vmatpush1.msra.mxu0 0.0
    %1119 = vmatprep.subr.mxu0 0.0
    %1120 = vmatpush1.msra.mxu0 0.0
    %1121 = vmatprep.subr.mxu0 0.0
    %1122 = vmatpush1.msra.mxu0 0.0
    %1123 = vmatprep.subr.mxu0 0.0
    %1124 = vmatpush1.msra.mxu0 0.0
    %1125 = vmatprep.subr.mxu0 0.0
    %1126 = vmatpush1.msra.mxu0 0.0
    %1127 = vmatprep.subr.mxu0 0.0
    %1128 = vmatpush1.msra.mxu0 0.0
    %1129 = vmatprep.subr.mxu0 0.0
    %1130 = vmatpush1.msra.mxu0 0.0
    %1131 = vmatprep.subr.mxu0 0.0
    %1132 = vmatpush1.msra.mxu0 0.0
    %1133 = vmatprep.mubr.f32.mxu0 0.0
    %1134 = vmatmul.mubr.f32.gmra.mrb[0].mxu0 %v119
    %v1135 = vpop.f32.mrb[0].mxu0
    %v1136 = vadd.f32 %v1058, %v1135
    %v1137 = vpop.f32.mrb[0].mxu0
    %1138 = vmatprep.mubr.f32.mxu0 0.0
    %1139 = vmatmul.mubr.f32.gmra.mrb[0].mxu0 %v122
    %v1140 = vpop.f32.mrb[0].mxu0
    %v1141 = vadd.f32 %v1063, %v1140
    %v1142 = vpop.f32.mrb[0].mxu0
    %1143 = vdwg.mxu0
    %1144 = vmatprep.subr.mxu0 0.0
    %1145 = vmatpush1.msra.mxu0 %v983
    %1146 = vmatprep.subr.mxu0 0.0
    %1147 = vmatpush1.msra.mxu0 %v1067
    %1148 = vmatprep.subr.mxu0 0.0
    %1149 = vmatpush1.msra.mxu0 0.0
    %1150 = vmatprep.subr.mxu0 0.0
    %1151 = vmatpush1.msra.mxu0 0.0
    %1152 = vmatprep.subr.mxu0 0.0
    %1153 = vmatpush1.msra.mxu0 0.0
    %1154 = vmatprep.subr.mxu0 0.0
    %1155 = vmatpush1.msra.mxu0 0.0
    %1156 = vmatprep.subr.mxu0 0.0
    %1157 = vmatpush1.msra.mxu0 0.0
    %1158 = vmatprep.subr.mxu0 0.0
    %1159 = vmatpush1.msra.mxu0 0.0
    %1160 = vmatprep.subr.mxu0 0.0
    %1161 = vmatpush1.msra.mxu0 0.0
    %1162 = vmatprep.subr.mxu0 0.0
    %1163 = vmatpush1.msra.mxu0 0.0
    %1164 = vmatprep.subr.mxu0 0.0
    %1165 = vmatpush1.msra.mxu0 0.0
    %1166 = vmatprep.subr.mxu0 0.0
    %1167 = vmatpush1.msra.mxu0 0.0
    %1168 = vmatprep.subr.mxu0 0.0
    %1169 = vmatpush1.msra.mxu0 0.0
    %1170 = vmatprep.subr.mxu0 0.0
    %1171 = vmatpush1.msra.mxu0 0.0
    %1172 = vmatprep.subr.mxu0 0.0
    %1173 = vmatpush1.msra.mxu0 0.0
    %1174 = vmatprep.subr.mxu0 0.0
    %1175 = vmatpush1.msra.mxu0 0.0
    %1176 = vmatprep.subr.mxu0 0.0
    %1177 = vmatpush1.msra.mxu0 0.0
    %1178 = vmatprep.subr.mxu0 0.0
    %1179 = vmatpush1.msra.mxu0 0.0
    %1180 = vmatprep.subr.mxu0 0.0
    %1181 = vmatpush1.msra.mxu0 0.0
    %1182 = vmatprep.subr.mxu0 0.0
    %1183 = vmatpush1.msra.mxu0 0.0
    %1184 = vmatprep.subr.mxu0 0.0
    %1185 = vmatpush1.msra.mxu0 0.0
    %1186 = vmatprep.subr.mxu0 0.0
    %1187 = vmatpush1.msra.mxu0 0.0
    %1188 = vmatprep.subr.mxu0 0.0
    %1189 = vmatpush1.msra.mxu0 0.0
    %1190 = vmatprep.subr.mxu0 0.0
    %1191 = vmatpush1.msra.mxu0 0.0
    %1192 = vmatprep.subr.mxu0 0.0
    %1193 = vmatpush1.msra.mxu0 0.0
    %1194 = vmatprep.subr.mxu0 0.0
    %1195 = vmatpush1.msra.mxu0 0.0
    %1196 = vmatprep.subr.mxu0 0.0
    %1197 = vmatpush1.msra.mxu0 0.0
    %1198 = vmatprep.subr.mxu0 0.0
    %1199 = vmatpush1.msra.mxu0 0.0
    %1200 = vmatprep.subr.mxu0 0.0
    %1201 = vmatpush1.msra.mxu0 0.0
    %1202 = vmatprep.subr.mxu0 0.0
    %1203 = vmatpush1.msra.mxu0 0.0
    %1204 = vmatprep.subr.mxu0 0.0
    %1205 = vmatpush1.msra.mxu0 0.0
    %1206 = vmatprep.subr.mxu0 0.0
    %1207 = vmatpush1.msra.mxu0 0.0
    %1208 = vmatprep.mubr.f32.mxu0 0.0
    %1209 = vmatmul.mubr.f32.gmra.mrb[0].mxu0 %v34
    %v1210 = vpop.f32.mrb[0].mxu0
    %v1211 = vadd.f32 0.0, %v1210
    %v1212 = vpop.f32.mrb[0].mxu0
    %1213 = vmatprep.mubr.f32.mxu0 0.0
    %1214 = vmatmul.mubr.f32.gmra.mrb[0].mxu0 %v37
    %v1215 = vpop.f32.mrb[0].mxu0
    %v1216 = vadd.f32 0.0, %v1215
    %v1217 = vpop.f32.mrb[0].mxu0
    %1218 = vdwg.mxu0
    %1219 = vmatprep.subr.mxu0 0.0
    %1220 = vmatpush1.msra.mxu0 %v986
    %1221 = vmatprep.subr.mxu0 0.0
    %1222 = vmatpush1.msra.mxu0 %v989
    %1223 = vmatprep.subr.mxu0 0.0
    %1224 = vmatpush1.msra.mxu0 0.0
    %1225 = vmatprep.subr.mxu0 0.0
    %1226 = vmatpush1.msra.mxu0 0.0
    %1227 = vmatprep.subr.mxu0 0.0
    %1228 = vmatpush1.msra.mxu0 0.0
    %1229 = vmatprep.subr.mxu0 0.0
    %1230 = vmatpush1.msra.mxu0 0.0
    %1231 = vmatprep.subr.mxu0 0.0
    %1232 = vmatpush1.msra.mxu0 0.0
    %1233 = vmatprep.subr.mxu0 0.0
    %1234 = vmatpush1.msra.mxu0 0.0
    %1235 = vmatprep.subr.mxu0 0.0
    %1236 = vmatpush1.msra.mxu0 0.0
    %1237 = vmatprep.subr.mxu0 0.0
    %1238 = vmatpush1.msra.mxu0 0.0
    %1239 = vmatprep.subr.mxu0 0.0
    %1240 = vmatpush1.msra.mxu0 0.0
    %1241 = vmatprep.subr.mxu0 0.0
    %1242 = vmatpush1.msra.mxu0 0.0
    %1243 = vmatprep.subr.mxu0 0.0
    %1244 = vmatpush1.msra.mxu0 0.0
    %1245 = vmatprep.subr.mxu0 0.0
    %1246 = vmatpush1.msra.mxu0 0.0
    %1247 = vmatprep.subr.mxu0 0.0
    %1248 = vmatpush1.msra.mxu0 0.0
    %1249 = vmatprep.subr.mxu0 0.0
    %1250 = vmatpush1.msra.mxu0 0.0
    %1251 = vmatprep.subr.mxu0 0.0
    %1252 = vmatpush1.msra.mxu0 0.0
    %1253 = vmatprep.subr.mxu0 0.0
    %1254 = vmatpush1.msra.mxu0 0.0
    %1255 = vmatprep.subr.mxu0 0.0
    %1256 = vmatpush1.msra.mxu0 0.0
    %1257 = vmatprep.subr.mxu0 0.0
    %1258 = vmatpush1.msra.mxu0 0.0
    %1259 = vmatprep.subr.mxu0 0.0
    %1260 = vmatpush1.msra.mxu0 0.0
    %1261 = vmatprep.subr.mxu0 0.0
    %1262 = vmatpush1.msra.mxu0 0.0
    %1263 = vmatprep.subr.mxu0 0.0
    %1264 = vmatpush1.msra.mxu0 0.0
    %1265 = vmatprep.subr.mxu0 0.0
    %1266 = vmatpush1.msra.mxu0 0.0
    %1267 = vmatprep.subr.mxu0 0.0
    %1268 = vmatpush1.msra.mxu0 0.0
    %1269 = vmatprep.subr.mxu0 0.0
    %1270 = vmatpush1.msra.mxu0 0.0
    %1271 = vmatprep.subr.mxu0 0.0
    %1272 = vmatpush1.msra.mxu0 0.0
    %1273 = vmatprep.subr.mxu0 0.0
    %1274 = vmatpush1.msra.mxu0 0.0
    %1275 = vmatprep.subr.mxu0 0.0
    %1276 = vmatpush1.msra.mxu0 0.0
    %1277 = vmatprep.subr.mxu0 0.0
    %1278 = vmatpush1.msra.mxu0 0.0
    %1279 = vmatprep.subr.mxu0 0.0
    %1280 = vmatpush1.msra.mxu0 0.0
    %1281 = vmatprep.subr.mxu0 0.0
    %1282 = vmatpush1.msra.mxu0 0.0
    %1283 = vmatprep.mubr.f32.mxu0 0.0
    %1284 = vmatmul.mubr.f32.gmra.mrb[0].mxu0 %v119
    %v1285 = vpop.f32.mrb[0].mxu0
    %v1286 = vadd.f32 0.0, %v1285
    %v1287 = vpop.f32.mrb[0].mxu0
    %1288 = vmatprep.mubr.f32.mxu0 0.0
    %1289 = vmatmul.mubr.f32.gmra.mrb[0].mxu0 %v122
    %v1290 = vpop.f32.mrb[0].mxu0
    %v1291 = vadd.f32 0.0, %v1290
    %v1292 = vpop.f32.mrb[0].mxu0
    %1293 = vdwg.mxu0
    %v1294 = vsub.f32 %v1211, %v1286
    %v1295 = vsub.f32 %v1216, %v1291
    %s1296 = scalar_lea.vmem %s0, 64
    %v1297 = vld [vmem:[%s1296] sm:$0xff]
    %v1298 = vld [vmem:[%s1296 + $0x8] sm:$0x1]
    %s1299 = scalar_lea.vmem %s1, 64
    %v1300 = vld [vmem:[%s1299] sm:$0xff]
    %v1301 = vld [vmem:[%s1299 + $0x8] sm:$0x1]
    %v1303 = vsel %vm39, %v1301, 0
    %1305 = vmatprep.subr.mxu0 0.0
    %1306 = vmatpush1.msra.mxu0 %v1300
    %1307 = vmatprep.subr.mxu0 0.0
    %1308 = vmatpush1.msra.mxu0 %v1303
    %1309 = vmatprep.subr.mxu0 0.0
    %1310 = vmatpush1.msra.mxu0 0.0
    %1311 = vmatprep.subr.mxu0 0.0
    %1312 = vmatpush1.msra.mxu0 0.0
    %1313 = vmatprep.subr.mxu0 0.0
    %1314 = vmatpush1.msra.mxu0 0.0
    %1315 = vmatprep.subr.mxu0 0.0
    %1316 = vmatpush1.msra.mxu0 0.0
    %1317 = vmatprep.subr.mxu0 0.0
    %1318 = vmatpush1.msra.mxu0 0.0
    %1319 = vmatprep.subr.mxu0 0.0
    %1320 = vmatpush1.msra.mxu0 0.0
    %1321 = vmatprep.subr.mxu0 0.0
    %1322 = vmatpush1.msra.mxu0 0.0
    %1323 = vmatprep.subr.mxu0 0.0
    %1324 = vmatpush1.msra.mxu0 0.0
    %1325 = vmatprep.subr.mxu0 0.0
    %1326 = vmatpush1.msra.mxu0 0.0
    %1327 = vmatprep.subr.mxu0 0.0
    %1328 = vmatpush1.msra.mxu0 0.0
    %1329 = vmatprep.subr.mxu0 0.0
    %1330 = vmatpush1.msra.mxu0 0.0
    %1331 = vmatprep.subr.mxu0 0.0
    %1332 = vmatpush1.msra.mxu0 0.0
    %1333 = vmatprep.subr.mxu0 0.0
    %1334 = vmatpush1.msra.mxu0 0.0
    %1335 = vmatprep.subr.mxu0 0.0
    %1336 = vmatpush1.msra.mxu0 0.0
    %1337 = vmatprep.subr.mxu0 0.0
    %1338 = vmatpush1.msra.mxu0 0.0
    %1339 = vmatprep.subr.mxu0 0.0
    %1340 = vmatpush1.msra.mxu0 0.0
    %1341 = vmatprep.subr.mxu0 0.0
    %1342 = vmatpush1.msra.mxu0 0.0
    %1343 = vmatprep.subr.mxu0 0.0
    %1344 = vmatpush1.msra.mxu0 0.0
    %1345 = vmatprep.subr.mxu0 0.0
    %1346 = vmatpush1.msra.mxu0 0.0
    %1347 = vmatprep.subr.mxu0 0.0
    %1348 = vmatpush1.msra.mxu0 0.0
    %1349 = vmatprep.subr.mxu0 0.0
    %1350 = vmatpush1.msra.mxu0 0.0
    %1351 = vmatprep.subr.mxu0 0.0
    %1352 = vmatpush1.msra.mxu0 0.0
    %1353 = vmatprep.subr.mxu0 0.0
    %1354 = vmatpush1.msra.mxu0 0.0
    %1355 = vmatprep.subr.mxu0 0.0
    %1356 = vmatpush1.msra.mxu0 0.0
    %1357 = vmatprep.subr.mxu0 0.0
    %1358 = vmatpush1.msra.mxu0 0.0
    %1359 = vmatprep.subr.mxu0 0.0
    %1360 = vmatpush1.msra.mxu0 0.0
    %1361 = vmatprep.subr.mxu0 0.0
    %1362 = vmatpush1.msra.mxu0 0.0
    %1363 = vmatprep.subr.mxu0 0.0
    %1364 = vmatpush1.msra.mxu0 0.0
    %1365 = vmatprep.subr.mxu0 0.0
    %1366 = vmatpush1.msra.mxu0 0.0
    %1367 = vmatprep.subr.mxu0 0.0
    %1368 = vmatpush1.msra.mxu0 0.0
    %1369 = vmatprep.mubr.f32.mxu0 0.0
    %1370 = vmatmul.mubr.f32.gmra.mrb[0].mxu0 %v34
    %v1371 = vpop.f32.mrb[0].mxu0
    %v1372 = vadd.f32 0.0, %v1371
    %v1373 = vpop.f32.mrb[0].mxu0
    %1374 = vmatprep.mubr.f32.mxu0 0.0
    %1375 = vmatmul.mubr.f32.gmra.mrb[0].mxu0 %v37
    %v1376 = vpop.f32.mrb[0].mxu0
    %v1377 = vadd.f32 0.0, %v1376
    %v1378 = vpop.f32.mrb[0].mxu0
    %1379 = vdwg.mxu0
    %v1381 = vsel %vm39, %v1298, 0
    %1383 = vmatprep.subr.mxu0 0.0
    %1384 = vmatpush1.msra.mxu0 %v1297
    %1385 = vmatprep.subr.mxu0 0.0
    %1386 = vmatpush1.msra.mxu0 %v1381
    %1387 = vmatprep.subr.mxu0 0.0
    %1388 = vmatpush1.msra.mxu0 0.0
    %1389 = vmatprep.subr.mxu0 0.0
    %1390 = vmatpush1.msra.mxu0 0.0
    %1391 = vmatprep.subr.mxu0 0.0
    %1392 = vmatpush1.msra.mxu0 0.0
    %1393 = vmatprep.subr.mxu0 0.0
    %1394 = vmatpush1.msra.mxu0 0.0
    %1395 = vmatprep.subr.mxu0 0.0
    %1396 = vmatpush1.msra.mxu0 0.0
    %1397 = vmatprep.subr.mxu0 0.0
    %1398 = vmatpush1.msra.mxu0 0.0
    %1399 = vmatprep.subr.mxu0 0.0
    %1400 = vmatpush1.msra.mxu0 0.0
    %1401 = vmatprep.subr.mxu0 0.0
    %1402 = vmatpush1.msra.mxu0 0.0
    %1403 = vmatprep.subr.mxu0 0.0
    %1404 = vmatpush1.msra.mxu0 0.0
    %1405 = vmatprep.subr.mxu0 0.0
    %1406 = vmatpush1.msra.mxu0 0.0
    %1407 = vmatprep.subr.mxu0 0.0
    %1408 = vmatpush1.msra.mxu0 0.0
    %1409 = vmatprep.subr.mxu0 0.0
    %1410 = vmatpush1.msra.mxu0 0.0
    %1411 = vmatprep.subr.mxu0 0.0
    %1412 = vmatpush1.msra.mxu0 0.0
    %1413 = vmatprep.subr.mxu0 0.0
    %1414 = vmatpush1.msra.mxu0 0.0
    %1415 = vmatprep.subr.mxu0 0.0
    %1416 = vmatpush1.msra.mxu0 0.0
    %1417 = vmatprep.subr.mxu0 0.0
    %1418 = vmatpush1.msra.mxu0 0.0
    %1419 = vmatprep.subr.mxu0 0.0
    %1420 = vmatpush1.msra.mxu0 0.0
    %1421 = vmatprep.subr.mxu0 0.0
    %1422 = vmatpush1.msra.mxu0 0.0
    %1423 = vmatprep.subr.mxu0 0.0
    %1424 = vmatpush1.msra.mxu0 0.0
    %1425 = vmatprep.subr.mxu0 0.0
    %1426 = vmatpush1.msra.mxu0 0.0
    %1427 = vmatprep.subr.mxu0 0.0
    %1428 = vmatpush1.msra.mxu0 0.0
    %1429 = vmatprep.subr.mxu0 0.0
    %1430 = vmatpush1.msra.mxu0 0.0
    %1431 = vmatprep.subr.mxu0 0.0
    %1432 = vmatpush1.msra.mxu0 0.0
    %1433 = vmatprep.subr.mxu0 0.0
    %1434 = vmatpush1.msra.mxu0 0.0
    %1435 = vmatprep.subr.mxu0 0.0
    %1436 = vmatpush1.msra.mxu0 0.0
    %1437 = vmatprep.subr.mxu0 0.0
    %1438 = vmatpush1.msra.mxu0 0.0
    %1439 = vmatprep.subr.mxu0 0.0
    %1440 = vmatpush1.msra.mxu0 0.0
    %1441 = vmatprep.subr.mxu0 0.0
    %1442 = vmatpush1.msra.mxu0 0.0
    %1443 = vmatprep.subr.mxu0 0.0
    %1444 = vmatpush1.msra.mxu0 0.0
    %1445 = vmatprep.subr.mxu0 0.0
    %1446 = vmatpush1.msra.mxu0 0.0
    %1447 = vmatprep.mubr.f32.mxu0 0.0
    %1448 = vmatmul.mubr.f32.gmra.mrb[0].mxu0 %v119
    %v1449 = vpop.f32.mrb[0].mxu0
    %v1450 = vadd.f32 %v1372, %v1449
    %v1451 = vpop.f32.mrb[0].mxu0
    %1452 = vmatprep.mubr.f32.mxu0 0.0
    %1453 = vmatmul.mubr.f32.gmra.mrb[0].mxu0 %v122
    %v1454 = vpop.f32.mrb[0].mxu0
    %v1455 = vadd.f32 %v1377, %v1454
    %v1456 = vpop.f32.mrb[0].mxu0
    %1457 = vdwg.mxu0
    %1458 = vmatprep.subr.mxu0 0.0
    %1459 = vmatpush1.msra.mxu0 %v1297
    %1460 = vmatprep.subr.mxu0 0.0
    %1461 = vmatpush1.msra.mxu0 %v1381
    %1462 = vmatprep.subr.mxu0 0.0
    %1463 = vmatpush1.msra.mxu0 0.0
    %1464 = vmatprep.subr.mxu0 0.0
    %1465 = vmatpush1.msra.mxu0 0.0
    %1466 = vmatprep.subr.mxu0 0.0
    %1467 = vmatpush1.msra.mxu0 0.0
    %1468 = vmatprep.subr.mxu0 0.0
    %1469 = vmatpush1.msra.mxu0 0.0
    %1470 = vmatprep.subr.mxu0 0.0
    %1471 = vmatpush1.msra.mxu0 0.0
    %1472 = vmatprep.subr.mxu0 0.0
    %1473 = vmatpush1.msra.mxu0 0.0
    %1474 = vmatprep.subr.mxu0 0.0
    %1475 = vmatpush1.msra.mxu0 0.0
    %1476 = vmatprep.subr.mxu0 0.0
    %1477 = vmatpush1.msra.mxu0 0.0
    %1478 = vmatprep.subr.mxu0 0.0
    %1479 = vmatpush1.msra.mxu0 0.0
    %1480 = vmatprep.subr.mxu0 0.0
    %1481 = vmatpush1.msra.mxu0 0.0
    %1482 = vmatprep.subr.mxu0 0.0
    %1483 = vmatpush1.msra.mxu0 0.0
    %1484 = vmatprep.subr.mxu0 0.0
    %1485 = vmatpush1.msra.mxu0 0.0
    %1486 = vmatprep.subr.mxu0 0.0
    %1487 = vmatpush1.msra.mxu0 0.0
    %1488 = vmatprep.subr.mxu0 0.0
    %1489 = vmatpush1.msra.mxu0 0.0
    %1490 = vmatprep.subr.mxu0 0.0
    %1491 = vmatpush1.msra.mxu0 0.0
    %1492 = vmatprep.subr.mxu0 0.0
    %1493 = vmatpush1.msra.mxu0 0.0
    %1494 = vmatprep.subr.mxu0 0.0
    %1495 = vmatpush1.msra.mxu0 0.0
    %1496 = vmatprep.subr.mxu0 0.0
    %1497 = vmatpush1.msra.mxu0 0.0
    %1498 = vmatprep.subr.mxu0 0.0
    %1499 = vmatpush1.msra.mxu0 0.0
    %1500 = vmatprep.subr.mxu0 0.0
    %1501 = vmatpush1.msra.mxu0 0.0
    %1502 = vmatprep.subr.mxu0 0.0
    %1503 = vmatpush1.msra.mxu0 0.0
    %1504 = vmatprep.subr.mxu0 0.0
    %1505 = vmatpush1.msra.mxu0 0.0
    %1506 = vmatprep.subr.mxu0 0.0
    %1507 = vmatpush1.msra.mxu0 0.0
    %1508 = vmatprep.subr.mxu0 0.0
    %1509 = vmatpush1.msra.mxu0 0.0
    %1510 = vmatprep.subr.mxu0 0.0
    %1511 = vmatpush1.msra.mxu0 0.0
    %1512 = vmatprep.subr.mxu0 0.0
    %1513 = vmatpush1.msra.mxu0 0.0
    %1514 = vmatprep.subr.mxu0 0.0
    %1515 = vmatpush1.msra.mxu0 0.0
    %1516 = vmatprep.subr.mxu0 0.0
    %1517 = vmatpush1.msra.mxu0 0.0
    %1518 = vmatprep.subr.mxu0 0.0
    %1519 = vmatpush1.msra.mxu0 0.0
    %1520 = vmatprep.subr.mxu0 0.0
    %1521 = vmatpush1.msra.mxu0 0.0
    %1522 = vmatprep.mubr.f32.mxu0 0.0
    %1523 = vmatmul.mubr.f32.gmra.mrb[0].mxu0 %v34
    %v1524 = vpop.f32.mrb[0].mxu0
    %v1525 = vadd.f32 0.0, %v1524
    %v1526 = vpop.f32.mrb[0].mxu0
    %1527 = vmatprep.mubr.f32.mxu0 0.0
    %1528 = vmatmul.mubr.f32.gmra.mrb[0].mxu0 %v37
    %v1529 = vpop.f32.mrb[0].mxu0
    %v1530 = vadd.f32 0.0, %v1529
    %v1531 = vpop.f32.mrb[0].mxu0
    %1532 = vdwg.mxu0
    %1533 = vmatprep.subr.mxu0 0.0
    %1534 = vmatpush1.msra.mxu0 %v1300
    %1535 = vmatprep.subr.mxu0 0.0
    %1536 = vmatpush1.msra.mxu0 %v1303
    %1537 = vmatprep.subr.mxu0 0.0
    %1538 = vmatpush1.msra.mxu0 0.0
    %1539 = vmatprep.subr.mxu0 0.0
    %1540 = vmatpush1.msra.mxu0 0.0
    %1541 = vmatprep.subr.mxu0 0.0
    %1542 = vmatpush1.msra.mxu0 0.0
    %1543 = vmatprep.subr.mxu0 0.0
    %1544 = vmatpush1.msra.mxu0 0.0
    %1545 = vmatprep.subr.mxu0 0.0
    %1546 = vmatpush1.msra.mxu0 0.0
    %1547 = vmatprep.subr.mxu0 0.0
    %1548 = vmatpush1.msra.mxu0 0.0
    %1549 = vmatprep.subr.mxu0 0.0
    %1550 = vmatpush1.msra.mxu0 0.0
    %1551 = vmatprep.subr.mxu0 0.0
    %1552 = vmatpush1.msra.mxu0 0.0
    %1553 = vmatprep.subr.mxu0 0.0
    %1554 = vmatpush1.msra.mxu0 0.0
    %1555 = vmatprep.subr.mxu0 0.0
    %1556 = vmatpush1.msra.mxu0 0.0
    %1557 = vmatprep.subr.mxu0 0.0
    %1558 = vmatpush1.msra.mxu0 0.0
    %1559 = vmatprep.subr.mxu0 0.0
    %1560 = vmatpush1.msra.mxu0 0.0
    %1561 = vmatprep.subr.mxu0 0.0
    %1562 = vmatpush1.msra.mxu0 0.0
    %1563 = vmatprep.subr.mxu0 0.0
    %1564 = vmatpush1.msra.mxu0 0.0
    %1565 = vmatprep.subr.mxu0 0.0
    %1566 = vmatpush1.msra.mxu0 0.0
    %1567 = vmatprep.subr.mxu0 0.0
    %1568 = vmatpush1.msra.mxu0 0.0
    %1569 = vmatprep.subr.mxu0 0.0
    %1570 = vmatpush1.msra.mxu0 0.0
    %1571 = vmatprep.subr.mxu0 0.0
    %1572 = vmatpush1.msra.mxu0 0.0
    %1573 = vmatprep.subr.mxu0 0.0
    %1574 = vmatpush1.msra.mxu0 0.0
    %1575 = vmatprep.subr.mxu0 0.0
    %1576 = vmatpush1.msra.mxu0 0.0
    %1577 = vmatprep.subr.mxu0 0.0
    %1578 = vmatpush1.msra.mxu0 0.0
    %1579 = vmatprep.subr.mxu0 0.0
    %1580 = vmatpush1.msra.mxu0 0.0
    %1581 = vmatprep.subr.mxu0 0.0
    %1582 = vmatpush1.msra.mxu0 0.0
    %1583 = vmatprep.subr.mxu0 0.0
    %1584 = vmatpush1.msra.mxu0 0.0
    %1585 = vmatprep.subr.mxu0 0.0
    %1586 = vmatpush1.msra.mxu0 0.0
    %1587 = vmatprep.subr.mxu0 0.0
    %1588 = vmatpush1.msra.mxu0 0.0
    %1589 = vmatprep.subr.mxu0 0.0
    %1590 = vmatpush1.msra.mxu0 0.0
    %1591 = vmatprep.subr.mxu0 0.0
    %1592 = vmatpush1.msra.mxu0 0.0
    %1593 = vmatprep.subr.mxu0 0.0
    %1594 = vmatpush1.msra.mxu0 0.0
    %1595 = vmatprep.subr.mxu0 0.0
    %1596 = vmatpush1.msra.mxu0 0.0
    %1597 = vmatprep.mubr.f32.mxu0 0.0
    %1598 = vmatmul.mubr.f32.gmra.mrb[0].mxu0 %v119
    %v1599 = vpop.f32.mrb[0].mxu0
    %v1600 = vadd.f32 0.0, %v1599
    %v1601 = vpop.f32.mrb[0].mxu0
    %1602 = vmatprep.mubr.f32.mxu0 0.0
    %1603 = vmatmul.mubr.f32.gmra.mrb[0].mxu0 %v122
    %v1604 = vpop.f32.mrb[0].mxu0
    %v1605 = vadd.f32 0.0, %v1604
    %v1606 = vpop.f32.mrb[0].mxu0
    %1607 = vdwg.mxu0
    %v1608 = vsub.f32 %v1525, %v1600
    %v1609 = vsub.f32 %v1530, %v1605
    %s1610 = scalar_lea.vmem %s0, 80
    %v1611 = vld [vmem:[%s1610] sm:$0xff]
    %v1612 = vld [vmem:[%s1610 + $0x8] sm:$0x1]
    %s1613 = scalar_lea.vmem %s1, 80
    %v1614 = vld [vmem:[%s1613] sm:$0xff]
    %v1615 = vld [vmem:[%s1613 + $0x8] sm:$0x1]
    %v1617 = vsel %vm39, %v1615, 0
    %1619 = vmatprep.subr.mxu0 0.0
    %1620 = vmatpush1.msra.mxu0 %v1614
    %1621 = vmatprep.subr.mxu0 0.0
    %1622 = vmatpush1.msra.mxu0 %v1617
    %1623 = vmatprep.subr.mxu0 0.0
    %1624 = vmatpush1.msra.mxu0 0.0
    %1625 = vmatprep.subr.mxu0 0.0
    %1626 = vmatpush1.msra.mxu0 0.0
    %1627 = vmatprep.subr.mxu0 0.0
    %1628 = vmatpush1.msra.mxu0 0.0
    %1629 = vmatprep.subr.mxu0 0.0
    %1630 = vmatpush1.msra.mxu0 0.0
    %1631 = vmatprep.subr.mxu0 0.0
    %1632 = vmatpush1.msra.mxu0 0.0
    %1633 = vmatprep.subr.mxu0 0.0
    %1634 = vmatpush1.msra.mxu0 0.0
    %1635 = vmatprep.subr.mxu0 0.0
    %1636 = vmatpush1.msra.mxu0 0.0
    %1637 = vmatprep.subr.mxu0 0.0
    %1638 = vmatpush1.msra.mxu0 0.0
    %1639 = vmatprep.subr.mxu0 0.0
    %1640 = vmatpush1.msra.mxu0 0.0
    %1641 = vmatprep.subr.mxu0 0.0
    %1642 = vmatpush1.msra.mxu0 0.0
    %1643 = vmatprep.subr.mxu0 0.0
    %1644 = vmatpush1.msra.mxu0 0.0
    %1645 = vmatprep.subr.mxu0 0.0
    %1646 = vmatpush1.msra.mxu0 0.0
    %1647 = vmatprep.subr.mxu0 0.0
    %1648 = vmatpush1.msra.mxu0 0.0
    %1649 = vmatprep.subr.mxu0 0.0
    %1650 = vmatpush1.msra.mxu0 0.0
    %1651 = vmatprep.subr.mxu0 0.0
    %1652 = vmatpush1.msra.mxu0 0.0
    %1653 = vmatprep.subr.mxu0 0.0
    %1654 = vmatpush1.msra.mxu0 0.0
    %1655 = vmatprep.subr.mxu0 0.0
    %1656 = vmatpush1.msra.mxu0 0.0
    %1657 = vmatprep.subr.mxu0 0.0
    %1658 = vmatpush1.msra.mxu0 0.0
    %1659 = vmatprep.subr.mxu0 0.0
    %1660 = vmatpush1.msra.mxu0 0.0
    %1661 = vmatprep.subr.mxu0 0.0
    %1662 = vmatpush1.msra.mxu0 0.0
    %1663 = vmatprep.subr.mxu0 0.0
    %1664 = vmatpush1.msra.mxu0 0.0
    %1665 = vmatprep.subr.mxu0 0.0
    %1666 = vmatpush1.msra.mxu0 0.0
    %1667 = vmatprep.subr.mxu0 0.0
    %1668 = vmatpush1.msra.mxu0 0.0
    %1669 = vmatprep.subr.mxu0 0.0
    %1670 = vmatpush1.msra.mxu0 0.0
    %1671 = vmatprep.subr.mxu0 0.0
    %1672 = vmatpush1.msra.mxu0 0.0
    %1673 = vmatprep.subr.mxu0 0.0
    %1674 = vmatpush1.msra.mxu0 0.0
    %1675 = vmatprep.subr.mxu0 0.0
    %1676 = vmatpush1.msra.mxu0 0.0
    %1677 = vmatprep.subr.mxu0 0.0
    %1678 = vmatpush1.msra.mxu0 0.0
    %1679 = vmatprep.subr.mxu0 0.0
    %1680 = vmatpush1.msra.mxu0 0.0
    %1681 = vmatprep.subr.mxu0 0.0
    %1682 = vmatpush1.msra.mxu0 0.0
    %1683 = vmatprep.mubr.f32.mxu0 0.0
    %1684 = vmatmul.mubr.f32.gmra.mrb[0].mxu0 %v34
    %v1685 = vpop.f32.mrb[0].mxu0
    %v1686 = vadd.f32 0.0, %v1685
    %v1687 = vpop.f32.mrb[0].mxu0
    %1688 = vmatprep.mubr.f32.mxu0 0.0
    %1689 = vmatmul.mubr.f32.gmra.mrb[0].mxu0 %v37
    %v1690 = vpop.f32.mrb[0].mxu0
    %v1691 = vadd.f32 0.0, %v1690
    %v1692 = vpop.f32.mrb[0].mxu0
    %1693 = vdwg.mxu0
    %v1695 = vsel %vm39, %v1612, 0
    %1697 = vmatprep.subr.mxu0 0.0
    %1698 = vmatpush1.msra.mxu0 %v1611
    %1699 = vmatprep.subr.mxu0 0.0
    %1700 = vmatpush1.msra.mxu0 %v1695
    %1701 = vmatprep.subr.mxu0 0.0
    %1702 = vmatpush1.msra.mxu0 0.0
    %1703 = vmatprep.subr.mxu0 0.0
    %1704 = vmatpush1.msra.mxu0 0.0
    %1705 = vmatprep.subr.mxu0 0.0
    %1706 = vmatpush1.msra.mxu0 0.0
    %1707 = vmatprep.subr.mxu0 0.0
    %1708 = vmatpush1.msra.mxu0 0.0
    %1709 = vmatprep.subr.mxu0 0.0
    %1710 = vmatpush1.msra.mxu0 0.0
    %1711 = vmatprep.subr.mxu0 0.0
    %1712 = vmatpush1.msra.mxu0 0.0
    %1713 = vmatprep.subr.mxu0 0.0
    %1714 = vmatpush1.msra.mxu0 0.0
    %1715 = vmatprep.subr.mxu0 0.0
    %1716 = vmatpush1.msra.mxu0 0.0
    %1717 = vmatprep.subr.mxu0 0.0
    %1718 = vmatpush1.msra.mxu0 0.0
    %1719 = vmatprep.subr.mxu0 0.0
    %1720 = vmatpush1.msra.mxu0 0.0
    %1721 = vmatprep.subr.mxu0 0.0
    %1722 = vmatpush1.msra.mxu0 0.0
    %1723 = vmatprep.subr.mxu0 0.0
    %1724 = vmatpush1.msra.mxu0 0.0
    %1725 = vmatprep.subr.mxu0 0.0
    %1726 = vmatpush1.msra.mxu0 0.0
    %1727 = vmatprep.subr.mxu0 0.0
    %1728 = vmatpush1.msra.mxu0 0.0
    %1729 = vmatprep.subr.mxu0 0.0
    %1730 = vmatpush1.msra.mxu0 0.0
    %1731 = vmatprep.subr.mxu0 0.0
    %1732 = vmatpush1.msra.mxu0 0.0
    %1733 = vmatprep.subr.mxu0 0.0
    %1734 = vmatpush1.msra.mxu0 0.0
    %1735 = vmatprep.subr.mxu0 0.0
    %1736 = vmatpush1.msra.mxu0 0.0
    %1737 = vmatprep.subr.mxu0 0.0
    %1738 = vmatpush1.msra.mxu0 0.0
    %1739 = vmatprep.subr.mxu0 0.0
    %1740 = vmatpush1.msra.mxu0 0.0
    %1741 = vmatprep.subr.mxu0 0.0
    %1742 = vmatpush1.msra.mxu0 0.0
    %1743 = vmatprep.subr.mxu0 0.0
    %1744 = vmatpush1.msra.mxu0 0.0
    %1745 = vmatprep.subr.mxu0 0.0
    %1746 = vmatpush1.msra.mxu0 0.0
    %1747 = vmatprep.subr.mxu0 0.0
    %1748 = vmatpush1.msra.mxu0 0.0
    %1749 = vmatprep.subr.mxu0 0.0
    %1750 = vmatpush1.msra.mxu0 0.0
    %1751 = vmatprep.subr.mxu0 0.0
    %1752 = vmatpush1.msra.mxu0 0.0
    %1753 = vmatprep.subr.mxu0 0.0
    %1754 = vmatpush1.msra.mxu0 0.0
    %1755 = vmatprep.subr.mxu0 0.0
    %1756 = vmatpush1.msra.mxu0 0.0
    %1757 = vmatprep.subr.mxu0 0.0
    %1758 = vmatpush1.msra.mxu0 0.0
    %1759 = vmatprep.subr.mxu0 0.0
    %1760 = vmatpush1.msra.mxu0 0.0
    %1761 = vmatprep.mubr.f32.mxu0 0.0
    %1762 = vmatmul.mubr.f32.gmra.mrb[0].mxu0 %v119
    %v1763 = vpop.f32.mrb[0].mxu0
    %v1764 = vadd.f32 %v1686, %v1763
    %v1765 = vpop.f32.mrb[0].mxu0
    %1766 = vmatprep.mubr.f32.mxu0 0.0
    %1767 = vmatmul.mubr.f32.gmra.mrb[0].mxu0 %v122
    %v1768 = vpop.f32.mrb[0].mxu0
    %v1769 = vadd.f32 %v1691, %v1768
    %v1770 = vpop.f32.mrb[0].mxu0
    %1771 = vdwg.mxu0
    %1772 = vmatprep.subr.mxu0 0.0
    %1773 = vmatpush1.msra.mxu0 %v1611
    %1774 = vmatprep.subr.mxu0 0.0
    %1775 = vmatpush1.msra.mxu0 %v1695
    %1776 = vmatprep.subr.mxu0 0.0
    %1777 = vmatpush1.msra.mxu0 0.0
    %1778 = vmatprep.subr.mxu0 0.0
    %1779 = vmatpush1.msra.mxu0 0.0
    %1780 = vmatprep.subr.mxu0 0.0
    %1781 = vmatpush1.msra.mxu0 0.0
    %1782 = vmatprep.subr.mxu0 0.0
    %1783 = vmatpush1.msra.mxu0 0.0
    %1784 = vmatprep.subr.mxu0 0.0
    %1785 = vmatpush1.msra.mxu0 0.0
    %1786 = vmatprep.subr.mxu0 0.0
    %1787 = vmatpush1.msra.mxu0 0.0
    %1788 = vmatprep.subr.mxu0 0.0
    %1789 = vmatpush1.msra.mxu0 0.0
    %1790 = vmatprep.subr.mxu0 0.0
    %1791 = vmatpush1.msra.mxu0 0.0
    %1792 = vmatprep.subr.mxu0 0.0
    %1793 = vmatpush1.msra.mxu0 0.0
    %1794 = vmatprep.subr.mxu0 0.0
    %1795 = vmatpush1.msra.mxu0 0.0
    %1796 = vmatprep.subr.mxu0 0.0
    %1797 = vmatpush1.msra.mxu0 0.0
    %1798 = vmatprep.subr.mxu0 0.0
    %1799 = vmatpush1.msra.mxu0 0.0
    %1800 = vmatprep.subr.mxu0 0.0
    %1801 = vmatpush1.msra.mxu0 0.0
    %1802 = vmatprep.subr.mxu0 0.0
    %1803 = vmatpush1.msra.mxu0 0.0
    %1804 = vmatprep.subr.mxu0 0.0
    %1805 = vmatpush1.msra.mxu0 0.0
    %1806 = vmatprep.subr.mxu0 0.0
    %1807 = vmatpush1.msra.mxu0 0.0
    %1808 = vmatprep.subr.mxu0 0.0
    %1809 = vmatpush1.msra.mxu0 0.0
    %1810 = vmatprep.subr.mxu0 0.0
    %1811 = vmatpush1.msra.mxu0 0.0
    %1812 = vmatprep.subr.mxu0 0.0
    %1813 = vmatpush1.msra.mxu0 0.0
    %1814 = vmatprep.subr.mxu0 0.0
    %1815 = vmatpush1.msra.mxu0 0.0
    %1816 = vmatprep.subr.mxu0 0.0
    %1817 = vmatpush1.msra.mxu0 0.0
    %1818 = vmatprep.subr.mxu0 0.0
    %1819 = vmatpush1.msra.mxu0 0.0
    %1820 = vmatprep.subr.mxu0 0.0
    %1821 = vmatpush1.msra.mxu0 0.0
    %1822 = vmatprep.subr.mxu0 0.0
    %1823 = vmatpush1.msra.mxu0 0.0
    %1824 = vmatprep.subr.mxu0 0.0
    %1825 = vmatpush1.msra.mxu0 0.0
    %1826 = vmatprep.subr.mxu0 0.0
    %1827 = vmatpush1.msra.mxu0 0.0
    %1828 = vmatprep.subr.mxu0 0.0
    %1829 = vmatpush1.msra.mxu0 0.0
    %1830 = vmatprep.subr.mxu0 0.0
    %1831 = vmatpush1.msra.mxu0 0.0
    %1832 = vmatprep.subr.mxu0 0.0
    %1833 = vmatpush1.msra.mxu0 0.0
    %1834 = vmatprep.subr.mxu0 0.0
    %1835 = vmatpush1.msra.mxu0 0.0
    %1836 = vmatprep.mubr.f32.mxu0 0.0
    %1837 = vmatmul.mubr.f32.gmra.mrb[0].mxu0 %v34
    %v1838 = vpop.f32.mrb[0].mxu0
    %v1839 = vadd.f32 0.0, %v1838
    %v1840 = vpop.f32.mrb[0].mxu0
    %1841 = vmatprep.mubr.f32.mxu0 0.0
    %1842 = vmatmul.mubr.f32.gmra.mrb[0].mxu0 %v37
    %v1843 = vpop.f32.mrb[0].mxu0
    %v1844 = vadd.f32 0.0, %v1843
    %v1845 = vpop.f32.mrb[0].mxu0
    %1846 = vdwg.mxu0
    %1847 = vmatprep.subr.mxu0 0.0
    %1848 = vmatpush1.msra.mxu0 %v1614
    %1849 = vmatprep.subr.mxu0 0.0
    %1850 = vmatpush1.msra.mxu0 %v1617
    %1851 = vmatprep.subr.mxu0 0.0
    %1852 = vmatpush1.msra.mxu0 0.0
    %1853 = vmatprep.subr.mxu0 0.0
    %1854 = vmatpush1.msra.mxu0 0.0
    %1855 = vmatprep.subr.mxu0 0.0
    %1856 = vmatpush1.msra.mxu0 0.0
    %1857 = vmatprep.subr.mxu0 0.0
    %1858 = vmatpush1.msra.mxu0 0.0
    %1859 = vmatprep.subr.mxu0 0.0
    %1860 = vmatpush1.msra.mxu0 0.0
    %1861 = vmatprep.subr.mxu0 0.0
    %1862 = vmatpush1.msra.mxu0 0.0
    %1863 = vmatprep.subr.mxu0 0.0
    %1864 = vmatpush1.msra.mxu0 0.0
    %1865 = vmatprep.subr.mxu0 0.0
    %1866 = vmatpush1.msra.mxu0 0.0
    %1867 = vmatprep.subr.mxu0 0.0
    %1868 = vmatpush1.msra.mxu0 0.0
    %1869 = vmatprep.subr.mxu0 0.0
    %1870 = vmatpush1.msra.mxu0 0.0
    %1871 = vmatprep.subr.mxu0 0.0
    %1872 = vmatpush1.msra.mxu0 0.0
    %1873 = vmatprep.subr.mxu0 0.0
    %1874 = vmatpush1.msra.mxu0 0.0
    %1875 = vmatprep.subr.mxu0 0.0
    %1876 = vmatpush1.msra.mxu0 0.0
    %1877 = vmatprep.subr.mxu0 0.0
    %1878 = vmatpush1.msra.mxu0 0.0
    %1879 = vmatprep.subr.mxu0 0.0
    %1880 = vmatpush1.msra.mxu0 0.0
    %1881 = vmatprep.subr.mxu0 0.0
    %1882 = vmatpush1.msra.mxu0 0.0
    %1883 = vmatprep.subr.mxu0 0.0
    %1884 = vmatpush1.msra.mxu0 0.0
    %1885 = vmatprep.subr.mxu0 0.0
    %1886 = vmatpush1.msra.mxu0 0.0
    %1887 = vmatprep.subr.mxu0 0.0
    %1888 = vmatpush1.msra.mxu0 0.0
    %1889 = vmatprep.subr.mxu0 0.0
    %1890 = vmatpush1.msra.mxu0 0.0
    %1891 = vmatprep.subr.mxu0 0.0
    %1892 = vmatpush1.msra.mxu0 0.0
    %1893 = vmatprep.subr.mxu0 0.0
    %1894 = vmatpush1.msra.mxu0 0.0
    %1895 = vmatprep.subr.mxu0 0.0
    %1896 = vmatpush1.msra.mxu0 0.0
    %1897 = vmatprep.subr.mxu0 0.0
    %1898 = vmatpush1.msra.mxu0 0.0
    %1899 = vmatprep.subr.mxu0 0.0
    %1900 = vmatpush1.msra.mxu0 0.0
    %1901 = vmatprep.subr.mxu0 0.0
    %1902 = vmatpush1.msra.mxu0 0.0
    %1903 = vmatprep.subr.mxu0 0.0
    %1904 = vmatpush1.msra.mxu0 0.0
    %1905 = vmatprep.subr.mxu0 0.0
    %1906 = vmatpush1.msra.mxu0 0.0
    %1907 = vmatprep.subr.mxu0 0.0
    %1908 = vmatpush1.msra.mxu0 0.0
    %1909 = vmatprep.subr.mxu0 0.0
    %1910 = vmatpush1.msra.mxu0 0.0
    %1911 = vmatprep.mubr.f32.mxu0 0.0
    %1912 = vmatmul.mubr.f32.gmra.mrb[0].mxu0 %v119
    %v1913 = vpop.f32.mrb[0].mxu0
    %v1914 = vadd.f32 0.0, %v1913
    %v1915 = vpop.f32.mrb[0].mxu0
    %1916 = vmatprep.mubr.f32.mxu0 0.0
    %1917 = vmatmul.mubr.f32.gmra.mrb[0].mxu0 %v122
    %v1918 = vpop.f32.mrb[0].mxu0
    %v1919 = vadd.f32 0.0, %v1918
    %v1920 = vpop.f32.mrb[0].mxu0
    %1921 = vdwg.mxu0
    %v1922 = vsub.f32 %v1839, %v1914
    %v1923 = vsub.f32 %v1844, %v1919
    %s1924 = scalar_lea.vmem %s0, 96
    %v1925 = vld [vmem:[%s1924] sm:$0xff]
    %v1926 = vld [vmem:[%s1924 + $0x8] sm:$0x1]
    %s1927 = scalar_lea.vmem %s1, 96
    %v1928 = vld [vmem:[%s1927] sm:$0xff]
    %v1929 = vld [vmem:[%s1927 + $0x8] sm:$0x1]
    %v1931 = vsel %vm39, %v1929, 0
    %1933 = vmatprep.subr.mxu0 0.0
    %1934 = vmatpush1.msra.mxu0 %v1928
    %1935 = vmatprep.subr.mxu0 0.0
    %1936 = vmatpush1.msra.mxu0 %v1931
    %1937 = vmatprep.subr.mxu0 0.0
    %1938 = vmatpush1.msra.mxu0 0.0
    %1939 = vmatprep.subr.mxu0 0.0
    %1940 = vmatpush1.msra.mxu0 0.0
    %1941 = vmatprep.subr.mxu0 0.0
    %1942 = vmatpush1.msra.mxu0 0.0
    %1943 = vmatprep.subr.mxu0 0.0
    %1944 = vmatpush1.msra.mxu0 0.0
    %1945 = vmatprep.subr.mxu0 0.0
    %1946 = vmatpush1.msra.mxu0 0.0
    %1947 = vmatprep.subr.mxu0 0.0
    %1948 = vmatpush1.msra.mxu0 0.0
    %1949 = vmatprep.subr.mxu0 0.0
    %1950 = vmatpush1.msra.mxu0 0.0
    %1951 = vmatprep.subr.mxu0 0.0
    %1952 = vmatpush1.msra.mxu0 0.0
    %1953 = vmatprep.subr.mxu0 0.0
    %1954 = vmatpush1.msra.mxu0 0.0
    %1955 = vmatprep.subr.mxu0 0.0
    %1956 = vmatpush1.msra.mxu0 0.0
    %1957 = vmatprep.subr.mxu0 0.0
    %1958 = vmatpush1.msra.mxu0 0.0
    %1959 = vmatprep.subr.mxu0 0.0
    %1960 = vmatpush1.msra.mxu0 0.0
    %1961 = vmatprep.subr.mxu0 0.0
    %1962 = vmatpush1.msra.mxu0 0.0
    %1963 = vmatprep.subr.mxu0 0.0
    %1964 = vmatpush1.msra.mxu0 0.0
    %1965 = vmatprep.subr.mxu0 0.0
    %1966 = vmatpush1.msra.mxu0 0.0
    %1967 = vmatprep.subr.mxu0 0.0
    %1968 = vmatpush1.msra.mxu0 0.0
    %1969 = vmatprep.subr.mxu0 0.0
    %1970 = vmatpush1.msra.mxu0 0.0
    %1971 = vmatprep.subr.mxu0 0.0
    %1972 = vmatpush1.msra.mxu0 0.0
    %1973 = vmatprep.subr.mxu0 0.0
    %1974 = vmatpush1.msra.mxu0 0.0
    %1975 = vmatprep.subr.mxu0 0.0
    %1976 = vmatpush1.msra.mxu0 0.0
    %1977 = vmatprep.subr.mxu0 0.0
    %1978 = vmatpush1.msra.mxu0 0.0
    %1979 = vmatprep.subr.mxu0 0.0
    %1980 = vmatpush1.msra.mxu0 0.0
    %1981 = vmatprep.subr.mxu0 0.0
    %1982 = vmatpush1.msra.mxu0 0.0
    %1983 = vmatprep.subr.mxu0 0.0
    %1984 = vmatpush1.msra.mxu0 0.0
    %1985 = vmatprep.subr.mxu0 0.0
    %1986 = vmatpush1.msra.mxu0 0.0
    %1987 = vmatprep.subr.mxu0 0.0
    %1988 = vmatpush1.msra.mxu0 0.0
    %1989 = vmatprep.subr.mxu0 0.0
    %1990 = vmatpush1.msra.mxu0 0.0
    %1991 = vmatprep.subr.mxu0 0.0
    %1992 = vmatpush1.msra.mxu0 0.0
    %1993 = vmatprep.subr.mxu0 0.0
    %1994 = vmatpush1.msra.mxu0 0.0
    %1995 = vmatprep.subr.mxu0 0.0
    %1996 = vmatpush1.msra.mxu0 0.0
    %1997 = vmatprep.mubr.f32.mxu0 0.0
    %1998 = vmatmul.mubr.f32.gmra.mrb[0].mxu0 %v34
    %v1999 = vpop.f32.mrb[0].mxu0
    %v2000 = vadd.f32 0.0, %v1999
    %v2001 = vpop.f32.mrb[0].mxu0
    %2002 = vmatprep.mubr.f32.mxu0 0.0
    %2003 = vmatmul.mubr.f32.gmra.mrb[0].mxu0 %v37
    %v2004 = vpop.f32.mrb[0].mxu0
    %v2005 = vadd.f32 0.0, %v2004
    %v2006 = vpop.f32.mrb[0].mxu0
    %2007 = vdwg.mxu0
    %v2009 = vsel %vm39, %v1926, 0
    %2011 = vmatprep.subr.mxu0 0.0
    %2012 = vmatpush1.msra.mxu0 %v1925
    %2013 = vmatprep.subr.mxu0 0.0
    %2014 = vmatpush1.msra.mxu0 %v2009
    %2015 = vmatprep.subr.mxu0 0.0
    %2016 = vmatpush1.msra.mxu0 0.0
    %2017 = vmatprep.subr.mxu0 0.0
    %2018 = vmatpush1.msra.mxu0 0.0
    %2019 = vmatprep.subr.mxu0 0.0
    %2020 = vmatpush1.msra.mxu0 0.0
    %2021 = vmatprep.subr.mxu0 0.0
    %2022 = vmatpush1.msra.mxu0 0.0
    %2023 = vmatprep.subr.mxu0 0.0
    %2024 = vmatpush1.msra.mxu0 0.0
    %2025 = vmatprep.subr.mxu0 0.0
    %2026 = vmatpush1.msra.mxu0 0.0
    %2027 = vmatprep.subr.mxu0 0.0
    %2028 = vmatpush1.msra.mxu0 0.0
    %2029 = vmatprep.subr.mxu0 0.0
    %2030 = vmatpush1.msra.mxu0 0.0
    %2031 = vmatprep.subr.mxu0 0.0
    %2032 = vmatpush1.msra.mxu0 0.0
    %2033 = vmatprep.subr.mxu0 0.0
    %2034 = vmatpush1.msra.mxu0 0.0
    %2035 = vmatprep.subr.mxu0 0.0
    %2036 = vmatpush1.msra.mxu0 0.0
    %2037 = vmatprep.subr.mxu0 0.0
    %2038 = vmatpush1.msra.mxu0 0.0
    %2039 = vmatprep.subr.mxu0 0.0
    %2040 = vmatpush1.msra.mxu0 0.0
    %2041 = vmatprep.subr.mxu0 0.0
    %2042 = vmatpush1.msra.mxu0 0.0
    %2043 = vmatprep.subr.mxu0 0.0
    %2044 = vmatpush1.msra.mxu0 0.0
    %2045 = vmatprep.subr.mxu0 0.0
    %2046 = vmatpush1.msra.mxu0 0.0
    %2047 = vmatprep.subr.mxu0 0.0
    %2048 = vmatpush1.msra.mxu0 0.0
    %2049 = vmatprep.subr.mxu0 0.0
    %2050 = vmatpush1.msra.mxu0 0.0
    %2051 = vmatprep.subr.mxu0 0.0
    %2052 = vmatpush1.msra.mxu0 0.0
    %2053 = vmatprep.subr.mxu0 0.0
    %2054 = vmatpush1.msra.mxu0 0.0
    %2055 = vmatprep.subr.mxu0 0.0
    %2056 = vmatpush1.msra.mxu0 0.0
    %2057 = vmatprep.subr.mxu0 0.0
    %2058 = vmatpush1.msra.mxu0 0.0
    %2059 = vmatprep.subr.mxu0 0.0
    %2060 = vmatpush1.msra.mxu0 0.0
    %2061 = vmatprep.subr.mxu0 0.0
    %2062 = vmatpush1.msra.mxu0 0.0
    %2063 = vmatprep.subr.mxu0 0.0
    %2064 = vmatpush1.msra.mxu0 0.0
    %2065 = vmatprep.subr.mxu0 0.0
    %2066 = vmatpush1.msra.mxu0 0.0
    %2067 = vmatprep.subr.mxu0 0.0
    %2068 = vmatpush1.msra.mxu0 0.0
    %2069 = vmatprep.subr.mxu0 0.0
    %2070 = vmatpush1.msra.mxu0 0.0
    %2071 = vmatprep.subr.mxu0 0.0
    %2072 = vmatpush1.msra.mxu0 0.0
    %2073 = vmatprep.subr.mxu0 0.0
    %2074 = vmatpush1.msra.mxu0 0.0
    %2075 = vmatprep.mubr.f32.mxu0 0.0
    %2076 = vmatmul.mubr.f32.gmra.mrb[0].mxu0 %v119
    %v2077 = vpop.f32.mrb[0].mxu0
    %v2078 = vadd.f32 %v2000, %v2077
    %v2079 = vpop.f32.mrb[0].mxu0
    %2080 = vmatprep.mubr.f32.mxu0 0.0
    %2081 = vmatmul.mubr.f32.gmra.mrb[0].mxu0 %v122
    %v2082 = vpop.f32.mrb[0].mxu0
    %v2083 = vadd.f32 %v2005, %v2082
    %v2084 = vpop.f32.mrb[0].mxu0
    %2085 = vdwg.mxu0
    %2086 = vmatprep.subr.mxu0 0.0
    %2087 = vmatpush1.msra.mxu0 %v1925
    %2088 = vmatprep.subr.mxu0 0.0
    %2089 = vmatpush1.msra.mxu0 %v2009
    %2090 = vmatprep.subr.mxu0 0.0
    %2091 = vmatpush1.msra.mxu0 0.0
    %2092 = vmatprep.subr.mxu0 0.0
    %2093 = vmatpush1.msra.mxu0 0.0
    %2094 = vmatprep.subr.mxu0 0.0
    %2095 = vmatpush1.msra.mxu0 0.0
    %2096 = vmatprep.subr.mxu0 0.0
    %2097 = vmatpush1.msra.mxu0 0.0
    %2098 = vmatprep.subr.mxu0 0.0
    %2099 = vmatpush1.msra.mxu0 0.0
    %2100 = vmatprep.subr.mxu0 0.0
    %2101 = vmatpush1.msra.mxu0 0.0
    %2102 = vmatprep.subr.mxu0 0.0
    %2103 = vmatpush1.msra.mxu0 0.0
    %2104 = vmatprep.subr.mxu0 0.0
    %2105 = vmatpush1.msra.mxu0 0.0
    %2106 = vmatprep.subr.mxu0 0.0
    %2107 = vmatpush1.msra.mxu0 0.0
    %2108 = vmatprep.subr.mxu0 0.0
    %2109 = vmatpush1.msra.mxu0 0.0
    %2110 = vmatprep.subr.mxu0 0.0
    %2111 = vmatpush1.msra.mxu0 0.0
    %2112 = vmatprep.subr.mxu0 0.0
    %2113 = vmatpush1.msra.mxu0 0.0
    %2114 = vmatprep.subr.mxu0 0.0
    %2115 = vmatpush1.msra.mxu0 0.0
    %2116 = vmatprep.subr.mxu0 0.0
    %2117 = vmatpush1.msra.mxu0 0.0
    %2118 = vmatprep.subr.mxu0 0.0
    %2119 = vmatpush1.msra.mxu0 0.0
    %2120 = vmatprep.subr.mxu0 0.0
    %2121 = vmatpush1.msra.mxu0 0.0
    %2122 = vmatprep.subr.mxu0 0.0
    %2123 = vmatpush1.msra.mxu0 0.0
    %2124 = vmatprep.subr.mxu0 0.0
    %2125 = vmatpush1.msra.mxu0 0.0
    %2126 = vmatprep.subr.mxu0 0.0
    %2127 = vmatpush1.msra.mxu0 0.0
    %2128 = vmatprep.subr.mxu0 0.0
    %2129 = vmatpush1.msra.mxu0 0.0
    %2130 = vmatprep.subr.mxu0 0.0
    %2131 = vmatpush1.msra.mxu0 0.0
    %2132 = vmatprep.subr.mxu0 0.0
    %2133 = vmatpush1.msra.mxu0 0.0
    %2134 = vmatprep.subr.mxu0 0.0
    %2135 = vmatpush1.msra.mxu0 0.0
    %2136 = vmatprep.subr.mxu0 0.0
    %2137 = vmatpush1.msra.mxu0 0.0
    %2138 = vmatprep.subr.mxu0 0.0
    %2139 = vmatpush1.msra.mxu0 0.0
    %2140 = vmatprep.subr.mxu0 0.0
    %2141 = vmatpush1.msra.mxu0 0.0
    %2142 = vmatprep.subr.mxu0 0.0
    %2143 = vmatpush1.msra.mxu0 0.0
    %2144 = vmatprep.subr.mxu0 0.0
    %2145 = vmatpush1.msra.mxu0 0.0
    %2146 = vmatprep.subr.mxu0 0.0
    %2147 = vmatpush1.msra.mxu0 0.0
    %2148 = vmatprep.subr.mxu0 0.0
    %2149 = vmatpush1.msra.mxu0 0.0
    %2150 = vmatprep.mubr.f32.mxu0 0.0
    %2151 = vmatmul.mubr.f32.gmra.mrb[0].mxu0 %v34
    %v2152 = vpop.f32.mrb[0].mxu0
    %v2153 = vadd.f32 0.0, %v2152
    %v2154 = vpop.f32.mrb[0].mxu0
    %2155 = vmatprep.mubr.f32.mxu0 0.0
    %2156 = vmatmul.mubr.f32.gmra.mrb[0].mxu0 %v37
    %v2157 = vpop.f32.mrb[0].mxu0
    %v2158 = vadd.f32 0.0, %v2157
    %v2159 = vpop.f32.mrb[0].mxu0
    %2160 = vdwg.mxu0
    %2161 = vmatprep.subr.mxu0 0.0
    %2162 = vmatpush1.msra.mxu0 %v1928
    %2163 = vmatprep.subr.mxu0 0.0
    %2164 = vmatpush1.msra.mxu0 %v1931
    %2165 = vmatprep.subr.mxu0 0.0
    %2166 = vmatpush1.msra.mxu0 0.0
    %2167 = vmatprep.subr.mxu0 0.0
    %2168 = vmatpush1.msra.mxu0 0.0
    %2169 = vmatprep.subr.mxu0 0.0
    %2170 = vmatpush1.msra.mxu0 0.0
    %2171 = vmatprep.subr.mxu0 0.0
    %2172 = vmatpush1.msra.mxu0 0.0
    %2173 = vmatprep.subr.mxu0 0.0
    %2174 = vmatpush1.msra.mxu0 0.0
    %2175 = vmatprep.subr.mxu0 0.0
    %2176 = vmatpush1.msra.mxu0 0.0
    %2177 = vmatprep.subr.mxu0 0.0
    %2178 = vmatpush1.msra.mxu0 0.0
    %2179 = vmatprep.subr.mxu0 0.0
    %2180 = vmatpush1.msra.mxu0 0.0
    %2181 = vmatprep.subr.mxu0 0.0
    %2182 = vmatpush1.msra.mxu0 0.0
    %2183 = vmatprep.subr.mxu0 0.0
    %2184 = vmatpush1.msra.mxu0 0.0
    %2185 = vmatprep.subr.mxu0 0.0
    %2186 = vmatpush1.msra.mxu0 0.0
    %2187 = vmatprep.subr.mxu0 0.0
    %2188 = vmatpush1.msra.mxu0 0.0
    %2189 = vmatprep.subr.mxu0 0.0
    %2190 = vmatpush1.msra.mxu0 0.0
    %2191 = vmatprep.subr.mxu0 0.0
    %2192 = vmatpush1.msra.mxu0 0.0
    %2193 = vmatprep.subr.mxu0 0.0
    %2194 = vmatpush1.msra.mxu0 0.0
    %2195 = vmatprep.subr.mxu0 0.0
    %2196 = vmatpush1.msra.mxu0 0.0
    %2197 = vmatprep.subr.mxu0 0.0
    %2198 = vmatpush1.msra.mxu0 0.0
    %2199 = vmatprep.subr.mxu0 0.0
    %2200 = vmatpush1.msra.mxu0 0.0
    %2201 = vmatprep.subr.mxu0 0.0
    %2202 = vmatpush1.msra.mxu0 0.0
    %2203 = vmatprep.subr.mxu0 0.0
    %2204 = vmatpush1.msra.mxu0 0.0
    %2205 = vmatprep.subr.mxu0 0.0
    %2206 = vmatpush1.msra.mxu0 0.0
    %2207 = vmatprep.subr.mxu0 0.0
    %2208 = vmatpush1.msra.mxu0 0.0
    %2209 = vmatprep.subr.mxu0 0.0
    %2210 = vmatpush1.msra.mxu0 0.0
    %2211 = vmatprep.subr.mxu0 0.0
    %2212 = vmatpush1.msra.mxu0 0.0
    %2213 = vmatprep.subr.mxu0 0.0
    %2214 = vmatpush1.msra.mxu0 0.0
    %2215 = vmatprep.subr.mxu0 0.0
    %2216 = vmatpush1.msra.mxu0 0.0
    %2217 = vmatprep.subr.mxu0 0.0
    %2218 = vmatpush1.msra.mxu0 0.0
    %2219 = vmatprep.subr.mxu0 0.0
    %2220 = vmatpush1.msra.mxu0 0.0
    %2221 = vmatprep.subr.mxu0 0.0
    %2222 = vmatpush1.msra.mxu0 0.0
    %2223 = vmatprep.subr.mxu0 0.0
    %2224 = vmatpush1.msra.mxu0 0.0
    %2225 = vmatprep.mubr.f32.mxu0 0.0
    %2226 = vmatmul.mubr.f32.gmra.mrb[0].mxu0 %v119
    %v2227 = vpop.f32.mrb[0].mxu0
    %v2228 = vadd.f32 0.0, %v2227
    %v2229 = vpop.f32.mrb[0].mxu0
    %2230 = vmatprep.mubr.f32.mxu0 0.0
    %2231 = vmatmul.mubr.f32.gmra.mrb[0].mxu0 %v122
    %v2232 = vpop.f32.mrb[0].mxu0
    %v2233 = vadd.f32 0.0, %v2232
    %v2234 = vpop.f32.mrb[0].mxu0
    %2235 = vdwg.mxu0
    %v2236 = vsub.f32 %v2153, %v2228
    %v2237 = vsub.f32 %v2158, %v2233
    %s2238 = scalar_lea.vmem %s0, 112
    %v2239 = vld [vmem:[%s2238] sm:$0xff]
    %v2240 = vld [vmem:[%s2238 + $0x8] sm:$0x1]
    %s2241 = scalar_lea.vmem %s1, 112
    %v2242 = vld [vmem:[%s2241] sm:$0xff]
    %v2243 = vld [vmem:[%s2241 + $0x8] sm:$0x1]
    %v2245 = vsel %vm39, %v2243, 0
    %2247 = vmatprep.subr.mxu0 0.0
    %2248 = vmatpush1.msra.mxu0 %v2242
    %2249 = vmatprep.subr.mxu0 0.0
    %2250 = vmatpush1.msra.mxu0 %v2245
    %2251 = vmatprep.subr.mxu0 0.0
    %2252 = vmatpush1.msra.mxu0 0.0
    %2253 = vmatprep.subr.mxu0 0.0
    %2254 = vmatpush1.msra.mxu0 0.0
    %2255 = vmatprep.subr.mxu0 0.0
    %2256 = vmatpush1.msra.mxu0 0.0
    %2257 = vmatprep.subr.mxu0 0.0
    %2258 = vmatpush1.msra.mxu0 0.0
    %2259 = vmatprep.subr.mxu0 0.0
    %2260 = vmatpush1.msra.mxu0 0.0
    %2261 = vmatprep.subr.mxu0 0.0
    %2262 = vmatpush1.msra.mxu0 0.0
    %2263 = vmatprep.subr.mxu0 0.0
    %2264 = vmatpush1.msra.mxu0 0.0
    %2265 = vmatprep.subr.mxu0 0.0
    %2266 = vmatpush1.msra.mxu0 0.0
    %2267 = vmatprep.subr.mxu0 0.0
    %2268 = vmatpush1.msra.mxu0 0.0
    %2269 = vmatprep.subr.mxu0 0.0
    %2270 = vmatpush1.msra.mxu0 0.0
    %2271 = vmatprep.subr.mxu0 0.0
    %2272 = vmatpush1.msra.mxu0 0.0
    %2273 = vmatprep.subr.mxu0 0.0
    %2274 = vmatpush1.msra.mxu0 0.0
    %2275 = vmatprep.subr.mxu0 0.0
    %2276 = vmatpush1.msra.mxu0 0.0
    %2277 = vmatprep.subr.mxu0 0.0
    %2278 = vmatpush1.msra.mxu0 0.0
    %2279 = vmatprep.subr.mxu0 0.0
    %2280 = vmatpush1.msra.mxu0 0.0
    %2281 = vmatprep.subr.mxu0 0.0
    %2282 = vmatpush1.msra.mxu0 0.0
    %2283 = vmatprep.subr.mxu0 0.0
    %2284 = vmatpush1.msra.mxu0 0.0
    %2285 = vmatprep.subr.mxu0 0.0
    %2286 = vmatpush1.msra.mxu0 0.0
    %2287 = vmatprep.subr.mxu0 0.0
    %2288 = vmatpush1.msra.mxu0 0.0
    %2289 = vmatprep.subr.mxu0 0.0
    %2290 = vmatpush1.msra.mxu0 0.0
    %2291 = vmatprep.subr.mxu0 0.0
    %2292 = vmatpush1.msra.mxu0 0.0
    %2293 = vmatprep.subr.mxu0 0.0
    %2294 = vmatpush1.msra.mxu0 0.0
    %2295 = vmatprep.subr.mxu0 0.0
    %2296 = vmatpush1.msra.mxu0 0.0
    %2297 = vmatprep.subr.mxu0 0.0
    %2298 = vmatpush1.msra.mxu0 0.0
    %2299 = vmatprep.subr.mxu0 0.0
    %2300 = vmatpush1.msra.mxu0 0.0
    %2301 = vmatprep.subr.mxu0 0.0
    %2302 = vmatpush1.msra.mxu0 0.0
    %2303 = vmatprep.subr.mxu0 0.0
    %2304 = vmatpush1.msra.mxu0 0.0
    %2305 = vmatprep.subr.mxu0 0.0
    %2306 = vmatpush1.msra.mxu0 0.0
    %2307 = vmatprep.subr.mxu0 0.0
    %2308 = vmatpush1.msra.mxu0 0.0
    %2309 = vmatprep.subr.mxu0 0.0
    %2310 = vmatpush1.msra.mxu0 0.0
    %2311 = vmatprep.mubr.f32.mxu0 0.0
    %2312 = vmatmul.mubr.f32.gmra.mrb[0].mxu0 %v34
    %v2313 = vpop.f32.mrb[0].mxu0
    %v2314 = vadd.f32 0.0, %v2313
    %v2315 = vpop.f32.mrb[0].mxu0
    %2316 = vmatprep.mubr.f32.mxu0 0.0
    %2317 = vmatmul.mubr.f32.gmra.mrb[0].mxu0 %v37
    %v2318 = vpop.f32.mrb[0].mxu0
    %v2319 = vadd.f32 0.0, %v2318
    %v2320 = vpop.f32.mrb[0].mxu0
    %2321 = vdwg.mxu0
    %v2323 = vsel %vm39, %v2240, 0
    %2325 = vmatprep.subr.mxu0 0.0
    %2326 = vmatpush1.msra.mxu0 %v2239
    %2327 = vmatprep.subr.mxu0 0.0
    %2328 = vmatpush1.msra.mxu0 %v2323
    %2329 = vmatprep.subr.mxu0 0.0
    %2330 = vmatpush1.msra.mxu0 0.0
    %2331 = vmatprep.subr.mxu0 0.0
    %2332 = vmatpush1.msra.mxu0 0.0
    %2333 = vmatprep.subr.mxu0 0.0
    %2334 = vmatpush1.msra.mxu0 0.0
    %2335 = vmatprep.subr.mxu0 0.0
    %2336 = vmatpush1.msra.mxu0 0.0
    %2337 = vmatprep.subr.mxu0 0.0
    %2338 = vmatpush1.msra.mxu0 0.0
    %2339 = vmatprep.subr.mxu0 0.0
    %2340 = vmatpush1.msra.mxu0 0.0
    %2341 = vmatprep.subr.mxu0 0.0
    %2342 = vmatpush1.msra.mxu0 0.0
    %2343 = vmatprep.subr.mxu0 0.0
    %2344 = vmatpush1.msra.mxu0 0.0
    %2345 = vmatprep.subr.mxu0 0.0
    %2346 = vmatpush1.msra.mxu0 0.0
    %2347 = vmatprep.subr.mxu0 0.0
    %2348 = vmatpush1.msra.mxu0 0.0
    %2349 = vmatprep.subr.mxu0 0.0
    %2350 = vmatpush1.msra.mxu0 0.0
    %2351 = vmatprep.subr.mxu0 0.0
    %2352 = vmatpush1.msra.mxu0 0.0
    %2353 = vmatprep.subr.mxu0 0.0
    %2354 = vmatpush1.msra.mxu0 0.0
    %2355 = vmatprep.subr.mxu0 0.0
    %2356 = vmatpush1.msra.mxu0 0.0
    %2357 = vmatprep.subr.mxu0 0.0
    %2358 = vmatpush1.msra.mxu0 0.0
    %2359 = vmatprep.subr.mxu0 0.0
    %2360 = vmatpush1.msra.mxu0 0.0
    %2361 = vmatprep.subr.mxu0 0.0
    %2362 = vmatpush1.msra.mxu0 0.0
    %2363 = vmatprep.subr.mxu0 0.0
    %2364 = vmatpush1.msra.mxu0 0.0
    %2365 = vmatprep.subr.mxu0 0.0
    %2366 = vmatpush1.msra.mxu0 0.0
    %2367 = vmatprep.subr.mxu0 0.0
    %2368 = vmatpush1.msra.mxu0 0.0
    %2369 = vmatprep.subr.mxu0 0.0
    %2370 = vmatpush1.msra.mxu0 0.0
    %2371 = vmatprep.subr.mxu0 0.0
    %2372 = vmatpush1.msra.mxu0 0.0
    %2373 = vmatprep.subr.mxu0 0.0
    %2374 = vmatpush1.msra.mxu0 0.0
    %2375 = vmatprep.subr.mxu0 0.0
    %2376 = vmatpush1.msra.mxu0 0.0
    %2377 = vmatprep.subr.mxu0 0.0
    %2378 = vmatpush1.msra.mxu0 0.0
    %2379 = vmatprep.subr.mxu0 0.0
    %2380 = vmatpush1.msra.mxu0 0.0
    %2381 = vmatprep.subr.mxu0 0.0
    %2382 = vmatpush1.msra.mxu0 0.0
    %2383 = vmatprep.subr.mxu0 0.0
    %2384 = vmatpush1.msra.mxu0 0.0
    %2385 = vmatprep.subr.mxu0 0.0
    %2386 = vmatpush1.msra.mxu0 0.0
    %2387 = vmatprep.subr.mxu0 0.0
    %2388 = vmatpush1.msra.mxu0 0.0
    %2389 = vmatprep.mubr.f32.mxu0 0.0
    %2390 = vmatmul.mubr.f32.gmra.mrb[0].mxu0 %v119
    %v2391 = vpop.f32.mrb[0].mxu0
    %v2392 = vadd.f32 %v2314, %v2391
    %v2393 = vpop.f32.mrb[0].mxu0
    %2394 = vmatprep.mubr.f32.mxu0 0.0
    %2395 = vmatmul.mubr.f32.gmra.mrb[0].mxu0 %v122
    %v2396 = vpop.f32.mrb[0].mxu0
    %v2397 = vadd.f32 %v2319, %v2396
    %v2398 = vpop.f32.mrb[0].mxu0
    %2399 = vdwg.mxu0
    %2400 = vmatprep.subr.mxu0 0.0
    %2401 = vmatpush1.msra.mxu0 %v2239
    %2402 = vmatprep.subr.mxu0 0.0
    %2403 = vmatpush1.msra.mxu0 %v2323
    %2404 = vmatprep.subr.mxu0 0.0
    %2405 = vmatpush1.msra.mxu0 0.0
    %2406 = vmatprep.subr.mxu0 0.0
    %2407 = vmatpush1.msra.mxu0 0.0
    %2408 = vmatprep.subr.mxu0 0.0
    %2409 = vmatpush1.msra.mxu0 0.0
    %2410 = vmatprep.subr.mxu0 0.0
    %2411 = vmatpush1.msra.mxu0 0.0
    %2412 = vmatprep.subr.mxu0 0.0
    %2413 = vmatpush1.msra.mxu0 0.0
    %2414 = vmatprep.subr.mxu0 0.0
    %2415 = vmatpush1.msra.mxu0 0.0
    %2416 = vmatprep.subr.mxu0 0.0
    %2417 = vmatpush1.msra.mxu0 0.0
    %2418 = vmatprep.subr.mxu0 0.0
    %2419 = vmatpush1.msra.mxu0 0.0
    %2420 = vmatprep.subr.mxu0 0.0
    %2421 = vmatpush1.msra.mxu0 0.0
    %2422 = vmatprep.subr.mxu0 0.0
    %2423 = vmatpush1.msra.mxu0 0.0
    %2424 = vmatprep.subr.mxu0 0.0
    %2425 = vmatpush1.msra.mxu0 0.0
    %2426 = vmatprep.subr.mxu0 0.0
    %2427 = vmatpush1.msra.mxu0 0.0
    %2428 = vmatprep.subr.mxu0 0.0
    %2429 = vmatpush1.msra.mxu0 0.0
    %2430 = vmatprep.subr.mxu0 0.0
    %2431 = vmatpush1.msra.mxu0 0.0
    %2432 = vmatprep.subr.mxu0 0.0
    %2433 = vmatpush1.msra.mxu0 0.0
    %2434 = vmatprep.subr.mxu0 0.0
    %2435 = vmatpush1.msra.mxu0 0.0
    %2436 = vmatprep.subr.mxu0 0.0
    %2437 = vmatpush1.msra.mxu0 0.0
    %2438 = vmatprep.subr.mxu0 0.0
    %2439 = vmatpush1.msra.mxu0 0.0
    %2440 = vmatprep.subr.mxu0 0.0
    %2441 = vmatpush1.msra.mxu0 0.0
    %2442 = vmatprep.subr.mxu0 0.0
    %2443 = vmatpush1.msra.mxu0 0.0
    %2444 = vmatprep.subr.mxu0 0.0
    %2445 = vmatpush1.msra.mxu0 0.0
    %2446 = vmatprep.subr.mxu0 0.0
    %2447 = vmatpush1.msra.mxu0 0.0
    %2448 = vmatprep.subr.mxu0 0.0
    %2449 = vmatpush1.msra.mxu0 0.0
    %2450 = vmatprep.subr.mxu0 0.0
    %2451 = vmatpush1.msra.mxu0 0.0
    %2452 = vmatprep.subr.mxu0 0.0
    %2453 = vmatpush1.msra.mxu0 0.0
    %2454 = vmatprep.subr.mxu0 0.0
    %2455 = vmatpush1.msra.mxu0 0.0
    %2456 = vmatprep.subr.mxu0 0.0
    %2457 = vmatpush1.msra.mxu0 0.0
    %2458 = vmatprep.subr.mxu0 0.0
    %2459 = vmatpush1.msra.mxu0 0.0
    %2460 = vmatprep.subr.mxu0 0.0
    %2461 = vmatpush1.msra.mxu0 0.0
    %2462 = vmatprep.subr.mxu0 0.0
    %2463 = vmatpush1.msra.mxu0 0.0
    %2464 = vmatprep.mubr.f32.mxu0 0.0
    %2465 = vmatmul.mubr.f32.gmra.mrb[0].mxu0 %v34
    %v2466 = vpop.f32.mrb[0].mxu0
    %v2467 = vadd.f32 0.0, %v2466
    %v2468 = vpop.f32.mrb[0].mxu0
    %2469 = vmatprep.mubr.f32.mxu0 0.0
    %2470 = vmatmul.mubr.f32.gmra.mrb[0].mxu0 %v37
    %v2471 = vpop.f32.mrb[0].mxu0
    %v2472 = vadd.f32 0.0, %v2471
    %v2473 = vpop.f32.mrb[0].mxu0
    %2474 = vdwg.mxu0
    %2475 = vmatprep.subr.mxu0 0.0
    %2476 = vmatpush1.msra.mxu0 %v2242
    %2477 = vmatprep.subr.mxu0 0.0
    %2478 = vmatpush1.msra.mxu0 %v2245
    %2479 = vmatprep.subr.mxu0 0.0
    %2480 = vmatpush1.msra.mxu0 0.0
    %2481 = vmatprep.subr.mxu0 0.0
    %2482 = vmatpush1.msra.mxu0 0.0
    %2483 = vmatprep.subr.mxu0 0.0
    %2484 = vmatpush1.msra.mxu0 0.0
    %2485 = vmatprep.subr.mxu0 0.0
    %2486 = vmatpush1.msra.mxu0 0.0
    %2487 = vmatprep.subr.mxu0 0.0
    %2488 = vmatpush1.msra.mxu0 0.0
    %2489 = vmatprep.subr.mxu0 0.0
    %2490 = vmatpush1.msra.mxu0 0.0
    %2491 = vmatprep.subr.mxu0 0.0
    %2492 = vmatpush1.msra.mxu0 0.0
    %2493 = vmatprep.subr.mxu0 0.0
    %2494 = vmatpush1.msra.mxu0 0.0
    %2495 = vmatprep.subr.mxu0 0.0
    %2496 = vmatpush1.msra.mxu0 0.0
    %2497 = vmatprep.subr.mxu0 0.0
    %2498 = vmatpush1.msra.mxu0 0.0
    %2499 = vmatprep.subr.mxu0 0.0
    %2500 = vmatpush1.msra.mxu0 0.0
    %2501 = vmatprep.subr.mxu0 0.0
    %2502 = vmatpush1.msra.mxu0 0.0
    %2503 = vmatprep.subr.mxu0 0.0
    %2504 = vmatpush1.msra.mxu0 0.0
    %2505 = vmatprep.subr.mxu0 0.0
    %2506 = vmatpush1.msra.mxu0 0.0
    %2507 = vmatprep.subr.mxu0 0.0
    %2508 = vmatpush1.msra.mxu0 0.0
    %2509 = vmatprep.subr.mxu0 0.0
    %2510 = vmatpush1.msra.mxu0 0.0
    %2511 = vmatprep.subr.mxu0 0.0
    %2512 = vmatpush1.msra.mxu0 0.0
    %2513 = vmatprep.subr.mxu0 0.0
    %2514 = vmatpush1.msra.mxu0 0.0
    %2515 = vmatprep.subr.mxu0 0.0
    %2516 = vmatpush1.msra.mxu0 0.0
    %2517 = vmatprep.subr.mxu0 0.0
    %2518 = vmatpush1.msra.mxu0 0.0
    %2519 = vmatprep.subr.mxu0 0.0
    %2520 = vmatpush1.msra.mxu0 0.0
    %2521 = vmatprep.subr.mxu0 0.0
    %2522 = vmatpush1.msra.mxu0 0.0
    %2523 = vmatprep.subr.mxu0 0.0
    %2524 = vmatpush1.msra.mxu0 0.0
    %2525 = vmatprep.subr.mxu0 0.0
    %2526 = vmatpush1.msra.mxu0 0.0
    %2527 = vmatprep.subr.mxu0 0.0
    %2528 = vmatpush1.msra.mxu0 0.0
    %2529 = vmatprep.subr.mxu0 0.0
    %2530 = vmatpush1.msra.mxu0 0.0
    %2531 = vmatprep.subr.mxu0 0.0
    %2532 = vmatpush1.msra.mxu0 0.0
    %2533 = vmatprep.subr.mxu0 0.0
    %2534 = vmatpush1.msra.mxu0 0.0
    %2535 = vmatprep.subr.mxu0 0.0
    %2536 = vmatpush1.msra.mxu0 0.0
    %2537 = vmatprep.subr.mxu0 0.0
    %2538 = vmatpush1.msra.mxu0 0.0
    %2539 = vmatprep.mubr.f32.mxu0 0.0
    %2540 = vmatmul.mubr.f32.gmra.mrb[0].mxu0 %v119
    %v2541 = vpop.f32.mrb[0].mxu0
    %v2542 = vadd.f32 0.0, %v2541
    %v2543 = vpop.f32.mrb[0].mxu0
    %2544 = vmatprep.mubr.f32.mxu0 0.0
    %2545 = vmatmul.mubr.f32.gmra.mrb[0].mxu0 %v122
    %v2546 = vpop.f32.mrb[0].mxu0
    %v2547 = vadd.f32 0.0, %v2546
    %v2548 = vpop.f32.mrb[0].mxu0
    %2549 = vdwg.mxu0
    %v2550 = vsub.f32 %v2467, %v2542
    %v2551 = vsub.f32 %v2472, %v2547
    %v2552 = vld [vmem:[%s4] sm:$0xff]
    %v2553 = vld [vmem:[%s4 + $0x8] sm:$0xff]
    %v2554 = vld [vmem:[%s4 + $0x10] sm:$0xff]
    %v2555 = vld [vmem:[%s4 + $0x18] sm:$0xff]
    %v2556 = vld [vmem:[%s4 + $0x20] sm:$0xff]
    %v2557 = vld [vmem:[%s4 + $0x28] sm:$0xff]
    %v2558 = vld [vmem:[%s4 + $0x30] sm:$0xff]
    %v2559 = vld [vmem:[%s4 + $0x38] sm:$0xff]
    %v2560 = vld [vmem:[%s4 + $0x40] sm:$0xff]
    %v2561 = vld [vmem:[%s4 + $0x48] sm:$0xff]
    %v2562 = vld [vmem:[%s4 + $0x50] sm:$0xff]
    %v2563 = vld [vmem:[%s4 + $0x58] sm:$0xff]
    %v2564 = vld [vmem:[%s4 + $0x60] sm:$0xff]
    %v2565 = vld [vmem:[%s4 + $0x68] sm:$0xff]
    %v2566 = vld [vmem:[%s4 + $0x70] sm:$0xff]
    %v2567 = vld [vmem:[%s4 + $0x78] sm:$0xff]
    %v2568 = vld [vmem:[%s5] sm:$0xff]
    %v2569 = vld [vmem:[%s5 + $0x8] sm:$0xff]
    %v2570 = vld [vmem:[%s5 + $0x10] sm:$0xff]
    %v2571 = vld [vmem:[%s5 + $0x18] sm:$0xff]
    %v2572 = vld [vmem:[%s5 + $0x20] sm:$0xff]
    %v2573 = vld [vmem:[%s5 + $0x28] sm:$0xff]
    %v2574 = vld [vmem:[%s5 + $0x30] sm:$0xff]
    %v2575 = vld [vmem:[%s5 + $0x38] sm:$0xff]
    %v2576 = vld [vmem:[%s5 + $0x40] sm:$0xff]
    %v2577 = vld [vmem:[%s5 + $0x48] sm:$0xff]
    %v2578 = vld [vmem:[%s5 + $0x50] sm:$0xff]
    %v2579 = vld [vmem:[%s5 + $0x58] sm:$0xff]
    %v2580 = vld [vmem:[%s5 + $0x60] sm:$0xff]
    %v2581 = vld [vmem:[%s5 + $0x68] sm:$0xff]
    %v2582 = vld [vmem:[%s5 + $0x70] sm:$0xff]
    %v2583 = vld [vmem:[%s5 + $0x78] sm:$0xff]
    %2584 = vmatprep.subr.mxu0 0.0
    %2585 = vmatpush1.msra.mxu0 %v2568
    %2586 = vmatprep.subr.mxu0 0.0
    %2587 = vmatpush1.msra.mxu0 %v2569
    %2588 = vmatprep.subr.mxu0 0.0
    %2589 = vmatpush1.msra.mxu0 %v2570
    %2590 = vmatprep.subr.mxu0 0.0
    %2591 = vmatpush1.msra.mxu0 %v2571
    %2592 = vmatprep.subr.mxu0 0.0
    %2593 = vmatpush1.msra.mxu0 %v2572
    %2594 = vmatprep.subr.mxu0 0.0
    %2595 = vmatpush1.msra.mxu0 %v2573
    %2596 = vmatprep.subr.mxu0 0.0
    %2597 = vmatpush1.msra.mxu0 %v2574
    %2598 = vmatprep.subr.mxu0 0.0
    %2599 = vmatpush1.msra.mxu0 %v2575
    %2600 = vmatprep.subr.mxu0 0.0
    %2601 = vmatpush1.msra.mxu0 %v2576
    %2602 = vmatprep.subr.mxu0 0.0
    %2603 = vmatpush1.msra.mxu0 %v2577
    %2604 = vmatprep.subr.mxu0 0.0
    %2605 = vmatpush1.msra.mxu0 %v2578
    %2606 = vmatprep.subr.mxu0 0.0
    %2607 = vmatpush1.msra.mxu0 %v2579
    %2608 = vmatprep.subr.mxu0 0.0
    %2609 = vmatpush1.msra.mxu0 %v2580
    %2610 = vmatprep.subr.mxu0 0.0
    %2611 = vmatpush1.msra.mxu0 %v2581
    %2612 = vmatprep.subr.mxu0 0.0
    %2613 = vmatpush1.msra.mxu0 %v2582
    %2614 = vmatprep.subr.mxu0 0.0
    %2615 = vmatpush1.msra.mxu0 %v2583
    %2616 = vmatprep.subr.mxu0 0.0
    %2617 = vmatpush1.msra.mxu0 0.0
    %2618 = vmatprep.subr.mxu0 0.0
    %2619 = vmatpush1.msra.mxu0 0.0
    %2620 = vmatprep.subr.mxu0 0.0
    %2621 = vmatpush1.msra.mxu0 0.0
    %2622 = vmatprep.subr.mxu0 0.0
    %2623 = vmatpush1.msra.mxu0 0.0
    %2624 = vmatprep.subr.mxu0 0.0
    %2625 = vmatpush1.msra.mxu0 0.0
    %2626 = vmatprep.subr.mxu0 0.0
    %2627 = vmatpush1.msra.mxu0 0.0
    %2628 = vmatprep.subr.mxu0 0.0
    %2629 = vmatpush1.msra.mxu0 0.0
    %2630 = vmatprep.subr.mxu0 0.0
    %2631 = vmatpush1.msra.mxu0 0.0
    %2632 = vmatprep.subr.mxu0 0.0
    %2633 = vmatpush1.msra.mxu0 0.0
    %2634 = vmatprep.subr.mxu0 0.0
    %2635 = vmatpush1.msra.mxu0 0.0
    %2636 = vmatprep.subr.mxu0 0.0
    %2637 = vmatpush1.msra.mxu0 0.0
    %2638 = vmatprep.subr.mxu0 0.0
    %2639 = vmatpush1.msra.mxu0 0.0
    %2640 = vmatprep.subr.mxu0 0.0
    %2641 = vmatpush1.msra.mxu0 0.0
    %2642 = vmatprep.subr.mxu0 0.0
    %2643 = vmatpush1.msra.mxu0 0.0
    %2644 = vmatprep.subr.mxu0 0.0
    %2645 = vmatpush1.msra.mxu0 0.0
    %2646 = vmatprep.subr.mxu0 0.0
    %2647 = vmatpush1.msra.mxu0 0.0
    %2648 = vmatprep.mubr.f32.mxu0 0.0
    %2649 = vmatmul.mubr.f32.gmra.mrb[0].mxu0 %v352
    %v2650 = vpop.f32.mrb[0].mxu0
    %v2651 = vadd.f32 0.0, %v2650
    %v2652 = vpop.f32.mrb[0].mxu0
    %2653 = vmatprep.mubr.f32.mxu0 0.0
    %2654 = vmatmul.mubr.f32.gmra.mrb[0].mxu0 %v353
    %v2655 = vpop.f32.mrb[0].mxu0
    %v2656 = vadd.f32 0.0, %v2655
    %v2657 = vpop.f32.mrb[0].mxu0
    %2658 = vmatprep.mubr.f32.mxu0 0.0
    %2659 = vmatmul.mubr.f32.gmra.mrb[0].mxu0 %v666
    %v2660 = vpop.f32.mrb[0].mxu0
    %v2661 = vadd.f32 0.0, %v2660
    %v2662 = vpop.f32.mrb[0].mxu0
    %2663 = vmatprep.mubr.f32.mxu0 0.0
    %2664 = vmatmul.mubr.f32.gmra.mrb[0].mxu0 %v667
    %v2665 = vpop.f32.mrb[0].mxu0
    %v2666 = vadd.f32 0.0, %v2665
    %v2667 = vpop.f32.mrb[0].mxu0
    %2668 = vmatprep.mubr.f32.mxu0 0.0
    %2669 = vmatmul.mubr.f32.gmra.mrb[0].mxu0 %v980
    %v2670 = vpop.f32.mrb[0].mxu0
    %v2671 = vadd.f32 0.0, %v2670
    %v2672 = vpop.f32.mrb[0].mxu0
    %2673 = vmatprep.mubr.f32.mxu0 0.0
    %2674 = vmatmul.mubr.f32.gmra.mrb[0].mxu0 %v981
    %v2675 = vpop.f32.mrb[0].mxu0
    %v2676 = vadd.f32 0.0, %v2675
    %v2677 = vpop.f32.mrb[0].mxu0
    %2678 = vmatprep.mubr.f32.mxu0 0.0
    %2679 = vmatmul.mubr.f32.gmra.mrb[0].mxu0 %v1294
    %v2680 = vpop.f32.mrb[0].mxu0
    %v2681 = vadd.f32 0.0, %v2680
    %v2682 = vpop.f32.mrb[0].mxu0
    %2683 = vmatprep.mubr.f32.mxu0 0.0
    %2684 = vmatmul.mubr.f32.gmra.mrb[0].mxu0 %v1295
    %v2685 = vpop.f32.mrb[0].mxu0
    %v2686 = vadd.f32 0.0, %v2685
    %v2687 = vpop.f32.mrb[0].mxu0
    %2688 = vmatprep.mubr.f32.mxu0 0.0
    %2689 = vmatmul.mubr.f32.gmra.mrb[0].mxu0 %v1608
    %v2690 = vpop.f32.mrb[0].mxu0
    %v2691 = vadd.f32 0.0, %v2690
    %v2692 = vpop.f32.mrb[0].mxu0
    %2693 = vmatprep.mubr.f32.mxu0 0.0
    %2694 = vmatmul.mubr.f32.gmra.mrb[0].mxu0 %v1609
    %v2695 = vpop.f32.mrb[0].mxu0
    %v2696 = vadd.f32 0.0, %v2695
    %v2697 = vpop.f32.mrb[0].mxu0
    %2698 = vmatprep.mubr.f32.mxu0 0.0
    %2699 = vmatmul.mubr.f32.gmra.mrb[0].mxu0 %v1922
    %v2700 = vpop.f32.mrb[0].mxu0
    %v2701 = vadd.f32 0.0, %v2700
    %v2702 = vpop.f32.mrb[0].mxu0
    %2703 = vmatprep.mubr.f32.mxu0 0.0
    %2704 = vmatmul.mubr.f32.gmra.mrb[0].mxu0 %v1923
    %v2705 = vpop.f32.mrb[0].mxu0
    %v2706 = vadd.f32 0.0, %v2705
    %v2707 = vpop.f32.mrb[0].mxu0
    %2708 = vmatprep.mubr.f32.mxu0 0.0
    %2709 = vmatmul.mubr.f32.gmra.mrb[0].mxu0 %v2236
    %v2710 = vpop.f32.mrb[0].mxu0
    %v2711 = vadd.f32 0.0, %v2710
    %v2712 = vpop.f32.mrb[0].mxu0
    %2713 = vmatprep.mubr.f32.mxu0 0.0
    %2714 = vmatmul.mubr.f32.gmra.mrb[0].mxu0 %v2237
    %v2715 = vpop.f32.mrb[0].mxu0
    %v2716 = vadd.f32 0.0, %v2715
    %v2717 = vpop.f32.mrb[0].mxu0
    %2718 = vmatprep.mubr.f32.mxu0 0.0
    %2719 = vmatmul.mubr.f32.gmra.mrb[0].mxu0 %v2550
    %v2720 = vpop.f32.mrb[0].mxu0
    %v2721 = vadd.f32 0.0, %v2720
    %v2722 = vpop.f32.mrb[0].mxu0
    %2723 = vmatprep.mubr.f32.mxu0 0.0
    %2724 = vmatmul.mubr.f32.gmra.mrb[0].mxu0 %v2551
    %v2725 = vpop.f32.mrb[0].mxu0
    %v2726 = vadd.f32 0.0, %v2725
    %v2727 = vpop.f32.mrb[0].mxu0
    %2728 = vdwg.mxu0
    %2729 = vmatprep.subr.mxu0 0.0
    %2730 = vmatpush1.msra.mxu0 %v2552
    %2731 = vmatprep.subr.mxu0 0.0
    %2732 = vmatpush1.msra.mxu0 %v2553
    %2733 = vmatprep.subr.mxu0 0.0
    %2734 = vmatpush1.msra.mxu0 %v2554
    %2735 = vmatprep.subr.mxu0 0.0
    %2736 = vmatpush1.msra.mxu0 %v2555
    %2737 = vmatprep.subr.mxu0 0.0
    %2738 = vmatpush1.msra.mxu0 %v2556
    %2739 = vmatprep.subr.mxu0 0.0
    %2740 = vmatpush1.msra.mxu0 %v2557
    %2741 = vmatprep.subr.mxu0 0.0
    %2742 = vmatpush1.msra.mxu0 %v2558
    %2743 = vmatprep.subr.mxu0 0.0
    %2744 = vmatpush1.msra.mxu0 %v2559
    %2745 = vmatprep.subr.mxu0 0.0
    %2746 = vmatpush1.msra.mxu0 %v2560
    %2747 = vmatprep.subr.mxu0 0.0
    %2748 = vmatpush1.msra.mxu0 %v2561
    %2749 = vmatprep.subr.mxu0 0.0
    %2750 = vmatpush1.msra.mxu0 %v2562
    %2751 = vmatprep.subr.mxu0 0.0
    %2752 = vmatpush1.msra.mxu0 %v2563
    %2753 = vmatprep.subr.mxu0 0.0
    %2754 = vmatpush1.msra.mxu0 %v2564
    %2755 = vmatprep.subr.mxu0 0.0
    %2756 = vmatpush1.msra.mxu0 %v2565
    %2757 = vmatprep.subr.mxu0 0.0
    %2758 = vmatpush1.msra.mxu0 %v2566
    %2759 = vmatprep.subr.mxu0 0.0
    %2760 = vmatpush1.msra.mxu0 %v2567
    %2761 = vmatprep.subr.mxu0 0.0
    %2762 = vmatpush1.msra.mxu0 0.0
    %2763 = vmatprep.subr.mxu0 0.0
    %2764 = vmatpush1.msra.mxu0 0.0
    %2765 = vmatprep.subr.mxu0 0.0
    %2766 = vmatpush1.msra.mxu0 0.0
    %2767 = vmatprep.subr.mxu0 0.0
    %2768 = vmatpush1.msra.mxu0 0.0
    %2769 = vmatprep.subr.mxu0 0.0
    %2770 = vmatpush1.msra.mxu0 0.0
    %2771 = vmatprep.subr.mxu0 0.0
    %2772 = vmatpush1.msra.mxu0 0.0
    %2773 = vmatprep.subr.mxu0 0.0
    %2774 = vmatpush1.msra.mxu0 0.0
    %2775 = vmatprep.subr.mxu0 0.0
    %2776 = vmatpush1.msra.mxu0 0.0
    %2777 = vmatprep.subr.mxu0 0.0
    %2778 = vmatpush1.msra.mxu0 0.0
    %2779 = vmatprep.subr.mxu0 0.0
    %2780 = vmatpush1.msra.mxu0 0.0
    %2781 = vmatprep.subr.mxu0 0.0
    %2782 = vmatpush1.msra.mxu0 0.0
    %2783 = vmatprep.subr.mxu0 0.0
    %2784 = vmatpush1.msra.mxu0 0.0
    %2785 = vmatprep.subr.mxu0 0.0
    %2786 = vmatpush1.msra.mxu0 0.0
    %2787 = vmatprep.subr.mxu0 0.0
    %2788 = vmatpush1.msra.mxu0 0.0
    %2789 = vmatprep.subr.mxu0 0.0
    %2790 = vmatpush1.msra.mxu0 0.0
    %2791 = vmatprep.subr.mxu0 0.0
    %2792 = vmatpush1.msra.mxu0 0.0
    %2793 = vmatprep.mubr.f32.mxu0 0.0
    %2794 = vmatmul.mubr.f32.gmra.mrb[0].mxu0 %v194
    %v2795 = vpop.f32.mrb[0].mxu0
    %v2796 = vadd.f32 %v2651, %v2795
    %v2797 = vpop.f32.mrb[0].mxu0
    %2798 = vmatprep.mubr.f32.mxu0 0.0
    %2799 = vmatmul.mubr.f32.gmra.mrb[0].mxu0 %v199
    %v2800 = vpop.f32.mrb[0].mxu0
    %v2801 = vadd.f32 %v2656, %v2800
    %v2802 = vpop.f32.mrb[0].mxu0
    %2803 = vmatprep.mubr.f32.mxu0 0.0
    %2804 = vmatmul.mubr.f32.gmra.mrb[0].mxu0 %v508
    %v2805 = vpop.f32.mrb[0].mxu0
    %v2806 = vadd.f32 %v2661, %v2805
    %v2807 = vpop.f32.mrb[0].mxu0
    %2808 = vmatprep.mubr.f32.mxu0 0.0
    %2809 = vmatmul.mubr.f32.gmra.mrb[0].mxu0 %v513
    %v2810 = vpop.f32.mrb[0].mxu0
    %v2811 = vadd.f32 %v2666, %v2810
    %v2812 = vpop.f32.mrb[0].mxu0
    %2813 = vmatprep.mubr.f32.mxu0 0.0
    %2814 = vmatmul.mubr.f32.gmra.mrb[0].mxu0 %v822
    %v2815 = vpop.f32.mrb[0].mxu0
    %v2816 = vadd.f32 %v2671, %v2815
    %v2817 = vpop.f32.mrb[0].mxu0
    %2818 = vmatprep.mubr.f32.mxu0 0.0
    %2819 = vmatmul.mubr.f32.gmra.mrb[0].mxu0 %v827
    %v2820 = vpop.f32.mrb[0].mxu0
    %v2821 = vadd.f32 %v2676, %v2820
    %v2822 = vpop.f32.mrb[0].mxu0
    %2823 = vmatprep.mubr.f32.mxu0 0.0
    %2824 = vmatmul.mubr.f32.gmra.mrb[0].mxu0 %v1136
    %v2825 = vpop.f32.mrb[0].mxu0
    %v2826 = vadd.f32 %v2681, %v2825
    %v2827 = vpop.f32.mrb[0].mxu0
    %2828 = vmatprep.mubr.f32.mxu0 0.0
    %2829 = vmatmul.mubr.f32.gmra.mrb[0].mxu0 %v1141
    %v2830 = vpop.f32.mrb[0].mxu0
    %v2831 = vadd.f32 %v2686, %v2830
    %v2832 = vpop.f32.mrb[0].mxu0
    %2833 = vmatprep.mubr.f32.mxu0 0.0
    %2834 = vmatmul.mubr.f32.gmra.mrb[0].mxu0 %v1450
    %v2835 = vpop.f32.mrb[0].mxu0
    %v2836 = vadd.f32 %v2691, %v2835
    %v2837 = vpop.f32.mrb[0].mxu0
    %2838 = vmatprep.mubr.f32.mxu0 0.0
    %2839 = vmatmul.mubr.f32.gmra.mrb[0].mxu0 %v1455
    %v2840 = vpop.f32.mrb[0].mxu0
    %v2841 = vadd.f32 %v2696, %v2840
    %v2842 = vpop.f32.mrb[0].mxu0
    %2843 = vmatprep.mubr.f32.mxu0 0.0
    %2844 = vmatmul.mubr.f32.gmra.mrb[0].mxu0 %v1764
    %v2845 = vpop.f32.mrb[0].mxu0
    %v2846 = vadd.f32 %v2701, %v2845
    %v2847 = vpop.f32.mrb[0].mxu0
    %2848 = vmatprep.mubr.f32.mxu0 0.0
    %2849 = vmatmul.mubr.f32.gmra.mrb[0].mxu0 %v1769
    %v2850 = vpop.f32.mrb[0].mxu0
    %v2851 = vadd.f32 %v2706, %v2850
    %v2852 = vpop.f32.mrb[0].mxu0
    %2853 = vmatprep.mubr.f32.mxu0 0.0
    %2854 = vmatmul.mubr.f32.gmra.mrb[0].mxu0 %v2078
    %v2855 = vpop.f32.mrb[0].mxu0
    %v2856 = vadd.f32 %v2711, %v2855
    %v2857 = vpop.f32.mrb[0].mxu0
    %2858 = vmatprep.mubr.f32.mxu0 0.0
    %2859 = vmatmul.mubr.f32.gmra.mrb[0].mxu0 %v2083
    %v2860 = vpop.f32.mrb[0].mxu0
    %v2861 = vadd.f32 %v2716, %v2860
    %v2862 = vpop.f32.mrb[0].mxu0
    %2863 = vmatprep.mubr.f32.mxu0 0.0
    %2864 = vmatmul.mubr.f32.gmra.mrb[0].mxu0 %v2392
    %v2865 = vpop.f32.mrb[0].mxu0
    %v2866 = vadd.f32 %v2721, %v2865
    %v2867 = vpop.f32.mrb[0].mxu0
    %2868 = vmatprep.mubr.f32.mxu0 0.0
    %2869 = vmatmul.mubr.f32.gmra.mrb[0].mxu0 %v2397
    %v2870 = vpop.f32.mrb[0].mxu0
    %v2871 = vadd.f32 %v2726, %v2870
    %v2872 = vpop.f32.mrb[0].mxu0
    %2873 = vdwg.mxu0
    %2874 = vst [vmem:[#allocation2] sm:$0xff] %v2796
    %2875 = vst [vmem:[#allocation2 + $0x8] sm:$0xff] %v2801
    %2876 = vst [vmem:[#allocation2 + $0x10] sm:$0xff] %v2806
    %2877 = vst [vmem:[#allocation2 + $0x18] sm:$0xff] %v2811
    %2878 = vst [vmem:[#allocation2 + $0x20] sm:$0xff] %v2816
    %2879 = vst [vmem:[#allocation2 + $0x28] sm:$0xff] %v2821
    %2880 = vst [vmem:[#allocation2 + $0x30] sm:$0xff] %v2826
    %2881 = vst [vmem:[#allocation2 + $0x38] sm:$0xff] %v2831
    %2882 = vst [vmem:[#allocation2 + $0x40] sm:$0xff] %v2836
    %2883 = vst [vmem:[#allocation2 + $0x48] sm:$0xff] %v2841
    %2884 = vst [vmem:[#allocation2 + $0x50] sm:$0xff] %v2846
    %2885 = vst [vmem:[#allocation2 + $0x58] sm:$0xff] %v2851
    %2886 = vst [vmem:[#allocation2 + $0x60] sm:$0xff] %v2856
    %2887 = vst [vmem:[#allocation2 + $0x68] sm:$0xff] %v2861
    %2888 = vst [vmem:[#allocation2 + $0x70] sm:$0xff] %v2866
    %2889 = vst [vmem:[#allocation2 + $0x78] sm:$0xff] %v2871
    // Predicated region
    $region26: #{tpu_custom_call.1} parent=1 // pred_check
      _
    $region27: #{tpu_custom_call.1} parent=1 // pred_check_branch
      %2891 = sbr.rel (0) target = $region29
    $region28: #{tpu_custom_call.1} parent=1 // pred_region
      %s2893 = ssub.s32 2048, 2048
      %2894 = vsyncadd [#allocation3], %s2893
      %s2895 = sshll.u32 [#allocation2], 4
      %s2896 = int_to_ptr.vmem [resolvable:$true] %s2895
      %2901 = dma.vmem_to_hbm [thread:$0]  %s2896, 2048, %s6, [#allocation3], 128, 128, 8
    $region29: #{tpu_custom_call.1} parent=1 // pred_fallthru
      _
    // Predicated region
    $region30: #{tpu_custom_call.1} parent=1 // pred_check
      _
    $region31: #{tpu_custom_call.1} parent=1 // pred_check_branch
      %2903 = sbr.rel (0) target = $region33
    $region32: #{tpu_custom_call.1} parent=1 // pred_region
      %2904 = dma.done [#allocation3], 2048
    $region33: #{tpu_custom_call.1} parent=1 // pred_fallthru
      _
    %2905 = vsyncpa [#allocation3], 1

// kernel: tpu_custom_call.1
$region0: #{tpu_custom_call.1}
  #allocation0 [shape = 'u32[]', space=smem, size = 0x4, offset = 0x4, fixed_abs, tag = 'smem constant byte address 0x4 - core index']
  #allocation1 [shape = 'u32[144,128]{1,0:T(1,128)}', space=vmem, size = 0x12000, scoped, tag = 'internal scratch']
  %s0 = inlined_call_operand.vmem [shape: f32[8,9,128], index: 0, kind: input, shape index: {}]
  %s1 = inlined_call_operand.vmem [shape: f32[8,9,128], index: 1, kind: input, shape index: {}]
  %s2 = inlined_call_operand.vmem [shape: f32[16,9], index: 2, kind: input, shape index: {}]
  %s3 = inlined_call_operand.vmem [shape: f32[16,9], index: 3, kind: input, shape index: {}]
  %s4 = inlined_call_operand.vmem [shape: f32[128,128], index: 4, kind: input, shape index: {}]
  %s5 = inlined_call_operand.vmem [shape: f32[128,128], index: 5, kind: input, shape index: {}]
  %s6 = inlined_call_operand.hbm [shape: f32[8,16,128], index: 6, kind: output, shape index: {}]
  %s7 = sld [smem:[#allocation0]]
  $region34: #{tpu_custom_call.1} parent=0
    _
  %s9 = ssub.s32 1, %s7
  %s10 = scalar_select 0, %s9, %s7
  $region1: #{tpu_custom_call.1} parent=0
    #allocation2 [shape = 'u8[65536]{0}', space=vmem, size = 0x10000, scoped, tag = 'output window, operand 0, single buffered']
    #allocation3 [shape = 's32[1]{0}', space=sflag, size = 0x4, scoped, tag = 'scoped memory for tpu_custom_call.1']
    %11 = vsyncpa [#allocation3], 0
    // Predicated region
    $region2: #{tpu_custom_call.1} parent=1 // pred_check
      _
    $region3: #{tpu_custom_call.1} parent=1 // pred_check_branch
      %13 = sbr.rel (0) target = $region5
    $region4: #{tpu_custom_call.1} parent=1 // pred_region
      _
    $region5: #{tpu_custom_call.1} parent=1 // pred_fallthru
      _
    // Predicated region
    $region6: #{tpu_custom_call.1} parent=1 // pred_check
      _
    $region7: #{tpu_custom_call.1} parent=1 // pred_check_branch
      %15 = sbr.rel (0) target = $region9
    $region8: #{tpu_custom_call.1} parent=1 // pred_region
      _
    $region9: #{tpu_custom_call.1} parent=1 // pred_fallthru
      _
    // Predicated region
    $region10: #{tpu_custom_call.1} parent=1 // pred_check
      _
    $region11: #{tpu_custom_call.1} parent=1 // pred_check_branch
      %17 = sbr.rel (0) target = $region13
    $region12: #{tpu_custom_call.1} parent=1 // pred_region
      _
    $region13: #{tpu_custom_call.1} parent=1 // pred_fallthru
      _
    // Predicated region
    $region14: #{tpu_custom_call.1} parent=1 // pred_check
      _
    $region15: #{tpu_custom_call.1} parent=1 // pred_check_branch
      %19 = sbr.rel (0) target = $region17
    $region16: #{tpu_custom_call.1} parent=1 // pred_region
      _
    $region17: #{tpu_custom_call.1} parent=1 // pred_fallthru
      _
    // Predicated region
    $region18: #{tpu_custom_call.1} parent=1 // pred_check
      _
    $region19: #{tpu_custom_call.1} parent=1 // pred_check_branch
      %21 = sbr.rel (0) target = $region21
    $region20: #{tpu_custom_call.1} parent=1 // pred_region
      _
    $region21: #{tpu_custom_call.1} parent=1 // pred_fallthru
      _
    // Predicated region
    $region22: #{tpu_custom_call.1} parent=1 // pred_check
      _
    $region23: #{tpu_custom_call.1} parent=1 // pred_check_branch
      %23 = sbr.rel (0) target = $region25
    $region24: #{tpu_custom_call.1} parent=1 // pred_region
      _
    $region25: #{tpu_custom_call.1} parent=1 // pred_fallthru
      _
    %v24 = vld [vmem:[%s2] sm:$0xff]
    %v25 = vld [vmem:[%s2 + $0x8] sm:$0xff]
    %v26 = vld [vmem:[%s3] sm:$0xff]
    %v27 = vld [vmem:[%s3 + $0x8] sm:$0xff]
    %v28 = vld [vmem:[%s0] sm:$0xff]
    %v29 = vld [vmem:[%s0 + $0x8] sm:$0x1]
    %v30 = vld [vmem:[%s1] sm:$0xff]
    %v31 = vld [vmem:[%s1 + $0x8] sm:$0x1]
    %vm32 = vcmask 72704
    %v34 = vsel %vm32, %v26, 0
    %v37 = vsel %vm32, %v27, 0
    %vm39 = vcmask 1040384
    %v41 = vsel %vm39, %v31, 0
    %43 = vmatprep.subr.mxu0 0.0
    %44 = vmatpush1.msra.mxu0 %v30
    %45 = vmatprep.subr.mxu0 0.0
    %46 = vmatpush1.msra.mxu0 %v41
    %47 = vmatprep.subr.mxu0 0.0
    %48 = vmatpush1.msra.mxu0 0.0
    %49 = vmatprep.subr.mxu0 0.0
    %50 = vmatpush1.msra.mxu0 0.0
    %51 = vmatprep.subr.mxu0 0.0
    %52 = vmatpush1.msra.mxu0 0.0
    %53 = vmatprep.subr.mxu0 0.0
    %54 = vmatpush1.msra.mxu0 0.0
    %55 = vmatprep.subr.mxu0 0.0
    %56 = vmatpush1.msra.mxu0 0.0
    %57 = vmatprep.subr.mxu0 0.0
    %58 = vmatpush1.msra.mxu0 0.0
    %59 = vmatprep.subr.mxu0 0.0
    %60 = vmatpush1.msra.mxu0 0.0
    %61 = vmatprep.subr.mxu0 0.0
    %62 = vmatpush1.msra.mxu0 0.0
    %63 = vmatprep.subr.mxu0 0.0
    %64 = vmatpush1.msra.mxu0 0.0
    %65 = vmatprep.subr.mxu0 0.0
    %66 = vmatpush1.msra.mxu0 0.0
    %67 = vmatprep.subr.mxu0 0.0
    %68 = vmatpush1.msra.mxu0 0.0
    %69 = vmatprep.subr.mxu0 0.0
    %70 = vmatpush1.msra.mxu0 0.0
    %71 = vmatprep.subr.mxu0 0.0
    %72 = vmatpush1.msra.mxu0 0.0
    %73 = vmatprep.subr.mxu0 0.0
    %74 = vmatpush1.msra.mxu0 0.0
    %75 = vmatprep.subr.mxu0 0.0
    %76 = vmatpush1.msra.mxu0 0.0
    %77 = vmatprep.subr.mxu0 0.0
    %78 = vmatpush1.msra.mxu0 0.0
    %79 = vmatprep.subr.mxu0 0.0
    %80 = vmatpush1.msra.mxu0 0.0
    %81 = vmatprep.subr.mxu0 0.0
    %82 = vmatpush1.msra.mxu0 0.0
    %83 = vmatprep.subr.mxu0 0.0
    %84 = vmatpush1.msra.mxu0 0.0
    %85 = vmatprep.subr.mxu0 0.0
    %86 = vmatpush1.msra.mxu0 0.0
    %87 = vmatprep.subr.mxu0 0.0
    %88 = vmatpush1.msra.mxu0 0.0
    %89 = vmatprep.subr.mxu0 0.0
    %90 = vmatpush1.msra.mxu0 0.0
    %91 = vmatprep.subr.mxu0 0.0
    %92 = vmatpush1.msra.mxu0 0.0
    %93 = vmatprep.subr.mxu0 0.0
    %94 = vmatpush1.msra.mxu0 0.0
    %95 = vmatprep.subr.mxu0 0.0
    %96 = vmatpush1.msra.mxu0 0.0
    %97 = vmatprep.subr.mxu0 0.0
    %98 = vmatpush1.msra.mxu0 0.0
    %99 = vmatprep.subr.mxu0 0.0
    %100 = vmatpush1.msra.mxu0 0.0
    %101 = vmatprep.subr.mxu0 0.0
    %102 = vmatpush1.msra.mxu0 0.0
    %103 = vmatprep.subr.mxu0 0.0
    %104 = vmatpush1.msra.mxu0 0.0
    %105 = vmatprep.subr.mxu0 0.0
    %106 = vmatpush1.msra.mxu0 0.0
    %107 = vmatprep.mubr.f32.mxu0 0.0
    %108 = vmatmul.mubr.f32.gmra.mrb[0].mxu0 %v34
    %v109 = vpop.f32.mrb[0].mxu0
    %v110 = vadd.f32 0.0, %v109
    %v111 = vpop.f32.mrb[0].mxu0
    %112 = vmatprep.mubr.f32.mxu0 0.0
    %113 = vmatmul.mubr.f32.gmra.mrb[0].mxu0 %v37
    %v114 = vpop.f32.mrb[0].mxu0
    %v115 = vadd.f32 0.0, %v114
    %v116 = vpop.f32.mrb[0].mxu0
    %117 = vdwg.mxu0
    %v119 = vsel %vm32, %v24, 0
    %v122 = vsel %vm32, %v25, 0
    %v125 = vsel %vm39, %v29, 0
    %127 = vmatprep.subr.mxu0 0.0
    %128 = vmatpush1.msra.mxu0 %v28
    %129 = vmatprep.subr.mxu0 0.0
    %130 = vmatpush1.msra.mxu0 %v125
    %131 = vmatprep.subr.mxu0 0.0
    %132 = vmatpush1.msra.mxu0 0.0
    %133 = vmatprep.subr.mxu0 0.0
    %134 = vmatpush1.msra.mxu0 0.0
    %135 = vmatprep.subr.mxu0 0.0
    %136 = vmatpush1.msra.mxu0 0.0
    %137 = vmatprep.subr.mxu0 0.0
    %138 = vmatpush1.msra.mxu0 0.0
    %139 = vmatprep.subr.mxu0 0.0
    %140 = vmatpush1.msra.mxu0 0.0
    %141 = vmatprep.subr.mxu0 0.0
    %142 = vmatpush1.msra.mxu0 0.0
    %143 = vmatprep.subr.mxu0 0.0
    %144 = vmatpush1.msra.mxu0 0.0
    %145 = vmatprep.subr.mxu0 0.0
    %146 = vmatpush1.msra.mxu0 0.0
    %147 = vmatprep.subr.mxu0 0.0
    %148 = vmatpush1.msra.mxu0 0.0
    %149 = vmatprep.subr.mxu0 0.0
    %150 = vmatpush1.msra.mxu0 0.0
    %151 = vmatprep.subr.mxu0 0.0
    %152 = vmatpush1.msra.mxu0 0.0
    %153 = vmatprep.subr.mxu0 0.0
    %154 = vmatpush1.msra.mxu0 0.0
    %155 = vmatprep.subr.mxu0 0.0
    %156 = vmatpush1.msra.mxu0 0.0
    %157 = vmatprep.subr.mxu0 0.0
    %158 = vmatpush1.msra.mxu0 0.0
    %159 = vmatprep.subr.mxu0 0.0
    %160 = vmatpush1.msra.mxu0 0.0
    %161 = vmatprep.subr.mxu0 0.0
    %162 = vmatpush1.msra.mxu0 0.0
    %163 = vmatprep.subr.mxu0 0.0
    %164 = vmatpush1.msra.mxu0 0.0
    %165 = vmatprep.subr.mxu0 0.0
    %166 = vmatpush1.msra.mxu0 0.0
    %167 = vmatprep.subr.mxu0 0.0
    %168 = vmatpush1.msra.mxu0 0.0
    %169 = vmatprep.subr.mxu0 0.0
    %170 = vmatpush1.msra.mxu0 0.0
    %171 = vmatprep.subr.mxu0 0.0
    %172 = vmatpush1.msra.mxu0 0.0
    %173 = vmatprep.subr.mxu0 0.0
    %174 = vmatpush1.msra.mxu0 0.0
    %175 = vmatprep.subr.mxu0 0.0
    %176 = vmatpush1.msra.mxu0 0.0
    %177 = vmatprep.subr.mxu0 0.0
    %178 = vmatpush1.msra.mxu0 0.0
    %179 = vmatprep.subr.mxu0 0.0
    %180 = vmatpush1.msra.mxu0 0.0
    %181 = vmatprep.subr.mxu0 0.0
    %182 = vmatpush1.msra.mxu0 0.0
    %183 = vmatprep.subr.mxu0 0.0
    %184 = vmatpush1.msra.mxu0 0.0
    %185 = vmatprep.subr.mxu0 0.0
    %186 = vmatpush1.msra.mxu0 0.0
    %187 = vmatprep.subr.mxu0 0.0
    %188 = vmatpush1.msra.mxu0 0.0
    %189 = vmatprep.subr.mxu0 0.0
    %190 = vmatpush1.msra.mxu0 0.0
    %191 = vmatprep.mubr.f32.mxu0 0.0
    %192 = vmatmul.mubr.f32.gmra.mrb[0].mxu0 %v119
    %v193 = vpop.f32.mrb[0].mxu0
    %v194 = vadd.f32 %v110, %v193
    %v195 = vpop.f32.mrb[0].mxu0
    %196 = vmatprep.mubr.f32.mxu0 0.0
    %197 = vmatmul.mubr.f32.gmra.mrb[0].mxu0 %v122
    %v198 = vpop.f32.mrb[0].mxu0
    %v199 = vadd.f32 %v115, %v198
    %v200 = vpop.f32.mrb[0].mxu0
    %201 = vdwg.mxu0
    %202 = vmatprep.subr.mxu0 0.0
    %203 = vmatpush1.msra.mxu0 %v28
    %204 = vmatprep.subr.mxu0 0.0
    %205 = vmatpush1.msra.mxu0 %v125
    %206 = vmatprep.subr.mxu0 0.0
    %207 = vmatpush1.msra.mxu0 0.0
    %208 = vmatprep.subr.mxu0 0.0
    %209 = vmatpush1.msra.mxu0 0.0
    %210 = vmatprep.subr.mxu0 0.0
    %211 = vmatpush1.msra.mxu0 0.0
    %212 = vmatprep.subr.mxu0 0.0
    %213 = vmatpush1.msra.mxu0 0.0
    %214 = vmatprep.subr.mxu0 0.0
    %215 = vmatpush1.msra.mxu0 0.0
    %216 = vmatprep.subr.mxu0 0.0
    %217 = vmatpush1.msra.mxu0 0.0
    %218 = vmatprep.subr.mxu0 0.0
    %219 = vmatpush1.msra.mxu0 0.0
    %220 = vmatprep.subr.mxu0 0.0
    %221 = vmatpush1.msra.mxu0 0.0
    %222 = vmatprep.subr.mxu0 0.0
    %223 = vmatpush1.msra.mxu0 0.0
    %224 = vmatprep.subr.mxu0 0.0
    %225 = vmatpush1.msra.mxu0 0.0
    %226 = vmatprep.subr.mxu0 0.0
    %227 = vmatpush1.msra.mxu0 0.0
    %228 = vmatprep.subr.mxu0 0.0
    %229 = vmatpush1.msra.mxu0 0.0
    %230 = vmatprep.subr.mxu0 0.0
    %231 = vmatpush1.msra.mxu0 0.0
    %232 = vmatprep.subr.mxu0 0.0
    %233 = vmatpush1.msra.mxu0 0.0
    %234 = vmatprep.subr.mxu0 0.0
    %235 = vmatpush1.msra.mxu0 0.0
    %236 = vmatprep.subr.mxu0 0.0
    %237 = vmatpush1.msra.mxu0 0.0
    %238 = vmatprep.subr.mxu0 0.0
    %239 = vmatpush1.msra.mxu0 0.0
    %240 = vmatprep.subr.mxu0 0.0
    %241 = vmatpush1.msra.mxu0 0.0
    %242 = vmatprep.subr.mxu0 0.0
    %243 = vmatpush1.msra.mxu0 0.0
    %244 = vmatprep.subr.mxu0 0.0
    %245 = vmatpush1.msra.mxu0 0.0
    %246 = vmatprep.subr.mxu0 0.0
    %247 = vmatpush1.msra.mxu0 0.0
    %248 = vmatprep.subr.mxu0 0.0
    %249 = vmatpush1.msra.mxu0 0.0
    %250 = vmatprep.subr.mxu0 0.0
    %251 = vmatpush1.msra.mxu0 0.0
    %252 = vmatprep.subr.mxu0 0.0
    %253 = vmatpush1.msra.mxu0 0.0
    %254 = vmatprep.subr.mxu0 0.0
    %255 = vmatpush1.msra.mxu0 0.0
    %256 = vmatprep.subr.mxu0 0.0
    %257 = vmatpush1.msra.mxu0 0.0
    %258 = vmatprep.subr.mxu0 0.0
    %259 = vmatpush1.msra.mxu0 0.0
    %260 = vmatprep.subr.mxu0 0.0
    %261 = vmatpush1.msra.mxu0 0.0
    %262 = vmatprep.subr.mxu0 0.0
    %263 = vmatpush1.msra.mxu0 0.0
    %264 = vmatprep.subr.mxu0 0.0
    %265 = vmatpush1.msra.mxu0 0.0
    %266 = vmatprep.mubr.f32.mxu0 0.0
    %267 = vmatmul.mubr.f32.gmra.mrb[0].mxu0 %v34
    %v268 = vpop.f32.mrb[0].mxu0
    %v269 = vadd.f32 0.0, %v268
    %v270 = vpop.f32.mrb[0].mxu0
    %271 = vmatprep.mubr.f32.mxu0 0.0
    %272 = vmatmul.mubr.f32.gmra.mrb[0].mxu0 %v37
    %v273 = vpop.f32.mrb[0].mxu0
    %v274 = vadd.f32 0.0, %v273
    %v275 = vpop.f32.mrb[0].mxu0
    %276 = vdwg.mxu0
    %277 = vmatprep.subr.mxu0 0.0
    %278 = vmatpush1.msra.mxu0 %v30
    %279 = vmatprep.subr.mxu0 0.0
    %280 = vmatpush1.msra.mxu0 %v41
    %281 = vmatprep.subr.mxu0 0.0
    %282 = vmatpush1.msra.mxu0 0.0
    %283 = vmatprep.subr.mxu0 0.0
    %284 = vmatpush1.msra.mxu0 0.0
    %285 = vmatprep.subr.mxu0 0.0
    %286 = vmatpush1.msra.mxu0 0.0
    %287 = vmatprep.subr.mxu0 0.0
    %288 = vmatpush1.msra.mxu0 0.0
    %289 = vmatprep.subr.mxu0 0.0
    %290 = vmatpush1.msra.mxu0 0.0
    %291 = vmatprep.subr.mxu0 0.0
    %292 = vmatpush1.msra.mxu0 0.0
    %293 = vmatprep.subr.mxu0 0.0
    %294 = vmatpush1.msra.mxu0 0.0
    %295 = vmatprep.subr.mxu0 0.0
    %296 = vmatpush1.msra.mxu0 0.0
    %297 = vmatprep.subr.mxu0 0.0
    %298 = vmatpush1.msra.mxu0 0.0
    %299 = vmatprep.subr.mxu0 0.0
    %300 = vmatpush1.msra.mxu0 0.0
    %301 = vmatprep.subr.mxu0 0.0
    %302 = vmatpush1.msra.mxu0 0.0
    %303 = vmatprep.subr.mxu0 0.0
    %304 = vmatpush1.msra.mxu0 0.0
    %305 = vmatprep.subr.mxu0 0.0
    %306 = vmatpush1.msra.mxu0 0.0
    %307 = vmatprep.subr.mxu0 0.0
    %308 = vmatpush1.msra.mxu0 0.0
    %309 = vmatprep.subr.mxu0 0.0
    %310 = vmatpush1.msra.mxu0 0.0
    %311 = vmatprep.subr.mxu0 0.0
    %312 = vmatpush1.msra.mxu0 0.0
    %313 = vmatprep.subr.mxu0 0.0
    %314 = vmatpush1.msra.mxu0 0.0
    %315 = vmatprep.subr.mxu0 0.0
    %316 = vmatpush1.msra.mxu0 0.0
    %317 = vmatprep.subr.mxu0 0.0
    %318 = vmatpush1.msra.mxu0 0.0
    %319 = vmatprep.subr.mxu0 0.0
    %320 = vmatpush1.msra.mxu0 0.0
    %321 = vmatprep.subr.mxu0 0.0
    %322 = vmatpush1.msra.mxu0 0.0
    %323 = vmatprep.subr.mxu0 0.0
    %324 = vmatpush1.msra.mxu0 0.0
    %325 = vmatprep.subr.mxu0 0.0
    %326 = vmatpush1.msra.mxu0 0.0
    %327 = vmatprep.subr.mxu0 0.0
    %328 = vmatpush1.msra.mxu0 0.0
    %329 = vmatprep.subr.mxu0 0.0
    %330 = vmatpush1.msra.mxu0 0.0
    %331 = vmatprep.subr.mxu0 0.0
    %332 = vmatpush1.msra.mxu0 0.0
    %333 = vmatprep.subr.mxu0 0.0
    %334 = vmatpush1.msra.mxu0 0.0
    %335 = vmatprep.subr.mxu0 0.0
    %336 = vmatpush1.msra.mxu0 0.0
    %337 = vmatprep.subr.mxu0 0.0
    %338 = vmatpush1.msra.mxu0 0.0
    %339 = vmatprep.subr.mxu0 0.0
    %340 = vmatpush1.msra.mxu0 0.0
    %341 = vmatprep.mubr.f32.mxu0 0.0
    %342 = vmatmul.mubr.f32.gmra.mrb[0].mxu0 %v119
    %v343 = vpop.f32.mrb[0].mxu0
    %v344 = vadd.f32 0.0, %v343
    %v345 = vpop.f32.mrb[0].mxu0
    %346 = vmatprep.mubr.f32.mxu0 0.0
    %347 = vmatmul.mubr.f32.gmra.mrb[0].mxu0 %v122
    %v348 = vpop.f32.mrb[0].mxu0
    %v349 = vadd.f32 0.0, %v348
    %v350 = vpop.f32.mrb[0].mxu0
    %351 = vdwg.mxu0
    %v352 = vsub.f32 %v269, %v344
    %v353 = vsub.f32 %v274, %v349
    %s354 = scalar_lea.vmem %s0, 16
    %v355 = vld [vmem:[%s354] sm:$0xff]
    %v356 = vld [vmem:[%s354 + $0x8] sm:$0x1]
    %s357 = scalar_lea.vmem %s1, 16
    %v358 = vld [vmem:[%s357] sm:$0xff]
    %v359 = vld [vmem:[%s357 + $0x8] sm:$0x1]
    %v361 = vsel %vm39, %v359, 0
    %363 = vmatprep.subr.mxu0 0.0
    %364 = vmatpush1.msra.mxu0 %v358
    %365 = vmatprep.subr.mxu0 0.0
    %366 = vmatpush1.msra.mxu0 %v361
    %367 = vmatprep.subr.mxu0 0.0
    %368 = vmatpush1.msra.mxu0 0.0
    %369 = vmatprep.subr.mxu0 0.0
    %370 = vmatpush1.msra.mxu0 0.0
    %371 = vmatprep.subr.mxu0 0.0
    %372 = vmatpush1.msra.mxu0 0.0
    %373 = vmatprep.subr.mxu0 0.0
    %374 = vmatpush1.msra.mxu0 0.0
    %375 = vmatprep.subr.mxu0 0.0
    %376 = vmatpush1.msra.mxu0 0.0
    %377 = vmatprep.subr.mxu0 0.0
    %378 = vmatpush1.msra.mxu0 0.0
    %379 = vmatprep.subr.mxu0 0.0
    %380 = vmatpush1.msra.mxu0 0.0
    %381 = vmatprep.subr.mxu0 0.0
    %382 = vmatpush1.msra.mxu0 0.0
    %383 = vmatprep.subr.mxu0 0.0
    %384 = vmatpush1.msra.mxu0 0.0
    %385 = vmatprep.subr.mxu0 0.0
    %386 = vmatpush1.msra.mxu0 0.0
    %387 = vmatprep.subr.mxu0 0.0
    %388 = vmatpush1.msra.mxu0 0.0
    %389 = vmatprep.subr.mxu0 0.0
    %390 = vmatpush1.msra.mxu0 0.0
    %391 = vmatprep.subr.mxu0 0.0
    %392 = vmatpush1.msra.mxu0 0.0
    %393 = vmatprep.subr.mxu0 0.0
    %394 = vmatpush1.msra.mxu0 0.0
    %395 = vmatprep.subr.mxu0 0.0
    %396 = vmatpush1.msra.mxu0 0.0
    %397 = vmatprep.subr.mxu0 0.0
    %398 = vmatpush1.msra.mxu0 0.0
    %399 = vmatprep.subr.mxu0 0.0
    %400 = vmatpush1.msra.mxu0 0.0
    %401 = vmatprep.subr.mxu0 0.0
    %402 = vmatpush1.msra.mxu0 0.0
    %403 = vmatprep.subr.mxu0 0.0
    %404 = vmatpush1.msra.mxu0 0.0
    %405 = vmatprep.subr.mxu0 0.0
    %406 = vmatpush1.msra.mxu0 0.0
    %407 = vmatprep.subr.mxu0 0.0
    %408 = vmatpush1.msra.mxu0 0.0
    %409 = vmatprep.subr.mxu0 0.0
    %410 = vmatpush1.msra.mxu0 0.0
    %411 = vmatprep.subr.mxu0 0.0
    %412 = vmatpush1.msra.mxu0 0.0
    %413 = vmatprep.subr.mxu0 0.0
    %414 = vmatpush1.msra.mxu0 0.0
    %415 = vmatprep.subr.mxu0 0.0
    %416 = vmatpush1.msra.mxu0 0.0
    %417 = vmatprep.subr.mxu0 0.0
    %418 = vmatpush1.msra.mxu0 0.0
    %419 = vmatprep.subr.mxu0 0.0
    %420 = vmatpush1.msra.mxu0 0.0
    %421 = vmatprep.subr.mxu0 0.0
    %422 = vmatpush1.msra.mxu0 0.0
    %423 = vmatprep.subr.mxu0 0.0
    %424 = vmatpush1.msra.mxu0 0.0
    %425 = vmatprep.subr.mxu0 0.0
    %426 = vmatpush1.msra.mxu0 0.0
    %427 = vmatprep.mubr.f32.mxu0 0.0
    %428 = vmatmul.mubr.f32.gmra.mrb[0].mxu0 %v34
    %v429 = vpop.f32.mrb[0].mxu0
    %v430 = vadd.f32 0.0, %v429
    %v431 = vpop.f32.mrb[0].mxu0
    %432 = vmatprep.mubr.f32.mxu0 0.0
    %433 = vmatmul.mubr.f32.gmra.mrb[0].mxu0 %v37
    %v434 = vpop.f32.mrb[0].mxu0
    %v435 = vadd.f32 0.0, %v434
    %v436 = vpop.f32.mrb[0].mxu0
    %437 = vdwg.mxu0
    %v439 = vsel %vm39, %v356, 0
    %441 = vmatprep.subr.mxu0 0.0
    %442 = vmatpush1.msra.mxu0 %v355
    %443 = vmatprep.subr.mxu0 0.0
    %444 = vmatpush1.msra.mxu0 %v439
    %445 = vmatprep.subr.mxu0 0.0
    %446 = vmatpush1.msra.mxu0 0.0
    %447 = vmatprep.subr.mxu0 0.0
    %448 = vmatpush1.msra.mxu0 0.0
    %449 = vmatprep.subr.mxu0 0.0
    %450 = vmatpush1.msra.mxu0 0.0
    %451 = vmatprep.subr.mxu0 0.0
    %452 = vmatpush1.msra.mxu0 0.0
    %453 = vmatprep.subr.mxu0 0.0
    %454 = vmatpush1.msra.mxu0 0.0
    %455 = vmatprep.subr.mxu0 0.0
    %456 = vmatpush1.msra.mxu0 0.0
    %457 = vmatprep.subr.mxu0 0.0
    %458 = vmatpush1.msra.mxu0 0.0
    %459 = vmatprep.subr.mxu0 0.0
    %460 = vmatpush1.msra.mxu0 0.0
    %461 = vmatprep.subr.mxu0 0.0
    %462 = vmatpush1.msra.mxu0 0.0
    %463 = vmatprep.subr.mxu0 0.0
    %464 = vmatpush1.msra.mxu0 0.0
    %465 = vmatprep.subr.mxu0 0.0
    %466 = vmatpush1.msra.mxu0 0.0
    %467 = vmatprep.subr.mxu0 0.0
    %468 = vmatpush1.msra.mxu0 0.0
    %469 = vmatprep.subr.mxu0 0.0
    %470 = vmatpush1.msra.mxu0 0.0
    %471 = vmatprep.subr.mxu0 0.0
    %472 = vmatpush1.msra.mxu0 0.0
    %473 = vmatprep.subr.mxu0 0.0
    %474 = vmatpush1.msra.mxu0 0.0
    %475 = vmatprep.subr.mxu0 0.0
    %476 = vmatpush1.msra.mxu0 0.0
    %477 = vmatprep.subr.mxu0 0.0
    %478 = vmatpush1.msra.mxu0 0.0
    %479 = vmatprep.subr.mxu0 0.0
    %480 = vmatpush1.msra.mxu0 0.0
    %481 = vmatprep.subr.mxu0 0.0
    %482 = vmatpush1.msra.mxu0 0.0
    %483 = vmatprep.subr.mxu0 0.0
    %484 = vmatpush1.msra.mxu0 0.0
    %485 = vmatprep.subr.mxu0 0.0
    %486 = vmatpush1.msra.mxu0 0.0
    %487 = vmatprep.subr.mxu0 0.0
    %488 = vmatpush1.msra.mxu0 0.0
    %489 = vmatprep.subr.mxu0 0.0
    %490 = vmatpush1.msra.mxu0 0.0
    %491 = vmatprep.subr.mxu0 0.0
    %492 = vmatpush1.msra.mxu0 0.0
    %493 = vmatprep.subr.mxu0 0.0
    %494 = vmatpush1.msra.mxu0 0.0
    %495 = vmatprep.subr.mxu0 0.0
    %496 = vmatpush1.msra.mxu0 0.0
    %497 = vmatprep.subr.mxu0 0.0
    %498 = vmatpush1.msra.mxu0 0.0
    %499 = vmatprep.subr.mxu0 0.0
    %500 = vmatpush1.msra.mxu0 0.0
    %501 = vmatprep.subr.mxu0 0.0
    %502 = vmatpush1.msra.mxu0 0.0
    %503 = vmatprep.subr.mxu0 0.0
    %504 = vmatpush1.msra.mxu0 0.0
    %505 = vmatprep.mubr.f32.mxu0 0.0
    %506 = vmatmul.mubr.f32.gmra.mrb[0].mxu0 %v119
    %v507 = vpop.f32.mrb[0].mxu0
    %v508 = vadd.f32 %v430, %v507
    %v509 = vpop.f32.mrb[0].mxu0
    %510 = vmatprep.mubr.f32.mxu0 0.0
    %511 = vmatmul.mubr.f32.gmra.mrb[0].mxu0 %v122
    %v512 = vpop.f32.mrb[0].mxu0
    %v513 = vadd.f32 %v435, %v512
    %v514 = vpop.f32.mrb[0].mxu0
    %515 = vdwg.mxu0
    %516 = vmatprep.subr.mxu0 0.0
    %517 = vmatpush1.msra.mxu0 %v355
    %518 = vmatprep.subr.mxu0 0.0
    %519 = vmatpush1.msra.mxu0 %v439
    %520 = vmatprep.subr.mxu0 0.0
    %521 = vmatpush1.msra.mxu0 0.0
    %522 = vmatprep.subr.mxu0 0.0
    %523 = vmatpush1.msra.mxu0 0.0
    %524 = vmatprep.subr.mxu0 0.0
    %525 = vmatpush1.msra.mxu0 0.0
    %526 = vmatprep.subr.mxu0 0.0
    %527 = vmatpush1.msra.mxu0 0.0
    %528 = vmatprep.subr.mxu0 0.0
    %529 = vmatpush1.msra.mxu0 0.0
    %530 = vmatprep.subr.mxu0 0.0
    %531 = vmatpush1.msra.mxu0 0.0
    %532 = vmatprep.subr.mxu0 0.0
    %533 = vmatpush1.msra.mxu0 0.0
    %534 = vmatprep.subr.mxu0 0.0
    %535 = vmatpush1.msra.mxu0 0.0
    %536 = vmatprep.subr.mxu0 0.0
    %537 = vmatpush1.msra.mxu0 0.0
    %538 = vmatprep.subr.mxu0 0.0
    %539 = vmatpush1.msra.mxu0 0.0
    %540 = vmatprep.subr.mxu0 0.0
    %541 = vmatpush1.msra.mxu0 0.0
    %542 = vmatprep.subr.mxu0 0.0
    %543 = vmatpush1.msra.mxu0 0.0
    %544 = vmatprep.subr.mxu0 0.0
    %545 = vmatpush1.msra.mxu0 0.0
    %546 = vmatprep.subr.mxu0 0.0
    %547 = vmatpush1.msra.mxu0 0.0
    %548 = vmatprep.subr.mxu0 0.0
    %549 = vmatpush1.msra.mxu0 0.0
    %550 = vmatprep.subr.mxu0 0.0
    %551 = vmatpush1.msra.mxu0 0.0
    %552 = vmatprep.subr.mxu0 0.0
    %553 = vmatpush1.msra.mxu0 0.0
    %554 = vmatprep.subr.mxu0 0.0
    %555 = vmatpush1.msra.mxu0 0.0
    %556 = vmatprep.subr.mxu0 0.0
    %557 = vmatpush1.msra.mxu0 0.0
    %558 = vmatprep.subr.mxu0 0.0
    %559 = vmatpush1.msra.mxu0 0.0
    %560 = vmatprep.subr.mxu0 0.0
    %561 = vmatpush1.msra.mxu0 0.0
    %562 = vmatprep.subr.mxu0 0.0
    %563 = vmatpush1.msra.mxu0 0.0
    %564 = vmatprep.subr.mxu0 0.0
    %565 = vmatpush1.msra.mxu0 0.0
    %566 = vmatprep.subr.mxu0 0.0
    %567 = vmatpush1.msra.mxu0 0.0
    %568 = vmatprep.subr.mxu0 0.0
    %569 = vmatpush1.msra.mxu0 0.0
    %570 = vmatprep.subr.mxu0 0.0
    %571 = vmatpush1.msra.mxu0 0.0
    %572 = vmatprep.subr.mxu0 0.0
    %573 = vmatpush1.msra.mxu0 0.0
    %574 = vmatprep.subr.mxu0 0.0
    %575 = vmatpush1.msra.mxu0 0.0
    %576 = vmatprep.subr.mxu0 0.0
    %577 = vmatpush1.msra.mxu0 0.0
    %578 = vmatprep.subr.mxu0 0.0
    %579 = vmatpush1.msra.mxu0 0.0
    %580 = vmatprep.mubr.f32.mxu0 0.0
    %581 = vmatmul.mubr.f32.gmra.mrb[0].mxu0 %v34
    %v582 = vpop.f32.mrb[0].mxu0
    %v583 = vadd.f32 0.0, %v582
    %v584 = vpop.f32.mrb[0].mxu0
    %585 = vmatprep.mubr.f32.mxu0 0.0
    %586 = vmatmul.mubr.f32.gmra.mrb[0].mxu0 %v37
    %v587 = vpop.f32.mrb[0].mxu0
    %v588 = vadd.f32 0.0, %v587
    %v589 = vpop.f32.mrb[0].mxu0
    %590 = vdwg.mxu0
    %591 = vmatprep.subr.mxu0 0.0
    %592 = vmatpush1.msra.mxu0 %v358
    %593 = vmatprep.subr.mxu0 0.0
    %594 = vmatpush1.msra.mxu0 %v361
    %595 = vmatprep.subr.mxu0 0.0
    %596 = vmatpush1.msra.mxu0 0.0
    %597 = vmatprep.subr.mxu0 0.0
    %598 = vmatpush1.msra.mxu0 0.0
    %599 = vmatprep.subr.mxu0 0.0
    %600 = vmatpush1.msra.mxu0 0.0
    %601 = vmatprep.subr.mxu0 0.0
    %602 = vmatpush1.msra.mxu0 0.0
    %603 = vmatprep.subr.mxu0 0.0
    %604 = vmatpush1.msra.mxu0 0.0
    %605 = vmatprep.subr.mxu0 0.0
    %606 = vmatpush1.msra.mxu0 0.0
    %607 = vmatprep.subr.mxu0 0.0
    %608 = vmatpush1.msra.mxu0 0.0
    %609 = vmatprep.subr.mxu0 0.0
    %610 = vmatpush1.msra.mxu0 0.0
    %611 = vmatprep.subr.mxu0 0.0
    %612 = vmatpush1.msra.mxu0 0.0
    %613 = vmatprep.subr.mxu0 0.0
    %614 = vmatpush1.msra.mxu0 0.0
    %615 = vmatprep.subr.mxu0 0.0
    %616 = vmatpush1.msra.mxu0 0.0
    %617 = vmatprep.subr.mxu0 0.0
    %618 = vmatpush1.msra.mxu0 0.0
    %619 = vmatprep.subr.mxu0 0.0
    %620 = vmatpush1.msra.mxu0 0.0
    %621 = vmatprep.subr.mxu0 0.0
    %622 = vmatpush1.msra.mxu0 0.0
    %623 = vmatprep.subr.mxu0 0.0
    %624 = vmatpush1.msra.mxu0 0.0
    %625 = vmatprep.subr.mxu0 0.0
    %626 = vmatpush1.msra.mxu0 0.0
    %627 = vmatprep.subr.mxu0 0.0
    %628 = vmatpush1.msra.mxu0 0.0
    %629 = vmatprep.subr.mxu0 0.0
    %630 = vmatpush1.msra.mxu0 0.0
    %631 = vmatprep.subr.mxu0 0.0
    %632 = vmatpush1.msra.mxu0 0.0
    %633 = vmatprep.subr.mxu0 0.0
    %634 = vmatpush1.msra.mxu0 0.0
    %635 = vmatprep.subr.mxu0 0.0
    %636 = vmatpush1.msra.mxu0 0.0
    %637 = vmatprep.subr.mxu0 0.0
    %638 = vmatpush1.msra.mxu0 0.0
    %639 = vmatprep.subr.mxu0 0.0
    %640 = vmatpush1.msra.mxu0 0.0
    %641 = vmatprep.subr.mxu0 0.0
    %642 = vmatpush1.msra.mxu0 0.0
    %643 = vmatprep.subr.mxu0 0.0
    %644 = vmatpush1.msra.mxu0 0.0
    %645 = vmatprep.subr.mxu0 0.0
    %646 = vmatpush1.msra.mxu0 0.0
    %647 = vmatprep.subr.mxu0 0.0
    %648 = vmatpush1.msra.mxu0 0.0
    %649 = vmatprep.subr.mxu0 0.0
    %650 = vmatpush1.msra.mxu0 0.0
    %651 = vmatprep.subr.mxu0 0.0
    %652 = vmatpush1.msra.mxu0 0.0
    %653 = vmatprep.subr.mxu0 0.0
    %654 = vmatpush1.msra.mxu0 0.0
    %655 = vmatprep.mubr.f32.mxu0 0.0
    %656 = vmatmul.mubr.f32.gmra.mrb[0].mxu0 %v119
    %v657 = vpop.f32.mrb[0].mxu0
    %v658 = vadd.f32 0.0, %v657
    %v659 = vpop.f32.mrb[0].mxu0
    %660 = vmatprep.mubr.f32.mxu0 0.0
    %661 = vmatmul.mubr.f32.gmra.mrb[0].mxu0 %v122
    %v662 = vpop.f32.mrb[0].mxu0
    %v663 = vadd.f32 0.0, %v662
    %v664 = vpop.f32.mrb[0].mxu0
    %665 = vdwg.mxu0
    %v666 = vsub.f32 %v583, %v658
    %v667 = vsub.f32 %v588, %v663
    %s668 = scalar_lea.vmem %s0, 32
    %v669 = vld [vmem:[%s668] sm:$0xff]
    %v670 = vld [vmem:[%s668 + $0x8] sm:$0x1]
    %s671 = scalar_lea.vmem %s1, 32
    %v672 = vld [vmem:[%s671] sm:$0xff]
    %v673 = vld [vmem:[%s671 + $0x8] sm:$0x1]
    %v675 = vsel %vm39, %v673, 0
    %677 = vmatprep.subr.mxu0 0.0
    %678 = vmatpush1.msra.mxu0 %v672
    %679 = vmatprep.subr.mxu0 0.0
    %680 = vmatpush1.msra.mxu0 %v675
    %681 = vmatprep.subr.mxu0 0.0
    %682 = vmatpush1.msra.mxu0 0.0
    %683 = vmatprep.subr.mxu0 0.0
    %684 = vmatpush1.msra.mxu0 0.0
    %685 = vmatprep.subr.mxu0 0.0
    %686 = vmatpush1.msra.mxu0 0.0
    %687 = vmatprep.subr.mxu0 0.0
    %688 = vmatpush1.msra.mxu0 0.0
    %689 = vmatprep.subr.mxu0 0.0
    %690 = vmatpush1.msra.mxu0 0.0
    %691 = vmatprep.subr.mxu0 0.0
    %692 = vmatpush1.msra.mxu0 0.0
    %693 = vmatprep.subr.mxu0 0.0
    %694 = vmatpush1.msra.mxu0 0.0
    %695 = vmatprep.subr.mxu0 0.0
    %696 = vmatpush1.msra.mxu0 0.0
    %697 = vmatprep.subr.mxu0 0.0
    %698 = vmatpush1.msra.mxu0 0.0
    %699 = vmatprep.subr.mxu0 0.0
    %700 = vmatpush1.msra.mxu0 0.0
    %701 = vmatprep.subr.mxu0 0.0
    %702 = vmatpush1.msra.mxu0 0.0
    %703 = vmatprep.subr.mxu0 0.0
    %704 = vmatpush1.msra.mxu0 0.0
    %705 = vmatprep.subr.mxu0 0.0
    %706 = vmatpush1.msra.mxu0 0.0
    %707 = vmatprep.subr.mxu0 0.0
    %708 = vmatpush1.msra.mxu0 0.0
    %709 = vmatprep.subr.mxu0 0.0
    %710 = vmatpush1.msra.mxu0 0.0
    %711 = vmatprep.subr.mxu0 0.0
    %712 = vmatpush1.msra.mxu0 0.0
    %713 = vmatprep.subr.mxu0 0.0
    %714 = vmatpush1.msra.mxu0 0.0
    %715 = vmatprep.subr.mxu0 0.0
    %716 = vmatpush1.msra.mxu0 0.0
    %717 = vmatprep.subr.mxu0 0.0
    %718 = vmatpush1.msra.mxu0 0.0
    %719 = vmatprep.subr.mxu0 0.0
    %720 = vmatpush1.msra.mxu0 0.0
    %721 = vmatprep.subr.mxu0 0.0
    %722 = vmatpush1.msra.mxu0 0.0
    %723 = vmatprep.subr.mxu0 0.0
    %724 = vmatpush1.msra.mxu0 0.0
    %725 = vmatprep.subr.mxu0 0.0
    %726 = vmatpush1.msra.mxu0 0.0
    %727 = vmatprep.subr.mxu0 0.0
    %728 = vmatpush1.msra.mxu0 0.0
    %729 = vmatprep.subr.mxu0 0.0
    %730 = vmatpush1.msra.mxu0 0.0
    %731 = vmatprep.subr.mxu0 0.0
    %732 = vmatpush1.msra.mxu0 0.0
    %733 = vmatprep.subr.mxu0 0.0
    %734 = vmatpush1.msra.mxu0 0.0
    %735 = vmatprep.subr.mxu0 0.0
    %736 = vmatpush1.msra.mxu0 0.0
    %737 = vmatprep.subr.mxu0 0.0
    %738 = vmatpush1.msra.mxu0 0.0
    %739 = vmatprep.subr.mxu0 0.0
    %740 = vmatpush1.msra.mxu0 0.0
    %741 = vmatprep.mubr.f32.mxu0 0.0
    %742 = vmatmul.mubr.f32.gmra.mrb[0].mxu0 %v34
    %v743 = vpop.f32.mrb[0].mxu0
    %v744 = vadd.f32 0.0, %v743
    %v745 = vpop.f32.mrb[0].mxu0
    %746 = vmatprep.mubr.f32.mxu0 0.0
    %747 = vmatmul.mubr.f32.gmra.mrb[0].mxu0 %v37
    %v748 = vpop.f32.mrb[0].mxu0
    %v749 = vadd.f32 0.0, %v748
    %v750 = vpop.f32.mrb[0].mxu0
    %751 = vdwg.mxu0
    %v753 = vsel %vm39, %v670, 0
    %755 = vmatprep.subr.mxu0 0.0
    %756 = vmatpush1.msra.mxu0 %v669
    %757 = vmatprep.subr.mxu0 0.0
    %758 = vmatpush1.msra.mxu0 %v753
    %759 = vmatprep.subr.mxu0 0.0
    %760 = vmatpush1.msra.mxu0 0.0
    %761 = vmatprep.subr.mxu0 0.0
    %762 = vmatpush1.msra.mxu0 0.0
    %763 = vmatprep.subr.mxu0 0.0
    %764 = vmatpush1.msra.mxu0 0.0
    %765 = vmatprep.subr.mxu0 0.0
    %766 = vmatpush1.msra.mxu0 0.0
    %767 = vmatprep.subr.mxu0 0.0
    %768 = vmatpush1.msra.mxu0 0.0
    %769 = vmatprep.subr.mxu0 0.0
    %770 = vmatpush1.msra.mxu0 0.0
    %771 = vmatprep.subr.mxu0 0.0
    %772 = vmatpush1.msra.mxu0 0.0
    %773 = vmatprep.subr.mxu0 0.0
    %774 = vmatpush1.msra.mxu0 0.0
    %775 = vmatprep.subr.mxu0 0.0
    %776 = vmatpush1.msra.mxu0 0.0
    %777 = vmatprep.subr.mxu0 0.0
    %778 = vmatpush1.msra.mxu0 0.0
    %779 = vmatprep.subr.mxu0 0.0
    %780 = vmatpush1.msra.mxu0 0.0
    %781 = vmatprep.subr.mxu0 0.0
    %782 = vmatpush1.msra.mxu0 0.0
    %783 = vmatprep.subr.mxu0 0.0
    %784 = vmatpush1.msra.mxu0 0.0
    %785 = vmatprep.subr.mxu0 0.0
    %786 = vmatpush1.msra.mxu0 0.0
    %787 = vmatprep.subr.mxu0 0.0
    %788 = vmatpush1.msra.mxu0 0.0
    %789 = vmatprep.subr.mxu0 0.0
    %790 = vmatpush1.msra.mxu0 0.0
    %791 = vmatprep.subr.mxu0 0.0
    %792 = vmatpush1.msra.mxu0 0.0
    %793 = vmatprep.subr.mxu0 0.0
    %794 = vmatpush1.msra.mxu0 0.0
    %795 = vmatprep.subr.mxu0 0.0
    %796 = vmatpush1.msra.mxu0 0.0
    %797 = vmatprep.subr.mxu0 0.0
    %798 = vmatpush1.msra.mxu0 0.0
    %799 = vmatprep.subr.mxu0 0.0
    %800 = vmatpush1.msra.mxu0 0.0
    %801 = vmatprep.subr.mxu0 0.0
    %802 = vmatpush1.msra.mxu0 0.0
    %803 = vmatprep.subr.mxu0 0.0
    %804 = vmatpush1.msra.mxu0 0.0
    %805 = vmatprep.subr.mxu0 0.0
    %806 = vmatpush1.msra.mxu0 0.0
    %807 = vmatprep.subr.mxu0 0.0
    %808 = vmatpush1.msra.mxu0 0.0
    %809 = vmatprep.subr.mxu0 0.0
    %810 = vmatpush1.msra.mxu0 0.0
    %811 = vmatprep.subr.mxu0 0.0
    %812 = vmatpush1.msra.mxu0 0.0
    %813 = vmatprep.subr.mxu0 0.0
    %814 = vmatpush1.msra.mxu0 0.0
    %815 = vmatprep.subr.mxu0 0.0
    %816 = vmatpush1.msra.mxu0 0.0
    %817 = vmatprep.subr.mxu0 0.0
    %818 = vmatpush1.msra.mxu0 0.0
    %819 = vmatprep.mubr.f32.mxu0 0.0
    %820 = vmatmul.mubr.f32.gmra.mrb[0].mxu0 %v119
    %v821 = vpop.f32.mrb[0].mxu0
    %v822 = vadd.f32 %v744, %v821
    %v823 = vpop.f32.mrb[0].mxu0
    %824 = vmatprep.mubr.f32.mxu0 0.0
    %825 = vmatmul.mubr.f32.gmra.mrb[0].mxu0 %v122
    %v826 = vpop.f32.mrb[0].mxu0
    %v827 = vadd.f32 %v749, %v826
    %v828 = vpop.f32.mrb[0].mxu0
    %829 = vdwg.mxu0
    %830 = vmatprep.subr.mxu0 0.0
    %831 = vmatpush1.msra.mxu0 %v669
    %832 = vmatprep.subr.mxu0 0.0
    %833 = vmatpush1.msra.mxu0 %v753
    %834 = vmatprep.subr.mxu0 0.0
    %835 = vmatpush1.msra.mxu0 0.0
    %836 = vmatprep.subr.mxu0 0.0
    %837 = vmatpush1.msra.mxu0 0.0
    %838 = vmatprep.subr.mxu0 0.0
    %839 = vmatpush1.msra.mxu0 0.0
    %840 = vmatprep.subr.mxu0 0.0
    %841 = vmatpush1.msra.mxu0 0.0
    %842 = vmatprep.subr.mxu0 0.0
    %843 = vmatpush1.msra.mxu0 0.0
    %844 = vmatprep.subr.mxu0 0.0
    %845 = vmatpush1.msra.mxu0 0.0
    %846 = vmatprep.subr.mxu0 0.0
    %847 = vmatpush1.msra.mxu0 0.0
    %848 = vmatprep.subr.mxu0 0.0
    %849 = vmatpush1.msra.mxu0 0.0
    %850 = vmatprep.subr.mxu0 0.0
    %851 = vmatpush1.msra.mxu0 0.0
    %852 = vmatprep.subr.mxu0 0.0
    %853 = vmatpush1.msra.mxu0 0.0
    %854 = vmatprep.subr.mxu0 0.0
    %855 = vmatpush1.msra.mxu0 0.0
    %856 = vmatprep.subr.mxu0 0.0
    %857 = vmatpush1.msra.mxu0 0.0
    %858 = vmatprep.subr.mxu0 0.0
    %859 = vmatpush1.msra.mxu0 0.0
    %860 = vmatprep.subr.mxu0 0.0
    %861 = vmatpush1.msra.mxu0 0.0
    %862 = vmatprep.subr.mxu0 0.0
    %863 = vmatpush1.msra.mxu0 0.0
    %864 = vmatprep.subr.mxu0 0.0
    %865 = vmatpush1.msra.mxu0 0.0
    %866 = vmatprep.subr.mxu0 0.0
    %867 = vmatpush1.msra.mxu0 0.0
    %868 = vmatprep.subr.mxu0 0.0
    %869 = vmatpush1.msra.mxu0 0.0
    %870 = vmatprep.subr.mxu0 0.0
    %871 = vmatpush1.msra.mxu0 0.0
    %872 = vmatprep.subr.mxu0 0.0
    %873 = vmatpush1.msra.mxu0 0.0
    %874 = vmatprep.subr.mxu0 0.0
    %875 = vmatpush1.msra.mxu0 0.0
    %876 = vmatprep.subr.mxu0 0.0
    %877 = vmatpush1.msra.mxu0 0.0
    %878 = vmatprep.subr.mxu0 0.0
    %879 = vmatpush1.msra.mxu0 0.0
    %880 = vmatprep.subr.mxu0 0.0
    %881 = vmatpush1.msra.mxu0 0.0
    %882 = vmatprep.subr.mxu0 0.0
    %883 = vmatpush1.msra.mxu0 0.0
    %884 = vmatprep.subr.mxu0 0.0
    %885 = vmatpush1.msra.mxu0 0.0
    %886 = vmatprep.subr.mxu0 0.0
    %887 = vmatpush1.msra.mxu0 0.0
    %888 = vmatprep.subr.mxu0 0.0
    %889 = vmatpush1.msra.mxu0 0.0
    %890 = vmatprep.subr.mxu0 0.0
    %891 = vmatpush1.msra.mxu0 0.0
    %892 = vmatprep.subr.mxu0 0.0
    %893 = vmatpush1.msra.mxu0 0.0
    %894 = vmatprep.mubr.f32.mxu0 0.0
    %895 = vmatmul.mubr.f32.gmra.mrb[0].mxu0 %v34
    %v896 = vpop.f32.mrb[0].mxu0
    %v897 = vadd.f32 0.0, %v896
    %v898 = vpop.f32.mrb[0].mxu0
    %899 = vmatprep.mubr.f32.mxu0 0.0
    %900 = vmatmul.mubr.f32.gmra.mrb[0].mxu0 %v37
    %v901 = vpop.f32.mrb[0].mxu0
    %v902 = vadd.f32 0.0, %v901
    %v903 = vpop.f32.mrb[0].mxu0
    %904 = vdwg.mxu0
    %905 = vmatprep.subr.mxu0 0.0
    %906 = vmatpush1.msra.mxu0 %v672
    %907 = vmatprep.subr.mxu0 0.0
    %908 = vmatpush1.msra.mxu0 %v675
    %909 = vmatprep.subr.mxu0 0.0
    %910 = vmatpush1.msra.mxu0 0.0
    %911 = vmatprep.subr.mxu0 0.0
    %912 = vmatpush1.msra.mxu0 0.0
    %913 = vmatprep.subr.mxu0 0.0
    %914 = vmatpush1.msra.mxu0 0.0
    %915 = vmatprep.subr.mxu0 0.0
    %916 = vmatpush1.msra.mxu0 0.0
    %917 = vmatprep.subr.mxu0 0.0
    %918 = vmatpush1.msra.mxu0 0.0
    %919 = vmatprep.subr.mxu0 0.0
    %920 = vmatpush1.msra.mxu0 0.0
    %921 = vmatprep.subr.mxu0 0.0
    %922 = vmatpush1.msra.mxu0 0.0
    %923 = vmatprep.subr.mxu0 0.0
    %924 = vmatpush1.msra.mxu0 0.0
    %925 = vmatprep.subr.mxu0 0.0
    %926 = vmatpush1.msra.mxu0 0.0
    %927 = vmatprep.subr.mxu0 0.0
    %928 = vmatpush1.msra.mxu0 0.0
    %929 = vmatprep.subr.mxu0 0.0
    %930 = vmatpush1.msra.mxu0 0.0
    %931 = vmatprep.subr.mxu0 0.0
    %932 = vmatpush1.msra.mxu0 0.0
    %933 = vmatprep.subr.mxu0 0.0
    %934 = vmatpush1.msra.mxu0 0.0
    %935 = vmatprep.subr.mxu0 0.0
    %936 = vmatpush1.msra.mxu0 0.0
    %937 = vmatprep.subr.mxu0 0.0
    %938 = vmatpush1.msra.mxu0 0.0
    %939 = vmatprep.subr.mxu0 0.0
    %940 = vmatpush1.msra.mxu0 0.0
    %941 = vmatprep.subr.mxu0 0.0
    %942 = vmatpush1.msra.mxu0 0.0
    %943 = vmatprep.subr.mxu0 0.0
    %944 = vmatpush1.msra.mxu0 0.0
    %945 = vmatprep.subr.mxu0 0.0
    %946 = vmatpush1.msra.mxu0 0.0
    %947 = vmatprep.subr.mxu0 0.0
    %948 = vmatpush1.msra.mxu0 0.0
    %949 = vmatprep.subr.mxu0 0.0
    %950 = vmatpush1.msra.mxu0 0.0
    %951 = vmatprep.subr.mxu0 0.0
    %952 = vmatpush1.msra.mxu0 0.0
    %953 = vmatprep.subr.mxu0 0.0
    %954 = vmatpush1.msra.mxu0 0.0
    %955 = vmatprep.subr.mxu0 0.0
    %956 = vmatpush1.msra.mxu0 0.0
    %957 = vmatprep.subr.mxu0 0.0
    %958 = vmatpush1.msra.mxu0 0.0
    %959 = vmatprep.subr.mxu0 0.0
    %960 = vmatpush1.msra.mxu0 0.0
    %961 = vmatprep.subr.mxu0 0.0
    %962 = vmatpush1.msra.mxu0 0.0
    %963 = vmatprep.subr.mxu0 0.0
    %964 = vmatpush1.msra.mxu0 0.0
    %965 = vmatprep.subr.mxu0 0.0
    %966 = vmatpush1.msra.mxu0 0.0
    %967 = vmatprep.subr.mxu0 0.0
    %968 = vmatpush1.msra.mxu0 0.0
    %969 = vmatprep.mubr.f32.mxu0 0.0
    %970 = vmatmul.mubr.f32.gmra.mrb[0].mxu0 %v119
    %v971 = vpop.f32.mrb[0].mxu0
    %v972 = vadd.f32 0.0, %v971
    %v973 = vpop.f32.mrb[0].mxu0
    %974 = vmatprep.mubr.f32.mxu0 0.0
    %975 = vmatmul.mubr.f32.gmra.mrb[0].mxu0 %v122
    %v976 = vpop.f32.mrb[0].mxu0
    %v977 = vadd.f32 0.0, %v976
    %v978 = vpop.f32.mrb[0].mxu0
    %979 = vdwg.mxu0
    %v980 = vsub.f32 %v897, %v972
    %v981 = vsub.f32 %v902, %v977
    %s982 = scalar_lea.vmem %s0, 48
    %v983 = vld [vmem:[%s982] sm:$0xff]
    %v984 = vld [vmem:[%s982 + $0x8] sm:$0x1]
    %s985 = scalar_lea.vmem %s1, 48
    %v986 = vld [vmem:[%s985] sm:$0xff]
    %v987 = vld [vmem:[%s985 + $0x8] sm:$0x1]
    %v989 = vsel %vm39, %v987, 0
    %991 = vmatprep.subr.mxu0 0.0
    %992 = vmatpush1.msra.mxu0 %v986
    %993 = vmatprep.subr.mxu0 0.0
    %994 = vmatpush1.msra.mxu0 %v989
    %995 = vmatprep.subr.mxu0 0.0
    %996 = vmatpush1.msra.mxu0 0.0
    %997 = vmatprep.subr.mxu0 0.0
    %998 = vmatpush1.msra.mxu0 0.0
    %999 = vmatprep.subr.mxu0 0.0
    %1000 = vmatpush1.msra.mxu0 0.0
    %1001 = vmatprep.subr.mxu0 0.0
    %1002 = vmatpush1.msra.mxu0 0.0
    %1003 = vmatprep.subr.mxu0 0.0
    %1004 = vmatpush1.msra.mxu0 0.0
    %1005 = vmatprep.subr.mxu0 0.0
    %1006 = vmatpush1.msra.mxu0 0.0
    %1007 = vmatprep.subr.mxu0 0.0
    %1008 = vmatpush1.msra.mxu0 0.0
    %1009 = vmatprep.subr.mxu0 0.0
    %1010 = vmatpush1.msra.mxu0 0.0
    %1011 = vmatprep.subr.mxu0 0.0
    %1012 = vmatpush1.msra.mxu0 0.0
    %1013 = vmatprep.subr.mxu0 0.0
    %1014 = vmatpush1.msra.mxu0 0.0
    %1015 = vmatprep.subr.mxu0 0.0
    %1016 = vmatpush1.msra.mxu0 0.0
    %1017 = vmatprep.subr.mxu0 0.0
    %1018 = vmatpush1.msra.mxu0 0.0
    %1019 = vmatprep.subr.mxu0 0.0
    %1020 = vmatpush1.msra.mxu0 0.0
    %1021 = vmatprep.subr.mxu0 0.0
    %1022 = vmatpush1.msra.mxu0 0.0
    %1023 = vmatprep.subr.mxu0 0.0
    %1024 = vmatpush1.msra.mxu0 0.0
    %1025 = vmatprep.subr.mxu0 0.0
    %1026 = vmatpush1.msra.mxu0 0.0
    %1027 = vmatprep.subr.mxu0 0.0
    %1028 = vmatpush1.msra.mxu0 0.0
    %1029 = vmatprep.subr.mxu0 0.0
    %1030 = vmatpush1.msra.mxu0 0.0
    %1031 = vmatprep.subr.mxu0 0.0
    %1032 = vmatpush1.msra.mxu0 0.0
    %1033 = vmatprep.subr.mxu0 0.0
    %1034 = vmatpush1.msra.mxu0 0.0
    %1035 = vmatprep.subr.mxu0 0.0
    %1036 = vmatpush1.msra.mxu0 0.0
    %1037 = vmatprep.subr.mxu0 0.0
    %1038 = vmatpush1.msra.mxu0 0.0
    %1039 = vmatprep.subr.mxu0 0.0
    %1040 = vmatpush1.msra.mxu0 0.0
    %1041 = vmatprep.subr.mxu0 0.0
    %1042 = vmatpush1.msra.mxu0 0.0
    %1043 = vmatprep.subr.mxu0 0.0
    %1044 = vmatpush1.msra.mxu0 0.0
    %1045 = vmatprep.subr.mxu0 0.0
    %1046 = vmatpush1.msra.mxu0 0.0
    %1047 = vmatprep.subr.mxu0 0.0
    %1048 = vmatpush1.msra.mxu0 0.0
    %1049 = vmatprep.subr.mxu0 0.0
    %1050 = vmatpush1.msra.mxu0 0.0
    %1051 = vmatprep.subr.mxu0 0.0
    %1052 = vmatpush1.msra.mxu0 0.0
    %1053 = vmatprep.subr.mxu0 0.0
    %1054 = vmatpush1.msra.mxu0 0.0
    %1055 = vmatprep.mubr.f32.mxu0 0.0
    %1056 = vmatmul.mubr.f32.gmra.mrb[0].mxu0 %v34
    %v1057 = vpop.f32.mrb[0].mxu0
    %v1058 = vadd.f32 0.0, %v1057
    %v1059 = vpop.f32.mrb[0].mxu0
    %1060 = vmatprep.mubr.f32.mxu0 0.0
    %1061 = vmatmul.mubr.f32.gmra.mrb[0].mxu0 %v37
    %v1062 = vpop.f32.mrb[0].mxu0
    %v1063 = vadd.f32 0.0, %v1062
    %v1064 = vpop.f32.mrb[0].mxu0
    %1065 = vdwg.mxu0
    %v1067 = vsel %vm39, %v984, 0
    %1069 = vmatprep.subr.mxu0 0.0
    %1070 = vmatpush1.msra.mxu0 %v983
    %1071 = vmatprep.subr.mxu0 0.0
    %1072 = vmatpush1.msra.mxu0 %v1067
    %1073 = vmatprep.subr.mxu0 0.0
    %1074 = vmatpush1.msra.mxu0 0.0
    %1075 = vmatprep.subr.mxu0 0.0
    %1076 = vmatpush1.msra.mxu0 0.0
    %1077 = vmatprep.subr.mxu0 0.0
    %1078 = vmatpush1.msra.mxu0 0.0
    %1079 = vmatprep.subr.mxu0 0.0
    %1080 = vmatpush1.msra.mxu0 0.0
    %1081 = vmatprep.subr.mxu0 0.0
    %1082 = vmatpush1.msra.mxu0 0.0
    %1083 = vmatprep.subr.mxu0 0.0
    %1084 = vmatpush1.msra.mxu0 0.0
    %1085 = vmatprep.subr.mxu0 0.0
    %1086 = vmatpush1.msra.mxu0 0.0
    %1087 = vmatprep.subr.mxu0 0.0
    %1088 = vmatpush1.msra.mxu0 0.0
    %1089 = vmatprep.subr.mxu0 0.0
    %1090 = vmatpush1.msra.mxu0 0.0
    %1091 = vmatprep.subr.mxu0 0.0
    %1092 = vmatpush1.msra.mxu0 0.0
    %1093 = vmatprep.subr.mxu0 0.0
    %1094 = vmatpush1.msra.mxu0 0.0
    %1095 = vmatprep.subr.mxu0 0.0
    %1096 = vmatpush1.msra.mxu0 0.0
    %1097 = vmatprep.subr.mxu0 0.0
    %1098 = vmatpush1.msra.mxu0 0.0
    %1099 = vmatprep.subr.mxu0 0.0
    %1100 = vmatpush1.msra.mxu0 0.0
    %1101 = vmatprep.subr.mxu0 0.0
    %1102 = vmatpush1.msra.mxu0 0.0
    %1103 = vmatprep.subr.mxu0 0.0
    %1104 = vmatpush1.msra.mxu0 0.0
    %1105 = vmatprep.subr.mxu0 0.0
    %1106 = vmatpush1.msra.mxu0 0.0
    %1107 = vmatprep.subr.mxu0 0.0
    %1108 = vmatpush1.msra.mxu0 0.0
    %1109 = vmatprep.subr.mxu0 0.0
    %1110 = vmatpush1.msra.mxu0 0.0
    %1111 = vmatprep.subr.mxu0 0.0
    %1112 = vmatpush1.msra.mxu0 0.0
    %1113 = vmatprep.subr.mxu0 0.0
    %1114 = vmatpush1.msra.mxu0 0.0
    %1115 = vmatprep.subr.mxu0 0.0
    %1116 = vmatpush1.msra.mxu0 0.0
    %1117 = vmatprep.subr.mxu0 0.0
    %1118 = vmatpush1.msra.mxu0 0.0
    %1119 = vmatprep.subr.mxu0 0.0
    %1120 = vmatpush1.msra.mxu0 0.0
    %1121 = vmatprep.subr.mxu0 0.0
    %1122 = vmatpush1.msra.mxu0 0.0
    %1123 = vmatprep.subr.mxu0 0.0
    %1124 = vmatpush1.msra.mxu0 0.0
    %1125 = vmatprep.subr.mxu0 0.0
    %1126 = vmatpush1.msra.mxu0 0.0
    %1127 = vmatprep.subr.mxu0 0.0
    %1128 = vmatpush1.msra.mxu0 0.0
    %1129 = vmatprep.subr.mxu0 0.0
    %1130 = vmatpush1.msra.mxu0 0.0
    %1131 = vmatprep.subr.mxu0 0.0
    %1132 = vmatpush1.msra.mxu0 0.0
    %1133 = vmatprep.mubr.f32.mxu0 0.0
    %1134 = vmatmul.mubr.f32.gmra.mrb[0].mxu0 %v119
    %v1135 = vpop.f32.mrb[0].mxu0
    %v1136 = vadd.f32 %v1058, %v1135
    %v1137 = vpop.f32.mrb[0].mxu0
    %1138 = vmatprep.mubr.f32.mxu0 0.0
    %1139 = vmatmul.mubr.f32.gmra.mrb[0].mxu0 %v122
    %v1140 = vpop.f32.mrb[0].mxu0
    %v1141 = vadd.f32 %v1063, %v1140
    %v1142 = vpop.f32.mrb[0].mxu0
    %1143 = vdwg.mxu0
    %1144 = vmatprep.subr.mxu0 0.0
    %1145 = vmatpush1.msra.mxu0 %v983
    %1146 = vmatprep.subr.mxu0 0.0
    %1147 = vmatpush1.msra.mxu0 %v1067
    %1148 = vmatprep.subr.mxu0 0.0
    %1149 = vmatpush1.msra.mxu0 0.0
    %1150 = vmatprep.subr.mxu0 0.0
    %1151 = vmatpush1.msra.mxu0 0.0
    %1152 = vmatprep.subr.mxu0 0.0
    %1153 = vmatpush1.msra.mxu0 0.0
    %1154 = vmatprep.subr.mxu0 0.0
    %1155 = vmatpush1.msra.mxu0 0.0
    %1156 = vmatprep.subr.mxu0 0.0
    %1157 = vmatpush1.msra.mxu0 0.0
    %1158 = vmatprep.subr.mxu0 0.0
    %1159 = vmatpush1.msra.mxu0 0.0
    %1160 = vmatprep.subr.mxu0 0.0
    %1161 = vmatpush1.msra.mxu0 0.0
    %1162 = vmatprep.subr.mxu0 0.0
    %1163 = vmatpush1.msra.mxu0 0.0
    %1164 = vmatprep.subr.mxu0 0.0
    %1165 = vmatpush1.msra.mxu0 0.0
    %1166 = vmatprep.subr.mxu0 0.0
    %1167 = vmatpush1.msra.mxu0 0.0
    %1168 = vmatprep.subr.mxu0 0.0
    %1169 = vmatpush1.msra.mxu0 0.0
    %1170 = vmatprep.subr.mxu0 0.0
    %1171 = vmatpush1.msra.mxu0 0.0
    %1172 = vmatprep.subr.mxu0 0.0
    %1173 = vmatpush1.msra.mxu0 0.0
    %1174 = vmatprep.subr.mxu0 0.0
    %1175 = vmatpush1.msra.mxu0 0.0
    %1176 = vmatprep.subr.mxu0 0.0
    %1177 = vmatpush1.msra.mxu0 0.0
    %1178 = vmatprep.subr.mxu0 0.0
    %1179 = vmatpush1.msra.mxu0 0.0
    %1180 = vmatprep.subr.mxu0 0.0
    %1181 = vmatpush1.msra.mxu0 0.0
    %1182 = vmatprep.subr.mxu0 0.0
    %1183 = vmatpush1.msra.mxu0 0.0
    %1184 = vmatprep.subr.mxu0 0.0
    %1185 = vmatpush1.msra.mxu0 0.0
    %1186 = vmatprep.subr.mxu0 0.0
    %1187 = vmatpush1.msra.mxu0 0.0
    %1188 = vmatprep.subr.mxu0 0.0
    %1189 = vmatpush1.msra.mxu0 0.0
    %1190 = vmatprep.subr.mxu0 0.0
    %1191 = vmatpush1.msra.mxu0 0.0
    %1192 = vmatprep.subr.mxu0 0.0
    %1193 = vmatpush1.msra.mxu0 0.0
    %1194 = vmatprep.subr.mxu0 0.0
    %1195 = vmatpush1.msra.mxu0 0.0
    %1196 = vmatprep.subr.mxu0 0.0
    %1197 = vmatpush1.msra.mxu0 0.0
    %1198 = vmatprep.subr.mxu0 0.0
    %1199 = vmatpush1.msra.mxu0 0.0
    %1200 = vmatprep.subr.mxu0 0.0
    %1201 = vmatpush1.msra.mxu0 0.0
    %1202 = vmatprep.subr.mxu0 0.0
    %1203 = vmatpush1.msra.mxu0 0.0
    %1204 = vmatprep.subr.mxu0 0.0
    %1205 = vmatpush1.msra.mxu0 0.0
    %1206 = vmatprep.subr.mxu0 0.0
    %1207 = vmatpush1.msra.mxu0 0.0
    %1208 = vmatprep.mubr.f32.mxu0 0.0
    %1209 = vmatmul.mubr.f32.gmra.mrb[0].mxu0 %v34
    %v1210 = vpop.f32.mrb[0].mxu0
    %v1211 = vadd.f32 0.0, %v1210
    %v1212 = vpop.f32.mrb[0].mxu0
    %1213 = vmatprep.mubr.f32.mxu0 0.0
    %1214 = vmatmul.mubr.f32.gmra.mrb[0].mxu0 %v37
    %v1215 = vpop.f32.mrb[0].mxu0
    %v1216 = vadd.f32 0.0, %v1215
    %v1217 = vpop.f32.mrb[0].mxu0
    %1218 = vdwg.mxu0
    %1219 = vmatprep.subr.mxu0 0.0
    %1220 = vmatpush1.msra.mxu0 %v986
    %1221 = vmatprep.subr.mxu0 0.0
    %1222 = vmatpush1.msra.mxu0 %v989
    %1223 = vmatprep.subr.mxu0 0.0
    %1224 = vmatpush1.msra.mxu0 0.0
    %1225 = vmatprep.subr.mxu0 0.0
    %1226 = vmatpush1.msra.mxu0 0.0
    %1227 = vmatprep.subr.mxu0 0.0
    %1228 = vmatpush1.msra.mxu0 0.0
    %1229 = vmatprep.subr.mxu0 0.0
    %1230 = vmatpush1.msra.mxu0 0.0
    %1231 = vmatprep.subr.mxu0 0.0
    %1232 = vmatpush1.msra.mxu0 0.0
    %1233 = vmatprep.subr.mxu0 0.0
    %1234 = vmatpush1.msra.mxu0 0.0
    %1235 = vmatprep.subr.mxu0 0.0
    %1236 = vmatpush1.msra.mxu0 0.0
    %1237 = vmatprep.subr.mxu0 0.0
    %1238 = vmatpush1.msra.mxu0 0.0
    %1239 = vmatprep.subr.mxu0 0.0
    %1240 = vmatpush1.msra.mxu0 0.0
    %1241 = vmatprep.subr.mxu0 0.0
    %1242 = vmatpush1.msra.mxu0 0.0
    %1243 = vmatprep.subr.mxu0 0.0
    %1244 = vmatpush1.msra.mxu0 0.0
    %1245 = vmatprep.subr.mxu0 0.0
    %1246 = vmatpush1.msra.mxu0 0.0
    %1247 = vmatprep.subr.mxu0 0.0
    %1248 = vmatpush1.msra.mxu0 0.0
    %1249 = vmatprep.subr.mxu0 0.0
    %1250 = vmatpush1.msra.mxu0 0.0
    %1251 = vmatprep.subr.mxu0 0.0
    %1252 = vmatpush1.msra.mxu0 0.0
    %1253 = vmatprep.subr.mxu0 0.0
    %1254 = vmatpush1.msra.mxu0 0.0
    %1255 = vmatprep.subr.mxu0 0.0
    %1256 = vmatpush1.msra.mxu0 0.0
    %1257 = vmatprep.subr.mxu0 0.0
    %1258 = vmatpush1.msra.mxu0 0.0
    %1259 = vmatprep.subr.mxu0 0.0
    %1260 = vmatpush1.msra.mxu0 0.0
    %1261 = vmatprep.subr.mxu0 0.0
    %1262 = vmatpush1.msra.mxu0 0.0
    %1263 = vmatprep.subr.mxu0 0.0
    %1264 = vmatpush1.msra.mxu0 0.0
    %1265 = vmatprep.subr.mxu0 0.0
    %1266 = vmatpush1.msra.mxu0 0.0
    %1267 = vmatprep.subr.mxu0 0.0
    %1268 = vmatpush1.msra.mxu0 0.0
    %1269 = vmatprep.subr.mxu0 0.0
    %1270 = vmatpush1.msra.mxu0 0.0
    %1271 = vmatprep.subr.mxu0 0.0
    %1272 = vmatpush1.msra.mxu0 0.0
    %1273 = vmatprep.subr.mxu0 0.0
    %1274 = vmatpush1.msra.mxu0 0.0
    %1275 = vmatprep.subr.mxu0 0.0
    %1276 = vmatpush1.msra.mxu0 0.0
    %1277 = vmatprep.subr.mxu0 0.0
    %1278 = vmatpush1.msra.mxu0 0.0
    %1279 = vmatprep.subr.mxu0 0.0
    %1280 = vmatpush1.msra.mxu0 0.0
    %1281 = vmatprep.subr.mxu0 0.0
    %1282 = vmatpush1.msra.mxu0 0.0
    %1283 = vmatprep.mubr.f32.mxu0 0.0
    %1284 = vmatmul.mubr.f32.gmra.mrb[0].mxu0 %v119
    %v1285 = vpop.f32.mrb[0].mxu0
    %v1286 = vadd.f32 0.0, %v1285
    %v1287 = vpop.f32.mrb[0].mxu0
    %1288 = vmatprep.mubr.f32.mxu0 0.0
    %1289 = vmatmul.mubr.f32.gmra.mrb[0].mxu0 %v122
    %v1290 = vpop.f32.mrb[0].mxu0
    %v1291 = vadd.f32 0.0, %v1290
    %v1292 = vpop.f32.mrb[0].mxu0
    %1293 = vdwg.mxu0
    %v1294 = vsub.f32 %v1211, %v1286
    %v1295 = vsub.f32 %v1216, %v1291
    %s1296 = scalar_lea.vmem %s0, 64
    %v1297 = vld [vmem:[%s1296] sm:$0xff]
    %v1298 = vld [vmem:[%s1296 + $0x8] sm:$0x1]
    %s1299 = scalar_lea.vmem %s1, 64
    %v1300 = vld [vmem:[%s1299] sm:$0xff]
    %v1301 = vld [vmem:[%s1299 + $0x8] sm:$0x1]
    %v1303 = vsel %vm39, %v1301, 0
    %1305 = vmatprep.subr.mxu0 0.0
    %1306 = vmatpush1.msra.mxu0 %v1300
    %1307 = vmatprep.subr.mxu0 0.0
    %1308 = vmatpush1.msra.mxu0 %v1303
    %1309 = vmatprep.subr.mxu0 0.0
    %1310 = vmatpush1.msra.mxu0 0.0
    %1311 = vmatprep.subr.mxu0 0.0
    %1312 = vmatpush1.msra.mxu0 0.0
    %1313 = vmatprep.subr.mxu0 0.0
    %1314 = vmatpush1.msra.mxu0 0.0
    %1315 = vmatprep.subr.mxu0 0.0
    %1316 = vmatpush1.msra.mxu0 0.0
    %1317 = vmatprep.subr.mxu0 0.0
    %1318 = vmatpush1.msra.mxu0 0.0
    %1319 = vmatprep.subr.mxu0 0.0
    %1320 = vmatpush1.msra.mxu0 0.0
    %1321 = vmatprep.subr.mxu0 0.0
    %1322 = vmatpush1.msra.mxu0 0.0
    %1323 = vmatprep.subr.mxu0 0.0
    %1324 = vmatpush1.msra.mxu0 0.0
    %1325 = vmatprep.subr.mxu0 0.0
    %1326 = vmatpush1.msra.mxu0 0.0
    %1327 = vmatprep.subr.mxu0 0.0
    %1328 = vmatpush1.msra.mxu0 0.0
    %1329 = vmatprep.subr.mxu0 0.0
    %1330 = vmatpush1.msra.mxu0 0.0
    %1331 = vmatprep.subr.mxu0 0.0
    %1332 = vmatpush1.msra.mxu0 0.0
    %1333 = vmatprep.subr.mxu0 0.0
    %1334 = vmatpush1.msra.mxu0 0.0
    %1335 = vmatprep.subr.mxu0 0.0
    %1336 = vmatpush1.msra.mxu0 0.0
    %1337 = vmatprep.subr.mxu0 0.0
    %1338 = vmatpush1.msra.mxu0 0.0
    %1339 = vmatprep.subr.mxu0 0.0
    %1340 = vmatpush1.msra.mxu0 0.0
    %1341 = vmatprep.subr.mxu0 0.0
    %1342 = vmatpush1.msra.mxu0 0.0
    %1343 = vmatprep.subr.mxu0 0.0
    %1344 = vmatpush1.msra.mxu0 0.0
    %1345 = vmatprep.subr.mxu0 0.0
    %1346 = vmatpush1.msra.mxu0 0.0
    %1347 = vmatprep.subr.mxu0 0.0
    %1348 = vmatpush1.msra.mxu0 0.0
    %1349 = vmatprep.subr.mxu0 0.0
    %1350 = vmatpush1.msra.mxu0 0.0
    %1351 = vmatprep.subr.mxu0 0.0
    %1352 = vmatpush1.msra.mxu0 0.0
    %1353 = vmatprep.subr.mxu0 0.0
    %1354 = vmatpush1.msra.mxu0 0.0
    %1355 = vmatprep.subr.mxu0 0.0
    %1356 = vmatpush1.msra.mxu0 0.0
    %1357 = vmatprep.subr.mxu0 0.0
    %1358 = vmatpush1.msra.mxu0 0.0
    %1359 = vmatprep.subr.mxu0 0.0
    %1360 = vmatpush1.msra.mxu0 0.0
    %1361 = vmatprep.subr.mxu0 0.0
    %1362 = vmatpush1.msra.mxu0 0.0
    %1363 = vmatprep.subr.mxu0 0.0
    %1364 = vmatpush1.msra.mxu0 0.0
    %1365 = vmatprep.subr.mxu0 0.0
    %1366 = vmatpush1.msra.mxu0 0.0
    %1367 = vmatprep.subr.mxu0 0.0
    %1368 = vmatpush1.msra.mxu0 0.0
    %1369 = vmatprep.mubr.f32.mxu0 0.0
    %1370 = vmatmul.mubr.f32.gmra.mrb[0].mxu0 %v34
    %v1371 = vpop.f32.mrb[0].mxu0
    %v1372 = vadd.f32 0.0, %v1371
    %v1373 = vpop.f32.mrb[0].mxu0
    %1374 = vmatprep.mubr.f32.mxu0 0.0
    %1375 = vmatmul.mubr.f32.gmra.mrb[0].mxu0 %v37
    %v1376 = vpop.f32.mrb[0].mxu0
    %v1377 = vadd.f32 0.0, %v1376
    %v1378 = vpop.f32.mrb[0].mxu0
    %1379 = vdwg.mxu0
    %v1381 = vsel %vm39, %v1298, 0
    %1383 = vmatprep.subr.mxu0 0.0
    %1384 = vmatpush1.msra.mxu0 %v1297
    %1385 = vmatprep.subr.mxu0 0.0
    %1386 = vmatpush1.msra.mxu0 %v1381
    %1387 = vmatprep.subr.mxu0 0.0
    %1388 = vmatpush1.msra.mxu0 0.0
    %1389 = vmatprep.subr.mxu0 0.0
    %1390 = vmatpush1.msra.mxu0 0.0
    %1391 = vmatprep.subr.mxu0 0.0
    %1392 = vmatpush1.msra.mxu0 0.0
    %1393 = vmatprep.subr.mxu0 0.0
    %1394 = vmatpush1.msra.mxu0 0.0
    %1395 = vmatprep.subr.mxu0 0.0
    %1396 = vmatpush1.msra.mxu0 0.0
    %1397 = vmatprep.subr.mxu0 0.0
    %1398 = vmatpush1.msra.mxu0 0.0
    %1399 = vmatprep.subr.mxu0 0.0
    %1400 = vmatpush1.msra.mxu0 0.0
    %1401 = vmatprep.subr.mxu0 0.0
    %1402 = vmatpush1.msra.mxu0 0.0
    %1403 = vmatprep.subr.mxu0 0.0
    %1404 = vmatpush1.msra.mxu0 0.0
    %1405 = vmatprep.subr.mxu0 0.0
    %1406 = vmatpush1.msra.mxu0 0.0
    %1407 = vmatprep.subr.mxu0 0.0
    %1408 = vmatpush1.msra.mxu0 0.0
    %1409 = vmatprep.subr.mxu0 0.0
    %1410 = vmatpush1.msra.mxu0 0.0
    %1411 = vmatprep.subr.mxu0 0.0
    %1412 = vmatpush1.msra.mxu0 0.0
    %1413 = vmatprep.subr.mxu0 0.0
    %1414 = vmatpush1.msra.mxu0 0.0
    %1415 = vmatprep.subr.mxu0 0.0
    %1416 = vmatpush1.msra.mxu0 0.0
    %1417 = vmatprep.subr.mxu0 0.0
    %1418 = vmatpush1.msra.mxu0 0.0
    %1419 = vmatprep.subr.mxu0 0.0
    %1420 = vmatpush1.msra.mxu0 0.0
    %1421 = vmatprep.subr.mxu0 0.0
    %1422 = vmatpush1.msra.mxu0 0.0
    %1423 = vmatprep.subr.mxu0 0.0
    %1424 = vmatpush1.msra.mxu0 0.0
    %1425 = vmatprep.subr.mxu0 0.0
    %1426 = vmatpush1.msra.mxu0 0.0
    %1427 = vmatprep.subr.mxu0 0.0
    %1428 = vmatpush1.msra.mxu0 0.0
    %1429 = vmatprep.subr.mxu0 0.0
    %1430 = vmatpush1.msra.mxu0 0.0
    %1431 = vmatprep.subr.mxu0 0.0
    %1432 = vmatpush1.msra.mxu0 0.0
    %1433 = vmatprep.subr.mxu0 0.0
    %1434 = vmatpush1.msra.mxu0 0.0
    %1435 = vmatprep.subr.mxu0 0.0
    %1436 = vmatpush1.msra.mxu0 0.0
    %1437 = vmatprep.subr.mxu0 0.0
    %1438 = vmatpush1.msra.mxu0 0.0
    %1439 = vmatprep.subr.mxu0 0.0
    %1440 = vmatpush1.msra.mxu0 0.0
    %1441 = vmatprep.subr.mxu0 0.0
    %1442 = vmatpush1.msra.mxu0 0.0
    %1443 = vmatprep.subr.mxu0 0.0
    %1444 = vmatpush1.msra.mxu0 0.0
    %1445 = vmatprep.subr.mxu0 0.0
    %1446 = vmatpush1.msra.mxu0 0.0
    %1447 = vmatprep.mubr.f32.mxu0 0.0
    %1448 = vmatmul.mubr.f32.gmra.mrb[0].mxu0 %v119
    %v1449 = vpop.f32.mrb[0].mxu0
    %v1450 = vadd.f32 %v1372, %v1449
    %v1451 = vpop.f32.mrb[0].mxu0
    %1452 = vmatprep.mubr.f32.mxu0 0.0
    %1453 = vmatmul.mubr.f32.gmra.mrb[0].mxu0 %v122
    %v1454 = vpop.f32.mrb[0].mxu0
    %v1455 = vadd.f32 %v1377, %v1454
    %v1456 = vpop.f32.mrb[0].mxu0
    %1457 = vdwg.mxu0
    %1458 = vmatprep.subr.mxu0 0.0
    %1459 = vmatpush1.msra.mxu0 %v1297
    %1460 = vmatprep.subr.mxu0 0.0
    %1461 = vmatpush1.msra.mxu0 %v1381
    %1462 = vmatprep.subr.mxu0 0.0
    %1463 = vmatpush1.msra.mxu0 0.0
    %1464 = vmatprep.subr.mxu0 0.0
    %1465 = vmatpush1.msra.mxu0 0.0
    %1466 = vmatprep.subr.mxu0 0.0
    %1467 = vmatpush1.msra.mxu0 0.0
    %1468 = vmatprep.subr.mxu0 0.0
    %1469 = vmatpush1.msra.mxu0 0.0
    %1470 = vmatprep.subr.mxu0 0.0
    %1471 = vmatpush1.msra.mxu0 0.0
    %1472 = vmatprep.subr.mxu0 0.0
    %1473 = vmatpush1.msra.mxu0 0.0
    %1474 = vmatprep.subr.mxu0 0.0
    %1475 = vmatpush1.msra.mxu0 0.0
    %1476 = vmatprep.subr.mxu0 0.0
    %1477 = vmatpush1.msra.mxu0 0.0
    %1478 = vmatprep.subr.mxu0 0.0
    %1479 = vmatpush1.msra.mxu0 0.0
    %1480 = vmatprep.subr.mxu0 0.0
    %1481 = vmatpush1.msra.mxu0 0.0
    %1482 = vmatprep.subr.mxu0 0.0
    %1483 = vmatpush1.msra.mxu0 0.0
    %1484 = vmatprep.subr.mxu0 0.0
    %1485 = vmatpush1.msra.mxu0 0.0
    %1486 = vmatprep.subr.mxu0 0.0
    %1487 = vmatpush1.msra.mxu0 0.0
    %1488 = vmatprep.subr.mxu0 0.0
    %1489 = vmatpush1.msra.mxu0 0.0
    %1490 = vmatprep.subr.mxu0 0.0
    %1491 = vmatpush1.msra.mxu0 0.0
    %1492 = vmatprep.subr.mxu0 0.0
    %1493 = vmatpush1.msra.mxu0 0.0
    %1494 = vmatprep.subr.mxu0 0.0
    %1495 = vmatpush1.msra.mxu0 0.0
    %1496 = vmatprep.subr.mxu0 0.0
    %1497 = vmatpush1.msra.mxu0 0.0
    %1498 = vmatprep.subr.mxu0 0.0
    %1499 = vmatpush1.msra.mxu0 0.0
    %1500 = vmatprep.subr.mxu0 0.0
    %1501 = vmatpush1.msra.mxu0 0.0
    %1502 = vmatprep.subr.mxu0 0.0
    %1503 = vmatpush1.msra.mxu0 0.0
    %1504 = vmatprep.subr.mxu0 0.0
    %1505 = vmatpush1.msra.mxu0 0.0
    %1506 = vmatprep.subr.mxu0 0.0
    %1507 = vmatpush1.msra.mxu0 0.0
    %1508 = vmatprep.subr.mxu0 0.0
    %1509 = vmatpush1.msra.mxu0 0.0
    %1510 = vmatprep.subr.mxu0 0.0
    %1511 = vmatpush1.msra.mxu0 0.0
    %1512 = vmatprep.subr.mxu0 0.0
    %1513 = vmatpush1.msra.mxu0 0.0
    %1514 = vmatprep.subr.mxu0 0.0
    %1515 = vmatpush1.msra.mxu0 0.0
    %1516 = vmatprep.subr.mxu0 0.0
    %1517 = vmatpush1.msra.mxu0 0.0
    %1518 = vmatprep.subr.mxu0 0.0
    %1519 = vmatpush1.msra.mxu0 0.0
    %1520 = vmatprep.subr.mxu0 0.0
    %1521 = vmatpush1.msra.mxu0 0.0
    %1522 = vmatprep.mubr.f32.mxu0 0.0
    %1523 = vmatmul.mubr.f32.gmra.mrb[0].mxu0 %v34
    %v1524 = vpop.f32.mrb[0].mxu0
    %v1525 = vadd.f32 0.0, %v1524
    %v1526 = vpop.f32.mrb[0].mxu0
    %1527 = vmatprep.mubr.f32.mxu0 0.0
    %1528 = vmatmul.mubr.f32.gmra.mrb[0].mxu0 %v37
    %v1529 = vpop.f32.mrb[0].mxu0
    %v1530 = vadd.f32 0.0, %v1529
    %v1531 = vpop.f32.mrb[0].mxu0
    %1532 = vdwg.mxu0
    %1533 = vmatprep.subr.mxu0 0.0
    %1534 = vmatpush1.msra.mxu0 %v1300
    %1535 = vmatprep.subr.mxu0 0.0
    %1536 = vmatpush1.msra.mxu0 %v1303
    %1537 = vmatprep.subr.mxu0 0.0
    %1538 = vmatpush1.msra.mxu0 0.0
    %1539 = vmatprep.subr.mxu0 0.0
    %1540 = vmatpush1.msra.mxu0 0.0
    %1541 = vmatprep.subr.mxu0 0.0
    %1542 = vmatpush1.msra.mxu0 0.0
    %1543 = vmatprep.subr.mxu0 0.0
    %1544 = vmatpush1.msra.mxu0 0.0
    %1545 = vmatprep.subr.mxu0 0.0
    %1546 = vmatpush1.msra.mxu0 0.0
    %1547 = vmatprep.subr.mxu0 0.0
    %1548 = vmatpush1.msra.mxu0 0.0
    %1549 = vmatprep.subr.mxu0 0.0
    %1550 = vmatpush1.msra.mxu0 0.0
    %1551 = vmatprep.subr.mxu0 0.0
    %1552 = vmatpush1.msra.mxu0 0.0
    %1553 = vmatprep.subr.mxu0 0.0
    %1554 = vmatpush1.msra.mxu0 0.0
    %1555 = vmatprep.subr.mxu0 0.0
    %1556 = vmatpush1.msra.mxu0 0.0
    %1557 = vmatprep.subr.mxu0 0.0
    %1558 = vmatpush1.msra.mxu0 0.0
    %1559 = vmatprep.subr.mxu0 0.0
    %1560 = vmatpush1.msra.mxu0 0.0
    %1561 = vmatprep.subr.mxu0 0.0
    %1562 = vmatpush1.msra.mxu0 0.0
    %1563 = vmatprep.subr.mxu0 0.0
    %1564 = vmatpush1.msra.mxu0 0.0
    %1565 = vmatprep.subr.mxu0 0.0
    %1566 = vmatpush1.msra.mxu0 0.0
    %1567 = vmatprep.subr.mxu0 0.0
    %1568 = vmatpush1.msra.mxu0 0.0
    %1569 = vmatprep.subr.mxu0 0.0
    %1570 = vmatpush1.msra.mxu0 0.0
    %1571 = vmatprep.subr.mxu0 0.0
    %1572 = vmatpush1.msra.mxu0 0.0
    %1573 = vmatprep.subr.mxu0 0.0
    %1574 = vmatpush1.msra.mxu0 0.0
    %1575 = vmatprep.subr.mxu0 0.0
    %1576 = vmatpush1.msra.mxu0 0.0
    %1577 = vmatprep.subr.mxu0 0.0
    %1578 = vmatpush1.msra.mxu0 0.0
    %1579 = vmatprep.subr.mxu0 0.0
    %1580 = vmatpush1.msra.mxu0 0.0
    %1581 = vmatprep.subr.mxu0 0.0
    %1582 = vmatpush1.msra.mxu0 0.0
    %1583 = vmatprep.subr.mxu0 0.0
    %1584 = vmatpush1.msra.mxu0 0.0
    %1585 = vmatprep.subr.mxu0 0.0
    %1586 = vmatpush1.msra.mxu0 0.0
    %1587 = vmatprep.subr.mxu0 0.0
    %1588 = vmatpush1.msra.mxu0 0.0
    %1589 = vmatprep.subr.mxu0 0.0
    %1590 = vmatpush1.msra.mxu0 0.0
    %1591 = vmatprep.subr.mxu0 0.0
    %1592 = vmatpush1.msra.mxu0 0.0
    %1593 = vmatprep.subr.mxu0 0.0
    %1594 = vmatpush1.msra.mxu0 0.0
    %1595 = vmatprep.subr.mxu0 0.0
    %1596 = vmatpush1.msra.mxu0 0.0
    %1597 = vmatprep.mubr.f32.mxu0 0.0
    %1598 = vmatmul.mubr.f32.gmra.mrb[0].mxu0 %v119
    %v1599 = vpop.f32.mrb[0].mxu0
    %v1600 = vadd.f32 0.0, %v1599
    %v1601 = vpop.f32.mrb[0].mxu0
    %1602 = vmatprep.mubr.f32.mxu0 0.0
    %1603 = vmatmul.mubr.f32.gmra.mrb[0].mxu0 %v122
    %v1604 = vpop.f32.mrb[0].mxu0
    %v1605 = vadd.f32 0.0, %v1604
    %v1606 = vpop.f32.mrb[0].mxu0
    %1607 = vdwg.mxu0
    %v1608 = vsub.f32 %v1525, %v1600
    %v1609 = vsub.f32 %v1530, %v1605
    %s1610 = scalar_lea.vmem %s0, 80
    %v1611 = vld [vmem:[%s1610] sm:$0xff]
    %v1612 = vld [vmem:[%s1610 + $0x8] sm:$0x1]
    %s1613 = scalar_lea.vmem %s1, 80
    %v1614 = vld [vmem:[%s1613] sm:$0xff]
    %v1615 = vld [vmem:[%s1613 + $0x8] sm:$0x1]
    %v1617 = vsel %vm39, %v1615, 0
    %1619 = vmatprep.subr.mxu0 0.0
    %1620 = vmatpush1.msra.mxu0 %v1614
    %1621 = vmatprep.subr.mxu0 0.0
    %1622 = vmatpush1.msra.mxu0 %v1617
    %1623 = vmatprep.subr.mxu0 0.0
    %1624 = vmatpush1.msra.mxu0 0.0
    %1625 = vmatprep.subr.mxu0 0.0
    %1626 = vmatpush1.msra.mxu0 0.0
    %1627 = vmatprep.subr.mxu0 0.0
    %1628 = vmatpush1.msra.mxu0 0.0
    %1629 = vmatprep.subr.mxu0 0.0
    %1630 = vmatpush1.msra.mxu0 0.0
    %1631 = vmatprep.subr.mxu0 0.0
    %1632 = vmatpush1.msra.mxu0 0.0
    %1633 = vmatprep.subr.mxu0 0.0
    %1634 = vmatpush1.msra.mxu0 0.0
    %1635 = vmatprep.subr.mxu0 0.0
    %1636 = vmatpush1.msra.mxu0 0.0
    %1637 = vmatprep.subr.mxu0 0.0
    %1638 = vmatpush1.msra.mxu0 0.0
    %1639 = vmatprep.subr.mxu0 0.0
    %1640 = vmatpush1.msra.mxu0 0.0
    %1641 = vmatprep.subr.mxu0 0.0
    %1642 = vmatpush1.msra.mxu0 0.0
    %1643 = vmatprep.subr.mxu0 0.0
    %1644 = vmatpush1.msra.mxu0 0.0
    %1645 = vmatprep.subr.mxu0 0.0
    %1646 = vmatpush1.msra.mxu0 0.0
    %1647 = vmatprep.subr.mxu0 0.0
    %1648 = vmatpush1.msra.mxu0 0.0
    %1649 = vmatprep.subr.mxu0 0.0
    %1650 = vmatpush1.msra.mxu0 0.0
    %1651 = vmatprep.subr.mxu0 0.0
    %1652 = vmatpush1.msra.mxu0 0.0
    %1653 = vmatprep.subr.mxu0 0.0
    %1654 = vmatpush1.msra.mxu0 0.0
    %1655 = vmatprep.subr.mxu0 0.0
    %1656 = vmatpush1.msra.mxu0 0.0
    %1657 = vmatprep.subr.mxu0 0.0
    %1658 = vmatpush1.msra.mxu0 0.0
    %1659 = vmatprep.subr.mxu0 0.0
    %1660 = vmatpush1.msra.mxu0 0.0
    %1661 = vmatprep.subr.mxu0 0.0
    %1662 = vmatpush1.msra.mxu0 0.0
    %1663 = vmatprep.subr.mxu0 0.0
    %1664 = vmatpush1.msra.mxu0 0.0
    %1665 = vmatprep.subr.mxu0 0.0
    %1666 = vmatpush1.msra.mxu0 0.0
    %1667 = vmatprep.subr.mxu0 0.0
    %1668 = vmatpush1.msra.mxu0 0.0
    %1669 = vmatprep.subr.mxu0 0.0
    %1670 = vmatpush1.msra.mxu0 0.0
    %1671 = vmatprep.subr.mxu0 0.0
    %1672 = vmatpush1.msra.mxu0 0.0
    %1673 = vmatprep.subr.mxu0 0.0
    %1674 = vmatpush1.msra.mxu0 0.0
    %1675 = vmatprep.subr.mxu0 0.0
    %1676 = vmatpush1.msra.mxu0 0.0
    %1677 = vmatprep.subr.mxu0 0.0
    %1678 = vmatpush1.msra.mxu0 0.0
    %1679 = vmatprep.subr.mxu0 0.0
    %1680 = vmatpush1.msra.mxu0 0.0
    %1681 = vmatprep.subr.mxu0 0.0
    %1682 = vmatpush1.msra.mxu0 0.0
    %1683 = vmatprep.mubr.f32.mxu0 0.0
    %1684 = vmatmul.mubr.f32.gmra.mrb[0].mxu0 %v34
    %v1685 = vpop.f32.mrb[0].mxu0
    %v1686 = vadd.f32 0.0, %v1685
    %v1687 = vpop.f32.mrb[0].mxu0
    %1688 = vmatprep.mubr.f32.mxu0 0.0
    %1689 = vmatmul.mubr.f32.gmra.mrb[0].mxu0 %v37
    %v1690 = vpop.f32.mrb[0].mxu0
    %v1691 = vadd.f32 0.0, %v1690
    %v1692 = vpop.f32.mrb[0].mxu0
    %1693 = vdwg.mxu0
    %v1695 = vsel %vm39, %v1612, 0
    %1697 = vmatprep.subr.mxu0 0.0
    %1698 = vmatpush1.msra.mxu0 %v1611
    %1699 = vmatprep.subr.mxu0 0.0
    %1700 = vmatpush1.msra.mxu0 %v1695
    %1701 = vmatprep.subr.mxu0 0.0
    %1702 = vmatpush1.msra.mxu0 0.0
    %1703 = vmatprep.subr.mxu0 0.0
    %1704 = vmatpush1.msra.mxu0 0.0
    %1705 = vmatprep.subr.mxu0 0.0
    %1706 = vmatpush1.msra.mxu0 0.0
    %1707 = vmatprep.subr.mxu0 0.0
    %1708 = vmatpush1.msra.mxu0 0.0
    %1709 = vmatprep.subr.mxu0 0.0
    %1710 = vmatpush1.msra.mxu0 0.0
    %1711 = vmatprep.subr.mxu0 0.0
    %1712 = vmatpush1.msra.mxu0 0.0
    %1713 = vmatprep.subr.mxu0 0.0
    %1714 = vmatpush1.msra.mxu0 0.0
    %1715 = vmatprep.subr.mxu0 0.0
    %1716 = vmatpush1.msra.mxu0 0.0
    %1717 = vmatprep.subr.mxu0 0.0
    %1718 = vmatpush1.msra.mxu0 0.0
    %1719 = vmatprep.subr.mxu0 0.0
    %1720 = vmatpush1.msra.mxu0 0.0
    %1721 = vmatprep.subr.mxu0 0.0
    %1722 = vmatpush1.msra.mxu0 0.0
    %1723 = vmatprep.subr.mxu0 0.0
    %1724 = vmatpush1.msra.mxu0 0.0
    %1725 = vmatprep.subr.mxu0 0.0
    %1726 = vmatpush1.msra.mxu0 0.0
    %1727 = vmatprep.subr.mxu0 0.0
    %1728 = vmatpush1.msra.mxu0 0.0
    %1729 = vmatprep.subr.mxu0 0.0
    %1730 = vmatpush1.msra.mxu0 0.0
    %1731 = vmatprep.subr.mxu0 0.0
    %1732 = vmatpush1.msra.mxu0 0.0
    %1733 = vmatprep.subr.mxu0 0.0
    %1734 = vmatpush1.msra.mxu0 0.0
    %1735 = vmatprep.subr.mxu0 0.0
    %1736 = vmatpush1.msra.mxu0 0.0
    %1737 = vmatprep.subr.mxu0 0.0
    %1738 = vmatpush1.msra.mxu0 0.0
    %1739 = vmatprep.subr.mxu0 0.0
    %1740 = vmatpush1.msra.mxu0 0.0
    %1741 = vmatprep.subr.mxu0 0.0
    %1742 = vmatpush1.msra.mxu0 0.0
    %1743 = vmatprep.subr.mxu0 0.0
    %1744 = vmatpush1.msra.mxu0 0.0
    %1745 = vmatprep.subr.mxu0 0.0
    %1746 = vmatpush1.msra.mxu0 0.0
    %1747 = vmatprep.subr.mxu0 0.0
    %1748 = vmatpush1.msra.mxu0 0.0
    %1749 = vmatprep.subr.mxu0 0.0
    %1750 = vmatpush1.msra.mxu0 0.0
    %1751 = vmatprep.subr.mxu0 0.0
    %1752 = vmatpush1.msra.mxu0 0.0
    %1753 = vmatprep.subr.mxu0 0.0
    %1754 = vmatpush1.msra.mxu0 0.0
    %1755 = vmatprep.subr.mxu0 0.0
    %1756 = vmatpush1.msra.mxu0 0.0
    %1757 = vmatprep.subr.mxu0 0.0
    %1758 = vmatpush1.msra.mxu0 0.0
    %1759 = vmatprep.subr.mxu0 0.0
    %1760 = vmatpush1.msra.mxu0 0.0
    %1761 = vmatprep.mubr.f32.mxu0 0.0
    %1762 = vmatmul.mubr.f32.gmra.mrb[0].mxu0 %v119
    %v1763 = vpop.f32.mrb[0].mxu0
    %v1764 = vadd.f32 %v1686, %v1763
    %v1765 = vpop.f32.mrb[0].mxu0
    %1766 = vmatprep.mubr.f32.mxu0 0.0
    %1767 = vmatmul.mubr.f32.gmra.mrb[0].mxu0 %v122
    %v1768 = vpop.f32.mrb[0].mxu0
    %v1769 = vadd.f32 %v1691, %v1768
    %v1770 = vpop.f32.mrb[0].mxu0
    %1771 = vdwg.mxu0
    %1772 = vmatprep.subr.mxu0 0.0
    %1773 = vmatpush1.msra.mxu0 %v1611
    %1774 = vmatprep.subr.mxu0 0.0
    %1775 = vmatpush1.msra.mxu0 %v1695
    %1776 = vmatprep.subr.mxu0 0.0
    %1777 = vmatpush1.msra.mxu0 0.0
    %1778 = vmatprep.subr.mxu0 0.0
    %1779 = vmatpush1.msra.mxu0 0.0
    %1780 = vmatprep.subr.mxu0 0.0
    %1781 = vmatpush1.msra.mxu0 0.0
    %1782 = vmatprep.subr.mxu0 0.0
    %1783 = vmatpush1.msra.mxu0 0.0
    %1784 = vmatprep.subr.mxu0 0.0
    %1785 = vmatpush1.msra.mxu0 0.0
    %1786 = vmatprep.subr.mxu0 0.0
    %1787 = vmatpush1.msra.mxu0 0.0
    %1788 = vmatprep.subr.mxu0 0.0
    %1789 = vmatpush1.msra.mxu0 0.0
    %1790 = vmatprep.subr.mxu0 0.0
    %1791 = vmatpush1.msra.mxu0 0.0
    %1792 = vmatprep.subr.mxu0 0.0
    %1793 = vmatpush1.msra.mxu0 0.0
    %1794 = vmatprep.subr.mxu0 0.0
    %1795 = vmatpush1.msra.mxu0 0.0
    %1796 = vmatprep.subr.mxu0 0.0
    %1797 = vmatpush1.msra.mxu0 0.0
    %1798 = vmatprep.subr.mxu0 0.0
    %1799 = vmatpush1.msra.mxu0 0.0
    %1800 = vmatprep.subr.mxu0 0.0
    %1801 = vmatpush1.msra.mxu0 0.0
    %1802 = vmatprep.subr.mxu0 0.0
    %1803 = vmatpush1.msra.mxu0 0.0
    %1804 = vmatprep.subr.mxu0 0.0
    %1805 = vmatpush1.msra.mxu0 0.0
    %1806 = vmatprep.subr.mxu0 0.0
    %1807 = vmatpush1.msra.mxu0 0.0
    %1808 = vmatprep.subr.mxu0 0.0
    %1809 = vmatpush1.msra.mxu0 0.0
    %1810 = vmatprep.subr.mxu0 0.0
    %1811 = vmatpush1.msra.mxu0 0.0
    %1812 = vmatprep.subr.mxu0 0.0
    %1813 = vmatpush1.msra.mxu0 0.0
    %1814 = vmatprep.subr.mxu0 0.0
    %1815 = vmatpush1.msra.mxu0 0.0
    %1816 = vmatprep.subr.mxu0 0.0
    %1817 = vmatpush1.msra.mxu0 0.0
    %1818 = vmatprep.subr.mxu0 0.0
    %1819 = vmatpush1.msra.mxu0 0.0
    %1820 = vmatprep.subr.mxu0 0.0
    %1821 = vmatpush1.msra.mxu0 0.0
    %1822 = vmatprep.subr.mxu0 0.0
    %1823 = vmatpush1.msra.mxu0 0.0
    %1824 = vmatprep.subr.mxu0 0.0
    %1825 = vmatpush1.msra.mxu0 0.0
    %1826 = vmatprep.subr.mxu0 0.0
    %1827 = vmatpush1.msra.mxu0 0.0
    %1828 = vmatprep.subr.mxu0 0.0
    %1829 = vmatpush1.msra.mxu0 0.0
    %1830 = vmatprep.subr.mxu0 0.0
    %1831 = vmatpush1.msra.mxu0 0.0
    %1832 = vmatprep.subr.mxu0 0.0
    %1833 = vmatpush1.msra.mxu0 0.0
    %1834 = vmatprep.subr.mxu0 0.0
    %1835 = vmatpush1.msra.mxu0 0.0
    %1836 = vmatprep.mubr.f32.mxu0 0.0
    %1837 = vmatmul.mubr.f32.gmra.mrb[0].mxu0 %v34
    %v1838 = vpop.f32.mrb[0].mxu0
    %v1839 = vadd.f32 0.0, %v1838
    %v1840 = vpop.f32.mrb[0].mxu0
    %1841 = vmatprep.mubr.f32.mxu0 0.0
    %1842 = vmatmul.mubr.f32.gmra.mrb[0].mxu0 %v37
    %v1843 = vpop.f32.mrb[0].mxu0
    %v1844 = vadd.f32 0.0, %v1843
    %v1845 = vpop.f32.mrb[0].mxu0
    %1846 = vdwg.mxu0
    %1847 = vmatprep.subr.mxu0 0.0
    %1848 = vmatpush1.msra.mxu0 %v1614
    %1849 = vmatprep.subr.mxu0 0.0
    %1850 = vmatpush1.msra.mxu0 %v1617
    %1851 = vmatprep.subr.mxu0 0.0
    %1852 = vmatpush1.msra.mxu0 0.0
    %1853 = vmatprep.subr.mxu0 0.0
    %1854 = vmatpush1.msra.mxu0 0.0
    %1855 = vmatprep.subr.mxu0 0.0
    %1856 = vmatpush1.msra.mxu0 0.0
    %1857 = vmatprep.subr.mxu0 0.0
    %1858 = vmatpush1.msra.mxu0 0.0
    %1859 = vmatprep.subr.mxu0 0.0
    %1860 = vmatpush1.msra.mxu0 0.0
    %1861 = vmatprep.subr.mxu0 0.0
    %1862 = vmatpush1.msra.mxu0 0.0
    %1863 = vmatprep.subr.mxu0 0.0
    %1864 = vmatpush1.msra.mxu0 0.0
    %1865 = vmatprep.subr.mxu0 0.0
    %1866 = vmatpush1.msra.mxu0 0.0
    %1867 = vmatprep.subr.mxu0 0.0
    %1868 = vmatpush1.msra.mxu0 0.0
    %1869 = vmatprep.subr.mxu0 0.0
    %1870 = vmatpush1.msra.mxu0 0.0
    %1871 = vmatprep.subr.mxu0 0.0
    %1872 = vmatpush1.msra.mxu0 0.0
    %1873 = vmatprep.subr.mxu0 0.0
    %1874 = vmatpush1.msra.mxu0 0.0
    %1875 = vmatprep.subr.mxu0 0.0
    %1876 = vmatpush1.msra.mxu0 0.0
    %1877 = vmatprep.subr.mxu0 0.0
    %1878 = vmatpush1.msra.mxu0 0.0
    %1879 = vmatprep.subr.mxu0 0.0
    %1880 = vmatpush1.msra.mxu0 0.0
    %1881 = vmatprep.subr.mxu0 0.0
    %1882 = vmatpush1.msra.mxu0 0.0
    %1883 = vmatprep.subr.mxu0 0.0
    %1884 = vmatpush1.msra.mxu0 0.0
    %1885 = vmatprep.subr.mxu0 0.0
    %1886 = vmatpush1.msra.mxu0 0.0
    %1887 = vmatprep.subr.mxu0 0.0
    %1888 = vmatpush1.msra.mxu0 0.0
    %1889 = vmatprep.subr.mxu0 0.0
    %1890 = vmatpush1.msra.mxu0 0.0
    %1891 = vmatprep.subr.mxu0 0.0
    %1892 = vmatpush1.msra.mxu0 0.0
    %1893 = vmatprep.subr.mxu0 0.0
    %1894 = vmatpush1.msra.mxu0 0.0
    %1895 = vmatprep.subr.mxu0 0.0
    %1896 = vmatpush1.msra.mxu0 0.0
    %1897 = vmatprep.subr.mxu0 0.0
    %1898 = vmatpush1.msra.mxu0 0.0
    %1899 = vmatprep.subr.mxu0 0.0
    %1900 = vmatpush1.msra.mxu0 0.0
    %1901 = vmatprep.subr.mxu0 0.0
    %1902 = vmatpush1.msra.mxu0 0.0
    %1903 = vmatprep.subr.mxu0 0.0
    %1904 = vmatpush1.msra.mxu0 0.0
    %1905 = vmatprep.subr.mxu0 0.0
    %1906 = vmatpush1.msra.mxu0 0.0
    %1907 = vmatprep.subr.mxu0 0.0
    %1908 = vmatpush1.msra.mxu0 0.0
    %1909 = vmatprep.subr.mxu0 0.0
    %1910 = vmatpush1.msra.mxu0 0.0
    %1911 = vmatprep.mubr.f32.mxu0 0.0
    %1912 = vmatmul.mubr.f32.gmra.mrb[0].mxu0 %v119
    %v1913 = vpop.f32.mrb[0].mxu0
    %v1914 = vadd.f32 0.0, %v1913
    %v1915 = vpop.f32.mrb[0].mxu0
    %1916 = vmatprep.mubr.f32.mxu0 0.0
    %1917 = vmatmul.mubr.f32.gmra.mrb[0].mxu0 %v122
    %v1918 = vpop.f32.mrb[0].mxu0
    %v1919 = vadd.f32 0.0, %v1918
    %v1920 = vpop.f32.mrb[0].mxu0
    %1921 = vdwg.mxu0
    %v1922 = vsub.f32 %v1839, %v1914
    %v1923 = vsub.f32 %v1844, %v1919
    %s1924 = scalar_lea.vmem %s0, 96
    %v1925 = vld [vmem:[%s1924] sm:$0xff]
    %v1926 = vld [vmem:[%s1924 + $0x8] sm:$0x1]
    %s1927 = scalar_lea.vmem %s1, 96
    %v1928 = vld [vmem:[%s1927] sm:$0xff]
    %v1929 = vld [vmem:[%s1927 + $0x8] sm:$0x1]
    %v1931 = vsel %vm39, %v1929, 0
    %1933 = vmatprep.subr.mxu0 0.0
    %1934 = vmatpush1.msra.mxu0 %v1928
    %1935 = vmatprep.subr.mxu0 0.0
    %1936 = vmatpush1.msra.mxu0 %v1931
    %1937 = vmatprep.subr.mxu0 0.0
    %1938 = vmatpush1.msra.mxu0 0.0
    %1939 = vmatprep.subr.mxu0 0.0
    %1940 = vmatpush1.msra.mxu0 0.0
    %1941 = vmatprep.subr.mxu0 0.0
    %1942 = vmatpush1.msra.mxu0 0.0
    %1943 = vmatprep.subr.mxu0 0.0
    %1944 = vmatpush1.msra.mxu0 0.0
    %1945 = vmatprep.subr.mxu0 0.0
    %1946 = vmatpush1.msra.mxu0 0.0
    %1947 = vmatprep.subr.mxu0 0.0
    %1948 = vmatpush1.msra.mxu0 0.0
    %1949 = vmatprep.subr.mxu0 0.0
    %1950 = vmatpush1.msra.mxu0 0.0
    %1951 = vmatprep.subr.mxu0 0.0
    %1952 = vmatpush1.msra.mxu0 0.0
    %1953 = vmatprep.subr.mxu0 0.0
    %1954 = vmatpush1.msra.mxu0 0.0
    %1955 = vmatprep.subr.mxu0 0.0
    %1956 = vmatpush1.msra.mxu0 0.0
    %1957 = vmatprep.subr.mxu0 0.0
    %1958 = vmatpush1.msra.mxu0 0.0
    %1959 = vmatprep.subr.mxu0 0.0
    %1960 = vmatpush1.msra.mxu0 0.0
    %1961 = vmatprep.subr.mxu0 0.0
    %1962 = vmatpush1.msra.mxu0 0.0
    %1963 = vmatprep.subr.mxu0 0.0
    %1964 = vmatpush1.msra.mxu0 0.0
    %1965 = vmatprep.subr.mxu0 0.0
    %1966 = vmatpush1.msra.mxu0 0.0
    %1967 = vmatprep.subr.mxu0 0.0
    %1968 = vmatpush1.msra.mxu0 0.0
    %1969 = vmatprep.subr.mxu0 0.0
    %1970 = vmatpush1.msra.mxu0 0.0
    %1971 = vmatprep.subr.mxu0 0.0
    %1972 = vmatpush1.msra.mxu0 0.0
    %1973 = vmatprep.subr.mxu0 0.0
    %1974 = vmatpush1.msra.mxu0 0.0
    %1975 = vmatprep.subr.mxu0 0.0
    %1976 = vmatpush1.msra.mxu0 0.0
    %1977 = vmatprep.subr.mxu0 0.0
    %1978 = vmatpush1.msra.mxu0 0.0
    %1979 = vmatprep.subr.mxu0 0.0
    %1980 = vmatpush1.msra.mxu0 0.0
    %1981 = vmatprep.subr.mxu0 0.0
    %1982 = vmatpush1.msra.mxu0 0.0
    %1983 = vmatprep.subr.mxu0 0.0
    %1984 = vmatpush1.msra.mxu0 0.0
    %1985 = vmatprep.subr.mxu0 0.0
    %1986 = vmatpush1.msra.mxu0 0.0
    %1987 = vmatprep.subr.mxu0 0.0
    %1988 = vmatpush1.msra.mxu0 0.0
    %1989 = vmatprep.subr.mxu0 0.0
    %1990 = vmatpush1.msra.mxu0 0.0
    %1991 = vmatprep.subr.mxu0 0.0
    %1992 = vmatpush1.msra.mxu0 0.0
    %1993 = vmatprep.subr.mxu0 0.0
    %1994 = vmatpush1.msra.mxu0 0.0
    %1995 = vmatprep.subr.mxu0 0.0
    %1996 = vmatpush1.msra.mxu0 0.0
    %1997 = vmatprep.mubr.f32.mxu0 0.0
    %1998 = vmatmul.mubr.f32.gmra.mrb[0].mxu0 %v34
    %v1999 = vpop.f32.mrb[0].mxu0
    %v2000 = vadd.f32 0.0, %v1999
    %v2001 = vpop.f32.mrb[0].mxu0
    %2002 = vmatprep.mubr.f32.mxu0 0.0
    %2003 = vmatmul.mubr.f32.gmra.mrb[0].mxu0 %v37
    %v2004 = vpop.f32.mrb[0].mxu0
    %v2005 = vadd.f32 0.0, %v2004
    %v2006 = vpop.f32.mrb[0].mxu0
    %2007 = vdwg.mxu0
    %v2009 = vsel %vm39, %v1926, 0
    %2011 = vmatprep.subr.mxu0 0.0
    %2012 = vmatpush1.msra.mxu0 %v1925
    %2013 = vmatprep.subr.mxu0 0.0
    %2014 = vmatpush1.msra.mxu0 %v2009
    %2015 = vmatprep.subr.mxu0 0.0
    %2016 = vmatpush1.msra.mxu0 0.0
    %2017 = vmatprep.subr.mxu0 0.0
    %2018 = vmatpush1.msra.mxu0 0.0
    %2019 = vmatprep.subr.mxu0 0.0
    %2020 = vmatpush1.msra.mxu0 0.0
    %2021 = vmatprep.subr.mxu0 0.0
    %2022 = vmatpush1.msra.mxu0 0.0
    %2023 = vmatprep.subr.mxu0 0.0
    %2024 = vmatpush1.msra.mxu0 0.0
    %2025 = vmatprep.subr.mxu0 0.0
    %2026 = vmatpush1.msra.mxu0 0.0
    %2027 = vmatprep.subr.mxu0 0.0
    %2028 = vmatpush1.msra.mxu0 0.0
    %2029 = vmatprep.subr.mxu0 0.0
    %2030 = vmatpush1.msra.mxu0 0.0
    %2031 = vmatprep.subr.mxu0 0.0
    %2032 = vmatpush1.msra.mxu0 0.0
    %2033 = vmatprep.subr.mxu0 0.0
    %2034 = vmatpush1.msra.mxu0 0.0
    %2035 = vmatprep.subr.mxu0 0.0
    %2036 = vmatpush1.msra.mxu0 0.0
    %2037 = vmatprep.subr.mxu0 0.0
    %2038 = vmatpush1.msra.mxu0 0.0
    %2039 = vmatprep.subr.mxu0 0.0
    %2040 = vmatpush1.msra.mxu0 0.0
    %2041 = vmatprep.subr.mxu0 0.0
    %2042 = vmatpush1.msra.mxu0 0.0
    %2043 = vmatprep.subr.mxu0 0.0
    %2044 = vmatpush1.msra.mxu0 0.0
    %2045 = vmatprep.subr.mxu0 0.0
    %2046 = vmatpush1.msra.mxu0 0.0
    %2047 = vmatprep.subr.mxu0 0.0
    %2048 = vmatpush1.msra.mxu0 0.0
    %2049 = vmatprep.subr.mxu0 0.0
    %2050 = vmatpush1.msra.mxu0 0.0
    %2051 = vmatprep.subr.mxu0 0.0
    %2052 = vmatpush1.msra.mxu0 0.0
    %2053 = vmatprep.subr.mxu0 0.0
    %2054 = vmatpush1.msra.mxu0 0.0
    %2055 = vmatprep.subr.mxu0 0.0
    %2056 = vmatpush1.msra.mxu0 0.0
    %2057 = vmatprep.subr.mxu0 0.0
    %2058 = vmatpush1.msra.mxu0 0.0
    %2059 = vmatprep.subr.mxu0 0.0
    %2060 = vmatpush1.msra.mxu0 0.0
    %2061 = vmatprep.subr.mxu0 0.0
    %2062 = vmatpush1.msra.mxu0 0.0
    %2063 = vmatprep.subr.mxu0 0.0
    %2064 = vmatpush1.msra.mxu0 0.0
    %2065 = vmatprep.subr.mxu0 0.0
    %2066 = vmatpush1.msra.mxu0 0.0
    %2067 = vmatprep.subr.mxu0 0.0
    %2068 = vmatpush1.msra.mxu0 0.0
    %2069 = vmatprep.subr.mxu0 0.0
    %2070 = vmatpush1.msra.mxu0 0.0
    %2071 = vmatprep.subr.mxu0 0.0
    %2072 = vmatpush1.msra.mxu0 0.0
    %2073 = vmatprep.subr.mxu0 0.0
    %2074 = vmatpush1.msra.mxu0 0.0
    %2075 = vmatprep.mubr.f32.mxu0 0.0
    %2076 = vmatmul.mubr.f32.gmra.mrb[0].mxu0 %v119
    %v2077 = vpop.f32.mrb[0].mxu0
    %v2078 = vadd.f32 %v2000, %v2077
    %v2079 = vpop.f32.mrb[0].mxu0
    %2080 = vmatprep.mubr.f32.mxu0 0.0
    %2081 = vmatmul.mubr.f32.gmra.mrb[0].mxu0 %v122
    %v2082 = vpop.f32.mrb[0].mxu0
    %v2083 = vadd.f32 %v2005, %v2082
    %v2084 = vpop.f32.mrb[0].mxu0
    %2085 = vdwg.mxu0
    %2086 = vmatprep.subr.mxu0 0.0
    %2087 = vmatpush1.msra.mxu0 %v1925
    %2088 = vmatprep.subr.mxu0 0.0
    %2089 = vmatpush1.msra.mxu0 %v2009
    %2090 = vmatprep.subr.mxu0 0.0
    %2091 = vmatpush1.msra.mxu0 0.0
    %2092 = vmatprep.subr.mxu0 0.0
    %2093 = vmatpush1.msra.mxu0 0.0
    %2094 = vmatprep.subr.mxu0 0.0
    %2095 = vmatpush1.msra.mxu0 0.0
    %2096 = vmatprep.subr.mxu0 0.0
    %2097 = vmatpush1.msra.mxu0 0.0
    %2098 = vmatprep.subr.mxu0 0.0
    %2099 = vmatpush1.msra.mxu0 0.0
    %2100 = vmatprep.subr.mxu0 0.0
    %2101 = vmatpush1.msra.mxu0 0.0
    %2102 = vmatprep.subr.mxu0 0.0
    %2103 = vmatpush1.msra.mxu0 0.0
    %2104 = vmatprep.subr.mxu0 0.0
    %2105 = vmatpush1.msra.mxu0 0.0
    %2106 = vmatprep.subr.mxu0 0.0
    %2107 = vmatpush1.msra.mxu0 0.0
    %2108 = vmatprep.subr.mxu0 0.0
    %2109 = vmatpush1.msra.mxu0 0.0
    %2110 = vmatprep.subr.mxu0 0.0
    %2111 = vmatpush1.msra.mxu0 0.0
    %2112 = vmatprep.subr.mxu0 0.0
    %2113 = vmatpush1.msra.mxu0 0.0
    %2114 = vmatprep.subr.mxu0 0.0
    %2115 = vmatpush1.msra.mxu0 0.0
    %2116 = vmatprep.subr.mxu0 0.0
    %2117 = vmatpush1.msra.mxu0 0.0
    %2118 = vmatprep.subr.mxu0 0.0
    %2119 = vmatpush1.msra.mxu0 0.0
    %2120 = vmatprep.subr.mxu0 0.0
    %2121 = vmatpush1.msra.mxu0 0.0
    %2122 = vmatprep.subr.mxu0 0.0
    %2123 = vmatpush1.msra.mxu0 0.0
    %2124 = vmatprep.subr.mxu0 0.0
    %2125 = vmatpush1.msra.mxu0 0.0
    %2126 = vmatprep.subr.mxu0 0.0
    %2127 = vmatpush1.msra.mxu0 0.0
    %2128 = vmatprep.subr.mxu0 0.0
    %2129 = vmatpush1.msra.mxu0 0.0
    %2130 = vmatprep.subr.mxu0 0.0
    %2131 = vmatpush1.msra.mxu0 0.0
    %2132 = vmatprep.subr.mxu0 0.0
    %2133 = vmatpush1.msra.mxu0 0.0
    %2134 = vmatprep.subr.mxu0 0.0
    %2135 = vmatpush1.msra.mxu0 0.0
    %2136 = vmatprep.subr.mxu0 0.0
    %2137 = vmatpush1.msra.mxu0 0.0
    %2138 = vmatprep.subr.mxu0 0.0
    %2139 = vmatpush1.msra.mxu0 0.0
    %2140 = vmatprep.subr.mxu0 0.0
    %2141 = vmatpush1.msra.mxu0 0.0
    %2142 = vmatprep.subr.mxu0 0.0
    %2143 = vmatpush1.msra.mxu0 0.0
    %2144 = vmatprep.subr.mxu0 0.0
    %2145 = vmatpush1.msra.mxu0 0.0
    %2146 = vmatprep.subr.mxu0 0.0
    %2147 = vmatpush1.msra.mxu0 0.0
    %2148 = vmatprep.subr.mxu0 0.0
    %2149 = vmatpush1.msra.mxu0 0.0
    %2150 = vmatprep.mubr.f32.mxu0 0.0
    %2151 = vmatmul.mubr.f32.gmra.mrb[0].mxu0 %v34
    %v2152 = vpop.f32.mrb[0].mxu0
    %v2153 = vadd.f32 0.0, %v2152
    %v2154 = vpop.f32.mrb[0].mxu0
    %2155 = vmatprep.mubr.f32.mxu0 0.0
    %2156 = vmatmul.mubr.f32.gmra.mrb[0].mxu0 %v37
    %v2157 = vpop.f32.mrb[0].mxu0
    %v2158 = vadd.f32 0.0, %v2157
    %v2159 = vpop.f32.mrb[0].mxu0
    %2160 = vdwg.mxu0
    %2161 = vmatprep.subr.mxu0 0.0
    %2162 = vmatpush1.msra.mxu0 %v1928
    %2163 = vmatprep.subr.mxu0 0.0
    %2164 = vmatpush1.msra.mxu0 %v1931
    %2165 = vmatprep.subr.mxu0 0.0
    %2166 = vmatpush1.msra.mxu0 0.0
    %2167 = vmatprep.subr.mxu0 0.0
    %2168 = vmatpush1.msra.mxu0 0.0
    %2169 = vmatprep.subr.mxu0 0.0
    %2170 = vmatpush1.msra.mxu0 0.0
    %2171 = vmatprep.subr.mxu0 0.0
    %2172 = vmatpush1.msra.mxu0 0.0
    %2173 = vmatprep.subr.mxu0 0.0
    %2174 = vmatpush1.msra.mxu0 0.0
    %2175 = vmatprep.subr.mxu0 0.0
    %2176 = vmatpush1.msra.mxu0 0.0
    %2177 = vmatprep.subr.mxu0 0.0
    %2178 = vmatpush1.msra.mxu0 0.0
    %2179 = vmatprep.subr.mxu0 0.0
    %2180 = vmatpush1.msra.mxu0 0.0
    %2181 = vmatprep.subr.mxu0 0.0
    %2182 = vmatpush1.msra.mxu0 0.0
    %2183 = vmatprep.subr.mxu0 0.0
    %2184 = vmatpush1.msra.mxu0 0.0
    %2185 = vmatprep.subr.mxu0 0.0
    %2186 = vmatpush1.msra.mxu0 0.0
    %2187 = vmatprep.subr.mxu0 0.0
    %2188 = vmatpush1.msra.mxu0 0.0
    %2189 = vmatprep.subr.mxu0 0.0
    %2190 = vmatpush1.msra.mxu0 0.0
    %2191 = vmatprep.subr.mxu0 0.0
    %2192 = vmatpush1.msra.mxu0 0.0
    %2193 = vmatprep.subr.mxu0 0.0
    %2194 = vmatpush1.msra.mxu0 0.0
    %2195 = vmatprep.subr.mxu0 0.0
    %2196 = vmatpush1.msra.mxu0 0.0
    %2197 = vmatprep.subr.mxu0 0.0
    %2198 = vmatpush1.msra.mxu0 0.0
    %2199 = vmatprep.subr.mxu0 0.0
    %2200 = vmatpush1.msra.mxu0 0.0
    %2201 = vmatprep.subr.mxu0 0.0
    %2202 = vmatpush1.msra.mxu0 0.0
    %2203 = vmatprep.subr.mxu0 0.0
    %2204 = vmatpush1.msra.mxu0 0.0
    %2205 = vmatprep.subr.mxu0 0.0
    %2206 = vmatpush1.msra.mxu0 0.0
    %2207 = vmatprep.subr.mxu0 0.0
    %2208 = vmatpush1.msra.mxu0 0.0
    %2209 = vmatprep.subr.mxu0 0.0
    %2210 = vmatpush1.msra.mxu0 0.0
    %2211 = vmatprep.subr.mxu0 0.0
    %2212 = vmatpush1.msra.mxu0 0.0
    %2213 = vmatprep.subr.mxu0 0.0
    %2214 = vmatpush1.msra.mxu0 0.0
    %2215 = vmatprep.subr.mxu0 0.0
    %2216 = vmatpush1.msra.mxu0 0.0
    %2217 = vmatprep.subr.mxu0 0.0
    %2218 = vmatpush1.msra.mxu0 0.0
    %2219 = vmatprep.subr.mxu0 0.0
    %2220 = vmatpush1.msra.mxu0 0.0
    %2221 = vmatprep.subr.mxu0 0.0
    %2222 = vmatpush1.msra.mxu0 0.0
    %2223 = vmatprep.subr.mxu0 0.0
    %2224 = vmatpush1.msra.mxu0 0.0
    %2225 = vmatprep.mubr.f32.mxu0 0.0
    %2226 = vmatmul.mubr.f32.gmra.mrb[0].mxu0 %v119
    %v2227 = vpop.f32.mrb[0].mxu0
    %v2228 = vadd.f32 0.0, %v2227
    %v2229 = vpop.f32.mrb[0].mxu0
    %2230 = vmatprep.mubr.f32.mxu0 0.0
    %2231 = vmatmul.mubr.f32.gmra.mrb[0].mxu0 %v122
    %v2232 = vpop.f32.mrb[0].mxu0
    %v2233 = vadd.f32 0.0, %v2232
    %v2234 = vpop.f32.mrb[0].mxu0
    %2235 = vdwg.mxu0
    %v2236 = vsub.f32 %v2153, %v2228
    %v2237 = vsub.f32 %v2158, %v2233
    %s2238 = scalar_lea.vmem %s0, 112
    %v2239 = vld [vmem:[%s2238] sm:$0xff]
    %v2240 = vld [vmem:[%s2238 + $0x8] sm:$0x1]
    %s2241 = scalar_lea.vmem %s1, 112
    %v2242 = vld [vmem:[%s2241] sm:$0xff]
    %v2243 = vld [vmem:[%s2241 + $0x8] sm:$0x1]
    %v2245 = vsel %vm39, %v2243, 0
    %2247 = vmatprep.subr.mxu0 0.0
    %2248 = vmatpush1.msra.mxu0 %v2242
    %2249 = vmatprep.subr.mxu0 0.0
    %2250 = vmatpush1.msra.mxu0 %v2245
    %2251 = vmatprep.subr.mxu0 0.0
    %2252 = vmatpush1.msra.mxu0 0.0
    %2253 = vmatprep.subr.mxu0 0.0
    %2254 = vmatpush1.msra.mxu0 0.0
    %2255 = vmatprep.subr.mxu0 0.0
    %2256 = vmatpush1.msra.mxu0 0.0
    %2257 = vmatprep.subr.mxu0 0.0
    %2258 = vmatpush1.msra.mxu0 0.0
    %2259 = vmatprep.subr.mxu0 0.0
    %2260 = vmatpush1.msra.mxu0 0.0
    %2261 = vmatprep.subr.mxu0 0.0
    %2262 = vmatpush1.msra.mxu0 0.0
    %2263 = vmatprep.subr.mxu0 0.0
    %2264 = vmatpush1.msra.mxu0 0.0
    %2265 = vmatprep.subr.mxu0 0.0
    %2266 = vmatpush1.msra.mxu0 0.0
    %2267 = vmatprep.subr.mxu0 0.0
    %2268 = vmatpush1.msra.mxu0 0.0
    %2269 = vmatprep.subr.mxu0 0.0
    %2270 = vmatpush1.msra.mxu0 0.0
    %2271 = vmatprep.subr.mxu0 0.0
    %2272 = vmatpush1.msra.mxu0 0.0
    %2273 = vmatprep.subr.mxu0 0.0
    %2274 = vmatpush1.msra.mxu0 0.0
    %2275 = vmatprep.subr.mxu0 0.0
    %2276 = vmatpush1.msra.mxu0 0.0
    %2277 = vmatprep.subr.mxu0 0.0
    %2278 = vmatpush1.msra.mxu0 0.0
    %2279 = vmatprep.subr.mxu0 0.0
    %2280 = vmatpush1.msra.mxu0 0.0
    %2281 = vmatprep.subr.mxu0 0.0
    %2282 = vmatpush1.msra.mxu0 0.0
    %2283 = vmatprep.subr.mxu0 0.0
    %2284 = vmatpush1.msra.mxu0 0.0
    %2285 = vmatprep.subr.mxu0 0.0
    %2286 = vmatpush1.msra.mxu0 0.0
    %2287 = vmatprep.subr.mxu0 0.0
    %2288 = vmatpush1.msra.mxu0 0.0
    %2289 = vmatprep.subr.mxu0 0.0
    %2290 = vmatpush1.msra.mxu0 0.0
    %2291 = vmatprep.subr.mxu0 0.0
    %2292 = vmatpush1.msra.mxu0 0.0
    %2293 = vmatprep.subr.mxu0 0.0
    %2294 = vmatpush1.msra.mxu0 0.0
    %2295 = vmatprep.subr.mxu0 0.0
    %2296 = vmatpush1.msra.mxu0 0.0
    %2297 = vmatprep.subr.mxu0 0.0
    %2298 = vmatpush1.msra.mxu0 0.0
    %2299 = vmatprep.subr.mxu0 0.0
    %2300 = vmatpush1.msra.mxu0 0.0
    %2301 = vmatprep.subr.mxu0 0.0
    %2302 = vmatpush1.msra.mxu0 0.0
    %2303 = vmatprep.subr.mxu0 0.0
    %2304 = vmatpush1.msra.mxu0 0.0
    %2305 = vmatprep.subr.mxu0 0.0
    %2306 = vmatpush1.msra.mxu0 0.0
    %2307 = vmatprep.subr.mxu0 0.0
    %2308 = vmatpush1.msra.mxu0 0.0
    %2309 = vmatprep.subr.mxu0 0.0
    %2310 = vmatpush1.msra.mxu0 0.0
    %2311 = vmatprep.mubr.f32.mxu0 0.0
    %2312 = vmatmul.mubr.f32.gmra.mrb[0].mxu0 %v34
    %v2313 = vpop.f32.mrb[0].mxu0
    %v2314 = vadd.f32 0.0, %v2313
    %v2315 = vpop.f32.mrb[0].mxu0
    %2316 = vmatprep.mubr.f32.mxu0 0.0
    %2317 = vmatmul.mubr.f32.gmra.mrb[0].mxu0 %v37
    %v2318 = vpop.f32.mrb[0].mxu0
    %v2319 = vadd.f32 0.0, %v2318
    %v2320 = vpop.f32.mrb[0].mxu0
    %2321 = vdwg.mxu0
    %v2323 = vsel %vm39, %v2240, 0
    %2325 = vmatprep.subr.mxu0 0.0
    %2326 = vmatpush1.msra.mxu0 %v2239
    %2327 = vmatprep.subr.mxu0 0.0
    %2328 = vmatpush1.msra.mxu0 %v2323
    %2329 = vmatprep.subr.mxu0 0.0
    %2330 = vmatpush1.msra.mxu0 0.0
    %2331 = vmatprep.subr.mxu0 0.0
    %2332 = vmatpush1.msra.mxu0 0.0
    %2333 = vmatprep.subr.mxu0 0.0
    %2334 = vmatpush1.msra.mxu0 0.0
    %2335 = vmatprep.subr.mxu0 0.0
    %2336 = vmatpush1.msra.mxu0 0.0
    %2337 = vmatprep.subr.mxu0 0.0
    %2338 = vmatpush1.msra.mxu0 0.0
    %2339 = vmatprep.subr.mxu0 0.0
    %2340 = vmatpush1.msra.mxu0 0.0
    %2341 = vmatprep.subr.mxu0 0.0
    %2342 = vmatpush1.msra.mxu0 0.0
    %2343 = vmatprep.subr.mxu0 0.0
    %2344 = vmatpush1.msra.mxu0 0.0
    %2345 = vmatprep.subr.mxu0 0.0
    %2346 = vmatpush1.msra.mxu0 0.0
    %2347 = vmatprep.subr.mxu0 0.0
    %2348 = vmatpush1.msra.mxu0 0.0
    %2349 = vmatprep.subr.mxu0 0.0
    %2350 = vmatpush1.msra.mxu0 0.0
    %2351 = vmatprep.subr.mxu0 0.0
    %2352 = vmatpush1.msra.mxu0 0.0
    %2353 = vmatprep.subr.mxu0 0.0
    %2354 = vmatpush1.msra.mxu0 0.0
    %2355 = vmatprep.subr.mxu0 0.0
    %2356 = vmatpush1.msra.mxu0 0.0
    %2357 = vmatprep.subr.mxu0 0.0
    %2358 = vmatpush1.msra.mxu0 0.0
    %2359 = vmatprep.subr.mxu0 0.0
    %2360 = vmatpush1.msra.mxu0 0.0
    %2361 = vmatprep.subr.mxu0 0.0
    %2362 = vmatpush1.msra.mxu0 0.0
    %2363 = vmatprep.subr.mxu0 0.0
    %2364 = vmatpush1.msra.mxu0 0.0
    %2365 = vmatprep.subr.mxu0 0.0
    %2366 = vmatpush1.msra.mxu0 0.0
    %2367 = vmatprep.subr.mxu0 0.0
    %2368 = vmatpush1.msra.mxu0 0.0
    %2369 = vmatprep.subr.mxu0 0.0
    %2370 = vmatpush1.msra.mxu0 0.0
    %2371 = vmatprep.subr.mxu0 0.0
    %2372 = vmatpush1.msra.mxu0 0.0
    %2373 = vmatprep.subr.mxu0 0.0
    %2374 = vmatpush1.msra.mxu0 0.0
    %2375 = vmatprep.subr.mxu0 0.0
    %2376 = vmatpush1.msra.mxu0 0.0
    %2377 = vmatprep.subr.mxu0 0.0
    %2378 = vmatpush1.msra.mxu0 0.0
    %2379 = vmatprep.subr.mxu0 0.0
    %2380 = vmatpush1.msra.mxu0 0.0
    %2381 = vmatprep.subr.mxu0 0.0
    %2382 = vmatpush1.msra.mxu0 0.0
    %2383 = vmatprep.subr.mxu0 0.0
    %2384 = vmatpush1.msra.mxu0 0.0
    %2385 = vmatprep.subr.mxu0 0.0
    %2386 = vmatpush1.msra.mxu0 0.0
    %2387 = vmatprep.subr.mxu0 0.0
    %2388 = vmatpush1.msra.mxu0 0.0
    %2389 = vmatprep.mubr.f32.mxu0 0.0
    %2390 = vmatmul.mubr.f32.gmra.mrb[0].mxu0 %v119
    %v2391 = vpop.f32.mrb[0].mxu0
    %v2392 = vadd.f32 %v2314, %v2391
    %v2393 = vpop.f32.mrb[0].mxu0
    %2394 = vmatprep.mubr.f32.mxu0 0.0
    %2395 = vmatmul.mubr.f32.gmra.mrb[0].mxu0 %v122
    %v2396 = vpop.f32.mrb[0].mxu0
    %v2397 = vadd.f32 %v2319, %v2396
    %v2398 = vpop.f32.mrb[0].mxu0
    %2399 = vdwg.mxu0
    %2400 = vmatprep.subr.mxu0 0.0
    %2401 = vmatpush1.msra.mxu0 %v2239
    %2402 = vmatprep.subr.mxu0 0.0
    %2403 = vmatpush1.msra.mxu0 %v2323
    %2404 = vmatprep.subr.mxu0 0.0
    %2405 = vmatpush1.msra.mxu0 0.0
    %2406 = vmatprep.subr.mxu0 0.0
    %2407 = vmatpush1.msra.mxu0 0.0
    %2408 = vmatprep.subr.mxu0 0.0
    %2409 = vmatpush1.msra.mxu0 0.0
    %2410 = vmatprep.subr.mxu0 0.0
    %2411 = vmatpush1.msra.mxu0 0.0
    %2412 = vmatprep.subr.mxu0 0.0
    %2413 = vmatpush1.msra.mxu0 0.0
    %2414 = vmatprep.subr.mxu0 0.0
    %2415 = vmatpush1.msra.mxu0 0.0
    %2416 = vmatprep.subr.mxu0 0.0
    %2417 = vmatpush1.msra.mxu0 0.0
    %2418 = vmatprep.subr.mxu0 0.0
    %2419 = vmatpush1.msra.mxu0 0.0
    %2420 = vmatprep.subr.mxu0 0.0
    %2421 = vmatpush1.msra.mxu0 0.0
    %2422 = vmatprep.subr.mxu0 0.0
    %2423 = vmatpush1.msra.mxu0 0.0
    %2424 = vmatprep.subr.mxu0 0.0
    %2425 = vmatpush1.msra.mxu0 0.0
    %2426 = vmatprep.subr.mxu0 0.0
    %2427 = vmatpush1.msra.mxu0 0.0
    %2428 = vmatprep.subr.mxu0 0.0
    %2429 = vmatpush1.msra.mxu0 0.0
    %2430 = vmatprep.subr.mxu0 0.0
    %2431 = vmatpush1.msra.mxu0 0.0
    %2432 = vmatprep.subr.mxu0 0.0
    %2433 = vmatpush1.msra.mxu0 0.0
    %2434 = vmatprep.subr.mxu0 0.0
    %2435 = vmatpush1.msra.mxu0 0.0
    %2436 = vmatprep.subr.mxu0 0.0
    %2437 = vmatpush1.msra.mxu0 0.0
    %2438 = vmatprep.subr.mxu0 0.0
    %2439 = vmatpush1.msra.mxu0 0.0
    %2440 = vmatprep.subr.mxu0 0.0
    %2441 = vmatpush1.msra.mxu0 0.0
    %2442 = vmatprep.subr.mxu0 0.0
    %2443 = vmatpush1.msra.mxu0 0.0
    %2444 = vmatprep.subr.mxu0 0.0
    %2445 = vmatpush1.msra.mxu0 0.0
    %2446 = vmatprep.subr.mxu0 0.0
    %2447 = vmatpush1.msra.mxu0 0.0
    %2448 = vmatprep.subr.mxu0 0.0
    %2449 = vmatpush1.msra.mxu0 0.0
    %2450 = vmatprep.subr.mxu0 0.0
    %2451 = vmatpush1.msra.mxu0 0.0
    %2452 = vmatprep.subr.mxu0 0.0
    %2453 = vmatpush1.msra.mxu0 0.0
    %2454 = vmatprep.subr.mxu0 0.0
    %2455 = vmatpush1.msra.mxu0 0.0
    %2456 = vmatprep.subr.mxu0 0.0
    %2457 = vmatpush1.msra.mxu0 0.0
    %2458 = vmatprep.subr.mxu0 0.0
    %2459 = vmatpush1.msra.mxu0 0.0
    %2460 = vmatprep.subr.mxu0 0.0
    %2461 = vmatpush1.msra.mxu0 0.0
    %2462 = vmatprep.subr.mxu0 0.0
    %2463 = vmatpush1.msra.mxu0 0.0
    %2464 = vmatprep.mubr.f32.mxu0 0.0
    %2465 = vmatmul.mubr.f32.gmra.mrb[0].mxu0 %v34
    %v2466 = vpop.f32.mrb[0].mxu0
    %v2467 = vadd.f32 0.0, %v2466
    %v2468 = vpop.f32.mrb[0].mxu0
    %2469 = vmatprep.mubr.f32.mxu0 0.0
    %2470 = vmatmul.mubr.f32.gmra.mrb[0].mxu0 %v37
    %v2471 = vpop.f32.mrb[0].mxu0
    %v2472 = vadd.f32 0.0, %v2471
    %v2473 = vpop.f32.mrb[0].mxu0
    %2474 = vdwg.mxu0
    %2475 = vmatprep.subr.mxu0 0.0
    %2476 = vmatpush1.msra.mxu0 %v2242
    %2477 = vmatprep.subr.mxu0 0.0
    %2478 = vmatpush1.msra.mxu0 %v2245
    %2479 = vmatprep.subr.mxu0 0.0
    %2480 = vmatpush1.msra.mxu0 0.0
    %2481 = vmatprep.subr.mxu0 0.0
    %2482 = vmatpush1.msra.mxu0 0.0
    %2483 = vmatprep.subr.mxu0 0.0
    %2484 = vmatpush1.msra.mxu0 0.0
    %2485 = vmatprep.subr.mxu0 0.0
    %2486 = vmatpush1.msra.mxu0 0.0
    %2487 = vmatprep.subr.mxu0 0.0
    %2488 = vmatpush1.msra.mxu0 0.0
    %2489 = vmatprep.subr.mxu0 0.0
    %2490 = vmatpush1.msra.mxu0 0.0
    %2491 = vmatprep.subr.mxu0 0.0
    %2492 = vmatpush1.msra.mxu0 0.0
    %2493 = vmatprep.subr.mxu0 0.0
    %2494 = vmatpush1.msra.mxu0 0.0
    %2495 = vmatprep.subr.mxu0 0.0
    %2496 = vmatpush1.msra.mxu0 0.0
    %2497 = vmatprep.subr.mxu0 0.0
    %2498 = vmatpush1.msra.mxu0 0.0
    %2499 = vmatprep.subr.mxu0 0.0
    %2500 = vmatpush1.msra.mxu0 0.0
    %2501 = vmatprep.subr.mxu0 0.0
    %2502 = vmatpush1.msra.mxu0 0.0
    %2503 = vmatprep.subr.mxu0 0.0
    %2504 = vmatpush1.msra.mxu0 0.0
    %2505 = vmatprep.subr.mxu0 0.0
    %2506 = vmatpush1.msra.mxu0 0.0
    %2507 = vmatprep.subr.mxu0 0.0
    %2508 = vmatpush1.msra.mxu0 0.0
    %2509 = vmatprep.subr.mxu0 0.0
    %2510 = vmatpush1.msra.mxu0 0.0
    %2511 = vmatprep.subr.mxu0 0.0
    %2512 = vmatpush1.msra.mxu0 0.0
    %2513 = vmatprep.subr.mxu0 0.0
    %2514 = vmatpush1.msra.mxu0 0.0
    %2515 = vmatprep.subr.mxu0 0.0
    %2516 = vmatpush1.msra.mxu0 0.0
    %2517 = vmatprep.subr.mxu0 0.0
    %2518 = vmatpush1.msra.mxu0 0.0
    %2519 = vmatprep.subr.mxu0 0.0
    %2520 = vmatpush1.msra.mxu0 0.0
    %2521 = vmatprep.subr.mxu0 0.0
    %2522 = vmatpush1.msra.mxu0 0.0
    %2523 = vmatprep.subr.mxu0 0.0
    %2524 = vmatpush1.msra.mxu0 0.0
    %2525 = vmatprep.subr.mxu0 0.0
    %2526 = vmatpush1.msra.mxu0 0.0
    %2527 = vmatprep.subr.mxu0 0.0
    %2528 = vmatpush1.msra.mxu0 0.0
    %2529 = vmatprep.subr.mxu0 0.0
    %2530 = vmatpush1.msra.mxu0 0.0
    %2531 = vmatprep.subr.mxu0 0.0
    %2532 = vmatpush1.msra.mxu0 0.0
    %2533 = vmatprep.subr.mxu0 0.0
    %2534 = vmatpush1.msra.mxu0 0.0
    %2535 = vmatprep.subr.mxu0 0.0
    %2536 = vmatpush1.msra.mxu0 0.0
    %2537 = vmatprep.subr.mxu0 0.0
    %2538 = vmatpush1.msra.mxu0 0.0
    %2539 = vmatprep.mubr.f32.mxu0 0.0
    %2540 = vmatmul.mubr.f32.gmra.mrb[0].mxu0 %v119
    %v2541 = vpop.f32.mrb[0].mxu0
    %v2542 = vadd.f32 0.0, %v2541
    %v2543 = vpop.f32.mrb[0].mxu0
    %2544 = vmatprep.mubr.f32.mxu0 0.0
    %2545 = vmatmul.mubr.f32.gmra.mrb[0].mxu0 %v122
    %v2546 = vpop.f32.mrb[0].mxu0
    %v2547 = vadd.f32 0.0, %v2546
    %v2548 = vpop.f32.mrb[0].mxu0
    %2549 = vdwg.mxu0
    %v2550 = vsub.f32 %v2467, %v2542
    %v2551 = vsub.f32 %v2472, %v2547
    %v2552 = vld [vmem:[%s4] sm:$0xff]
    %v2553 = vld [vmem:[%s4 + $0x8] sm:$0xff]
    %v2554 = vld [vmem:[%s4 + $0x10] sm:$0xff]
    %v2555 = vld [vmem:[%s4 + $0x18] sm:$0xff]
    %v2556 = vld [vmem:[%s4 + $0x20] sm:$0xff]
    %v2557 = vld [vmem:[%s4 + $0x28] sm:$0xff]
    %v2558 = vld [vmem:[%s4 + $0x30] sm:$0xff]
    %v2559 = vld [vmem:[%s4 + $0x38] sm:$0xff]
    %v2560 = vld [vmem:[%s4 + $0x40] sm:$0xff]
    %v2561 = vld [vmem:[%s4 + $0x48] sm:$0xff]
    %v2562 = vld [vmem:[%s4 + $0x50] sm:$0xff]
    %v2563 = vld [vmem:[%s4 + $0x58] sm:$0xff]
    %v2564 = vld [vmem:[%s4 + $0x60] sm:$0xff]
    %v2565 = vld [vmem:[%s4 + $0x68] sm:$0xff]
    %v2566 = vld [vmem:[%s4 + $0x70] sm:$0xff]
    %v2567 = vld [vmem:[%s4 + $0x78] sm:$0xff]
    %v2568 = vld [vmem:[%s5] sm:$0xff]
    %v2569 = vld [vmem:[%s5 + $0x8] sm:$0xff]
    %v2570 = vld [vmem:[%s5 + $0x10] sm:$0xff]
    %v2571 = vld [vmem:[%s5 + $0x18] sm:$0xff]
    %v2572 = vld [vmem:[%s5 + $0x20] sm:$0xff]
    %v2573 = vld [vmem:[%s5 + $0x28] sm:$0xff]
    %v2574 = vld [vmem:[%s5 + $0x30] sm:$0xff]
    %v2575 = vld [vmem:[%s5 + $0x38] sm:$0xff]
    %v2576 = vld [vmem:[%s5 + $0x40] sm:$0xff]
    %v2577 = vld [vmem:[%s5 + $0x48] sm:$0xff]
    %v2578 = vld [vmem:[%s5 + $0x50] sm:$0xff]
    %v2579 = vld [vmem:[%s5 + $0x58] sm:$0xff]
    %v2580 = vld [vmem:[%s5 + $0x60] sm:$0xff]
    %v2581 = vld [vmem:[%s5 + $0x68] sm:$0xff]
    %v2582 = vld [vmem:[%s5 + $0x70] sm:$0xff]
    %v2583 = vld [vmem:[%s5 + $0x78] sm:$0xff]
    %2584 = vmatprep.subr.mxu0 0.0
    %2585 = vmatpush1.msra.mxu0 %v2568
    %2586 = vmatprep.subr.mxu0 0.0
    %2587 = vmatpush1.msra.mxu0 %v2569
    %2588 = vmatprep.subr.mxu0 0.0
    %2589 = vmatpush1.msra.mxu0 %v2570
    %2590 = vmatprep.subr.mxu0 0.0
    %2591 = vmatpush1.msra.mxu0 %v2571
    %2592 = vmatprep.subr.mxu0 0.0
    %2593 = vmatpush1.msra.mxu0 %v2572
    %2594 = vmatprep.subr.mxu0 0.0
    %2595 = vmatpush1.msra.mxu0 %v2573
    %2596 = vmatprep.subr.mxu0 0.0
    %2597 = vmatpush1.msra.mxu0 %v2574
    %2598 = vmatprep.subr.mxu0 0.0
    %2599 = vmatpush1.msra.mxu0 %v2575
    %2600 = vmatprep.subr.mxu0 0.0
    %2601 = vmatpush1.msra.mxu0 %v2576
    %2602 = vmatprep.subr.mxu0 0.0
    %2603 = vmatpush1.msra.mxu0 %v2577
    %2604 = vmatprep.subr.mxu0 0.0
    %2605 = vmatpush1.msra.mxu0 %v2578
    %2606 = vmatprep.subr.mxu0 0.0
    %2607 = vmatpush1.msra.mxu0 %v2579
    %2608 = vmatprep.subr.mxu0 0.0
    %2609 = vmatpush1.msra.mxu0 %v2580
    %2610 = vmatprep.subr.mxu0 0.0
    %2611 = vmatpush1.msra.mxu0 %v2581
    %2612 = vmatprep.subr.mxu0 0.0
    %2613 = vmatpush1.msra.mxu0 %v2582
    %2614 = vmatprep.subr.mxu0 0.0
    %2615 = vmatpush1.msra.mxu0 %v2583
    %2616 = vmatprep.subr.mxu0 0.0
    %2617 = vmatpush1.msra.mxu0 0.0
    %2618 = vmatprep.subr.mxu0 0.0
    %2619 = vmatpush1.msra.mxu0 0.0
    %2620 = vmatprep.subr.mxu0 0.0
    %2621 = vmatpush1.msra.mxu0 0.0
    %2622 = vmatprep.subr.mxu0 0.0
    %2623 = vmatpush1.msra.mxu0 0.0
    %2624 = vmatprep.subr.mxu0 0.0
    %2625 = vmatpush1.msra.mxu0 0.0
    %2626 = vmatprep.subr.mxu0 0.0
    %2627 = vmatpush1.msra.mxu0 0.0
    %2628 = vmatprep.subr.mxu0 0.0
    %2629 = vmatpush1.msra.mxu0 0.0
    %2630 = vmatprep.subr.mxu0 0.0
    %2631 = vmatpush1.msra.mxu0 0.0
    %2632 = vmatprep.subr.mxu0 0.0
    %2633 = vmatpush1.msra.mxu0 0.0
    %2634 = vmatprep.subr.mxu0 0.0
    %2635 = vmatpush1.msra.mxu0 0.0
    %2636 = vmatprep.subr.mxu0 0.0
    %2637 = vmatpush1.msra.mxu0 0.0
    %2638 = vmatprep.subr.mxu0 0.0
    %2639 = vmatpush1.msra.mxu0 0.0
    %2640 = vmatprep.subr.mxu0 0.0
    %2641 = vmatpush1.msra.mxu0 0.0
    %2642 = vmatprep.subr.mxu0 0.0
    %2643 = vmatpush1.msra.mxu0 0.0
    %2644 = vmatprep.subr.mxu0 0.0
    %2645 = vmatpush1.msra.mxu0 0.0
    %2646 = vmatprep.subr.mxu0 0.0
    %2647 = vmatpush1.msra.mxu0 0.0
    %2648 = vmatprep.mubr.f32.mxu0 0.0
    %2649 = vmatmul.mubr.f32.gmra.mrb[0].mxu0 %v352
    %v2650 = vpop.f32.mrb[0].mxu0
    %v2651 = vadd.f32 0.0, %v2650
    %v2652 = vpop.f32.mrb[0].mxu0
    %2653 = vmatprep.mubr.f32.mxu0 0.0
    %2654 = vmatmul.mubr.f32.gmra.mrb[0].mxu0 %v353
    %v2655 = vpop.f32.mrb[0].mxu0
    %v2656 = vadd.f32 0.0, %v2655
    %v2657 = vpop.f32.mrb[0].mxu0
    %2658 = vmatprep.mubr.f32.mxu0 0.0
    %2659 = vmatmul.mubr.f32.gmra.mrb[0].mxu0 %v666
    %v2660 = vpop.f32.mrb[0].mxu0
    %v2661 = vadd.f32 0.0, %v2660
    %v2662 = vpop.f32.mrb[0].mxu0
    %2663 = vmatprep.mubr.f32.mxu0 0.0
    %2664 = vmatmul.mubr.f32.gmra.mrb[0].mxu0 %v667
    %v2665 = vpop.f32.mrb[0].mxu0
    %v2666 = vadd.f32 0.0, %v2665
    %v2667 = vpop.f32.mrb[0].mxu0
    %2668 = vmatprep.mubr.f32.mxu0 0.0
    %2669 = vmatmul.mubr.f32.gmra.mrb[0].mxu0 %v980
    %v2670 = vpop.f32.mrb[0].mxu0
    %v2671 = vadd.f32 0.0, %v2670
    %v2672 = vpop.f32.mrb[0].mxu0
    %2673 = vmatprep.mubr.f32.mxu0 0.0
    %2674 = vmatmul.mubr.f32.gmra.mrb[0].mxu0 %v981
    %v2675 = vpop.f32.mrb[0].mxu0
    %v2676 = vadd.f32 0.0, %v2675
    %v2677 = vpop.f32.mrb[0].mxu0
    %2678 = vmatprep.mubr.f32.mxu0 0.0
    %2679 = vmatmul.mubr.f32.gmra.mrb[0].mxu0 %v1294
    %v2680 = vpop.f32.mrb[0].mxu0
    %v2681 = vadd.f32 0.0, %v2680
    %v2682 = vpop.f32.mrb[0].mxu0
    %2683 = vmatprep.mubr.f32.mxu0 0.0
    %2684 = vmatmul.mubr.f32.gmra.mrb[0].mxu0 %v1295
    %v2685 = vpop.f32.mrb[0].mxu0
    %v2686 = vadd.f32 0.0, %v2685
    %v2687 = vpop.f32.mrb[0].mxu0
    %2688 = vmatprep.mubr.f32.mxu0 0.0
    %2689 = vmatmul.mubr.f32.gmra.mrb[0].mxu0 %v1608
    %v2690 = vpop.f32.mrb[0].mxu0
    %v2691 = vadd.f32 0.0, %v2690
    %v2692 = vpop.f32.mrb[0].mxu0
    %2693 = vmatprep.mubr.f32.mxu0 0.0
    %2694 = vmatmul.mubr.f32.gmra.mrb[0].mxu0 %v1609
    %v2695 = vpop.f32.mrb[0].mxu0
    %v2696 = vadd.f32 0.0, %v2695
    %v2697 = vpop.f32.mrb[0].mxu0
    %2698 = vmatprep.mubr.f32.mxu0 0.0
    %2699 = vmatmul.mubr.f32.gmra.mrb[0].mxu0 %v1922
    %v2700 = vpop.f32.mrb[0].mxu0
    %v2701 = vadd.f32 0.0, %v2700
    %v2702 = vpop.f32.mrb[0].mxu0
    %2703 = vmatprep.mubr.f32.mxu0 0.0
    %2704 = vmatmul.mubr.f32.gmra.mrb[0].mxu0 %v1923
    %v2705 = vpop.f32.mrb[0].mxu0
    %v2706 = vadd.f32 0.0, %v2705
    %v2707 = vpop.f32.mrb[0].mxu0
    %2708 = vmatprep.mubr.f32.mxu0 0.0
    %2709 = vmatmul.mubr.f32.gmra.mrb[0].mxu0 %v2236
    %v2710 = vpop.f32.mrb[0].mxu0
    %v2711 = vadd.f32 0.0, %v2710
    %v2712 = vpop.f32.mrb[0].mxu0
    %2713 = vmatprep.mubr.f32.mxu0 0.0
    %2714 = vmatmul.mubr.f32.gmra.mrb[0].mxu0 %v2237
    %v2715 = vpop.f32.mrb[0].mxu0
    %v2716 = vadd.f32 0.0, %v2715
    %v2717 = vpop.f32.mrb[0].mxu0
    %2718 = vmatprep.mubr.f32.mxu0 0.0
    %2719 = vmatmul.mubr.f32.gmra.mrb[0].mxu0 %v2550
    %v2720 = vpop.f32.mrb[0].mxu0
    %v2721 = vadd.f32 0.0, %v2720
    %v2722 = vpop.f32.mrb[0].mxu0
    %2723 = vmatprep.mubr.f32.mxu0 0.0
    %2724 = vmatmul.mubr.f32.gmra.mrb[0].mxu0 %v2551
    %v2725 = vpop.f32.mrb[0].mxu0
    %v2726 = vadd.f32 0.0, %v2725
    %v2727 = vpop.f32.mrb[0].mxu0
    %2728 = vdwg.mxu0
    %2729 = vmatprep.subr.mxu0 0.0
    %2730 = vmatpush1.msra.mxu0 %v2552
    %2731 = vmatprep.subr.mxu0 0.0
    %2732 = vmatpush1.msra.mxu0 %v2553
    %2733 = vmatprep.subr.mxu0 0.0
    %2734 = vmatpush1.msra.mxu0 %v2554
    %2735 = vmatprep.subr.mxu0 0.0
    %2736 = vmatpush1.msra.mxu0 %v2555
    %2737 = vmatprep.subr.mxu0 0.0
    %2738 = vmatpush1.msra.mxu0 %v2556
    %2739 = vmatprep.subr.mxu0 0.0
    %2740 = vmatpush1.msra.mxu0 %v2557
    %2741 = vmatprep.subr.mxu0 0.0
    %2742 = vmatpush1.msra.mxu0 %v2558
    %2743 = vmatprep.subr.mxu0 0.0
    %2744 = vmatpush1.msra.mxu0 %v2559
    %2745 = vmatprep.subr.mxu0 0.0
    %2746 = vmatpush1.msra.mxu0 %v2560
    %2747 = vmatprep.subr.mxu0 0.0
    %2748 = vmatpush1.msra.mxu0 %v2561
    %2749 = vmatprep.subr.mxu0 0.0
    %2750 = vmatpush1.msra.mxu0 %v2562
    %2751 = vmatprep.subr.mxu0 0.0
    %2752 = vmatpush1.msra.mxu0 %v2563
    %2753 = vmatprep.subr.mxu0 0.0
    %2754 = vmatpush1.msra.mxu0 %v2564
    %2755 = vmatprep.subr.mxu0 0.0
    %2756 = vmatpush1.msra.mxu0 %v2565
    %2757 = vmatprep.subr.mxu0 0.0
    %2758 = vmatpush1.msra.mxu0 %v2566
    %2759 = vmatprep.subr.mxu0 0.0
    %2760 = vmatpush1.msra.mxu0 %v2567
    %2761 = vmatprep.subr.mxu0 0.0
    %2762 = vmatpush1.msra.mxu0 0.0
    %2763 = vmatprep.subr.mxu0 0.0
    %2764 = vmatpush1.msra.mxu0 0.0
    %2765 = vmatprep.subr.mxu0 0.0
    %2766 = vmatpush1.msra.mxu0 0.0
    %2767 = vmatprep.subr.mxu0 0.0
    %2768 = vmatpush1.msra.mxu0 0.0
    %2769 = vmatprep.subr.mxu0 0.0
    %2770 = vmatpush1.msra.mxu0 0.0
    %2771 = vmatprep.subr.mxu0 0.0
    %2772 = vmatpush1.msra.mxu0 0.0
    %2773 = vmatprep.subr.mxu0 0.0
    %2774 = vmatpush1.msra.mxu0 0.0
    %2775 = vmatprep.subr.mxu0 0.0
    %2776 = vmatpush1.msra.mxu0 0.0
    %2777 = vmatprep.subr.mxu0 0.0
    %2778 = vmatpush1.msra.mxu0 0.0
    %2779 = vmatprep.subr.mxu0 0.0
    %2780 = vmatpush1.msra.mxu0 0.0
    %2781 = vmatprep.subr.mxu0 0.0
    %2782 = vmatpush1.msra.mxu0 0.0
    %2783 = vmatprep.subr.mxu0 0.0
    %2784 = vmatpush1.msra.mxu0 0.0
    %2785 = vmatprep.subr.mxu0 0.0
    %2786 = vmatpush1.msra.mxu0 0.0
    %2787 = vmatprep.subr.mxu0 0.0
    %2788 = vmatpush1.msra.mxu0 0.0
    %2789 = vmatprep.subr.mxu0 0.0
    %2790 = vmatpush1.msra.mxu0 0.0
    %2791 = vmatprep.subr.mxu0 0.0
    %2792 = vmatpush1.msra.mxu0 0.0
    %2793 = vmatprep.mubr.f32.mxu0 0.0
    %2794 = vmatmul.mubr.f32.gmra.mrb[0].mxu0 %v194
    %v2795 = vpop.f32.mrb[0].mxu0
    %v2796 = vadd.f32 %v2651, %v2795
    %v2797 = vpop.f32.mrb[0].mxu0
    %2798 = vmatprep.mubr.f32.mxu0 0.0
    %2799 = vmatmul.mubr.f32.gmra.mrb[0].mxu0 %v199
    %v2800 = vpop.f32.mrb[0].mxu0
    %v2801 = vadd.f32 %v2656, %v2800
    %v2802 = vpop.f32.mrb[0].mxu0
    %2803 = vmatprep.mubr.f32.mxu0 0.0
    %2804 = vmatmul.mubr.f32.gmra.mrb[0].mxu0 %v508
    %v2805 = vpop.f32.mrb[0].mxu0
    %v2806 = vadd.f32 %v2661, %v2805
    %v2807 = vpop.f32.mrb[0].mxu0
    %2808 = vmatprep.mubr.f32.mxu0 0.0
    %2809 = vmatmul.mubr.f32.gmra.mrb[0].mxu0 %v513
    %v2810 = vpop.f32.mrb[0].mxu0
    %v2811 = vadd.f32 %v2666, %v2810
    %v2812 = vpop.f32.mrb[0].mxu0
    %2813 = vmatprep.mubr.f32.mxu0 0.0
    %2814 = vmatmul.mubr.f32.gmra.mrb[0].mxu0 %v822
    %v2815 = vpop.f32.mrb[0].mxu0
    %v2816 = vadd.f32 %v2671, %v2815
    %v2817 = vpop.f32.mrb[0].mxu0
    %2818 = vmatprep.mubr.f32.mxu0 0.0
    %2819 = vmatmul.mubr.f32.gmra.mrb[0].mxu0 %v827
    %v2820 = vpop.f32.mrb[0].mxu0
    %v2821 = vadd.f32 %v2676, %v2820
    %v2822 = vpop.f32.mrb[0].mxu0
    %2823 = vmatprep.mubr.f32.mxu0 0.0
    %2824 = vmatmul.mubr.f32.gmra.mrb[0].mxu0 %v1136
    %v2825 = vpop.f32.mrb[0].mxu0
    %v2826 = vadd.f32 %v2681, %v2825
    %v2827 = vpop.f32.mrb[0].mxu0
    %2828 = vmatprep.mubr.f32.mxu0 0.0
    %2829 = vmatmul.mubr.f32.gmra.mrb[0].mxu0 %v1141
    %v2830 = vpop.f32.mrb[0].mxu0
    %v2831 = vadd.f32 %v2686, %v2830
    %v2832 = vpop.f32.mrb[0].mxu0
    %2833 = vmatprep.mubr.f32.mxu0 0.0
    %2834 = vmatmul.mubr.f32.gmra.mrb[0].mxu0 %v1450
    %v2835 = vpop.f32.mrb[0].mxu0
    %v2836 = vadd.f32 %v2691, %v2835
    %v2837 = vpop.f32.mrb[0].mxu0
    %2838 = vmatprep.mubr.f32.mxu0 0.0
    %2839 = vmatmul.mubr.f32.gmra.mrb[0].mxu0 %v1455
    %v2840 = vpop.f32.mrb[0].mxu0
    %v2841 = vadd.f32 %v2696, %v2840
    %v2842 = vpop.f32.mrb[0].mxu0
    %2843 = vmatprep.mubr.f32.mxu0 0.0
    %2844 = vmatmul.mubr.f32.gmra.mrb[0].mxu0 %v1764
    %v2845 = vpop.f32.mrb[0].mxu0
    %v2846 = vadd.f32 %v2701, %v2845
    %v2847 = vpop.f32.mrb[0].mxu0
    %2848 = vmatprep.mubr.f32.mxu0 0.0
    %2849 = vmatmul.mubr.f32.gmra.mrb[0].mxu0 %v1769
    %v2850 = vpop.f32.mrb[0].mxu0
    %v2851 = vadd.f32 %v2706, %v2850
    %v2852 = vpop.f32.mrb[0].mxu0
    %2853 = vmatprep.mubr.f32.mxu0 0.0
    %2854 = vmatmul.mubr.f32.gmra.mrb[0].mxu0 %v2078
    %v2855 = vpop.f32.mrb[0].mxu0
    %v2856 = vadd.f32 %v2711, %v2855
    %v2857 = vpop.f32.mrb[0].mxu0
    %2858 = vmatprep.mubr.f32.mxu0 0.0
    %2859 = vmatmul.mubr.f32.gmra.mrb[0].mxu0 %v2083
    %v2860 = vpop.f32.mrb[0].mxu0
    %v2861 = vadd.f32 %v2716, %v2860
    %v2862 = vpop.f32.mrb[0].mxu0
    %2863 = vmatprep.mubr.f32.mxu0 0.0
    %2864 = vmatmul.mubr.f32.gmra.mrb[0].mxu0 %v2392
    %v2865 = vpop.f32.mrb[0].mxu0
    %v2866 = vadd.f32 %v2721, %v2865
    %v2867 = vpop.f32.mrb[0].mxu0
    %2868 = vmatprep.mubr.f32.mxu0 0.0
    %2869 = vmatmul.mubr.f32.gmra.mrb[0].mxu0 %v2397
    %v2870 = vpop.f32.mrb[0].mxu0
    %v2871 = vadd.f32 %v2726, %v2870
    %v2872 = vpop.f32.mrb[0].mxu0
    %2873 = vdwg.mxu0
    %2874 = vst [vmem:[#allocation2] sm:$0xff] %v2796
    %2875 = vst [vmem:[#allocation2 + $0x8] sm:$0xff] %v2801
    %2876 = vst [vmem:[#allocation2 + $0x10] sm:$0xff] %v2806
    %2877 = vst [vmem:[#allocation2 + $0x18] sm:$0xff] %v2811
    %2878 = vst [vmem:[#allocation2 + $0x20] sm:$0xff] %v2816
    %2879 = vst [vmem:[#allocation2 + $0x28] sm:$0xff] %v2821
    %2880 = vst [vmem:[#allocation2 + $0x30] sm:$0xff] %v2826
    %2881 = vst [vmem:[#allocation2 + $0x38] sm:$0xff] %v2831
    %2882 = vst [vmem:[#allocation2 + $0x40] sm:$0xff] %v2836
    %2883 = vst [vmem:[#allocation2 + $0x48] sm:$0xff] %v2841
    %2884 = vst [vmem:[#allocation2 + $0x50] sm:$0xff] %v2846
    %2885 = vst [vmem:[#allocation2 + $0x58] sm:$0xff] %v2851
    %2886 = vst [vmem:[#allocation2 + $0x60] sm:$0xff] %v2856
    %2887 = vst [vmem:[#allocation2 + $0x68] sm:$0xff] %v2861
    %2888 = vst [vmem:[#allocation2 + $0x70] sm:$0xff] %v2866
    %2889 = vst [vmem:[#allocation2 + $0x78] sm:$0xff] %v2871
    // Predicated region
    $region26: #{tpu_custom_call.1} parent=1 // pred_check
      _
    $region27: #{tpu_custom_call.1} parent=1 // pred_check_branch
      %2891 = sbr.rel (0) target = $region29
    $region28: #{tpu_custom_call.1} parent=1 // pred_region
      %s2893 = ssub.s32 2048, 2048
      %2894 = vsyncadd [#allocation3], %s2893
      %s2895 = sshll.u32 [#allocation2], 4
      %s2896 = int_to_ptr.vmem [resolvable:$true] %s2895
      %2901 = dma.vmem_to_hbm [thread:$0]  %s2896, 2048, %s6, [#allocation3], 128, 128, 8
    $region29: #{tpu_custom_call.1} parent=1 // pred_fallthru
      _
    // Predicated region
    $region30: #{tpu_custom_call.1} parent=1 // pred_check
      _
    $region31: #{tpu_custom_call.1} parent=1 // pred_check_branch
      %2903 = sbr.rel (0) target = $region33
    $region32: #{tpu_custom_call.1} parent=1 // pred_region
      %2904 = dma.done [#allocation3], 2048
    $region33: #{tpu_custom_call.1} parent=1 // pred_fallthru
      _
    %2905 = vsyncpa [#allocation3], 1

</llo_original>
